<compile_context>
chip_gen: v7x
topology: tpu7x:2x2x1
jax: 0.10.0
libtpu: 0.0.40
codegen_flags: <defaults>
</compile_context>

<pallas_src>
import functools

import jax
import jax.numpy as jnp
from jax import lax
from jax.experimental import pallas as pl
from jax.experimental.pallas import tpu as pltpu

LN_EPS = 1e-5
TK = 512  # K-chunk size of the combined weight stream (gcd(1536, 2048) = 512)


def _layernorm_f32(h, gamma, beta):
    mean = jnp.mean(h, axis=-1, keepdims=True)
    c = h - mean
    var = jnp.mean(c * c, axis=-1, keepdims=True)
    return c * lax.rsqrt(var + LN_EPS) * gamma + beta


# ----------------------------------------------------------------------------
# Fused head kernel.
# Grid: (n1 + n2,) sequential steps over the combined weight stream W1 || W2.
#   steps 0..n1-1   : acc += x_chunk(bf16) @ W_chunk(bf16)            (f32 acc)
#   step  n1-1      : epilogue1: +b1, LayerNorm1, stash h1 (bf16) in VMEM,
#                     reset accumulator
#   steps n1..end   : acc += h1_chunk(bf16) @ W_chunk(bf16)
#   last step       : epilogue2: +b2, LayerNorm2, logits = h @ W3 + b3,
#                     softmax -> output (B, 2)
# ----------------------------------------------------------------------------
def _fused_head_kernel(x_ref, w_ref, ln1_ref, ln2_ref, w3_ref, b3_ref,
                       o_ref, acc_ref, h1_ref, *, n1, n2, tk):
    k = pl.program_id(0)
    n_total = n1 + n2

    @pl.when(k == 0)
    def _():
        acc_ref[...] = jnp.zeros_like(acc_ref)

    # ---- layer 1 accumulation -------------------------------------------
    @pl.when(k < n1)
    def _():
        acc_ref[...] += jnp.dot(
            x_ref[...], w_ref[...], preferred_element_type=jnp.float32
        )

    # ---- layer 1 epilogue: bias + LN1, stash bf16 hidden state -----------
    @pl.when(k == n1 - 1)
    def _():
        h = acc_ref[...] + ln1_ref[0:1, :]
        h = _layernorm_f32(h, ln1_ref[1:2, :], ln1_ref[2:3, :])
        hb = h.astype(jnp.bfloat16)
        for c in range(n2):  # static unroll: write per-chunk tiles
            h1_ref[c] = hb[:, c * tk:(c + 1) * tk]
        acc_ref[...] = jnp.zeros_like(acc_ref)  # reset for layer 2

    # ---- layer 2 accumulation -------------------------------------------
    @pl.when(k >= n1)
    def _():
        l = k - n1
        acc_ref[...] += jnp.dot(
            h1_ref[l], w_ref[...], preferred_element_type=jnp.float32
        )

    # ---- final epilogue: bias + LN2, Linear3, softmax ---------------------
    @pl.when(k == n_total - 1)
    def _():
        h = acc_ref[...] + ln2_ref[0:1, :]
        h = _layernorm_f32(h, ln2_ref[1:2, :], ln2_ref[2:3, :])
        logits = jnp.dot(h, w3_ref[...], preferred_element_type=jnp.float32)
        logits = logits + b3_ref[...]
        m = jnp.max(logits, axis=-1, keepdims=True)
        e = jnp.exp(logits - m)
        o_ref[...] = (e / jnp.sum(e, axis=-1, keepdims=True)).astype(o_ref.dtype)


def fused_head(x_bf16, w_cat_bf16, ln1, ln2, w3, b3):
    Bp, K1 = x_bf16.shape
    Ktot, N = w_cat_bf16.shape
    K2 = Ktot - K1
    n_out = w3.shape[1]
    assert K1 % TK == 0 and K2 % TK == 0 and Bp % 8 == 0
    n1 = K1 // TK
    n2 = K2 // TK
    b3_2d = b3.reshape(1, n_out)

    kernel = functools.partial(_fused_head_kernel, n1=n1, n2=n2, tk=TK)

    return pl.pallas_call(
        kernel,
        out_shape=jax.ShapeDtypeStruct((Bp, n_out), jnp.float32),
        grid_spec=pltpu.PrefetchScalarGridSpec(
            num_scalar_prefetch=0,
            grid=(n1 + n2,),
            in_specs=[
                # x chunks (consumed while k < n1; index saturates after -> no re-DMA)
                pl.BlockSpec((Bp, TK), lambda k: (0, jnp.minimum(k, n1 - 1))),
                # combined W1||W2 stream: pure (k, 0) streaming, one chunk per step
                pl.BlockSpec((TK, N), lambda k: (k, 0)),
                # packed (b1, g1, beta1) resident
                pl.BlockSpec((3, N), lambda k: (0, 0)),
                # packed (b2, g2, beta2) resident
                pl.BlockSpec((3, N), lambda k: (0, 0)),
                # W3 (2048, 2) resident
                pl.BlockSpec((K2, n_out), lambda k: (0, 0)),
                # b3 (1, 2) resident
                pl.BlockSpec((1, n_out), lambda k: (0, 0)),
            ],
            out_specs=pl.BlockSpec((Bp, n_out), lambda k: (0, 0)),
            scratch_shapes=[
                pltpu.VMEM((Bp, N), jnp.float32),        # shared f32 accumulator
                pltpu.VMEM((n2, Bp, TK), jnp.bfloat16),  # hidden state, chunked
            ],
        ),
        compiler_params=pltpu.CompilerParams(
            dimension_semantics=("arbitrary",),
        ),
    )(x_bf16, w_cat_bf16, ln1, ln2, w3, b3_2d)


# ----------------------------------------------------------------------------
# Forward pass wrapper (concat + batch padding in plain JAX, head in Pallas)
# ----------------------------------------------------------------------------
@jax.jit
def b_classifier_forward(nl, pl_feats, kparams):
    x = jnp.concatenate((nl, pl_feats), axis=1).astype(jnp.bfloat16)  # (B, 1536)
    B = x.shape[0]
    Bp = ((B + 7) // 8) * 8
    if Bp != B:
        x = jnp.pad(x, ((0, Bp - B), (0, 0)))
    out = fused_head(
        x,
        kparams["w_cat"], kparams["ln1"], kparams["ln2"],
        kparams["w3"], kparams["b3"],
    )
    return out[:B]


def prepare_params(p):
    """Concatenate & pre-cast the big weights to bf16; pack the LayerNorm params."""
    w_cat = jnp.concatenate([p["w1"], p["w2"]], axis=0).astype(jnp.bfloat16)
    return {
        "w_cat": w_cat,                                            # (3584, 2048) bf16
        "ln1": jnp.stack([p["b1"], p["g1"], p["beta1"]], axis=0),  # (3, 2048) f32
        "ln2": jnp.stack([p["b2"], p["g2"], p["beta2"]], axis=0),  # (3, 2048) f32
        "w3": p["w3"],
        "b3": p["b3"],
    }


# ----------------------------------------------------------------------------
# References
# ----------------------------------------------------------------------------
def _ln_ref(h, g, b):
    mu = jnp.mean(h, axis=-1, keepdims=True)
    var = jnp.mean((h - mu) ** 2, axis=-1, keepdims=True)
    return (h - mu) * lax.rsqrt(var + LN_EPS) * g + b


def _reference_forward_f32(nl, pl_feats, p):
    x = jnp.concatenate((nl, pl_feats), axis=1)
    h = _ln_ref(x @ p["w1"] + p["b1"], p["g1"], p["beta1"])
    h = _ln_ref(h @ p["w2"] + p["b2"], p["g2"], p["beta2"])
    return jax.nn.softmax(h @ p["w3"] + p["b3"], axis=1)


def _reference_forward_bf16(nl, pl_feats, p):
    x = jnp.concatenate((nl, pl_feats), axis=1).astype(jnp.bfloat16)
    h = jnp.dot(x, p["w1"].astype(jnp.bfloat16),
                preferred_element_type=jnp.float32) + p["b1"]
    h = _ln_ref(h, p["g1"], p["beta1"])
    h = jnp.dot(h.astype(jnp.bfloat16), p["w2"].astype(jnp.bfloat16),
                preferred_element_type=jnp.float32) + p["b2"]
    h = _ln_ref(h, p["g2"], p["beta2"])
    return jax.nn.softmax(h @ p["w3"] + p["b3"], axis=1)


def init_params(key):
    k1, k2, k3, k4, k5, k6 = jax.random.split(key, 6)
    d_in, d_h, d_out = 768 * 2, 2048, 2
    s1 = 1.0 / jnp.sqrt(d_in)
    s2 = 1.0 / jnp.sqrt(d_h)
    return {
        "w1": jax.random.uniform(k1, (d_in, d_h), jnp.float32, -s1, s1),
        "b1": jax.random.uniform(k2, (d_h,), jnp.float32, -s1, s1),
        "g1": jnp.ones((d_h,), jnp.float32),
        "beta1": jnp.zeros((d_h,), jnp.float32),
        "w2": jax.random.uniform(k3, (d_h, d_h), jnp.float32, -s2, s2),
        "b2": jax.random.uniform(k4, (d_h,), jnp.float32, -s2, s2),
        "g2": jnp.ones((d_h,), jnp.float32),
        "beta2": jnp.zeros((d_h,), jnp.float32),
        "w3": jax.random.uniform(k5, (d_h, d_out), jnp.float32, -s2, s2),
        "b3": jax.random.uniform(k6, (d_out,), jnp.float32, -s2, s2),
    }


if __name__ == "__main__":
    key = jax.random.PRNGKey(0)
    kp, ka, kb = jax.random.split(key, 3)

    B = 8
    nl = jax.random.normal(ka, (B, 768), jnp.float32)
    pl_feats = jax.random.normal(kb, (B, 768), jnp.float32)

    params = init_params(kp)
    kparams = prepare_params(params)

    out = b_classifier_forward(nl, pl_feats, kparams)
    out = jax.block_until_ready(out)
    assert out.shape == (B, 2)

    # Tight check vs. a bf16-weight / f32-accumulation reference (same math).
    ref_bf16 = _reference_forward_bf16(nl, pl_feats, params)
    assert jnp.allclose(out, ref_bf16, rtol=5e-3, atol=5e-3), "mismatch vs bf16 reference"

    # Looser check vs. the full-f32 PyTorch-equivalent reference.
    ref_f32 = _reference_forward_f32(nl, pl_feats, params)
    assert jnp.allclose(out, ref_f32, rtol=5e-2, atol=2e-2), "mismatch vs f32 reference"

    # Row sums of a softmax are 1.
    assert jnp.allclose(jnp.sum(out, axis=1), jnp.ones((B,)), atol=1e-5)

    print("KERNEL_OK")
</pallas_src>

<mosaic_0001>
module attributes {stable_mosaic.version = 11 : i64} {
  func.func @_fused_head_kernel(%arg0: i32, %arg1: memref<8x512xbf16, #tpu.memory_space<vmem>>, %arg2: memref<512x2048xbf16, #tpu.memory_space<vmem>>, %arg3: memref<3x2048xf32, #tpu.memory_space<vmem>>, %arg4: memref<3x2048xf32, #tpu.memory_space<vmem>>, %arg5: memref<2048x2xf32, #tpu.memory_space<vmem>>, %arg6: memref<1x2xf32, #tpu.memory_space<vmem>>, %arg7: memref<8x2xf32, #tpu.memory_space<vmem>>, %arg8: memref<8x2048xf32, #tpu.memory_space<vmem>>, %arg9: memref<4x8x512xbf16, #tpu.memory_space<vmem>>) attributes {dimension_semantics = [#tpu.dimension_semantics<arbitrary>], iteration_bounds = array<i64: 7>, scalar_prefetch = 0 : i64, scratch_operands = 2 : i64, tpu.core_type = #tpu.core_type<tc>, window_params = [{transform_indices = @transform_0, window_bounds = array<i64: 8, 512>}, {transform_indices = @transform_1, window_bounds = array<i64: 512, 2048>}, {pipeline_mode = #tpu.pipeline_mode<synchronous>, transform_indices = @transform_2, window_bounds = array<i64: 3, 2048>}, {pipeline_mode = #tpu.pipeline_mode<synchronous>, transform_indices = @transform_3, window_bounds = array<i64: 3, 2048>}, {pipeline_mode = #tpu.pipeline_mode<synchronous>, transform_indices = @transform_4, window_bounds = array<i64: 2048, 2>}, {pipeline_mode = #tpu.pipeline_mode<synchronous>, transform_indices = @transform_5, window_bounds = array<i64: 1, 2>}, {pipeline_mode = #tpu.pipeline_mode<synchronous>, transform_indices = @transform_6, window_bounds = array<i64: 8, 2>}]} {
    %c0_i32 = arith.constant 0 : i32
    %0 = arith.cmpi eq, %arg0, %c0_i32 : i32
    %1 = arith.extui %0 : i1 to i32
    %c0_i32_0 = arith.constant 0 : i32
    %2 = arith.cmpi ne, %1, %c0_i32_0 : i32
    scf.if %2 {
      %cst = arith.constant 0.000000e+00 : f32
      %15 = vector.broadcast %cst : f32 to vector<8x2048xf32>
      %c0 = arith.constant 0 : index
      %c0_6 = arith.constant 0 : index
      %16 = vector.load %arg8[%c0, %c0_6] : memref<8x2048xf32, #tpu.memory_space<vmem>>, vector<8x2048xf32>
      tpu.vector_store %arg8[%c0, %c0_6], %15 {strides = array<i32>} : memref<8x2048xf32, #tpu.memory_space<vmem>>, vector<8x2048xf32>,
    } else {
    }
    %c3_i32 = arith.constant 3 : i32
    %3 = arith.cmpi slt, %arg0, %c3_i32 : i32
    %4 = arith.extui %3 : i1 to i32
    %c0_i32_1 = arith.constant 0 : i32
    %5 = arith.cmpi ne, %4, %c0_i32_1 : i32
    scf.if %5 {
      %c0 = arith.constant 0 : index
      %c0_6 = arith.constant 0 : index
      %15 = vector.load %arg8[%c0, %c0_6] : memref<8x2048xf32, #tpu.memory_space<vmem>>, vector<8x2048xf32>
      %c0_7 = arith.constant 0 : index
      %c0_8 = arith.constant 0 : index
      %16 = vector.load %arg1[%c0_7, %c0_8] : memref<8x512xbf16, #tpu.memory_space<vmem>>, vector<8x512xbf16>
      %c0_9 = arith.constant 0 : index
      %c0_10 = arith.constant 0 : index
      %17 = vector.load %arg2[%c0_9, %c0_10] : memref<512x2048xbf16, #tpu.memory_space<vmem>>, vector<512x2048xbf16>
      %cst = arith.constant dense<0.000000e+00> : vector<8x2048xf32>
      %18 = tpu.matmul %16, %17, %cst {dimension_numbers = #tpu.dot_dimension_numbers<[1], [0], [0], [1], [0, 0, 1, 1], [], []>} : vector<8x512xbf16>, vector<512x2048xbf16>, vector<8x2048xf32> -> vector<8x2048xf32>
      %19 = arith.addf %15, %18 : vector<8x2048xf32>
      %c0_11 = arith.constant 0 : index
      %c0_12 = arith.constant 0 : index
      %20 = vector.load %arg8[%c0_11, %c0_12] : memref<8x2048xf32, #tpu.memory_space<vmem>>, vector<8x2048xf32>
      tpu.vector_store %arg8[%c0_11, %c0_12], %19 {strides = array<i32>} : memref<8x2048xf32, #tpu.memory_space<vmem>>, vector<8x2048xf32>,
    } else {
    }
    %c2_i32 = arith.constant 2 : i32
    %6 = arith.cmpi eq, %arg0, %c2_i32 : i32
    %7 = arith.extui %6 : i1 to i32
    %c0_i32_2 = arith.constant 0 : i32
    %8 = arith.cmpi ne, %7, %c0_i32_2 : i32
    scf.if %8 {
      %c0 = arith.constant 0 : index
      %c0_6 = arith.constant 0 : index
      %15 = vector.load %arg8[%c0, %c0_6] : memref<8x2048xf32, #tpu.memory_space<vmem>>, vector<8x2048xf32>
      %c0_7 = arith.constant 0 : index
      %c0_8 = arith.constant 0 : index
      %16 = vector.load %arg3[%c0_7, %c0_8] : memref<3x2048xf32, #tpu.memory_space<vmem>>, vector<1x2048xf32>
      %17 = vector.broadcast %16 : vector<1x2048xf32> to vector<8x2048xf32>
      %18 = arith.addf %15, %17 : vector<8x2048xf32>
      %c1 = arith.constant 1 : index
      %c0_9 = arith.constant 0 : index
      %19 = vector.load %arg3[%c1, %c0_9] : memref<3x2048xf32, #tpu.memory_space<vmem>>, vector<1x2048xf32>
      %c2 = arith.constant 2 : index
      %c0_10 = arith.constant 0 : index
      %20 = vector.load %arg3[%c2, %c0_10] : memref<3x2048xf32, #tpu.memory_space<vmem>>, vector<1x2048xf32>
      %cst = arith.constant dense<0.000000e+00> : vector<8xf32>
      %21 = vector.multi_reduction <add>, %18, %cst [1] : vector<8x2048xf32> to vector<8xf32>
      %22 = vector.shape_cast %21 : vector<8xf32> to vector<8x1xf32>
      %cst_11 = arith.constant 2.048000e+03 : f32
      %23 = vector.broadcast %cst_11 : f32 to vector<8x1xf32>
      %24 = arith.divf %22, %23 : vector<8x1xf32>
      %25 = vector.broadcast %24 : vector<8x1xf32> to vector<8x2048xf32>
      %26 = arith.subf %18, %25 : vector<8x2048xf32>
      %27 = arith.mulf %26, %26 : vector<8x2048xf32>
      %cst_12 = arith.constant dense<0.000000e+00> : vector<8xf32>
      %28 = vector.multi_reduction <add>, %27, %cst_12 [1] : vector<8x2048xf32> to vector<8xf32>
      %29 = vector.shape_cast %28 : vector<8xf32> to vector<8x1xf32>
      %cst_13 = arith.constant 2.048000e+03 : f32
      %30 = vector.broadcast %cst_13 : f32 to vector<8x1xf32>
      %31 = arith.divf %29, %30 : vector<8x1xf32>
      %cst_14 = arith.constant 9.99999974E-6 : f32
      %32 = vector.broadcast %cst_14 : f32 to vector<8x1xf32>
      %33 = arith.addf %31, %32 : vector<8x1xf32>
      %34 = math.rsqrt %33 : vector<8x1xf32>
      %35 = vector.broadcast %34 : vector<8x1xf32> to vector<8x2048xf32>
      %36 = arith.mulf %26, %35 : vector<8x2048xf32>
      %37 = vector.broadcast %19 : vector<1x2048xf32> to vector<8x2048xf32>
      %38 = arith.mulf %36, %37 : vector<8x2048xf32>
      %39 = vector.broadcast %20 : vector<1x2048xf32> to vector<8x2048xf32>
      %40 = arith.addf %38, %39 : vector<8x2048xf32>
      %41 = arith.truncf %40 : vector<8x2048xf32> to vector<8x2048xbf16>
      %42 = vector.extract_strided_slice %41 {offsets = [0, 0], sizes = [8, 512], strides = [1, 1]} : vector<8x2048xbf16> to vector<8x512xbf16>
      %c0_15 = arith.constant 0 : index
      %c0_16 = arith.constant 0 : index
      %c0_17 = arith.constant 0 : index
      %43 = vector.load %arg9[%c0_15, %c0_16, %c0_17] : memref<4x8x512xbf16, #tpu.memory_space<vmem>>, vector<1x8x512xbf16>
      %44 = vector.shape_cast %43 : vector<1x8x512xbf16> to vector<8x512xbf16>
      %45 = vector.shape_cast %42 : vector<8x512xbf16> to vector<1x8x512xbf16>
      tpu.vector_store %arg9[%c0_15, %c0_16, %c0_17], %45 {strides = array<i32>} : memref<4x8x512xbf16, #tpu.memory_space<vmem>>, vector<1x8x512xbf16>,
      %46 = vector.extract_strided_slice %41 {offsets = [0, 512], sizes = [8, 512], strides = [1, 1]} : vector<8x2048xbf16> to vector<8x512xbf16>
      %c1_18 = arith.constant 1 : index
      %c0_19 = arith.constant 0 : index
      %c0_20 = arith.constant 0 : index
      %47 = vector.load %arg9[%c1_18, %c0_19, %c0_20] : memref<4x8x512xbf16, #tpu.memory_space<vmem>>, vector<1x8x512xbf16>
      %48 = vector.shape_cast %47 : vector<1x8x512xbf16> to vector<8x512xbf16>
      %49 = vector.shape_cast %46 : vector<8x512xbf16> to vector<1x8x512xbf16>
      tpu.vector_store %arg9[%c1_18, %c0_19, %c0_20], %49 {strides = array<i32>} : memref<4x8x512xbf16, #tpu.memory_space<vmem>>, vector<1x8x512xbf16>,
      %50 = vector.extract_strided_slice %41 {offsets = [0, 1024], sizes = [8, 512], strides = [1, 1]} : vector<8x2048xbf16> to vector<8x512xbf16>
      %c2_21 = arith.constant 2 : index
      %c0_22 = arith.constant 0 : index
      %c0_23 = arith.constant 0 : index
      %51 = vector.load %arg9[%c2_21, %c0_22, %c0_23] : memref<4x8x512xbf16, #tpu.memory_space<vmem>>, vector<1x8x512xbf16>
      %52 = vector.shape_cast %51 : vector<1x8x512xbf16> to vector<8x512xbf16>
      %53 = vector.shape_cast %50 : vector<8x512xbf16> to vector<1x8x512xbf16>
      tpu.vector_store %arg9[%c2_21, %c0_22, %c0_23], %53 {strides = array<i32>} : memref<4x8x512xbf16, #tpu.memory_space<vmem>>, vector<1x8x512xbf16>,
      %54 = vector.extract_strided_slice %41 {offsets = [0, 1536], sizes = [8, 512], strides = [1, 1]} : vector<8x2048xbf16> to vector<8x512xbf16>
      %c3 = arith.constant 3 : index
      %c0_24 = arith.constant 0 : index
      %c0_25 = arith.constant 0 : index
      %55 = vector.load %arg9[%c3, %c0_24, %c0_25] : memref<4x8x512xbf16, #tpu.memory_space<vmem>>, vector<1x8x512xbf16>
      %56 = vector.shape_cast %55 : vector<1x8x512xbf16> to vector<8x512xbf16>
      %57 = vector.shape_cast %54 : vector<8x512xbf16> to vector<1x8x512xbf16>
      tpu.vector_store %arg9[%c3, %c0_24, %c0_25], %57 {strides = array<i32>} : memref<4x8x512xbf16, #tpu.memory_space<vmem>>, vector<1x8x512xbf16>,
      %cst_26 = arith.constant 0.000000e+00 : f32
      %58 = vector.broadcast %cst_26 : f32 to vector<8x2048xf32>
      %c0_27 = arith.constant 0 : index
      %c0_28 = arith.constant 0 : index
      %59 = vector.load %arg8[%c0_27, %c0_28] : memref<8x2048xf32, #tpu.memory_space<vmem>>, vector<8x2048xf32>
      tpu.vector_store %arg8[%c0_27, %c0_28], %58 {strides = array<i32>} : memref<8x2048xf32, #tpu.memory_space<vmem>>, vector<8x2048xf32>,
    } else {
    }
    %c3_i32_3 = arith.constant 3 : i32
    %9 = arith.cmpi sge, %arg0, %c3_i32_3 : i32
    %10 = arith.extui %9 : i1 to i32
    %c0_i32_4 = arith.constant 0 : i32
    %11 = arith.cmpi ne, %10, %c0_i32_4 : i32
    scf.if %11 {
      %c3_i32_6 = arith.constant 3 : i32
      %15 = arith.subi %arg0, %c3_i32_6 : i32
      %c0 = arith.constant 0 : index
      %c0_7 = arith.constant 0 : index
      %16 = vector.load %arg8[%c0, %c0_7] : memref<8x2048xf32, #tpu.memory_space<vmem>>, vector<8x2048xf32>
      %17 = arith.index_cast %15 : i32 to index
      %c0_8 = arith.constant 0 : index
      %c0_9 = arith.constant 0 : index
      %18 = vector.load %arg9[%17, %c0_8, %c0_9] : memref<4x8x512xbf16, #tpu.memory_space<vmem>>, vector<1x8x512xbf16>
      %19 = vector.shape_cast %18 : vector<1x8x512xbf16> to vector<8x512xbf16>
      %c0_10 = arith.constant 0 : index
      %c0_11 = arith.constant 0 : index
      %20 = vector.load %arg2[%c0_10, %c0_11] : memref<512x2048xbf16, #tpu.memory_space<vmem>>, vector<512x2048xbf16>
      %cst = arith.constant dense<0.000000e+00> : vector<8x2048xf32>
      %21 = tpu.matmul %19, %20, %cst {dimension_numbers = #tpu.dot_dimension_numbers<[1], [0], [0], [1], [0, 0, 1, 1], [], []>} : vector<8x512xbf16>, vector<512x2048xbf16>, vector<8x2048xf32> -> vector<8x2048xf32>
      %22 = arith.addf %16, %21 : vector<8x2048xf32>
      %c0_12 = arith.constant 0 : index
      %c0_13 = arith.constant 0 : index
      %23 = vector.load %arg8[%c0_12, %c0_13] : memref<8x2048xf32, #tpu.memory_space<vmem>>, vector<8x2048xf32>
      tpu.vector_store %arg8[%c0_12, %c0_13], %22 {strides = array<i32>} : memref<8x2048xf32, #tpu.memory_space<vmem>>, vector<8x2048xf32>,
    } else {
    }
    %c6_i32 = arith.constant 6 : i32
    %12 = arith.cmpi eq, %arg0, %c6_i32 : i32
    %13 = arith.extui %12 : i1 to i32
    %c0_i32_5 = arith.constant 0 : i32
    %14 = arith.cmpi ne, %13, %c0_i32_5 : i32
    scf.if %14 {
      %c0 = arith.constant 0 : index
      %c0_6 = arith.constant 0 : index
      %15 = vector.load %arg8[%c0, %c0_6] : memref<8x2048xf32, #tpu.memory_space<vmem>>, vector<8x2048xf32>
      %c0_7 = arith.constant 0 : index
      %c0_8 = arith.constant 0 : index
      %16 = vector.load %arg4[%c0_7, %c0_8] : memref<3x2048xf32, #tpu.memory_space<vmem>>, vector<1x2048xf32>
      %17 = vector.broadcast %16 : vector<1x2048xf32> to vector<8x2048xf32>
      %18 = arith.addf %15, %17 : vector<8x2048xf32>
      %c1 = arith.constant 1 : index
      %c0_9 = arith.constant 0 : index
      %19 = vector.load %arg4[%c1, %c0_9] : memref<3x2048xf32, #tpu.memory_space<vmem>>, vector<1x2048xf32>
      %c2 = arith.constant 2 : index
      %c0_10 = arith.constant 0 : index
      %20 = vector.load %arg4[%c2, %c0_10] : memref<3x2048xf32, #tpu.memory_space<vmem>>, vector<1x2048xf32>
      %cst = arith.constant dense<0.000000e+00> : vector<8xf32>
      %21 = vector.multi_reduction <add>, %18, %cst [1] : vector<8x2048xf32> to vector<8xf32>
      %22 = vector.shape_cast %21 : vector<8xf32> to vector<8x1xf32>
      %cst_11 = arith.constant 2.048000e+03 : f32
      %23 = vector.broadcast %cst_11 : f32 to vector<8x1xf32>
      %24 = arith.divf %22, %23 : vector<8x1xf32>
      %25 = vector.broadcast %24 : vector<8x1xf32> to vector<8x2048xf32>
      %26 = arith.subf %18, %25 : vector<8x2048xf32>
      %27 = arith.mulf %26, %26 : vector<8x2048xf32>
      %cst_12 = arith.constant dense<0.000000e+00> : vector<8xf32>
      %28 = vector.multi_reduction <add>, %27, %cst_12 [1] : vector<8x2048xf32> to vector<8xf32>
      %29 = vector.shape_cast %28 : vector<8xf32> to vector<8x1xf32>
      %cst_13 = arith.constant 2.048000e+03 : f32
      %30 = vector.broadcast %cst_13 : f32 to vector<8x1xf32>
      %31 = arith.divf %29, %30 : vector<8x1xf32>
      %cst_14 = arith.constant 9.99999974E-6 : f32
      %32 = vector.broadcast %cst_14 : f32 to vector<8x1xf32>
      %33 = arith.addf %31, %32 : vector<8x1xf32>
      %34 = math.rsqrt %33 : vector<8x1xf32>
      %35 = vector.broadcast %34 : vector<8x1xf32> to vector<8x2048xf32>
      %36 = arith.mulf %26, %35 : vector<8x2048xf32>
      %37 = vector.broadcast %19 : vector<1x2048xf32> to vector<8x2048xf32>
      %38 = arith.mulf %36, %37 : vector<8x2048xf32>
      %39 = vector.broadcast %20 : vector<1x2048xf32> to vector<8x2048xf32>
      %40 = arith.addf %38, %39 : vector<8x2048xf32>
      %c0_15 = arith.constant 0 : index
      %c0_16 = arith.constant 0 : index
      %41 = vector.load %arg5[%c0_15, %c0_16] : memref<2048x2xf32, #tpu.memory_space<vmem>>, vector<2048x2xf32>
      %cst_17 = arith.constant dense<0.000000e+00> : vector<8x2xf32>
      %42 = tpu.matmul %40, %41, %cst_17 {dimension_numbers = #tpu.dot_dimension_numbers<[1], [0], [0], [1], [0, 0, 1, 1], [], []>} : vector<8x2048xf32>, vector<2048x2xf32>, vector<8x2xf32> -> vector<8x2xf32>
      %c0_18 = arith.constant 0 : index
      %c0_19 = arith.constant 0 : index
      %43 = vector.load %arg6[%c0_18, %c0_19] : memref<1x2xf32, #tpu.memory_space<vmem>>, vector<1x2xf32>
      %44 = vector.broadcast %43 : vector<1x2xf32> to vector<8x2xf32>
      %45 = arith.addf %42, %44 : vector<8x2xf32>
      %cst_20 = arith.constant dense<0xFF800000> : vector<8xf32>
      %46 = vector.multi_reduction <maximumf>, %45, %cst_20 [1] : vector<8x2xf32> to vector<8xf32>
      %47 = vector.shape_cast %46 : vector<8xf32> to vector<8x1xf32>
      %48 = vector.broadcast %47 : vector<8x1xf32> to vector<8x2xf32>
      %49 = arith.subf %45, %48 : vector<8x2xf32>
      %50 = math.exp %49 : vector<8x2xf32>
      %cst_21 = arith.constant dense<0.000000e+00> : vector<8xf32>
      %51 = vector.multi_reduction <add>, %50, %cst_21 [1] : vector<8x2xf32> to vector<8xf32>
      %52 = vector.shape_cast %51 : vector<8xf32> to vector<8x1xf32>
      %53 = vector.broadcast %52 : vector<8x1xf32> to vector<8x2xf32>
      %54 = arith.divf %50, %53 : vector<8x2xf32>
      %c0_22 = arith.constant 0 : index
      %c0_23 = arith.constant 0 : index
      %55 = vector.load %arg7[%c0_22, %c0_23] : memref<8x2xf32, #tpu.memory_space<vmem>>, vector<8x2xf32>
      tpu.vector_store %arg7[%c0_22, %c0_23], %54 {strides = array<i32>} : memref<8x2xf32, #tpu.memory_space<vmem>>, vector<8x2xf32>,
    } else {
    }
    return
  }
  func.func @transform_0(%arg0: i32) -> (i32, i32) {
    %c2_i32 = arith.constant 2 : i32
    %0 = arith.minsi %arg0, %c2_i32 : i32
    %c0_i32 = arith.constant 0 : i32
    %c0_i32_0 = arith.constant 0 : i32
    return %c0_i32, %0 : i32, i32
  }
  func.func @transform_1(%arg0: i32) -> (i32, i32) {
    %c0_i32 = arith.constant 0 : i32
    %c0_i32_0 = arith.constant 0 : i32
    return %arg0, %c0_i32 : i32, i32
  }
  func.func @transform_2(%arg0: i32) -> (i32, i32) {
    %c0_i32 = arith.constant 0 : i32
    %c0_i32_0 = arith.constant 0 : i32
    %c0_i32_1 = arith.constant 0 : i32
    return %c0_i32, %c0_i32_0 : i32, i32
  }
  func.func @transform_3(%arg0: i32) -> (i32, i32) {
    %c0_i32 = arith.constant 0 : i32
    %c0_i32_0 = arith.constant 0 : i32
    %c0_i32_1 = arith.constant 0 : i32
    return %c0_i32, %c0_i32_0 : i32, i32
  }
  func.func @transform_4(%arg0: i32) -> (i32, i32) {
    %c0_i32 = arith.constant 0 : i32
    %c0_i32_0 = arith.constant 0 : i32
    %c0_i32_1 = arith.constant 0 : i32
    return %c0_i32, %c0_i32_0 : i32, i32
  }
  func.func @transform_5(%arg0: i32) -> (i32, i32) {
    %c0_i32 = arith.constant 0 : i32
    %c0_i32_0 = arith.constant 0 : i32
    %c0_i32_1 = arith.constant 0 : i32
    return %c0_i32, %c0_i32_0 : i32, i32
  }
  func.func @transform_6(%arg0: i32) -> (i32, i32) {
    %c0_i32 = arith.constant 0 : i32
    %c0_i32_0 = arith.constant 0 : i32
    %c0_i32_1 = arith.constant 0 : i32
    return %c0_i32, %c0_i32_0 : i32, i32
  }
}

</mosaic_0001>

<llo_original>
// kernel: b_classifier_forward.1
$region0: #{b_classifier_forward.1}
  #allocation0 [shape = 'u32[]', space=smem, size = 0x4, offset = 0x4, fixed_abs, tag = 'smem constant byte address 0x4 - core index']
  #allocation1 [shape = 'u32[144,128]{1,0:T(1,128)}', space=vmem, size = 0x12000, scoped, tag = 'internal scratch']
  #allocation2 [shape = 'f32[8,2048]{1,0:T(8,128)}', space=vmem, size = 0x10000, scoped, tag = 'scratch operand']
  #allocation3 [shape = 'bf16[4,8,512]{2,1,0:T(8,128)(2,1)}', space=vmem, size = 0x8000, scoped, tag = 'scratch operand']
  %s0 = inlined_call_operand.vmem [shape: bf16[8,1536], index: 0, kind: input, shape index: {}]
  %s1 = inlined_call_operand.hbm [shape: bf16[3584,2048], index: 1, kind: input, shape index: {}]
  %s2 = inlined_call_operand.hbm [shape: f32[3,2048], index: 2, kind: input, shape index: {}]
  %s3 = inlined_call_operand.hbm [shape: f32[3,2048], index: 3, kind: input, shape index: {}]
  %s4 = inlined_call_operand.vmem [shape: f32[2048,2], index: 4, kind: input, shape index: {}]
  %s5 = inlined_call_operand.hbm [shape: f32[1,2], index: 5, kind: input, shape index: {}]
  %s6 = inlined_call_operand.vmem [shape: f32[8,2], index: 6, kind: output, shape index: {}]
  %s7 = sld [smem:[#allocation0]]
  $region93: #{b_classifier_forward.1} parent=0
    _
  %s9 = ssub.s32 1, %s7
  %s10 = scalar_select 0, %s9, %s7
  $region1: #{b_classifier_forward.1} parent=0
    #allocation4 [shape = 'u8[4194304]{0}', space=vmem, size = 0x400000, scoped, tag = 'input window, operand 1']
    #allocation5 [shape = 's32[2]{0}', space=sflag, size = 0x8, scoped, tag = 'scoped memory for b_classifier_forward.1']
    #allocation6 [shape = 'u8[32768]{0}', space=vmem, size = 0x8000, scoped, tag = 'input window, operand 2, single buffered']
    #allocation7 [shape = 's32[1]{0}', space=sflag, size = 0x4, scoped, tag = 'scoped memory for b_classifier_forward.1']
    #allocation8 [shape = 'u8[32768]{0}', space=vmem, size = 0x8000, scoped, tag = 'input window, operand 3, single buffered']
    #allocation9 [shape = 'u8[512]{0}', space=vmem, size = 0x400, scoped, tag = 'input window, operand 5, single buffered']
    #allocation10 [shape = 's32[1]{0}', space=sflag, size = 0x4, scoped, tag = 'scoped memory for b_classifier_forward.1']
    %11 = vsyncpa [#allocation5], 0
    %s12 = scalar_lea.sflag [#allocation5], 1
    %13 = vsyncpa %s12, 0
    %14 = vsyncpa [#allocation7], 0
    %15 = vsyncpa [#allocation10], 0
    loop: start=0, step=1, limit=9
    $region2: #{b_classifier_forward.1} parent=1 // loop_pre_header
      _
    $region3: #{b_classifier_forward.1} parent=1 // loop_header
      %s17 = sphi 0, %s21
      %p18 = scmp.ge.s32.totalorder %s17, 9
      %s31 = sphi 0, %s33
      %s34 = sphi 0, %s31
      %s35 = sphi 0, %s34
      %s51 = sphi 0, %s35
      %s57 = sphi 0, %s59
      %s60 = sphi 0, %s57
      %s61 = sphi 0, %s60
      %s77 = sphi 0, %s61
      %s81 = sphi 0, %s81
      %s83 = sphi 0, %s81
      %s84 = sphi 0, %s83
      %s98 = sphi 0, %s84
      %s102 = sphi 0, %s102
      %s104 = sphi 0, %s102
      %s105 = sphi 0, %s104
      %s119 = sphi 0, %s105
      %s123 = sphi 0, %s123
      %s125 = sphi 0, %s123
      %s126 = sphi 0, %s125
      %s140 = sphi 0, %s126
      %s144 = sphi 0, %s144
      %s146 = sphi 0, %s144
      %s147 = sphi 0, %s146
      %s161 = sphi 0, %s147
      %s165 = sphi 0, %s165
      %s167 = sphi 0, %s165
      %s168 = sphi 0, %s167
      %s182 = sphi 0, %s168
    $region4: #{b_classifier_forward.1} parent=1 // loop_header_branch
      %20 = sbr.rel (%p18) target = $region8
    $region5: #{b_classifier_forward.1} parent=1 // loop_body
      %s22 = ssub.s32 %s17, 1
      %s23 = ssub.s32 %s17, 2
      %s24 = sadd.s32 %s17, 1
      %p25 = scmp.lt.s32.totalorder %s17, 2
      %s26 = scalar_select %p25, %s17, 2
      %p27 = scmp.lt.s32.totalorder %s24, 2
      %s28 = scalar_select %p27, %s24, 2
      %s29 = ssub.s32 %s26, %s28
      %p30 = scmp.eq.s32.totalorder %s29, 0
      %s32 = sadd.s32 %s31, 1
      %s33 = scalar_select %p30, %s31, %s32
      %p36 = pneg %p30
      %p37 = scmp.eq.s32.totalorder %s17, 6
      %p38 = por %p36, %p37
      %p39 = scmp.ne.s32.totalorder %s31, %s34
      %p40 = scmp.eq.s32.totalorder %s17, 0
      %p41 = por %p39, %p40
      %p42 = scmp.ne.s32.totalorder %s31, %s34
      %p43 = scmp.eq.s32.totalorder %s22, 6
      %p44 = por %p42, %p43
      %p45 = scmp.ne.s32.totalorder %s34, %s35
      %p46 = scmp.eq.s32.totalorder %s22, 0
      %p47 = por %p45, %p46
      %p48 = scmp.ne.s32.totalorder %s34, %s35
      %p49 = scmp.eq.s32.totalorder %s23, 6
      %p50 = por %p48, %p49
      %p52 = scmp.ne.s32.totalorder %s35, %s51
      %p53 = scmp.eq.s32.totalorder %s23, 0
      %p54 = por %p52, %p53
      %s55 = ssub.s32 %s17, %s24
      %p56 = scmp.eq.s32.totalorder %s55, 0
      %s58 = sadd.s32 %s57, 1
      %s59 = scalar_select %p56, %s57, %s58
      %p62 = pneg %p56
      %p63 = scmp.eq.s32.totalorder %s17, 6
      %p64 = por %p62, %p63
      %p65 = scmp.ne.s32.totalorder %s57, %s60
      %p66 = scmp.eq.s32.totalorder %s17, 0
      %p67 = por %p65, %p66
      %p68 = scmp.ne.s32.totalorder %s57, %s60
      %p69 = scmp.eq.s32.totalorder %s22, 6
      %p70 = por %p68, %p69
      %p71 = scmp.ne.s32.totalorder %s60, %s61
      %p72 = scmp.eq.s32.totalorder %s22, 0
      %p73 = por %p71, %p72
      %p74 = scmp.ne.s32.totalorder %s60, %s61
      %p75 = scmp.eq.s32.totalorder %s23, 6
      %p76 = por %p74, %p75
      %p78 = scmp.ne.s32.totalorder %s61, %s77
      %p79 = scmp.eq.s32.totalorder %s23, 0
      %p80 = por %p78, %p79
      %s82 = sadd.s32 %s81, 1
      %p85 = scmp.eq.s32.totalorder %s17, 6
      %p86 = scmp.ne.s32.totalorder %s81, %s83
      %p87 = scmp.eq.s32.totalorder %s17, 0
      %p88 = por %p86, %p87
      %p89 = scmp.ne.s32.totalorder %s81, %s83
      %p90 = scmp.eq.s32.totalorder %s22, 6
      %p91 = por %p89, %p90
      %p92 = scmp.ne.s32.totalorder %s83, %s84
      %p93 = scmp.eq.s32.totalorder %s22, 0
      %p94 = por %p92, %p93
      %p95 = scmp.ne.s32.totalorder %s83, %s84
      %p96 = scmp.eq.s32.totalorder %s23, 6
      %p97 = por %p95, %p96
      %p99 = scmp.ne.s32.totalorder %s84, %s98
      %p100 = scmp.eq.s32.totalorder %s23, 0
      %p101 = por %p99, %p100
      %s103 = sadd.s32 %s102, 1
      %p106 = scmp.eq.s32.totalorder %s17, 6
      %p107 = scmp.ne.s32.totalorder %s102, %s104
      %p108 = scmp.eq.s32.totalorder %s17, 0
      %p109 = por %p107, %p108
      %p110 = scmp.ne.s32.totalorder %s102, %s104
      %p111 = scmp.eq.s32.totalorder %s22, 6
      %p112 = por %p110, %p111
      %p113 = scmp.ne.s32.totalorder %s104, %s105
      %p114 = scmp.eq.s32.totalorder %s22, 0
      %p115 = por %p113, %p114
      %p116 = scmp.ne.s32.totalorder %s104, %s105
      %p117 = scmp.eq.s32.totalorder %s23, 6
      %p118 = por %p116, %p117
      %p120 = scmp.ne.s32.totalorder %s105, %s119
      %p121 = scmp.eq.s32.totalorder %s23, 0
      %p122 = por %p120, %p121
      %s124 = sadd.s32 %s123, 1
      %p127 = scmp.eq.s32.totalorder %s17, 6
      %p128 = scmp.ne.s32.totalorder %s123, %s125
      %p129 = scmp.eq.s32.totalorder %s17, 0
      %p130 = por %p128, %p129
      %p131 = scmp.ne.s32.totalorder %s123, %s125
      %p132 = scmp.eq.s32.totalorder %s22, 6
      %p133 = por %p131, %p132
      %p134 = scmp.ne.s32.totalorder %s125, %s126
      %p135 = scmp.eq.s32.totalorder %s22, 0
      %p136 = por %p134, %p135
      %p137 = scmp.ne.s32.totalorder %s125, %s126
      %p138 = scmp.eq.s32.totalorder %s23, 6
      %p139 = por %p137, %p138
      %p141 = scmp.ne.s32.totalorder %s126, %s140
      %p142 = scmp.eq.s32.totalorder %s23, 0
      %p143 = por %p141, %p142
      %s145 = sadd.s32 %s144, 1
      %p148 = scmp.eq.s32.totalorder %s17, 6
      %p149 = scmp.ne.s32.totalorder %s144, %s146
      %p150 = scmp.eq.s32.totalorder %s17, 0
      %p151 = por %p149, %p150
      %p152 = scmp.ne.s32.totalorder %s144, %s146
      %p153 = scmp.eq.s32.totalorder %s22, 6
      %p154 = por %p152, %p153
      %p155 = scmp.ne.s32.totalorder %s146, %s147
      %p156 = scmp.eq.s32.totalorder %s22, 0
      %p157 = por %p155, %p156
      %p158 = scmp.ne.s32.totalorder %s146, %s147
      %p159 = scmp.eq.s32.totalorder %s23, 6
      %p160 = por %p158, %p159
      %p162 = scmp.ne.s32.totalorder %s147, %s161
      %p163 = scmp.eq.s32.totalorder %s23, 0
      %p164 = por %p162, %p163
      %s166 = sadd.s32 %s165, 1
      %p169 = scmp.eq.s32.totalorder %s17, 6
      %p170 = scmp.ne.s32.totalorder %s165, %s167
      %p171 = scmp.eq.s32.totalorder %s17, 0
      %p172 = por %p170, %p171
      %p173 = scmp.ne.s32.totalorder %s165, %s167
      %p174 = scmp.eq.s32.totalorder %s22, 6
      %p175 = por %p173, %p174
      %p176 = scmp.ne.s32.totalorder %s167, %s168
      %p177 = scmp.eq.s32.totalorder %s22, 0
      %p178 = por %p176, %p177
      %p179 = scmp.ne.s32.totalorder %s167, %s168
      %p180 = scmp.eq.s32.totalorder %s23, 6
      %p181 = por %p179, %p180
      %p183 = scmp.ne.s32.totalorder %s168, %s182
      %p184 = scmp.eq.s32.totalorder %s23, 0
      %p185 = por %p183, %p184
      %p186 = scmp.le.s32.totalorder 1, %s17
      %p187 = scmp.lt.s32.totalorder %s17, 8
      %p188 = pnand %p186, %p187
      %p189 = pneg %p188
      // Predicated region
      $region9: #{b_classifier_forward.1} parent=5 // pred_check
        _
      $region10: #{b_classifier_forward.1} parent=5 // pred_check_branch
        %191 = sbr.rel (%p188) target = $region12
      $region11: #{b_classifier_forward.1} parent=5 // pred_region
        %s192 = ssub.s32 %s17, 1
        // Predicated region
        $region13: #{b_classifier_forward.1} parent=11 // pred_check
          %p193 = pneg %p94
        $region14: #{b_classifier_forward.1} parent=11 // pred_check_branch
          %195 = sbr.rel (%p193) target = $region16
        $region15: #{b_classifier_forward.1} parent=11 // pred_region
          %s197 = ssub.s32 1024, 1024
          %198 = vsyncadd [#allocation7], %s197
          %s200 = sshll.u32 [#allocation6], 4
          %s201 = int_to_ptr.vmem [resolvable:$true] %s200
          %203 = dma.hbm_to_vmem [thread:$0]  %s2, 1024, %s201, [#allocation7]
        $region16: #{b_classifier_forward.1} parent=11 // pred_fallthru
          _
        // Predicated region
        $region17: #{b_classifier_forward.1} parent=11 // pred_check
          %p204 = pneg %p115
        $region18: #{b_classifier_forward.1} parent=11 // pred_check_branch
          %206 = sbr.rel (%p204) target = $region20
        $region19: #{b_classifier_forward.1} parent=11 // pred_region
          %s208 = ssub.s32 1024, 1024
          %209 = vsyncadd [#allocation7], %s208
          %s211 = sshll.u32 [#allocation8], 4
          %s212 = int_to_ptr.vmem [resolvable:$true] %s211
          %214 = dma.hbm_to_vmem [thread:$0]  %s3, 1024, %s212, [#allocation7]
        $region20: #{b_classifier_forward.1} parent=11 // pred_fallthru
          _
        // Predicated region
        $region21: #{b_classifier_forward.1} parent=11 // pred_check
          %p215 = pneg %p136
        $region22: #{b_classifier_forward.1} parent=11 // pred_check_branch
          %217 = sbr.rel (%p215) target = $region24
        $region23: #{b_classifier_forward.1} parent=11 // pred_region
          _
        $region24: #{b_classifier_forward.1} parent=11 // pred_fallthru
          _
        // Predicated region
        $region25: #{b_classifier_forward.1} parent=11 // pred_check
          %p218 = pneg %p157
        $region26: #{b_classifier_forward.1} parent=11 // pred_check_branch
          %220 = sbr.rel (%p218) target = $region28
        $region27: #{b_classifier_forward.1} parent=11 // pred_region
          %s222 = ssub.s32 16, 16
          %223 = vsyncadd [#allocation10], %s222
          %s225 = sshll.u32 [#allocation9], 4
          %s226 = int_to_ptr.vmem [resolvable:$true] %s225
          %228 = dma.hbm_to_vmem [thread:$0]  %s5, 16, %s226, [#allocation10]
        $region28: #{b_classifier_forward.1} parent=11 // pred_fallthru
          _
      $region12: #{b_classifier_forward.1} parent=5 // pred_fallthru
        _
      %p229 = scmp.lt.s32.totalorder %s17, 7
      // Predicated region
      $region29: #{b_classifier_forward.1} parent=5 // pred_check
        %p230 = pneg %p229
      $region30: #{b_classifier_forward.1} parent=5 // pred_check_branch
        %232 = sbr.rel (%p230) target = $region32
      $region31: #{b_classifier_forward.1} parent=5 // pred_region
        // Predicated region
        $region33: #{b_classifier_forward.1} parent=31 // pred_check
          %p233 = pneg %p41
        $region34: #{b_classifier_forward.1} parent=31 // pred_check_branch
          %235 = sbr.rel (%p233) target = $region36
        $region35: #{b_classifier_forward.1} parent=31 // pred_region
          %p236 = scmp.lt.s32.totalorder %s17, 2
          %s237 = scalar_select %p236, %s17, 2
          %s238 = smul.u32 4, %s237
          %p239 = scmp.lt.s32.totalorder %s238, 11
          %s240 = scalar_select %p239, %s238, 11
          %s241 = smul.addr %s240, 4
          %s242 = scalar_lea.vmem %s0, %s241
          %p243 = scmp.lt.s32.totalorder %s17, 2
          %s244 = scalar_select %p243, %s17, 2
          %s245 = smul.u32 4, %s244
        $region36: #{b_classifier_forward.1} parent=31 // pred_fallthru
          _
        // Predicated region
        $region37: #{b_classifier_forward.1} parent=31 // pred_check
          %p246 = pneg %p67
        $region38: #{b_classifier_forward.1} parent=31 // pred_check_branch
          %248 = sbr.rel (%p246) target = $region40
        $region39: #{b_classifier_forward.1} parent=31 // pred_region
          %s249 = sand.u32 %s57, 1
          %s250 = scalar_lea.sflag [#allocation5], %s249
          %s251 = sand.u32 %s57, 1
          %s252 = smul.addr %s251, 4096
          %s253 = scalar_lea.vmem [#allocation4], %s252
          %s254 = smul.u32 64, %s17
          %s256 = ssub.s32 65536, 65536
          %257 = vsyncadd %s250, %s256
          %s258 = smul.addr %s254, 16
          %s259 = smul.addr %s258, 64
          %s260 = scalar_lea.hbm %s1, %s259
          %s261 = sshll.u32 %s253, 4
          %s262 = int_to_ptr.vmem [resolvable:$true] %s261
          %267 = dma.hbm_to_vmem [thread:$0]  %s260, 65536, %s262, %s250, 1024, 1024, 64
        $region40: #{b_classifier_forward.1} parent=31 // pred_fallthru
          _
      $region32: #{b_classifier_forward.1} parent=5 // pred_fallthru
        _
      %p268 = scmp.le.s32.totalorder 1, %s17
      %p269 = scmp.lt.s32.totalorder %s17, 8
      %p270 = pnand %p268, %p269
      %p271 = pneg %p270
      // Predicated region
      $region41: #{b_classifier_forward.1} parent=5 // pred_check
        _
      $region42: #{b_classifier_forward.1} parent=5 // pred_check_branch
        %273 = sbr.rel (%p270) target = $region44
      $region43: #{b_classifier_forward.1} parent=5 // pred_region
        %s274 = ssub.s32 %s17, 1
        %s275 = sand.u32 %s60, 1
        %s276 = scalar_lea.sflag [#allocation5], %s275
        %s277 = sand.u32 %s60, 1
        %s278 = smul.addr %s277, 4096
        %s279 = scalar_lea.vmem [#allocation4], %s278
        // Predicated region
        $region45: #{b_classifier_forward.1} parent=43 // pred_check
          %p280 = pneg %p73
        $region46: #{b_classifier_forward.1} parent=43 // pred_check_branch
          %282 = sbr.rel (%p280) target = $region48
        $region47: #{b_classifier_forward.1} parent=43 // pred_region
          %283 = dma.done %s276, 65536
        $region48: #{b_classifier_forward.1} parent=43 // pred_fallthru
          _
        // Predicated region
        $region49: #{b_classifier_forward.1} parent=43 // pred_check
          %p284 = pneg %p94
        $region50: #{b_classifier_forward.1} parent=43 // pred_check_branch
          %286 = sbr.rel (%p284) target = $region52
        $region51: #{b_classifier_forward.1} parent=43 // pred_region
          %287 = dma.done [#allocation7], 1024
        $region52: #{b_classifier_forward.1} parent=43 // pred_fallthru
          _
        // Predicated region
        $region53: #{b_classifier_forward.1} parent=43 // pred_check
          %p288 = pneg %p115
        $region54: #{b_classifier_forward.1} parent=43 // pred_check_branch
          %290 = sbr.rel (%p288) target = $region56
        $region55: #{b_classifier_forward.1} parent=43 // pred_region
          %291 = dma.done [#allocation7], 1024
        $region56: #{b_classifier_forward.1} parent=43 // pred_fallthru
          _
        // Predicated region
        $region57: #{b_classifier_forward.1} parent=43 // pred_check
          %p292 = pneg %p157
        $region58: #{b_classifier_forward.1} parent=43 // pred_check_branch
          %294 = sbr.rel (%p292) target = $region60
        $region59: #{b_classifier_forward.1} parent=43 // pred_region
          %295 = dma.done [#allocation10], 16
        $region60: #{b_classifier_forward.1} parent=43 // pred_fallthru
          _
        %p296 = scmp.lt.s32.totalorder %s22, 2
        %s297 = scalar_select %p296, %s22, 2
        %s298 = smul.u32 4, %s297
        %p299 = scmp.lt.s32.totalorder %s298, 11
        %s300 = scalar_select %p299, %s298, 11
        %s301 = smul.addr %s300, 4
        %s302 = scalar_lea.vmem %s0, %s301
        %p303 = pneg %p47
        %p304 = pneg %p44
        %s305 = sand.u32 %s60, 1
        %s306 = scalar_lea.sflag [#allocation5], %s305
        %s307 = sand.u32 %s60, 1
        %s308 = smul.addr %s307, 4096
        %s309 = scalar_lea.vmem [#allocation4], %s308
        %p310 = pneg %p73
        %p311 = pneg %p70
        %p312 = pneg %p94
        %p313 = pneg %p91
        %p314 = pneg %p115
        %p315 = pneg %p112
        %p316 = pneg %p136
        %p317 = pneg %p133
        %p318 = pneg %p157
        %p319 = pneg %p154
        %p320 = pneg %p178
        %p321 = pneg %p175
        %p322 = scmp.lt.s32.totalorder %s22, 2
        %s323 = scalar_select %p322, %s22, 2
        %s324 = smul.u32 4, %s323
        %p325 = scmp.lt.s32.totalorder %s324, 11
        %s326 = scalar_select %p325, %s324, 11
        %s327 = smul.addr %s326, 4
        %s328 = scalar_lea.vmem %s0, %s327
        %p329 = scmp.lt.s32.totalorder %s22, 2
        %s330 = scalar_select %p329, %s22, 2
        %s331 = smul.u32 4, %s330
        %s332 = smul.u32 64, %s22
        %p333 = scmp.eq.s32.totalorder %s22, 0
        // Predicated region
        $region61: #{b_classifier_forward.1} parent=43 // pred_check
          %p334 = pneg %p333
        $region62: #{b_classifier_forward.1} parent=43 // pred_check_branch
          %336 = sbr.rel (%p334) target = $region64
        $region63: #{b_classifier_forward.1} parent=43 // pred_region
          %337 = vst [vmem:[#allocation2] sm:$0xff] 0.0
          %338 = vst [vmem:[#allocation2 + $0x8] sm:$0xff] 0.0
          %339 = vst [vmem:[#allocation2 + $0x10] sm:$0xff] 0.0
          %340 = vst [vmem:[#allocation2 + $0x18] sm:$0xff] 0.0
          %341 = vst [vmem:[#allocation2 + $0x20] sm:$0xff] 0.0
          %342 = vst [vmem:[#allocation2 + $0x28] sm:$0xff] 0.0
          %343 = vst [vmem:[#allocation2 + $0x30] sm:$0xff] 0.0
          %344 = vst [vmem:[#allocation2 + $0x38] sm:$0xff] 0.0
          %345 = vst [vmem:[#allocation2 + $0x40] sm:$0xff] 0.0
          %346 = vst [vmem:[#allocation2 + $0x48] sm:$0xff] 0.0
          %347 = vst [vmem:[#allocation2 + $0x50] sm:$0xff] 0.0
          %348 = vst [vmem:[#allocation2 + $0x58] sm:$0xff] 0.0
          %349 = vst [vmem:[#allocation2 + $0x60] sm:$0xff] 0.0
          %350 = vst [vmem:[#allocation2 + $0x68] sm:$0xff] 0.0
          %351 = vst [vmem:[#allocation2 + $0x70] sm:$0xff] 0.0
          %352 = vst [vmem:[#allocation2 + $0x78] sm:$0xff] 0.0
        $region64: #{b_classifier_forward.1} parent=43 // pred_fallthru
          _
        %p353 = scmp.lt.s32.totalorder %s22, 3
        // Predicated region
        $region65: #{b_classifier_forward.1} parent=43 // pred_check
          %p354 = pneg %p353
        $region66: #{b_classifier_forward.1} parent=43 // pred_check_branch
          %356 = sbr.rel (%p354) target = $region68
        $region67: #{b_classifier_forward.1} parent=43 // pred_region
          %v357 = vld [vmem:[#allocation2] sm:$0xff]
          %v358 = vld [vmem:[#allocation2 + $0x8] sm:$0xff]
          %v359 = vld [vmem:[#allocation2 + $0x10] sm:$0xff]
          %v360 = vld [vmem:[#allocation2 + $0x18] sm:$0xff]
          %v361 = vld [vmem:[#allocation2 + $0x20] sm:$0xff]
          %v362 = vld [vmem:[#allocation2 + $0x28] sm:$0xff]
          %v363 = vld [vmem:[#allocation2 + $0x30] sm:$0xff]
          %v364 = vld [vmem:[#allocation2 + $0x38] sm:$0xff]
          %v365 = vld [vmem:[#allocation2 + $0x40] sm:$0xff]
          %v366 = vld [vmem:[#allocation2 + $0x48] sm:$0xff]
          %v367 = vld [vmem:[#allocation2 + $0x50] sm:$0xff]
          %v368 = vld [vmem:[#allocation2 + $0x58] sm:$0xff]
          %v369 = vld [vmem:[#allocation2 + $0x60] sm:$0xff]
          %v370 = vld [vmem:[#allocation2 + $0x68] sm:$0xff]
          %v371 = vld [vmem:[#allocation2 + $0x70] sm:$0xff]
          %v372 = vld [vmem:[#allocation2 + $0x78] sm:$0xff]
          %v373 = vld [vmem:[%s328] sm:$0xff]
          %v374 = vld [vmem:[%s328 + $0x8] sm:$0xff]
          %v375 = vld [vmem:[%s279] sm:$0xff]
          %v376 = vld [vmem:[%s279 + $0x8] sm:$0xff]
          %v377 = vld [vmem:[%s279 + $0x10] sm:$0xff]
          %v378 = vld [vmem:[%s279 + $0x18] sm:$0xff]
          %v379 = vld [vmem:[%s279 + $0x20] sm:$0xff]
          %v380 = vld [vmem:[%s279 + $0x28] sm:$0xff]
          %v381 = vld [vmem:[%s279 + $0x30] sm:$0xff]
          %v382 = vld [vmem:[%s279 + $0x38] sm:$0xff]
          %v383 = vld [vmem:[%s279 + $0x40] sm:$0xff]
          %v384 = vld [vmem:[%s279 + $0x48] sm:$0xff]
          %v385 = vld [vmem:[%s279 + $0x50] sm:$0xff]
          %v386 = vld [vmem:[%s279 + $0x58] sm:$0xff]
          %v387 = vld [vmem:[%s279 + $0x60] sm:$0xff]
          %v388 = vld [vmem:[%s279 + $0x68] sm:$0xff]
          %v389 = vld [vmem:[%s279 + $0x70] sm:$0xff]
          %v390 = vld [vmem:[%s279 + $0x78] sm:$0xff]
          %v391 = vld [vmem:[%s279 + $0x80] sm:$0xff]
          %v392 = vld [vmem:[%s279 + $0x88] sm:$0xff]
          %v393 = vld [vmem:[%s279 + $0x90] sm:$0xff]
          %v394 = vld [vmem:[%s279 + $0x98] sm:$0xff]
          %v395 = vld [vmem:[%s279 + $0xa0] sm:$0xff]
          %v396 = vld [vmem:[%s279 + $0xa8] sm:$0xff]
          %v397 = vld [vmem:[%s279 + $0xb0] sm:$0xff]
          %v398 = vld [vmem:[%s279 + $0xb8] sm:$0xff]
          %v399 = vld [vmem:[%s279 + $0xc0] sm:$0xff]
          %v400 = vld [vmem:[%s279 + $0xc8] sm:$0xff]
          %v401 = vld [vmem:[%s279 + $0xd0] sm:$0xff]
          %v402 = vld [vmem:[%s279 + $0xd8] sm:$0xff]
          %v403 = vld [vmem:[%s279 + $0xe0] sm:$0xff]
          %v404 = vld [vmem:[%s279 + $0xe8] sm:$0xff]
          %v405 = vld [vmem:[%s279 + $0xf0] sm:$0xff]
          %v406 = vld [vmem:[%s279 + $0xf8] sm:$0xff]
          %v407 = vld [vmem:[%s279 + $0x100] sm:$0xff]
          %v408 = vld [vmem:[%s279 + $0x108] sm:$0xff]
          %v409 = vld [vmem:[%s279 + $0x110] sm:$0xff]
          %v410 = vld [vmem:[%s279 + $0x118] sm:$0xff]
          %v411 = vld [vmem:[%s279 + $0x120] sm:$0xff]
          %v412 = vld [vmem:[%s279 + $0x128] sm:$0xff]
          %v413 = vld [vmem:[%s279 + $0x130] sm:$0xff]
          %v414 = vld [vmem:[%s279 + $0x138] sm:$0xff]
          %v415 = vld [vmem:[%s279 + $0x140] sm:$0xff]
          %v416 = vld [vmem:[%s279 + $0x148] sm:$0xff]
          %v417 = vld [vmem:[%s279 + $0x150] sm:$0xff]
          %v418 = vld [vmem:[%s279 + $0x158] sm:$0xff]
          %v419 = vld [vmem:[%s279 + $0x160] sm:$0xff]
          %v420 = vld [vmem:[%s279 + $0x168] sm:$0xff]
          %v421 = vld [vmem:[%s279 + $0x170] sm:$0xff]
          %v422 = vld [vmem:[%s279 + $0x178] sm:$0xff]
          %v423 = vld [vmem:[%s279 + $0x180] sm:$0xff]
          %v424 = vld [vmem:[%s279 + $0x188] sm:$0xff]
          %v425 = vld [vmem:[%s279 + $0x190] sm:$0xff]
          %v426 = vld [vmem:[%s279 + $0x198] sm:$0xff]
          %v427 = vld [vmem:[%s279 + $0x1a0] sm:$0xff]
          %v428 = vld [vmem:[%s279 + $0x1a8] sm:$0xff]
          %v429 = vld [vmem:[%s279 + $0x1b0] sm:$0xff]
          %v430 = vld [vmem:[%s279 + $0x1b8] sm:$0xff]
          %v431 = vld [vmem:[%s279 + $0x1c0] sm:$0xff]
          %v432 = vld [vmem:[%s279 + $0x1c8] sm:$0xff]
          %v433 = vld [vmem:[%s279 + $0x1d0] sm:$0xff]
          %v434 = vld [vmem:[%s279 + $0x1d8] sm:$0xff]
          %v435 = vld [vmem:[%s279 + $0x1e0] sm:$0xff]
          %v436 = vld [vmem:[%s279 + $0x1e8] sm:$0xff]
          %v437 = vld [vmem:[%s279 + $0x1f0] sm:$0xff]
          %v438 = vld [vmem:[%s279 + $0x1f8] sm:$0xff]
          %v439 = vld [vmem:[%s279 + $0x200] sm:$0xff]
          %v440 = vld [vmem:[%s279 + $0x208] sm:$0xff]
          %v441 = vld [vmem:[%s279 + $0x210] sm:$0xff]
          %v442 = vld [vmem:[%s279 + $0x218] sm:$0xff]
          %v443 = vld [vmem:[%s279 + $0x220] sm:$0xff]
          %v444 = vld [vmem:[%s279 + $0x228] sm:$0xff]
          %v445 = vld [vmem:[%s279 + $0x230] sm:$0xff]
          %v446 = vld [vmem:[%s279 + $0x238] sm:$0xff]
          %v447 = vld [vmem:[%s279 + $0x240] sm:$0xff]
          %v448 = vld [vmem:[%s279 + $0x248] sm:$0xff]
          %v449 = vld [vmem:[%s279 + $0x250] sm:$0xff]
          %v450 = vld [vmem:[%s279 + $0x258] sm:$0xff]
          %v451 = vld [vmem:[%s279 + $0x260] sm:$0xff]
          %v452 = vld [vmem:[%s279 + $0x268] sm:$0xff]
          %v453 = vld [vmem:[%s279 + $0x270] sm:$0xff]
          %v454 = vld [vmem:[%s279 + $0x278] sm:$0xff]
          %v455 = vld [vmem:[%s279 + $0x280] sm:$0xff]
          %v456 = vld [vmem:[%s279 + $0x288] sm:$0xff]
          %v457 = vld [vmem:[%s279 + $0x290] sm:$0xff]
          %v458 = vld [vmem:[%s279 + $0x298] sm:$0xff]
          %v459 = vld [vmem:[%s279 + $0x2a0] sm:$0xff]
          %v460 = vld [vmem:[%s279 + $0x2a8] sm:$0xff]
          %v461 = vld [vmem:[%s279 + $0x2b0] sm:$0xff]
          %v462 = vld [vmem:[%s279 + $0x2b8] sm:$0xff]
          %v463 = vld [vmem:[%s279 + $0x2c0] sm:$0xff]
          %v464 = vld [vmem:[%s279 + $0x2c8] sm:$0xff]
          %v465 = vld [vmem:[%s279 + $0x2d0] sm:$0xff]
          %v466 = vld [vmem:[%s279 + $0x2d8] sm:$0xff]
          %v467 = vld [vmem:[%s279 + $0x2e0] sm:$0xff]
          %v468 = vld [vmem:[%s279 + $0x2e8] sm:$0xff]
          %v469 = vld [vmem:[%s279 + $0x2f0] sm:$0xff]
          %v470 = vld [vmem:[%s279 + $0x2f8] sm:$0xff]
          %v471 = vld [vmem:[%s279 + $0x300] sm:$0xff]
          %v472 = vld [vmem:[%s279 + $0x308] sm:$0xff]
          %v473 = vld [vmem:[%s279 + $0x310] sm:$0xff]
          %v474 = vld [vmem:[%s279 + $0x318] sm:$0xff]
          %v475 = vld [vmem:[%s279 + $0x320] sm:$0xff]
          %v476 = vld [vmem:[%s279 + $0x328] sm:$0xff]
          %v477 = vld [vmem:[%s279 + $0x330] sm:$0xff]
          %v478 = vld [vmem:[%s279 + $0x338] sm:$0xff]
          %v479 = vld [vmem:[%s279 + $0x340] sm:$0xff]
          %v480 = vld [vmem:[%s279 + $0x348] sm:$0xff]
          %v481 = vld [vmem:[%s279 + $0x350] sm:$0xff]
          %v482 = vld [vmem:[%s279 + $0x358] sm:$0xff]
          %v483 = vld [vmem:[%s279 + $0x360] sm:$0xff]
          %v484 = vld [vmem:[%s279 + $0x368] sm:$0xff]
          %v485 = vld [vmem:[%s279 + $0x370] sm:$0xff]
          %v486 = vld [vmem:[%s279 + $0x378] sm:$0xff]
          %v487 = vld [vmem:[%s279 + $0x380] sm:$0xff]
          %v488 = vld [vmem:[%s279 + $0x388] sm:$0xff]
          %v489 = vld [vmem:[%s279 + $0x390] sm:$0xff]
          %v490 = vld [vmem:[%s279 + $0x398] sm:$0xff]
          %v491 = vld [vmem:[%s279 + $0x3a0] sm:$0xff]
          %v492 = vld [vmem:[%s279 + $0x3a8] sm:$0xff]
          %v493 = vld [vmem:[%s279 + $0x3b0] sm:$0xff]
          %v494 = vld [vmem:[%s279 + $0x3b8] sm:$0xff]
          %v495 = vld [vmem:[%s279 + $0x3c0] sm:$0xff]
          %v496 = vld [vmem:[%s279 + $0x3c8] sm:$0xff]
          %v497 = vld [vmem:[%s279 + $0x3d0] sm:$0xff]
          %v498 = vld [vmem:[%s279 + $0x3d8] sm:$0xff]
          %v499 = vld [vmem:[%s279 + $0x3e0] sm:$0xff]
          %v500 = vld [vmem:[%s279 + $0x3e8] sm:$0xff]
          %v501 = vld [vmem:[%s279 + $0x3f0] sm:$0xff]
          %v502 = vld [vmem:[%s279 + $0x3f8] sm:$0xff]
          %v503 = vld [vmem:[%s279 + $0x400] sm:$0xff]
          %v504 = vld [vmem:[%s279 + $0x408] sm:$0xff]
          %v505 = vld [vmem:[%s279 + $0x410] sm:$0xff]
          %v506 = vld [vmem:[%s279 + $0x418] sm:$0xff]
          %v507 = vld [vmem:[%s279 + $0x420] sm:$0xff]
          %v508 = vld [vmem:[%s279 + $0x428] sm:$0xff]
          %v509 = vld [vmem:[%s279 + $0x430] sm:$0xff]
          %v510 = vld [vmem:[%s279 + $0x438] sm:$0xff]
          %v511 = vld [vmem:[%s279 + $0x440] sm:$0xff]
          %v512 = vld [vmem:[%s279 + $0x448] sm:$0xff]
          %v513 = vld [vmem:[%s279 + $0x450] sm:$0xff]
          %v514 = vld [vmem:[%s279 + $0x458] sm:$0xff]
          %v515 = vld [vmem:[%s279 + $0x460] sm:$0xff]
          %v516 = vld [vmem:[%s279 + $0x468] sm:$0xff]
          %v517 = vld [vmem:[%s279 + $0x470] sm:$0xff]
          %v518 = vld [vmem:[%s279 + $0x478] sm:$0xff]
          %v519 = vld [vmem:[%s279 + $0x480] sm:$0xff]
          %v520 = vld [vmem:[%s279 + $0x488] sm:$0xff]
          %v521 = vld [vmem:[%s279 + $0x490] sm:$0xff]
          %v522 = vld [vmem:[%s279 + $0x498] sm:$0xff]
          %v523 = vld [vmem:[%s279 + $0x4a0] sm:$0xff]
          %v524 = vld [vmem:[%s279 + $0x4a8] sm:$0xff]
          %v525 = vld [vmem:[%s279 + $0x4b0] sm:$0xff]
          %v526 = vld [vmem:[%s279 + $0x4b8] sm:$0xff]
          %v527 = vld [vmem:[%s279 + $0x4c0] sm:$0xff]
          %v528 = vld [vmem:[%s279 + $0x4c8] sm:$0xff]
          %v529 = vld [vmem:[%s279 + $0x4d0] sm:$0xff]
          %v530 = vld [vmem:[%s279 + $0x4d8] sm:$0xff]
          %v531 = vld [vmem:[%s279 + $0x4e0] sm:$0xff]
          %v532 = vld [vmem:[%s279 + $0x4e8] sm:$0xff]
          %v533 = vld [vmem:[%s279 + $0x4f0] sm:$0xff]
          %v534 = vld [vmem:[%s279 + $0x4f8] sm:$0xff]
          %v535 = vld [vmem:[%s279 + $0x500] sm:$0xff]
          %v536 = vld [vmem:[%s279 + $0x508] sm:$0xff]
          %v537 = vld [vmem:[%s279 + $0x510] sm:$0xff]
          %v538 = vld [vmem:[%s279 + $0x518] sm:$0xff]
          %v539 = vld [vmem:[%s279 + $0x520] sm:$0xff]
          %v540 = vld [vmem:[%s279 + $0x528] sm:$0xff]
          %v541 = vld [vmem:[%s279 + $0x530] sm:$0xff]
          %v542 = vld [vmem:[%s279 + $0x538] sm:$0xff]
          %v543 = vld [vmem:[%s279 + $0x540] sm:$0xff]
          %v544 = vld [vmem:[%s279 + $0x548] sm:$0xff]
          %v545 = vld [vmem:[%s279 + $0x550] sm:$0xff]
          %v546 = vld [vmem:[%s279 + $0x558] sm:$0xff]
          %v547 = vld [vmem:[%s279 + $0x560] sm:$0xff]
          %v548 = vld [vmem:[%s279 + $0x568] sm:$0xff]
          %v549 = vld [vmem:[%s279 + $0x570] sm:$0xff]
          %v550 = vld [vmem:[%s279 + $0x578] sm:$0xff]
          %v551 = vld [vmem:[%s279 + $0x580] sm:$0xff]
          %v552 = vld [vmem:[%s279 + $0x588] sm:$0xff]
          %v553 = vld [vmem:[%s279 + $0x590] sm:$0xff]
          %v554 = vld [vmem:[%s279 + $0x598] sm:$0xff]
          %v555 = vld [vmem:[%s279 + $0x5a0] sm:$0xff]
          %v556 = vld [vmem:[%s279 + $0x5a8] sm:$0xff]
          %v557 = vld [vmem:[%s279 + $0x5b0] sm:$0xff]
          %v558 = vld [vmem:[%s279 + $0x5b8] sm:$0xff]
          %v559 = vld [vmem:[%s279 + $0x5c0] sm:$0xff]
          %v560 = vld [vmem:[%s279 + $0x5c8] sm:$0xff]
          %v561 = vld [vmem:[%s279 + $0x5d0] sm:$0xff]
          %v562 = vld [vmem:[%s279 + $0x5d8] sm:$0xff]
          %v563 = vld [vmem:[%s279 + $0x5e0] sm:$0xff]
          %v564 = vld [vmem:[%s279 + $0x5e8] sm:$0xff]
          %v565 = vld [vmem:[%s279 + $0x5f0] sm:$0xff]
          %v566 = vld [vmem:[%s279 + $0x5f8] sm:$0xff]
          %v567 = vld [vmem:[%s279 + $0x600] sm:$0xff]
          %v568 = vld [vmem:[%s279 + $0x608] sm:$0xff]
          %v569 = vld [vmem:[%s279 + $0x610] sm:$0xff]
          %v570 = vld [vmem:[%s279 + $0x618] sm:$0xff]
          %v571 = vld [vmem:[%s279 + $0x620] sm:$0xff]
          %v572 = vld [vmem:[%s279 + $0x628] sm:$0xff]
          %v573 = vld [vmem:[%s279 + $0x630] sm:$0xff]
          %v574 = vld [vmem:[%s279 + $0x638] sm:$0xff]
          %v575 = vld [vmem:[%s279 + $0x640] sm:$0xff]
          %v576 = vld [vmem:[%s279 + $0x648] sm:$0xff]
          %v577 = vld [vmem:[%s279 + $0x650] sm:$0xff]
          %v578 = vld [vmem:[%s279 + $0x658] sm:$0xff]
          %v579 = vld [vmem:[%s279 + $0x660] sm:$0xff]
          %v580 = vld [vmem:[%s279 + $0x668] sm:$0xff]
          %v581 = vld [vmem:[%s279 + $0x670] sm:$0xff]
          %v582 = vld [vmem:[%s279 + $0x678] sm:$0xff]
          %v583 = vld [vmem:[%s279 + $0x680] sm:$0xff]
          %v584 = vld [vmem:[%s279 + $0x688] sm:$0xff]
          %v585 = vld [vmem:[%s279 + $0x690] sm:$0xff]
          %v586 = vld [vmem:[%s279 + $0x698] sm:$0xff]
          %v587 = vld [vmem:[%s279 + $0x6a0] sm:$0xff]
          %v588 = vld [vmem:[%s279 + $0x6a8] sm:$0xff]
          %v589 = vld [vmem:[%s279 + $0x6b0] sm:$0xff]
          %v590 = vld [vmem:[%s279 + $0x6b8] sm:$0xff]
          %v591 = vld [vmem:[%s279 + $0x6c0] sm:$0xff]
          %v592 = vld [vmem:[%s279 + $0x6c8] sm:$0xff]
          %v593 = vld [vmem:[%s279 + $0x6d0] sm:$0xff]
          %v594 = vld [vmem:[%s279 + $0x6d8] sm:$0xff]
          %v595 = vld [vmem:[%s279 + $0x6e0] sm:$0xff]
          %v596 = vld [vmem:[%s279 + $0x6e8] sm:$0xff]
          %v597 = vld [vmem:[%s279 + $0x6f0] sm:$0xff]
          %v598 = vld [vmem:[%s279 + $0x6f8] sm:$0xff]
          %v599 = vld [vmem:[%s279 + $0x700] sm:$0xff]
          %v600 = vld [vmem:[%s279 + $0x708] sm:$0xff]
          %v601 = vld [vmem:[%s279 + $0x710] sm:$0xff]
          %v602 = vld [vmem:[%s279 + $0x718] sm:$0xff]
          %v603 = vld [vmem:[%s279 + $0x720] sm:$0xff]
          %v604 = vld [vmem:[%s279 + $0x728] sm:$0xff]
          %v605 = vld [vmem:[%s279 + $0x730] sm:$0xff]
          %v606 = vld [vmem:[%s279 + $0x738] sm:$0xff]
          %v607 = vld [vmem:[%s279 + $0x740] sm:$0xff]
          %v608 = vld [vmem:[%s279 + $0x748] sm:$0xff]
          %v609 = vld [vmem:[%s279 + $0x750] sm:$0xff]
          %v610 = vld [vmem:[%s279 + $0x758] sm:$0xff]
          %v611 = vld [vmem:[%s279 + $0x760] sm:$0xff]
          %v612 = vld [vmem:[%s279 + $0x768] sm:$0xff]
          %v613 = vld [vmem:[%s279 + $0x770] sm:$0xff]
          %v614 = vld [vmem:[%s279 + $0x778] sm:$0xff]
          %v615 = vld [vmem:[%s279 + $0x780] sm:$0xff]
          %v616 = vld [vmem:[%s279 + $0x788] sm:$0xff]
          %v617 = vld [vmem:[%s279 + $0x790] sm:$0xff]
          %v618 = vld [vmem:[%s279 + $0x798] sm:$0xff]
          %v619 = vld [vmem:[%s279 + $0x7a0] sm:$0xff]
          %v620 = vld [vmem:[%s279 + $0x7a8] sm:$0xff]
          %v621 = vld [vmem:[%s279 + $0x7b0] sm:$0xff]
          %v622 = vld [vmem:[%s279 + $0x7b8] sm:$0xff]
          %v623 = vld [vmem:[%s279 + $0x7c0] sm:$0xff]
          %v624 = vld [vmem:[%s279 + $0x7c8] sm:$0xff]
          %v625 = vld [vmem:[%s279 + $0x7d0] sm:$0xff]
          %v626 = vld [vmem:[%s279 + $0x7d8] sm:$0xff]
          %v627 = vld [vmem:[%s279 + $0x7e0] sm:$0xff]
          %v628 = vld [vmem:[%s279 + $0x7e8] sm:$0xff]
          %v629 = vld [vmem:[%s279 + $0x7f0] sm:$0xff]
          %v630 = vld [vmem:[%s279 + $0x7f8] sm:$0xff]
          %v631 = vld [vmem:[%s279 + $0x800] sm:$0xff]
          %v632 = vld [vmem:[%s279 + $0x808] sm:$0xff]
          %v633 = vld [vmem:[%s279 + $0x810] sm:$0xff]
          %v634 = vld [vmem:[%s279 + $0x818] sm:$0xff]
          %v635 = vld [vmem:[%s279 + $0x820] sm:$0xff]
          %v636 = vld [vmem:[%s279 + $0x828] sm:$0xff]
          %v637 = vld [vmem:[%s279 + $0x830] sm:$0xff]
          %v638 = vld [vmem:[%s279 + $0x838] sm:$0xff]
          %v639 = vld [vmem:[%s279 + $0x840] sm:$0xff]
          %v640 = vld [vmem:[%s279 + $0x848] sm:$0xff]
          %v641 = vld [vmem:[%s279 + $0x850] sm:$0xff]
          %v642 = vld [vmem:[%s279 + $0x858] sm:$0xff]
          %v643 = vld [vmem:[%s279 + $0x860] sm:$0xff]
          %v644 = vld [vmem:[%s279 + $0x868] sm:$0xff]
          %v645 = vld [vmem:[%s279 + $0x870] sm:$0xff]
          %v646 = vld [vmem:[%s279 + $0x878] sm:$0xff]
          %v647 = vld [vmem:[%s279 + $0x880] sm:$0xff]
          %v648 = vld [vmem:[%s279 + $0x888] sm:$0xff]
          %v649 = vld [vmem:[%s279 + $0x890] sm:$0xff]
          %v650 = vld [vmem:[%s279 + $0x898] sm:$0xff]
          %v651 = vld [vmem:[%s279 + $0x8a0] sm:$0xff]
          %v652 = vld [vmem:[%s279 + $0x8a8] sm:$0xff]
          %v653 = vld [vmem:[%s279 + $0x8b0] sm:$0xff]
          %v654 = vld [vmem:[%s279 + $0x8b8] sm:$0xff]
          %v655 = vld [vmem:[%s279 + $0x8c0] sm:$0xff]
          %v656 = vld [vmem:[%s279 + $0x8c8] sm:$0xff]
          %v657 = vld [vmem:[%s279 + $0x8d0] sm:$0xff]
          %v658 = vld [vmem:[%s279 + $0x8d8] sm:$0xff]
          %v659 = vld [vmem:[%s279 + $0x8e0] sm:$0xff]
          %v660 = vld [vmem:[%s279 + $0x8e8] sm:$0xff]
          %v661 = vld [vmem:[%s279 + $0x8f0] sm:$0xff]
          %v662 = vld [vmem:[%s279 + $0x8f8] sm:$0xff]
          %v663 = vld [vmem:[%s279 + $0x900] sm:$0xff]
          %v664 = vld [vmem:[%s279 + $0x908] sm:$0xff]
          %v665 = vld [vmem:[%s279 + $0x910] sm:$0xff]
          %v666 = vld [vmem:[%s279 + $0x918] sm:$0xff]
          %v667 = vld [vmem:[%s279 + $0x920] sm:$0xff]
          %v668 = vld [vmem:[%s279 + $0x928] sm:$0xff]
          %v669 = vld [vmem:[%s279 + $0x930] sm:$0xff]
          %v670 = vld [vmem:[%s279 + $0x938] sm:$0xff]
          %v671 = vld [vmem:[%s279 + $0x940] sm:$0xff]
          %v672 = vld [vmem:[%s279 + $0x948] sm:$0xff]
          %v673 = vld [vmem:[%s279 + $0x950] sm:$0xff]
          %v674 = vld [vmem:[%s279 + $0x958] sm:$0xff]
          %v675 = vld [vmem:[%s279 + $0x960] sm:$0xff]
          %v676 = vld [vmem:[%s279 + $0x968] sm:$0xff]
          %v677 = vld [vmem:[%s279 + $0x970] sm:$0xff]
          %v678 = vld [vmem:[%s279 + $0x978] sm:$0xff]
          %v679 = vld [vmem:[%s279 + $0x980] sm:$0xff]
          %v680 = vld [vmem:[%s279 + $0x988] sm:$0xff]
          %v681 = vld [vmem:[%s279 + $0x990] sm:$0xff]
          %v682 = vld [vmem:[%s279 + $0x998] sm:$0xff]
          %v683 = vld [vmem:[%s279 + $0x9a0] sm:$0xff]
          %v684 = vld [vmem:[%s279 + $0x9a8] sm:$0xff]
          %v685 = vld [vmem:[%s279 + $0x9b0] sm:$0xff]
          %v686 = vld [vmem:[%s279 + $0x9b8] sm:$0xff]
          %v687 = vld [vmem:[%s279 + $0x9c0] sm:$0xff]
          %v688 = vld [vmem:[%s279 + $0x9c8] sm:$0xff]
          %v689 = vld [vmem:[%s279 + $0x9d0] sm:$0xff]
          %v690 = vld [vmem:[%s279 + $0x9d8] sm:$0xff]
          %v691 = vld [vmem:[%s279 + $0x9e0] sm:$0xff]
          %v692 = vld [vmem:[%s279 + $0x9e8] sm:$0xff]
          %v693 = vld [vmem:[%s279 + $0x9f0] sm:$0xff]
          %v694 = vld [vmem:[%s279 + $0x9f8] sm:$0xff]
          %v695 = vld [vmem:[%s279 + $0xa00] sm:$0xff]
          %v696 = vld [vmem:[%s279 + $0xa08] sm:$0xff]
          %v697 = vld [vmem:[%s279 + $0xa10] sm:$0xff]
          %v698 = vld [vmem:[%s279 + $0xa18] sm:$0xff]
          %v699 = vld [vmem:[%s279 + $0xa20] sm:$0xff]
          %v700 = vld [vmem:[%s279 + $0xa28] sm:$0xff]
          %v701 = vld [vmem:[%s279 + $0xa30] sm:$0xff]
          %v702 = vld [vmem:[%s279 + $0xa38] sm:$0xff]
          %v703 = vld [vmem:[%s279 + $0xa40] sm:$0xff]
          %v704 = vld [vmem:[%s279 + $0xa48] sm:$0xff]
          %v705 = vld [vmem:[%s279 + $0xa50] sm:$0xff]
          %v706 = vld [vmem:[%s279 + $0xa58] sm:$0xff]
          %v707 = vld [vmem:[%s279 + $0xa60] sm:$0xff]
          %v708 = vld [vmem:[%s279 + $0xa68] sm:$0xff]
          %v709 = vld [vmem:[%s279 + $0xa70] sm:$0xff]
          %v710 = vld [vmem:[%s279 + $0xa78] sm:$0xff]
          %v711 = vld [vmem:[%s279 + $0xa80] sm:$0xff]
          %v712 = vld [vmem:[%s279 + $0xa88] sm:$0xff]
          %v713 = vld [vmem:[%s279 + $0xa90] sm:$0xff]
          %v714 = vld [vmem:[%s279 + $0xa98] sm:$0xff]
          %v715 = vld [vmem:[%s279 + $0xaa0] sm:$0xff]
          %v716 = vld [vmem:[%s279 + $0xaa8] sm:$0xff]
          %v717 = vld [vmem:[%s279 + $0xab0] sm:$0xff]
          %v718 = vld [vmem:[%s279 + $0xab8] sm:$0xff]
          %v719 = vld [vmem:[%s279 + $0xac0] sm:$0xff]
          %v720 = vld [vmem:[%s279 + $0xac8] sm:$0xff]
          %v721 = vld [vmem:[%s279 + $0xad0] sm:$0xff]
          %v722 = vld [vmem:[%s279 + $0xad8] sm:$0xff]
          %v723 = vld [vmem:[%s279 + $0xae0] sm:$0xff]
          %v724 = vld [vmem:[%s279 + $0xae8] sm:$0xff]
          %v725 = vld [vmem:[%s279 + $0xaf0] sm:$0xff]
          %v726 = vld [vmem:[%s279 + $0xaf8] sm:$0xff]
          %v727 = vld [vmem:[%s279 + $0xb00] sm:$0xff]
          %v728 = vld [vmem:[%s279 + $0xb08] sm:$0xff]
          %v729 = vld [vmem:[%s279 + $0xb10] sm:$0xff]
          %v730 = vld [vmem:[%s279 + $0xb18] sm:$0xff]
          %v731 = vld [vmem:[%s279 + $0xb20] sm:$0xff]
          %v732 = vld [vmem:[%s279 + $0xb28] sm:$0xff]
          %v733 = vld [vmem:[%s279 + $0xb30] sm:$0xff]
          %v734 = vld [vmem:[%s279 + $0xb38] sm:$0xff]
          %v735 = vld [vmem:[%s279 + $0xb40] sm:$0xff]
          %v736 = vld [vmem:[%s279 + $0xb48] sm:$0xff]
          %v737 = vld [vmem:[%s279 + $0xb50] sm:$0xff]
          %v738 = vld [vmem:[%s279 + $0xb58] sm:$0xff]
          %v739 = vld [vmem:[%s279 + $0xb60] sm:$0xff]
          %v740 = vld [vmem:[%s279 + $0xb68] sm:$0xff]
          %v741 = vld [vmem:[%s279 + $0xb70] sm:$0xff]
          %v742 = vld [vmem:[%s279 + $0xb78] sm:$0xff]
          %v743 = vld [vmem:[%s279 + $0xb80] sm:$0xff]
          %v744 = vld [vmem:[%s279 + $0xb88] sm:$0xff]
          %v745 = vld [vmem:[%s279 + $0xb90] sm:$0xff]
          %v746 = vld [vmem:[%s279 + $0xb98] sm:$0xff]
          %v747 = vld [vmem:[%s279 + $0xba0] sm:$0xff]
          %v748 = vld [vmem:[%s279 + $0xba8] sm:$0xff]
          %v749 = vld [vmem:[%s279 + $0xbb0] sm:$0xff]
          %v750 = vld [vmem:[%s279 + $0xbb8] sm:$0xff]
          %v751 = vld [vmem:[%s279 + $0xbc0] sm:$0xff]
          %v752 = vld [vmem:[%s279 + $0xbc8] sm:$0xff]
          %v753 = vld [vmem:[%s279 + $0xbd0] sm:$0xff]
          %v754 = vld [vmem:[%s279 + $0xbd8] sm:$0xff]
          %v755 = vld [vmem:[%s279 + $0xbe0] sm:$0xff]
          %v756 = vld [vmem:[%s279 + $0xbe8] sm:$0xff]
          %v757 = vld [vmem:[%s279 + $0xbf0] sm:$0xff]
          %v758 = vld [vmem:[%s279 + $0xbf8] sm:$0xff]
          %v759 = vld [vmem:[%s279 + $0xc00] sm:$0xff]
          %v760 = vld [vmem:[%s279 + $0xc08] sm:$0xff]
          %v761 = vld [vmem:[%s279 + $0xc10] sm:$0xff]
          %v762 = vld [vmem:[%s279 + $0xc18] sm:$0xff]
          %v763 = vld [vmem:[%s279 + $0xc20] sm:$0xff]
          %v764 = vld [vmem:[%s279 + $0xc28] sm:$0xff]
          %v765 = vld [vmem:[%s279 + $0xc30] sm:$0xff]
          %v766 = vld [vmem:[%s279 + $0xc38] sm:$0xff]
          %v767 = vld [vmem:[%s279 + $0xc40] sm:$0xff]
          %v768 = vld [vmem:[%s279 + $0xc48] sm:$0xff]
          %v769 = vld [vmem:[%s279 + $0xc50] sm:$0xff]
          %v770 = vld [vmem:[%s279 + $0xc58] sm:$0xff]
          %v771 = vld [vmem:[%s279 + $0xc60] sm:$0xff]
          %v772 = vld [vmem:[%s279 + $0xc68] sm:$0xff]
          %v773 = vld [vmem:[%s279 + $0xc70] sm:$0xff]
          %v774 = vld [vmem:[%s279 + $0xc78] sm:$0xff]
          %v775 = vld [vmem:[%s279 + $0xc80] sm:$0xff]
          %v776 = vld [vmem:[%s279 + $0xc88] sm:$0xff]
          %v777 = vld [vmem:[%s279 + $0xc90] sm:$0xff]
          %v778 = vld [vmem:[%s279 + $0xc98] sm:$0xff]
          %v779 = vld [vmem:[%s279 + $0xca0] sm:$0xff]
          %v780 = vld [vmem:[%s279 + $0xca8] sm:$0xff]
          %v781 = vld [vmem:[%s279 + $0xcb0] sm:$0xff]
          %v782 = vld [vmem:[%s279 + $0xcb8] sm:$0xff]
          %v783 = vld [vmem:[%s279 + $0xcc0] sm:$0xff]
          %v784 = vld [vmem:[%s279 + $0xcc8] sm:$0xff]
          %v785 = vld [vmem:[%s279 + $0xcd0] sm:$0xff]
          %v786 = vld [vmem:[%s279 + $0xcd8] sm:$0xff]
          %v787 = vld [vmem:[%s279 + $0xce0] sm:$0xff]
          %v788 = vld [vmem:[%s279 + $0xce8] sm:$0xff]
          %v789 = vld [vmem:[%s279 + $0xcf0] sm:$0xff]
          %v790 = vld [vmem:[%s279 + $0xcf8] sm:$0xff]
          %v791 = vld [vmem:[%s279 + $0xd00] sm:$0xff]
          %v792 = vld [vmem:[%s279 + $0xd08] sm:$0xff]
          %v793 = vld [vmem:[%s279 + $0xd10] sm:$0xff]
          %v794 = vld [vmem:[%s279 + $0xd18] sm:$0xff]
          %v795 = vld [vmem:[%s279 + $0xd20] sm:$0xff]
          %v796 = vld [vmem:[%s279 + $0xd28] sm:$0xff]
          %v797 = vld [vmem:[%s279 + $0xd30] sm:$0xff]
          %v798 = vld [vmem:[%s279 + $0xd38] sm:$0xff]
          %v799 = vld [vmem:[%s279 + $0xd40] sm:$0xff]
          %v800 = vld [vmem:[%s279 + $0xd48] sm:$0xff]
          %v801 = vld [vmem:[%s279 + $0xd50] sm:$0xff]
          %v802 = vld [vmem:[%s279 + $0xd58] sm:$0xff]
          %v803 = vld [vmem:[%s279 + $0xd60] sm:$0xff]
          %v804 = vld [vmem:[%s279 + $0xd68] sm:$0xff]
          %v805 = vld [vmem:[%s279 + $0xd70] sm:$0xff]
          %v806 = vld [vmem:[%s279 + $0xd78] sm:$0xff]
          %v807 = vld [vmem:[%s279 + $0xd80] sm:$0xff]
          %v808 = vld [vmem:[%s279 + $0xd88] sm:$0xff]
          %v809 = vld [vmem:[%s279 + $0xd90] sm:$0xff]
          %v810 = vld [vmem:[%s279 + $0xd98] sm:$0xff]
          %v811 = vld [vmem:[%s279 + $0xda0] sm:$0xff]
          %v812 = vld [vmem:[%s279 + $0xda8] sm:$0xff]
          %v813 = vld [vmem:[%s279 + $0xdb0] sm:$0xff]
          %v814 = vld [vmem:[%s279 + $0xdb8] sm:$0xff]
          %v815 = vld [vmem:[%s279 + $0xdc0] sm:$0xff]
          %v816 = vld [vmem:[%s279 + $0xdc8] sm:$0xff]
          %v817 = vld [vmem:[%s279 + $0xdd0] sm:$0xff]
          %v818 = vld [vmem:[%s279 + $0xdd8] sm:$0xff]
          %v819 = vld [vmem:[%s279 + $0xde0] sm:$0xff]
          %v820 = vld [vmem:[%s279 + $0xde8] sm:$0xff]
          %v821 = vld [vmem:[%s279 + $0xdf0] sm:$0xff]
          %v822 = vld [vmem:[%s279 + $0xdf8] sm:$0xff]
          %v823 = vld [vmem:[%s279 + $0xe00] sm:$0xff]
          %v824 = vld [vmem:[%s279 + $0xe08] sm:$0xff]
          %v825 = vld [vmem:[%s279 + $0xe10] sm:$0xff]
          %v826 = vld [vmem:[%s279 + $0xe18] sm:$0xff]
          %v827 = vld [vmem:[%s279 + $0xe20] sm:$0xff]
          %v828 = vld [vmem:[%s279 + $0xe28] sm:$0xff]
          %v829 = vld [vmem:[%s279 + $0xe30] sm:$0xff]
          %v830 = vld [vmem:[%s279 + $0xe38] sm:$0xff]
          %v831 = vld [vmem:[%s279 + $0xe40] sm:$0xff]
          %v832 = vld [vmem:[%s279 + $0xe48] sm:$0xff]
          %v833 = vld [vmem:[%s279 + $0xe50] sm:$0xff]
          %v834 = vld [vmem:[%s279 + $0xe58] sm:$0xff]
          %v835 = vld [vmem:[%s279 + $0xe60] sm:$0xff]
          %v836 = vld [vmem:[%s279 + $0xe68] sm:$0xff]
          %v837 = vld [vmem:[%s279 + $0xe70] sm:$0xff]
          %v838 = vld [vmem:[%s279 + $0xe78] sm:$0xff]
          %v839 = vld [vmem:[%s279 + $0xe80] sm:$0xff]
          %v840 = vld [vmem:[%s279 + $0xe88] sm:$0xff]
          %v841 = vld [vmem:[%s279 + $0xe90] sm:$0xff]
          %v842 = vld [vmem:[%s279 + $0xe98] sm:$0xff]
          %v843 = vld [vmem:[%s279 + $0xea0] sm:$0xff]
          %v844 = vld [vmem:[%s279 + $0xea8] sm:$0xff]
          %v845 = vld [vmem:[%s279 + $0xeb0] sm:$0xff]
          %v846 = vld [vmem:[%s279 + $0xeb8] sm:$0xff]
          %v847 = vld [vmem:[%s279 + $0xec0] sm:$0xff]
          %v848 = vld [vmem:[%s279 + $0xec8] sm:$0xff]
          %v849 = vld [vmem:[%s279 + $0xed0] sm:$0xff]
          %v850 = vld [vmem:[%s279 + $0xed8] sm:$0xff]
          %v851 = vld [vmem:[%s279 + $0xee0] sm:$0xff]
          %v852 = vld [vmem:[%s279 + $0xee8] sm:$0xff]
          %v853 = vld [vmem:[%s279 + $0xef0] sm:$0xff]
          %v854 = vld [vmem:[%s279 + $0xef8] sm:$0xff]
          %v855 = vld [vmem:[%s279 + $0xf00] sm:$0xff]
          %v856 = vld [vmem:[%s279 + $0xf08] sm:$0xff]
          %v857 = vld [vmem:[%s279 + $0xf10] sm:$0xff]
          %v858 = vld [vmem:[%s279 + $0xf18] sm:$0xff]
          %v859 = vld [vmem:[%s279 + $0xf20] sm:$0xff]
          %v860 = vld [vmem:[%s279 + $0xf28] sm:$0xff]
          %v861 = vld [vmem:[%s279 + $0xf30] sm:$0xff]
          %v862 = vld [vmem:[%s279 + $0xf38] sm:$0xff]
          %v863 = vld [vmem:[%s279 + $0xf40] sm:$0xff]
          %v864 = vld [vmem:[%s279 + $0xf48] sm:$0xff]
          %v865 = vld [vmem:[%s279 + $0xf50] sm:$0xff]
          %v866 = vld [vmem:[%s279 + $0xf58] sm:$0xff]
          %v867 = vld [vmem:[%s279 + $0xf60] sm:$0xff]
          %v868 = vld [vmem:[%s279 + $0xf68] sm:$0xff]
          %v869 = vld [vmem:[%s279 + $0xf70] sm:$0xff]
          %v870 = vld [vmem:[%s279 + $0xf78] sm:$0xff]
          %v871 = vld [vmem:[%s279 + $0xf80] sm:$0xff]
          %v872 = vld [vmem:[%s279 + $0xf88] sm:$0xff]
          %v873 = vld [vmem:[%s279 + $0xf90] sm:$0xff]
          %v874 = vld [vmem:[%s279 + $0xf98] sm:$0xff]
          %v875 = vld [vmem:[%s279 + $0xfa0] sm:$0xff]
          %v876 = vld [vmem:[%s279 + $0xfa8] sm:$0xff]
          %v877 = vld [vmem:[%s279 + $0xfb0] sm:$0xff]
          %v878 = vld [vmem:[%s279 + $0xfb8] sm:$0xff]
          %v879 = vld [vmem:[%s279 + $0xfc0] sm:$0xff]
          %v880 = vld [vmem:[%s279 + $0xfc8] sm:$0xff]
          %v881 = vld [vmem:[%s279 + $0xfd0] sm:$0xff]
          %v882 = vld [vmem:[%s279 + $0xfd8] sm:$0xff]
          %v883 = vld [vmem:[%s279 + $0xfe0] sm:$0xff]
          %v884 = vld [vmem:[%s279 + $0xfe8] sm:$0xff]
          %v885 = vld [vmem:[%s279 + $0xff0] sm:$0xff]
          %v886 = vld [vmem:[%s279 + $0xff8] sm:$0xff]
          %v889 = vunpack.c.l.b16 %v373
          %v890 = vunpack.c.h.b16 %v373
          %v891 = vunpack.c.l.b16 %v374
          %v892 = vunpack.c.h.b16 %v374
          %v893 = vpack.c.b16 %v889, %v889
          %v894 = vpack.c.b16 %v890, %v890
          %v895 = vpack.c.b16 %v891, %v891
          %v896 = vpack.c.b16 %v892, %v892
          %v1413 = vunpack.c.l.b16 %v375
          %v1414 = vunpack.c.h.b16 %v375
          %v1415 = vunpack.c.l.b16 %v376
          %v1416 = vunpack.c.h.b16 %v376
          %v1417 = vunpack.c.l.b16 %v377
          %v1418 = vunpack.c.h.b16 %v377
          %v1419 = vunpack.c.l.b16 %v378
          %v1420 = vunpack.c.h.b16 %v378
          %v1421 = vunpack.c.l.b16 %v379
          %v1422 = vunpack.c.h.b16 %v379
          %v1423 = vunpack.c.l.b16 %v380
          %v1424 = vunpack.c.h.b16 %v380
          %v1425 = vunpack.c.l.b16 %v381
          %v1426 = vunpack.c.h.b16 %v381
          %v1427 = vunpack.c.l.b16 %v382
          %v1428 = vunpack.c.h.b16 %v382
          %v1429 = vunpack.c.l.b16 %v383
          %v1430 = vunpack.c.h.b16 %v383
          %v1431 = vunpack.c.l.b16 %v384
          %v1432 = vunpack.c.h.b16 %v384
          %v1433 = vunpack.c.l.b16 %v385
          %v1434 = vunpack.c.h.b16 %v385
          %v1435 = vunpack.c.l.b16 %v386
          %v1436 = vunpack.c.h.b16 %v386
          %v1437 = vunpack.c.l.b16 %v387
          %v1438 = vunpack.c.h.b16 %v387
          %v1439 = vunpack.c.l.b16 %v388
          %v1440 = vunpack.c.h.b16 %v388
          %v1441 = vunpack.c.l.b16 %v389
          %v1442 = vunpack.c.h.b16 %v389
          %v1443 = vunpack.c.l.b16 %v390
          %v1444 = vunpack.c.h.b16 %v390
          %v1445 = vunpack.c.l.b16 %v391
          %v1446 = vunpack.c.h.b16 %v391
          %v1447 = vunpack.c.l.b16 %v392
          %v1448 = vunpack.c.h.b16 %v392
          %v1449 = vunpack.c.l.b16 %v393
          %v1450 = vunpack.c.h.b16 %v393
          %v1451 = vunpack.c.l.b16 %v394
          %v1452 = vunpack.c.h.b16 %v394
          %v1453 = vunpack.c.l.b16 %v395
          %v1454 = vunpack.c.h.b16 %v395
          %v1455 = vunpack.c.l.b16 %v396
          %v1456 = vunpack.c.h.b16 %v396
          %v1457 = vunpack.c.l.b16 %v397
          %v1458 = vunpack.c.h.b16 %v397
          %v1459 = vunpack.c.l.b16 %v398
          %v1460 = vunpack.c.h.b16 %v398
          %v1461 = vunpack.c.l.b16 %v399
          %v1462 = vunpack.c.h.b16 %v399
          %v1463 = vunpack.c.l.b16 %v400
          %v1464 = vunpack.c.h.b16 %v400
          %v1465 = vunpack.c.l.b16 %v401
          %v1466 = vunpack.c.h.b16 %v401
          %v1467 = vunpack.c.l.b16 %v402
          %v1468 = vunpack.c.h.b16 %v402
          %v1469 = vunpack.c.l.b16 %v403
          %v1470 = vunpack.c.h.b16 %v403
          %v1471 = vunpack.c.l.b16 %v404
          %v1472 = vunpack.c.h.b16 %v404
          %v1473 = vunpack.c.l.b16 %v405
          %v1474 = vunpack.c.h.b16 %v405
          %v1475 = vunpack.c.l.b16 %v406
          %v1476 = vunpack.c.h.b16 %v406
          %v1477 = vunpack.c.l.b16 %v407
          %v1478 = vunpack.c.h.b16 %v407
          %v1479 = vunpack.c.l.b16 %v408
          %v1480 = vunpack.c.h.b16 %v408
          %v1481 = vunpack.c.l.b16 %v409
          %v1482 = vunpack.c.h.b16 %v409
          %v1483 = vunpack.c.l.b16 %v410
          %v1484 = vunpack.c.h.b16 %v410
          %v1485 = vunpack.c.l.b16 %v411
          %v1486 = vunpack.c.h.b16 %v411
          %v1487 = vunpack.c.l.b16 %v412
          %v1488 = vunpack.c.h.b16 %v412
          %v1489 = vunpack.c.l.b16 %v413
          %v1490 = vunpack.c.h.b16 %v413
          %v1491 = vunpack.c.l.b16 %v414
          %v1492 = vunpack.c.h.b16 %v414
          %v1493 = vunpack.c.l.b16 %v415
          %v1494 = vunpack.c.h.b16 %v415
          %v1495 = vunpack.c.l.b16 %v416
          %v1496 = vunpack.c.h.b16 %v416
          %v1497 = vunpack.c.l.b16 %v417
          %v1498 = vunpack.c.h.b16 %v417
          %v1499 = vunpack.c.l.b16 %v418
          %v1500 = vunpack.c.h.b16 %v418
          %v1501 = vunpack.c.l.b16 %v419
          %v1502 = vunpack.c.h.b16 %v419
          %v1503 = vunpack.c.l.b16 %v420
          %v1504 = vunpack.c.h.b16 %v420
          %v1505 = vunpack.c.l.b16 %v421
          %v1506 = vunpack.c.h.b16 %v421
          %v1507 = vunpack.c.l.b16 %v422
          %v1508 = vunpack.c.h.b16 %v422
          %v1509 = vunpack.c.l.b16 %v423
          %v1510 = vunpack.c.h.b16 %v423
          %v1511 = vunpack.c.l.b16 %v424
          %v1512 = vunpack.c.h.b16 %v424
          %v1513 = vunpack.c.l.b16 %v425
          %v1514 = vunpack.c.h.b16 %v425
          %v1515 = vunpack.c.l.b16 %v426
          %v1516 = vunpack.c.h.b16 %v426
          %v1517 = vunpack.c.l.b16 %v427
          %v1518 = vunpack.c.h.b16 %v427
          %v1519 = vunpack.c.l.b16 %v428
          %v1520 = vunpack.c.h.b16 %v428
          %v1521 = vunpack.c.l.b16 %v429
          %v1522 = vunpack.c.h.b16 %v429
          %v1523 = vunpack.c.l.b16 %v430
          %v1524 = vunpack.c.h.b16 %v430
          %v1525 = vunpack.c.l.b16 %v431
          %v1526 = vunpack.c.h.b16 %v431
          %v1527 = vunpack.c.l.b16 %v432
          %v1528 = vunpack.c.h.b16 %v432
          %v1529 = vunpack.c.l.b16 %v433
          %v1530 = vunpack.c.h.b16 %v433
          %v1531 = vunpack.c.l.b16 %v434
          %v1532 = vunpack.c.h.b16 %v434
          %v1533 = vunpack.c.l.b16 %v435
          %v1534 = vunpack.c.h.b16 %v435
          %v1535 = vunpack.c.l.b16 %v436
          %v1536 = vunpack.c.h.b16 %v436
          %v1537 = vunpack.c.l.b16 %v437
          %v1538 = vunpack.c.h.b16 %v437
          %v1539 = vunpack.c.l.b16 %v438
          %v1540 = vunpack.c.h.b16 %v438
          %v1541 = vunpack.c.l.b16 %v439
          %v1542 = vunpack.c.h.b16 %v439
          %v1543 = vunpack.c.l.b16 %v440
          %v1544 = vunpack.c.h.b16 %v440
          %v1545 = vunpack.c.l.b16 %v441
          %v1546 = vunpack.c.h.b16 %v441
          %v1547 = vunpack.c.l.b16 %v442
          %v1548 = vunpack.c.h.b16 %v442
          %v1549 = vunpack.c.l.b16 %v443
          %v1550 = vunpack.c.h.b16 %v443
          %v1551 = vunpack.c.l.b16 %v444
          %v1552 = vunpack.c.h.b16 %v444
          %v1553 = vunpack.c.l.b16 %v445
          %v1554 = vunpack.c.h.b16 %v445
          %v1555 = vunpack.c.l.b16 %v446
          %v1556 = vunpack.c.h.b16 %v446
          %v1557 = vunpack.c.l.b16 %v447
          %v1558 = vunpack.c.h.b16 %v447
          %v1559 = vunpack.c.l.b16 %v448
          %v1560 = vunpack.c.h.b16 %v448
          %v1561 = vunpack.c.l.b16 %v449
          %v1562 = vunpack.c.h.b16 %v449
          %v1563 = vunpack.c.l.b16 %v450
          %v1564 = vunpack.c.h.b16 %v450
          %v1565 = vunpack.c.l.b16 %v451
          %v1566 = vunpack.c.h.b16 %v451
          %v1567 = vunpack.c.l.b16 %v452
          %v1568 = vunpack.c.h.b16 %v452
          %v1569 = vunpack.c.l.b16 %v453
          %v1570 = vunpack.c.h.b16 %v453
          %v1571 = vunpack.c.l.b16 %v454
          %v1572 = vunpack.c.h.b16 %v454
          %v1573 = vunpack.c.l.b16 %v455
          %v1574 = vunpack.c.h.b16 %v455
          %v1575 = vunpack.c.l.b16 %v456
          %v1576 = vunpack.c.h.b16 %v456
          %v1577 = vunpack.c.l.b16 %v457
          %v1578 = vunpack.c.h.b16 %v457
          %v1579 = vunpack.c.l.b16 %v458
          %v1580 = vunpack.c.h.b16 %v458
          %v1581 = vunpack.c.l.b16 %v459
          %v1582 = vunpack.c.h.b16 %v459
          %v1583 = vunpack.c.l.b16 %v460
          %v1584 = vunpack.c.h.b16 %v460
          %v1585 = vunpack.c.l.b16 %v461
          %v1586 = vunpack.c.h.b16 %v461
          %v1587 = vunpack.c.l.b16 %v462
          %v1588 = vunpack.c.h.b16 %v462
          %v1589 = vunpack.c.l.b16 %v463
          %v1590 = vunpack.c.h.b16 %v463
          %v1591 = vunpack.c.l.b16 %v464
          %v1592 = vunpack.c.h.b16 %v464
          %v1593 = vunpack.c.l.b16 %v465
          %v1594 = vunpack.c.h.b16 %v465
          %v1595 = vunpack.c.l.b16 %v466
          %v1596 = vunpack.c.h.b16 %v466
          %v1597 = vunpack.c.l.b16 %v467
          %v1598 = vunpack.c.h.b16 %v467
          %v1599 = vunpack.c.l.b16 %v468
          %v1600 = vunpack.c.h.b16 %v468
          %v1601 = vunpack.c.l.b16 %v469
          %v1602 = vunpack.c.h.b16 %v469
          %v1603 = vunpack.c.l.b16 %v470
          %v1604 = vunpack.c.h.b16 %v470
          %v1605 = vunpack.c.l.b16 %v471
          %v1606 = vunpack.c.h.b16 %v471
          %v1607 = vunpack.c.l.b16 %v472
          %v1608 = vunpack.c.h.b16 %v472
          %v1609 = vunpack.c.l.b16 %v473
          %v1610 = vunpack.c.h.b16 %v473
          %v1611 = vunpack.c.l.b16 %v474
          %v1612 = vunpack.c.h.b16 %v474
          %v1613 = vunpack.c.l.b16 %v475
          %v1614 = vunpack.c.h.b16 %v475
          %v1615 = vunpack.c.l.b16 %v476
          %v1616 = vunpack.c.h.b16 %v476
          %v1617 = vunpack.c.l.b16 %v477
          %v1618 = vunpack.c.h.b16 %v477
          %v1619 = vunpack.c.l.b16 %v478
          %v1620 = vunpack.c.h.b16 %v478
          %v1621 = vunpack.c.l.b16 %v479
          %v1622 = vunpack.c.h.b16 %v479
          %v1623 = vunpack.c.l.b16 %v480
          %v1624 = vunpack.c.h.b16 %v480
          %v1625 = vunpack.c.l.b16 %v481
          %v1626 = vunpack.c.h.b16 %v481
          %v1627 = vunpack.c.l.b16 %v482
          %v1628 = vunpack.c.h.b16 %v482
          %v1629 = vunpack.c.l.b16 %v483
          %v1630 = vunpack.c.h.b16 %v483
          %v1631 = vunpack.c.l.b16 %v484
          %v1632 = vunpack.c.h.b16 %v484
          %v1633 = vunpack.c.l.b16 %v485
          %v1634 = vunpack.c.h.b16 %v485
          %v1635 = vunpack.c.l.b16 %v486
          %v1636 = vunpack.c.h.b16 %v486
          %v1637 = vunpack.c.l.b16 %v487
          %v1638 = vunpack.c.h.b16 %v487
          %v1639 = vunpack.c.l.b16 %v488
          %v1640 = vunpack.c.h.b16 %v488
          %v1641 = vunpack.c.l.b16 %v489
          %v1642 = vunpack.c.h.b16 %v489
          %v1643 = vunpack.c.l.b16 %v490
          %v1644 = vunpack.c.h.b16 %v490
          %v1645 = vunpack.c.l.b16 %v491
          %v1646 = vunpack.c.h.b16 %v491
          %v1647 = vunpack.c.l.b16 %v492
          %v1648 = vunpack.c.h.b16 %v492
          %v1649 = vunpack.c.l.b16 %v493
          %v1650 = vunpack.c.h.b16 %v493
          %v1651 = vunpack.c.l.b16 %v494
          %v1652 = vunpack.c.h.b16 %v494
          %v1653 = vunpack.c.l.b16 %v495
          %v1654 = vunpack.c.h.b16 %v495
          %v1655 = vunpack.c.l.b16 %v496
          %v1656 = vunpack.c.h.b16 %v496
          %v1657 = vunpack.c.l.b16 %v497
          %v1658 = vunpack.c.h.b16 %v497
          %v1659 = vunpack.c.l.b16 %v498
          %v1660 = vunpack.c.h.b16 %v498
          %v1661 = vunpack.c.l.b16 %v499
          %v1662 = vunpack.c.h.b16 %v499
          %v1663 = vunpack.c.l.b16 %v500
          %v1664 = vunpack.c.h.b16 %v500
          %v1665 = vunpack.c.l.b16 %v501
          %v1666 = vunpack.c.h.b16 %v501
          %v1667 = vunpack.c.l.b16 %v502
          %v1668 = vunpack.c.h.b16 %v502
          %v1669 = vunpack.c.l.b16 %v503
          %v1670 = vunpack.c.h.b16 %v503
          %v1671 = vunpack.c.l.b16 %v504
          %v1672 = vunpack.c.h.b16 %v504
          %v1673 = vunpack.c.l.b16 %v505
          %v1674 = vunpack.c.h.b16 %v505
          %v1675 = vunpack.c.l.b16 %v506
          %v1676 = vunpack.c.h.b16 %v506
          %v1677 = vunpack.c.l.b16 %v507
          %v1678 = vunpack.c.h.b16 %v507
          %v1679 = vunpack.c.l.b16 %v508
          %v1680 = vunpack.c.h.b16 %v508
          %v1681 = vunpack.c.l.b16 %v509
          %v1682 = vunpack.c.h.b16 %v509
          %v1683 = vunpack.c.l.b16 %v510
          %v1684 = vunpack.c.h.b16 %v510
          %v1685 = vunpack.c.l.b16 %v511
          %v1686 = vunpack.c.h.b16 %v511
          %v1687 = vunpack.c.l.b16 %v512
          %v1688 = vunpack.c.h.b16 %v512
          %v1689 = vunpack.c.l.b16 %v513
          %v1690 = vunpack.c.h.b16 %v513
          %v1691 = vunpack.c.l.b16 %v514
          %v1692 = vunpack.c.h.b16 %v514
          %v1693 = vunpack.c.l.b16 %v515
          %v1694 = vunpack.c.h.b16 %v515
          %v1695 = vunpack.c.l.b16 %v516
          %v1696 = vunpack.c.h.b16 %v516
          %v1697 = vunpack.c.l.b16 %v517
          %v1698 = vunpack.c.h.b16 %v517
          %v1699 = vunpack.c.l.b16 %v518
          %v1700 = vunpack.c.h.b16 %v518
          %v1701 = vunpack.c.l.b16 %v519
          %v1702 = vunpack.c.h.b16 %v519
          %v1703 = vunpack.c.l.b16 %v520
          %v1704 = vunpack.c.h.b16 %v520
          %v1705 = vunpack.c.l.b16 %v521
          %v1706 = vunpack.c.h.b16 %v521
          %v1707 = vunpack.c.l.b16 %v522
          %v1708 = vunpack.c.h.b16 %v522
          %v1709 = vunpack.c.l.b16 %v523
          %v1710 = vunpack.c.h.b16 %v523
          %v1711 = vunpack.c.l.b16 %v524
          %v1712 = vunpack.c.h.b16 %v524
          %v1713 = vunpack.c.l.b16 %v525
          %v1714 = vunpack.c.h.b16 %v525
          %v1715 = vunpack.c.l.b16 %v526
          %v1716 = vunpack.c.h.b16 %v526
          %v1717 = vunpack.c.l.b16 %v527
          %v1718 = vunpack.c.h.b16 %v527
          %v1719 = vunpack.c.l.b16 %v528
          %v1720 = vunpack.c.h.b16 %v528
          %v1721 = vunpack.c.l.b16 %v529
          %v1722 = vunpack.c.h.b16 %v529
          %v1723 = vunpack.c.l.b16 %v530
          %v1724 = vunpack.c.h.b16 %v530
          %v1725 = vunpack.c.l.b16 %v531
          %v1726 = vunpack.c.h.b16 %v531
          %v1727 = vunpack.c.l.b16 %v532
          %v1728 = vunpack.c.h.b16 %v532
          %v1729 = vunpack.c.l.b16 %v533
          %v1730 = vunpack.c.h.b16 %v533
          %v1731 = vunpack.c.l.b16 %v534
          %v1732 = vunpack.c.h.b16 %v534
          %v1733 = vunpack.c.l.b16 %v535
          %v1734 = vunpack.c.h.b16 %v535
          %v1735 = vunpack.c.l.b16 %v536
          %v1736 = vunpack.c.h.b16 %v536
          %v1737 = vunpack.c.l.b16 %v537
          %v1738 = vunpack.c.h.b16 %v537
          %v1739 = vunpack.c.l.b16 %v538
          %v1740 = vunpack.c.h.b16 %v538
          %v1741 = vunpack.c.l.b16 %v539
          %v1742 = vunpack.c.h.b16 %v539
          %v1743 = vunpack.c.l.b16 %v540
          %v1744 = vunpack.c.h.b16 %v540
          %v1745 = vunpack.c.l.b16 %v541
          %v1746 = vunpack.c.h.b16 %v541
          %v1747 = vunpack.c.l.b16 %v542
          %v1748 = vunpack.c.h.b16 %v542
          %v1749 = vunpack.c.l.b16 %v543
          %v1750 = vunpack.c.h.b16 %v543
          %v1751 = vunpack.c.l.b16 %v544
          %v1752 = vunpack.c.h.b16 %v544
          %v1753 = vunpack.c.l.b16 %v545
          %v1754 = vunpack.c.h.b16 %v545
          %v1755 = vunpack.c.l.b16 %v546
          %v1756 = vunpack.c.h.b16 %v546
          %v1757 = vunpack.c.l.b16 %v547
          %v1758 = vunpack.c.h.b16 %v547
          %v1759 = vunpack.c.l.b16 %v548
          %v1760 = vunpack.c.h.b16 %v548
          %v1761 = vunpack.c.l.b16 %v549
          %v1762 = vunpack.c.h.b16 %v549
          %v1763 = vunpack.c.l.b16 %v550
          %v1764 = vunpack.c.h.b16 %v550
          %v1765 = vunpack.c.l.b16 %v551
          %v1766 = vunpack.c.h.b16 %v551
          %v1767 = vunpack.c.l.b16 %v552
          %v1768 = vunpack.c.h.b16 %v552
          %v1769 = vunpack.c.l.b16 %v553
          %v1770 = vunpack.c.h.b16 %v553
          %v1771 = vunpack.c.l.b16 %v554
          %v1772 = vunpack.c.h.b16 %v554
          %v1773 = vunpack.c.l.b16 %v555
          %v1774 = vunpack.c.h.b16 %v555
          %v1775 = vunpack.c.l.b16 %v556
          %v1776 = vunpack.c.h.b16 %v556
          %v1777 = vunpack.c.l.b16 %v557
          %v1778 = vunpack.c.h.b16 %v557
          %v1779 = vunpack.c.l.b16 %v558
          %v1780 = vunpack.c.h.b16 %v558
          %v1781 = vunpack.c.l.b16 %v559
          %v1782 = vunpack.c.h.b16 %v559
          %v1783 = vunpack.c.l.b16 %v560
          %v1784 = vunpack.c.h.b16 %v560
          %v1785 = vunpack.c.l.b16 %v561
          %v1786 = vunpack.c.h.b16 %v561
          %v1787 = vunpack.c.l.b16 %v562
          %v1788 = vunpack.c.h.b16 %v562
          %v1789 = vunpack.c.l.b16 %v563
          %v1790 = vunpack.c.h.b16 %v563
          %v1791 = vunpack.c.l.b16 %v564
          %v1792 = vunpack.c.h.b16 %v564
          %v1793 = vunpack.c.l.b16 %v565
          %v1794 = vunpack.c.h.b16 %v565
          %v1795 = vunpack.c.l.b16 %v566
          %v1796 = vunpack.c.h.b16 %v566
          %v1797 = vunpack.c.l.b16 %v567
          %v1798 = vunpack.c.h.b16 %v567
          %v1799 = vunpack.c.l.b16 %v568
          %v1800 = vunpack.c.h.b16 %v568
          %v1801 = vunpack.c.l.b16 %v569
          %v1802 = vunpack.c.h.b16 %v569
          %v1803 = vunpack.c.l.b16 %v570
          %v1804 = vunpack.c.h.b16 %v570
          %v1805 = vunpack.c.l.b16 %v571
          %v1806 = vunpack.c.h.b16 %v571
          %v1807 = vunpack.c.l.b16 %v572
          %v1808 = vunpack.c.h.b16 %v572
          %v1809 = vunpack.c.l.b16 %v573
          %v1810 = vunpack.c.h.b16 %v573
          %v1811 = vunpack.c.l.b16 %v574
          %v1812 = vunpack.c.h.b16 %v574
          %v1813 = vunpack.c.l.b16 %v575
          %v1814 = vunpack.c.h.b16 %v575
          %v1815 = vunpack.c.l.b16 %v576
          %v1816 = vunpack.c.h.b16 %v576
          %v1817 = vunpack.c.l.b16 %v577
          %v1818 = vunpack.c.h.b16 %v577
          %v1819 = vunpack.c.l.b16 %v578
          %v1820 = vunpack.c.h.b16 %v578
          %v1821 = vunpack.c.l.b16 %v579
          %v1822 = vunpack.c.h.b16 %v579
          %v1823 = vunpack.c.l.b16 %v580
          %v1824 = vunpack.c.h.b16 %v580
          %v1825 = vunpack.c.l.b16 %v581
          %v1826 = vunpack.c.h.b16 %v581
          %v1827 = vunpack.c.l.b16 %v582
          %v1828 = vunpack.c.h.b16 %v582
          %v1829 = vunpack.c.l.b16 %v583
          %v1830 = vunpack.c.h.b16 %v583
          %v1831 = vunpack.c.l.b16 %v584
          %v1832 = vunpack.c.h.b16 %v584
          %v1833 = vunpack.c.l.b16 %v585
          %v1834 = vunpack.c.h.b16 %v585
          %v1835 = vunpack.c.l.b16 %v586
          %v1836 = vunpack.c.h.b16 %v586
          %v1837 = vunpack.c.l.b16 %v587
          %v1838 = vunpack.c.h.b16 %v587
          %v1839 = vunpack.c.l.b16 %v588
          %v1840 = vunpack.c.h.b16 %v588
          %v1841 = vunpack.c.l.b16 %v589
          %v1842 = vunpack.c.h.b16 %v589
          %v1843 = vunpack.c.l.b16 %v590
          %v1844 = vunpack.c.h.b16 %v590
          %v1845 = vunpack.c.l.b16 %v591
          %v1846 = vunpack.c.h.b16 %v591
          %v1847 = vunpack.c.l.b16 %v592
          %v1848 = vunpack.c.h.b16 %v592
          %v1849 = vunpack.c.l.b16 %v593
          %v1850 = vunpack.c.h.b16 %v593
          %v1851 = vunpack.c.l.b16 %v594
          %v1852 = vunpack.c.h.b16 %v594
          %v1853 = vunpack.c.l.b16 %v595
          %v1854 = vunpack.c.h.b16 %v595
          %v1855 = vunpack.c.l.b16 %v596
          %v1856 = vunpack.c.h.b16 %v596
          %v1857 = vunpack.c.l.b16 %v597
          %v1858 = vunpack.c.h.b16 %v597
          %v1859 = vunpack.c.l.b16 %v598
          %v1860 = vunpack.c.h.b16 %v598
          %v1861 = vunpack.c.l.b16 %v599
          %v1862 = vunpack.c.h.b16 %v599
          %v1863 = vunpack.c.l.b16 %v600
          %v1864 = vunpack.c.h.b16 %v600
          %v1865 = vunpack.c.l.b16 %v601
          %v1866 = vunpack.c.h.b16 %v601
          %v1867 = vunpack.c.l.b16 %v602
          %v1868 = vunpack.c.h.b16 %v602
          %v1869 = vunpack.c.l.b16 %v603
          %v1870 = vunpack.c.h.b16 %v603
          %v1871 = vunpack.c.l.b16 %v604
          %v1872 = vunpack.c.h.b16 %v604
          %v1873 = vunpack.c.l.b16 %v605
          %v1874 = vunpack.c.h.b16 %v605
          %v1875 = vunpack.c.l.b16 %v606
          %v1876 = vunpack.c.h.b16 %v606
          %v1877 = vunpack.c.l.b16 %v607
          %v1878 = vunpack.c.h.b16 %v607
          %v1879 = vunpack.c.l.b16 %v608
          %v1880 = vunpack.c.h.b16 %v608
          %v1881 = vunpack.c.l.b16 %v609
          %v1882 = vunpack.c.h.b16 %v609
          %v1883 = vunpack.c.l.b16 %v610
          %v1884 = vunpack.c.h.b16 %v610
          %v1885 = vunpack.c.l.b16 %v611
          %v1886 = vunpack.c.h.b16 %v611
          %v1887 = vunpack.c.l.b16 %v612
          %v1888 = vunpack.c.h.b16 %v612
          %v1889 = vunpack.c.l.b16 %v613
          %v1890 = vunpack.c.h.b16 %v613
          %v1891 = vunpack.c.l.b16 %v614
          %v1892 = vunpack.c.h.b16 %v614
          %v1893 = vunpack.c.l.b16 %v615
          %v1894 = vunpack.c.h.b16 %v615
          %v1895 = vunpack.c.l.b16 %v616
          %v1896 = vunpack.c.h.b16 %v616
          %v1897 = vunpack.c.l.b16 %v617
          %v1898 = vunpack.c.h.b16 %v617
          %v1899 = vunpack.c.l.b16 %v618
          %v1900 = vunpack.c.h.b16 %v618
          %v1901 = vunpack.c.l.b16 %v619
          %v1902 = vunpack.c.h.b16 %v619
          %v1903 = vunpack.c.l.b16 %v620
          %v1904 = vunpack.c.h.b16 %v620
          %v1905 = vunpack.c.l.b16 %v621
          %v1906 = vunpack.c.h.b16 %v621
          %v1907 = vunpack.c.l.b16 %v622
          %v1908 = vunpack.c.h.b16 %v622
          %v1909 = vunpack.c.l.b16 %v623
          %v1910 = vunpack.c.h.b16 %v623
          %v1911 = vunpack.c.l.b16 %v624
          %v1912 = vunpack.c.h.b16 %v624
          %v1913 = vunpack.c.l.b16 %v625
          %v1914 = vunpack.c.h.b16 %v625
          %v1915 = vunpack.c.l.b16 %v626
          %v1916 = vunpack.c.h.b16 %v626
          %v1917 = vunpack.c.l.b16 %v627
          %v1918 = vunpack.c.h.b16 %v627
          %v1919 = vunpack.c.l.b16 %v628
          %v1920 = vunpack.c.h.b16 %v628
          %v1921 = vunpack.c.l.b16 %v629
          %v1922 = vunpack.c.h.b16 %v629
          %v1923 = vunpack.c.l.b16 %v630
          %v1924 = vunpack.c.h.b16 %v630
          %v1925 = vunpack.c.l.b16 %v631
          %v1926 = vunpack.c.h.b16 %v631
          %v1927 = vunpack.c.l.b16 %v632
          %v1928 = vunpack.c.h.b16 %v632
          %v1929 = vunpack.c.l.b16 %v633
          %v1930 = vunpack.c.h.b16 %v633
          %v1931 = vunpack.c.l.b16 %v634
          %v1932 = vunpack.c.h.b16 %v634
          %v1933 = vunpack.c.l.b16 %v635
          %v1934 = vunpack.c.h.b16 %v635
          %v1935 = vunpack.c.l.b16 %v636
          %v1936 = vunpack.c.h.b16 %v636
          %v1937 = vunpack.c.l.b16 %v637
          %v1938 = vunpack.c.h.b16 %v637
          %v1939 = vunpack.c.l.b16 %v638
          %v1940 = vunpack.c.h.b16 %v638
          %v1941 = vunpack.c.l.b16 %v639
          %v1942 = vunpack.c.h.b16 %v639
          %v1943 = vunpack.c.l.b16 %v640
          %v1944 = vunpack.c.h.b16 %v640
          %v1945 = vunpack.c.l.b16 %v641
          %v1946 = vunpack.c.h.b16 %v641
          %v1947 = vunpack.c.l.b16 %v642
          %v1948 = vunpack.c.h.b16 %v642
          %v1949 = vunpack.c.l.b16 %v643
          %v1950 = vunpack.c.h.b16 %v643
          %v1951 = vunpack.c.l.b16 %v644
          %v1952 = vunpack.c.h.b16 %v644
          %v1953 = vunpack.c.l.b16 %v645
          %v1954 = vunpack.c.h.b16 %v645
          %v1955 = vunpack.c.l.b16 %v646
          %v1956 = vunpack.c.h.b16 %v646
          %v1957 = vunpack.c.l.b16 %v647
          %v1958 = vunpack.c.h.b16 %v647
          %v1959 = vunpack.c.l.b16 %v648
          %v1960 = vunpack.c.h.b16 %v648
          %v1961 = vunpack.c.l.b16 %v649
          %v1962 = vunpack.c.h.b16 %v649
          %v1963 = vunpack.c.l.b16 %v650
          %v1964 = vunpack.c.h.b16 %v650
          %v1965 = vunpack.c.l.b16 %v651
          %v1966 = vunpack.c.h.b16 %v651
          %v1967 = vunpack.c.l.b16 %v652
          %v1968 = vunpack.c.h.b16 %v652
          %v1969 = vunpack.c.l.b16 %v653
          %v1970 = vunpack.c.h.b16 %v653
          %v1971 = vunpack.c.l.b16 %v654
          %v1972 = vunpack.c.h.b16 %v654
          %v1973 = vunpack.c.l.b16 %v655
          %v1974 = vunpack.c.h.b16 %v655
          %v1975 = vunpack.c.l.b16 %v656
          %v1976 = vunpack.c.h.b16 %v656
          %v1977 = vunpack.c.l.b16 %v657
          %v1978 = vunpack.c.h.b16 %v657
          %v1979 = vunpack.c.l.b16 %v658
          %v1980 = vunpack.c.h.b16 %v658
          %v1981 = vunpack.c.l.b16 %v659
          %v1982 = vunpack.c.h.b16 %v659
          %v1983 = vunpack.c.l.b16 %v660
          %v1984 = vunpack.c.h.b16 %v660
          %v1985 = vunpack.c.l.b16 %v661
          %v1986 = vunpack.c.h.b16 %v661
          %v1987 = vunpack.c.l.b16 %v662
          %v1988 = vunpack.c.h.b16 %v662
          %v1989 = vunpack.c.l.b16 %v663
          %v1990 = vunpack.c.h.b16 %v663
          %v1991 = vunpack.c.l.b16 %v664
          %v1992 = vunpack.c.h.b16 %v664
          %v1993 = vunpack.c.l.b16 %v665
          %v1994 = vunpack.c.h.b16 %v665
          %v1995 = vunpack.c.l.b16 %v666
          %v1996 = vunpack.c.h.b16 %v666
          %v1997 = vunpack.c.l.b16 %v667
          %v1998 = vunpack.c.h.b16 %v667
          %v1999 = vunpack.c.l.b16 %v668
          %v2000 = vunpack.c.h.b16 %v668
          %v2001 = vunpack.c.l.b16 %v669
          %v2002 = vunpack.c.h.b16 %v669
          %v2003 = vunpack.c.l.b16 %v670
          %v2004 = vunpack.c.h.b16 %v670
          %v2005 = vunpack.c.l.b16 %v671
          %v2006 = vunpack.c.h.b16 %v671
          %v2007 = vunpack.c.l.b16 %v672
          %v2008 = vunpack.c.h.b16 %v672
          %v2009 = vunpack.c.l.b16 %v673
          %v2010 = vunpack.c.h.b16 %v673
          %v2011 = vunpack.c.l.b16 %v674
          %v2012 = vunpack.c.h.b16 %v674
          %v2013 = vunpack.c.l.b16 %v675
          %v2014 = vunpack.c.h.b16 %v675
          %v2015 = vunpack.c.l.b16 %v676
          %v2016 = vunpack.c.h.b16 %v676
          %v2017 = vunpack.c.l.b16 %v677
          %v2018 = vunpack.c.h.b16 %v677
          %v2019 = vunpack.c.l.b16 %v678
          %v2020 = vunpack.c.h.b16 %v678
          %v2021 = vunpack.c.l.b16 %v679
          %v2022 = vunpack.c.h.b16 %v679
          %v2023 = vunpack.c.l.b16 %v680
          %v2024 = vunpack.c.h.b16 %v680
          %v2025 = vunpack.c.l.b16 %v681
          %v2026 = vunpack.c.h.b16 %v681
          %v2027 = vunpack.c.l.b16 %v682
          %v2028 = vunpack.c.h.b16 %v682
          %v2029 = vunpack.c.l.b16 %v683
          %v2030 = vunpack.c.h.b16 %v683
          %v2031 = vunpack.c.l.b16 %v684
          %v2032 = vunpack.c.h.b16 %v684
          %v2033 = vunpack.c.l.b16 %v685
          %v2034 = vunpack.c.h.b16 %v685
          %v2035 = vunpack.c.l.b16 %v686
          %v2036 = vunpack.c.h.b16 %v686
          %v2037 = vunpack.c.l.b16 %v687
          %v2038 = vunpack.c.h.b16 %v687
          %v2039 = vunpack.c.l.b16 %v688
          %v2040 = vunpack.c.h.b16 %v688
          %v2041 = vunpack.c.l.b16 %v689
          %v2042 = vunpack.c.h.b16 %v689
          %v2043 = vunpack.c.l.b16 %v690
          %v2044 = vunpack.c.h.b16 %v690
          %v2045 = vunpack.c.l.b16 %v691
          %v2046 = vunpack.c.h.b16 %v691
          %v2047 = vunpack.c.l.b16 %v692
          %v2048 = vunpack.c.h.b16 %v692
          %v2049 = vunpack.c.l.b16 %v693
          %v2050 = vunpack.c.h.b16 %v693
          %v2051 = vunpack.c.l.b16 %v694
          %v2052 = vunpack.c.h.b16 %v694
          %v2053 = vunpack.c.l.b16 %v695
          %v2054 = vunpack.c.h.b16 %v695
          %v2055 = vunpack.c.l.b16 %v696
          %v2056 = vunpack.c.h.b16 %v696
          %v2057 = vunpack.c.l.b16 %v697
          %v2058 = vunpack.c.h.b16 %v697
          %v2059 = vunpack.c.l.b16 %v698
          %v2060 = vunpack.c.h.b16 %v698
          %v2061 = vunpack.c.l.b16 %v699
          %v2062 = vunpack.c.h.b16 %v699
          %v2063 = vunpack.c.l.b16 %v700
          %v2064 = vunpack.c.h.b16 %v700
          %v2065 = vunpack.c.l.b16 %v701
          %v2066 = vunpack.c.h.b16 %v701
          %v2067 = vunpack.c.l.b16 %v702
          %v2068 = vunpack.c.h.b16 %v702
          %v2069 = vunpack.c.l.b16 %v703
          %v2070 = vunpack.c.h.b16 %v703
          %v2071 = vunpack.c.l.b16 %v704
          %v2072 = vunpack.c.h.b16 %v704
          %v2073 = vunpack.c.l.b16 %v705
          %v2074 = vunpack.c.h.b16 %v705
          %v2075 = vunpack.c.l.b16 %v706
          %v2076 = vunpack.c.h.b16 %v706
          %v2077 = vunpack.c.l.b16 %v707
          %v2078 = vunpack.c.h.b16 %v707
          %v2079 = vunpack.c.l.b16 %v708
          %v2080 = vunpack.c.h.b16 %v708
          %v2081 = vunpack.c.l.b16 %v709
          %v2082 = vunpack.c.h.b16 %v709
          %v2083 = vunpack.c.l.b16 %v710
          %v2084 = vunpack.c.h.b16 %v710
          %v2085 = vunpack.c.l.b16 %v711
          %v2086 = vunpack.c.h.b16 %v711
          %v2087 = vunpack.c.l.b16 %v712
          %v2088 = vunpack.c.h.b16 %v712
          %v2089 = vunpack.c.l.b16 %v713
          %v2090 = vunpack.c.h.b16 %v713
          %v2091 = vunpack.c.l.b16 %v714
          %v2092 = vunpack.c.h.b16 %v714
          %v2093 = vunpack.c.l.b16 %v715
          %v2094 = vunpack.c.h.b16 %v715
          %v2095 = vunpack.c.l.b16 %v716
          %v2096 = vunpack.c.h.b16 %v716
          %v2097 = vunpack.c.l.b16 %v717
          %v2098 = vunpack.c.h.b16 %v717
          %v2099 = vunpack.c.l.b16 %v718
          %v2100 = vunpack.c.h.b16 %v718
          %v2101 = vunpack.c.l.b16 %v719
          %v2102 = vunpack.c.h.b16 %v719
          %v2103 = vunpack.c.l.b16 %v720
          %v2104 = vunpack.c.h.b16 %v720
          %v2105 = vunpack.c.l.b16 %v721
          %v2106 = vunpack.c.h.b16 %v721
          %v2107 = vunpack.c.l.b16 %v722
          %v2108 = vunpack.c.h.b16 %v722
          %v2109 = vunpack.c.l.b16 %v723
          %v2110 = vunpack.c.h.b16 %v723
          %v2111 = vunpack.c.l.b16 %v724
          %v2112 = vunpack.c.h.b16 %v724
          %v2113 = vunpack.c.l.b16 %v725
          %v2114 = vunpack.c.h.b16 %v725
          %v2115 = vunpack.c.l.b16 %v726
          %v2116 = vunpack.c.h.b16 %v726
          %v2117 = vunpack.c.l.b16 %v727
          %v2118 = vunpack.c.h.b16 %v727
          %v2119 = vunpack.c.l.b16 %v728
          %v2120 = vunpack.c.h.b16 %v728
          %v2121 = vunpack.c.l.b16 %v729
          %v2122 = vunpack.c.h.b16 %v729
          %v2123 = vunpack.c.l.b16 %v730
          %v2124 = vunpack.c.h.b16 %v730
          %v2125 = vunpack.c.l.b16 %v731
          %v2126 = vunpack.c.h.b16 %v731
          %v2127 = vunpack.c.l.b16 %v732
          %v2128 = vunpack.c.h.b16 %v732
          %v2129 = vunpack.c.l.b16 %v733
          %v2130 = vunpack.c.h.b16 %v733
          %v2131 = vunpack.c.l.b16 %v734
          %v2132 = vunpack.c.h.b16 %v734
          %v2133 = vunpack.c.l.b16 %v735
          %v2134 = vunpack.c.h.b16 %v735
          %v2135 = vunpack.c.l.b16 %v736
          %v2136 = vunpack.c.h.b16 %v736
          %v2137 = vunpack.c.l.b16 %v737
          %v2138 = vunpack.c.h.b16 %v737
          %v2139 = vunpack.c.l.b16 %v738
          %v2140 = vunpack.c.h.b16 %v738
          %v2141 = vunpack.c.l.b16 %v739
          %v2142 = vunpack.c.h.b16 %v739
          %v2143 = vunpack.c.l.b16 %v740
          %v2144 = vunpack.c.h.b16 %v740
          %v2145 = vunpack.c.l.b16 %v741
          %v2146 = vunpack.c.h.b16 %v741
          %v2147 = vunpack.c.l.b16 %v742
          %v2148 = vunpack.c.h.b16 %v742
          %v2149 = vunpack.c.l.b16 %v743
          %v2150 = vunpack.c.h.b16 %v743
          %v2151 = vunpack.c.l.b16 %v744
          %v2152 = vunpack.c.h.b16 %v744
          %v2153 = vunpack.c.l.b16 %v745
          %v2154 = vunpack.c.h.b16 %v745
          %v2155 = vunpack.c.l.b16 %v746
          %v2156 = vunpack.c.h.b16 %v746
          %v2157 = vunpack.c.l.b16 %v747
          %v2158 = vunpack.c.h.b16 %v747
          %v2159 = vunpack.c.l.b16 %v748
          %v2160 = vunpack.c.h.b16 %v748
          %v2161 = vunpack.c.l.b16 %v749
          %v2162 = vunpack.c.h.b16 %v749
          %v2163 = vunpack.c.l.b16 %v750
          %v2164 = vunpack.c.h.b16 %v750
          %v2165 = vunpack.c.l.b16 %v751
          %v2166 = vunpack.c.h.b16 %v751
          %v2167 = vunpack.c.l.b16 %v752
          %v2168 = vunpack.c.h.b16 %v752
          %v2169 = vunpack.c.l.b16 %v753
          %v2170 = vunpack.c.h.b16 %v753
          %v2171 = vunpack.c.l.b16 %v754
          %v2172 = vunpack.c.h.b16 %v754
          %v2173 = vunpack.c.l.b16 %v755
          %v2174 = vunpack.c.h.b16 %v755
          %v2175 = vunpack.c.l.b16 %v756
          %v2176 = vunpack.c.h.b16 %v756
          %v2177 = vunpack.c.l.b16 %v757
          %v2178 = vunpack.c.h.b16 %v757
          %v2179 = vunpack.c.l.b16 %v758
          %v2180 = vunpack.c.h.b16 %v758
          %v2181 = vunpack.c.l.b16 %v759
          %v2182 = vunpack.c.h.b16 %v759
          %v2183 = vunpack.c.l.b16 %v760
          %v2184 = vunpack.c.h.b16 %v760
          %v2185 = vunpack.c.l.b16 %v761
          %v2186 = vunpack.c.h.b16 %v761
          %v2187 = vunpack.c.l.b16 %v762
          %v2188 = vunpack.c.h.b16 %v762
          %v2189 = vunpack.c.l.b16 %v763
          %v2190 = vunpack.c.h.b16 %v763
          %v2191 = vunpack.c.l.b16 %v764
          %v2192 = vunpack.c.h.b16 %v764
          %v2193 = vunpack.c.l.b16 %v765
          %v2194 = vunpack.c.h.b16 %v765
          %v2195 = vunpack.c.l.b16 %v766
          %v2196 = vunpack.c.h.b16 %v766
          %v2197 = vunpack.c.l.b16 %v767
          %v2198 = vunpack.c.h.b16 %v767
          %v2199 = vunpack.c.l.b16 %v768
          %v2200 = vunpack.c.h.b16 %v768
          %v2201 = vunpack.c.l.b16 %v769
          %v2202 = vunpack.c.h.b16 %v769
          %v2203 = vunpack.c.l.b16 %v770
          %v2204 = vunpack.c.h.b16 %v770
          %v2205 = vunpack.c.l.b16 %v771
          %v2206 = vunpack.c.h.b16 %v771
          %v2207 = vunpack.c.l.b16 %v772
          %v2208 = vunpack.c.h.b16 %v772
          %v2209 = vunpack.c.l.b16 %v773
          %v2210 = vunpack.c.h.b16 %v773
          %v2211 = vunpack.c.l.b16 %v774
          %v2212 = vunpack.c.h.b16 %v774
          %v2213 = vunpack.c.l.b16 %v775
          %v2214 = vunpack.c.h.b16 %v775
          %v2215 = vunpack.c.l.b16 %v776
          %v2216 = vunpack.c.h.b16 %v776
          %v2217 = vunpack.c.l.b16 %v777
          %v2218 = vunpack.c.h.b16 %v777
          %v2219 = vunpack.c.l.b16 %v778
          %v2220 = vunpack.c.h.b16 %v778
          %v2221 = vunpack.c.l.b16 %v779
          %v2222 = vunpack.c.h.b16 %v779
          %v2223 = vunpack.c.l.b16 %v780
          %v2224 = vunpack.c.h.b16 %v780
          %v2225 = vunpack.c.l.b16 %v781
          %v2226 = vunpack.c.h.b16 %v781
          %v2227 = vunpack.c.l.b16 %v782
          %v2228 = vunpack.c.h.b16 %v782
          %v2229 = vunpack.c.l.b16 %v783
          %v2230 = vunpack.c.h.b16 %v783
          %v2231 = vunpack.c.l.b16 %v784
          %v2232 = vunpack.c.h.b16 %v784
          %v2233 = vunpack.c.l.b16 %v785
          %v2234 = vunpack.c.h.b16 %v785
          %v2235 = vunpack.c.l.b16 %v786
          %v2236 = vunpack.c.h.b16 %v786
          %v2237 = vunpack.c.l.b16 %v787
          %v2238 = vunpack.c.h.b16 %v787
          %v2239 = vunpack.c.l.b16 %v788
          %v2240 = vunpack.c.h.b16 %v788
          %v2241 = vunpack.c.l.b16 %v789
          %v2242 = vunpack.c.h.b16 %v789
          %v2243 = vunpack.c.l.b16 %v790
          %v2244 = vunpack.c.h.b16 %v790
          %v2245 = vunpack.c.l.b16 %v791
          %v2246 = vunpack.c.h.b16 %v791
          %v2247 = vunpack.c.l.b16 %v792
          %v2248 = vunpack.c.h.b16 %v792
          %v2249 = vunpack.c.l.b16 %v793
          %v2250 = vunpack.c.h.b16 %v793
          %v2251 = vunpack.c.l.b16 %v794
          %v2252 = vunpack.c.h.b16 %v794
          %v2253 = vunpack.c.l.b16 %v795
          %v2254 = vunpack.c.h.b16 %v795
          %v2255 = vunpack.c.l.b16 %v796
          %v2256 = vunpack.c.h.b16 %v796
          %v2257 = vunpack.c.l.b16 %v797
          %v2258 = vunpack.c.h.b16 %v797
          %v2259 = vunpack.c.l.b16 %v798
          %v2260 = vunpack.c.h.b16 %v798
          %v2261 = vunpack.c.l.b16 %v799
          %v2262 = vunpack.c.h.b16 %v799
          %v2263 = vunpack.c.l.b16 %v800
          %v2264 = vunpack.c.h.b16 %v800
          %v2265 = vunpack.c.l.b16 %v801
          %v2266 = vunpack.c.h.b16 %v801
          %v2267 = vunpack.c.l.b16 %v802
          %v2268 = vunpack.c.h.b16 %v802
          %v2269 = vunpack.c.l.b16 %v803
          %v2270 = vunpack.c.h.b16 %v803
          %v2271 = vunpack.c.l.b16 %v804
          %v2272 = vunpack.c.h.b16 %v804
          %v2273 = vunpack.c.l.b16 %v805
          %v2274 = vunpack.c.h.b16 %v805
          %v2275 = vunpack.c.l.b16 %v806
          %v2276 = vunpack.c.h.b16 %v806
          %v2277 = vunpack.c.l.b16 %v807
          %v2278 = vunpack.c.h.b16 %v807
          %v2279 = vunpack.c.l.b16 %v808
          %v2280 = vunpack.c.h.b16 %v808
          %v2281 = vunpack.c.l.b16 %v809
          %v2282 = vunpack.c.h.b16 %v809
          %v2283 = vunpack.c.l.b16 %v810
          %v2284 = vunpack.c.h.b16 %v810
          %v2285 = vunpack.c.l.b16 %v811
          %v2286 = vunpack.c.h.b16 %v811
          %v2287 = vunpack.c.l.b16 %v812
          %v2288 = vunpack.c.h.b16 %v812
          %v2289 = vunpack.c.l.b16 %v813
          %v2290 = vunpack.c.h.b16 %v813
          %v2291 = vunpack.c.l.b16 %v814
          %v2292 = vunpack.c.h.b16 %v814
          %v2293 = vunpack.c.l.b16 %v815
          %v2294 = vunpack.c.h.b16 %v815
          %v2295 = vunpack.c.l.b16 %v816
          %v2296 = vunpack.c.h.b16 %v816
          %v2297 = vunpack.c.l.b16 %v817
          %v2298 = vunpack.c.h.b16 %v817
          %v2299 = vunpack.c.l.b16 %v818
          %v2300 = vunpack.c.h.b16 %v818
          %v2301 = vunpack.c.l.b16 %v819
          %v2302 = vunpack.c.h.b16 %v819
          %v2303 = vunpack.c.l.b16 %v820
          %v2304 = vunpack.c.h.b16 %v820
          %v2305 = vunpack.c.l.b16 %v821
          %v2306 = vunpack.c.h.b16 %v821
          %v2307 = vunpack.c.l.b16 %v822
          %v2308 = vunpack.c.h.b16 %v822
          %v2309 = vunpack.c.l.b16 %v823
          %v2310 = vunpack.c.h.b16 %v823
          %v2311 = vunpack.c.l.b16 %v824
          %v2312 = vunpack.c.h.b16 %v824
          %v2313 = vunpack.c.l.b16 %v825
          %v2314 = vunpack.c.h.b16 %v825
          %v2315 = vunpack.c.l.b16 %v826
          %v2316 = vunpack.c.h.b16 %v826
          %v2317 = vunpack.c.l.b16 %v827
          %v2318 = vunpack.c.h.b16 %v827
          %v2319 = vunpack.c.l.b16 %v828
          %v2320 = vunpack.c.h.b16 %v828
          %v2321 = vunpack.c.l.b16 %v829
          %v2322 = vunpack.c.h.b16 %v829
          %v2323 = vunpack.c.l.b16 %v830
          %v2324 = vunpack.c.h.b16 %v830
          %v2325 = vunpack.c.l.b16 %v831
          %v2326 = vunpack.c.h.b16 %v831
          %v2327 = vunpack.c.l.b16 %v832
          %v2328 = vunpack.c.h.b16 %v832
          %v2329 = vunpack.c.l.b16 %v833
          %v2330 = vunpack.c.h.b16 %v833
          %v2331 = vunpack.c.l.b16 %v834
          %v2332 = vunpack.c.h.b16 %v834
          %v2333 = vunpack.c.l.b16 %v835
          %v2334 = vunpack.c.h.b16 %v835
          %v2335 = vunpack.c.l.b16 %v836
          %v2336 = vunpack.c.h.b16 %v836
          %v2337 = vunpack.c.l.b16 %v837
          %v2338 = vunpack.c.h.b16 %v837
          %v2339 = vunpack.c.l.b16 %v838
          %v2340 = vunpack.c.h.b16 %v838
          %v2341 = vunpack.c.l.b16 %v839
          %v2342 = vunpack.c.h.b16 %v839
          %v2343 = vunpack.c.l.b16 %v840
          %v2344 = vunpack.c.h.b16 %v840
          %v2345 = vunpack.c.l.b16 %v841
          %v2346 = vunpack.c.h.b16 %v841
          %v2347 = vunpack.c.l.b16 %v842
          %v2348 = vunpack.c.h.b16 %v842
          %v2349 = vunpack.c.l.b16 %v843
          %v2350 = vunpack.c.h.b16 %v843
          %v2351 = vunpack.c.l.b16 %v844
          %v2352 = vunpack.c.h.b16 %v844
          %v2353 = vunpack.c.l.b16 %v845
          %v2354 = vunpack.c.h.b16 %v845
          %v2355 = vunpack.c.l.b16 %v846
          %v2356 = vunpack.c.h.b16 %v846
          %v2357 = vunpack.c.l.b16 %v847
          %v2358 = vunpack.c.h.b16 %v847
          %v2359 = vunpack.c.l.b16 %v848
          %v2360 = vunpack.c.h.b16 %v848
          %v2361 = vunpack.c.l.b16 %v849
          %v2362 = vunpack.c.h.b16 %v849
          %v2363 = vunpack.c.l.b16 %v850
          %v2364 = vunpack.c.h.b16 %v850
          %v2365 = vunpack.c.l.b16 %v851
          %v2366 = vunpack.c.h.b16 %v851
          %v2367 = vunpack.c.l.b16 %v852
          %v2368 = vunpack.c.h.b16 %v852
          %v2369 = vunpack.c.l.b16 %v853
          %v2370 = vunpack.c.h.b16 %v853
          %v2371 = vunpack.c.l.b16 %v854
          %v2372 = vunpack.c.h.b16 %v854
          %v2373 = vunpack.c.l.b16 %v855
          %v2374 = vunpack.c.h.b16 %v855
          %v2375 = vunpack.c.l.b16 %v856
          %v2376 = vunpack.c.h.b16 %v856
          %v2377 = vunpack.c.l.b16 %v857
          %v2378 = vunpack.c.h.b16 %v857
          %v2379 = vunpack.c.l.b16 %v858
          %v2380 = vunpack.c.h.b16 %v858
          %v2381 = vunpack.c.l.b16 %v859
          %v2382 = vunpack.c.h.b16 %v859
          %v2383 = vunpack.c.l.b16 %v860
          %v2384 = vunpack.c.h.b16 %v860
          %v2385 = vunpack.c.l.b16 %v861
          %v2386 = vunpack.c.h.b16 %v861
          %v2387 = vunpack.c.l.b16 %v862
          %v2388 = vunpack.c.h.b16 %v862
          %v2389 = vunpack.c.l.b16 %v863
          %v2390 = vunpack.c.h.b16 %v863
          %v2391 = vunpack.c.l.b16 %v864
          %v2392 = vunpack.c.h.b16 %v864
          %v2393 = vunpack.c.l.b16 %v865
          %v2394 = vunpack.c.h.b16 %v865
          %v2395 = vunpack.c.l.b16 %v866
          %v2396 = vunpack.c.h.b16 %v866
          %v2397 = vunpack.c.l.b16 %v867
          %v2398 = vunpack.c.h.b16 %v867
          %v2399 = vunpack.c.l.b16 %v868
          %v2400 = vunpack.c.h.b16 %v868
          %v2401 = vunpack.c.l.b16 %v869
          %v2402 = vunpack.c.h.b16 %v869
          %v2403 = vunpack.c.l.b16 %v870
          %v2404 = vunpack.c.h.b16 %v870
          %v2405 = vunpack.c.l.b16 %v871
          %v2406 = vunpack.c.h.b16 %v871
          %v2407 = vunpack.c.l.b16 %v872
          %v2408 = vunpack.c.h.b16 %v872
          %v2409 = vunpack.c.l.b16 %v873
          %v2410 = vunpack.c.h.b16 %v873
          %v2411 = vunpack.c.l.b16 %v874
          %v2412 = vunpack.c.h.b16 %v874
          %v2413 = vunpack.c.l.b16 %v875
          %v2414 = vunpack.c.h.b16 %v875
          %v2415 = vunpack.c.l.b16 %v876
          %v2416 = vunpack.c.h.b16 %v876
          %v2417 = vunpack.c.l.b16 %v877
          %v2418 = vunpack.c.h.b16 %v877
          %v2419 = vunpack.c.l.b16 %v878
          %v2420 = vunpack.c.h.b16 %v878
          %v2421 = vunpack.c.l.b16 %v879
          %v2422 = vunpack.c.h.b16 %v879
          %v2423 = vunpack.c.l.b16 %v880
          %v2424 = vunpack.c.h.b16 %v880
          %v2425 = vunpack.c.l.b16 %v881
          %v2426 = vunpack.c.h.b16 %v881
          %v2427 = vunpack.c.l.b16 %v882
          %v2428 = vunpack.c.h.b16 %v882
          %v2429 = vunpack.c.l.b16 %v883
          %v2430 = vunpack.c.h.b16 %v883
          %v2431 = vunpack.c.l.b16 %v884
          %v2432 = vunpack.c.h.b16 %v884
          %v2433 = vunpack.c.l.b16 %v885
          %v2434 = vunpack.c.h.b16 %v885
          %v2435 = vunpack.c.l.b16 %v886
          %v2436 = vunpack.c.h.b16 %v886
          %v2437 = vpack.c.b16 %v1429, %v1413
          %v2438 = vpack.c.b16 %v1430, %v1414
          %v2439 = vpack.c.b16 %v1431, %v1415
          %v2440 = vpack.c.b16 %v1432, %v1416
          %v2441 = vpack.c.b16 %v1433, %v1417
          %v2442 = vpack.c.b16 %v1434, %v1418
          %v2443 = vpack.c.b16 %v1435, %v1419
          %v2444 = vpack.c.b16 %v1436, %v1420
          %v2445 = vpack.c.b16 %v1437, %v1421
          %v2446 = vpack.c.b16 %v1438, %v1422
          %v2447 = vpack.c.b16 %v1439, %v1423
          %v2448 = vpack.c.b16 %v1440, %v1424
          %v2449 = vpack.c.b16 %v1441, %v1425
          %v2450 = vpack.c.b16 %v1442, %v1426
          %v2451 = vpack.c.b16 %v1443, %v1427
          %v2452 = vpack.c.b16 %v1444, %v1428
          %v2453 = vpack.c.b16 %v1461, %v1445
          %v2454 = vpack.c.b16 %v1462, %v1446
          %v2455 = vpack.c.b16 %v1463, %v1447
          %v2456 = vpack.c.b16 %v1464, %v1448
          %v2457 = vpack.c.b16 %v1465, %v1449
          %v2458 = vpack.c.b16 %v1466, %v1450
          %v2459 = vpack.c.b16 %v1467, %v1451
          %v2460 = vpack.c.b16 %v1468, %v1452
          %v2461 = vpack.c.b16 %v1469, %v1453
          %v2462 = vpack.c.b16 %v1470, %v1454
          %v2463 = vpack.c.b16 %v1471, %v1455
          %v2464 = vpack.c.b16 %v1472, %v1456
          %v2465 = vpack.c.b16 %v1473, %v1457
          %v2466 = vpack.c.b16 %v1474, %v1458
          %v2467 = vpack.c.b16 %v1475, %v1459
          %v2468 = vpack.c.b16 %v1476, %v1460
          %v2469 = vpack.c.b16 %v1493, %v1477
          %v2470 = vpack.c.b16 %v1494, %v1478
          %v2471 = vpack.c.b16 %v1495, %v1479
          %v2472 = vpack.c.b16 %v1496, %v1480
          %v2473 = vpack.c.b16 %v1497, %v1481
          %v2474 = vpack.c.b16 %v1498, %v1482
          %v2475 = vpack.c.b16 %v1499, %v1483
          %v2476 = vpack.c.b16 %v1500, %v1484
          %v2477 = vpack.c.b16 %v1501, %v1485
          %v2478 = vpack.c.b16 %v1502, %v1486
          %v2479 = vpack.c.b16 %v1503, %v1487
          %v2480 = vpack.c.b16 %v1504, %v1488
          %v2481 = vpack.c.b16 %v1505, %v1489
          %v2482 = vpack.c.b16 %v1506, %v1490
          %v2483 = vpack.c.b16 %v1507, %v1491
          %v2484 = vpack.c.b16 %v1508, %v1492
          %v2485 = vpack.c.b16 %v1525, %v1509
          %v2486 = vpack.c.b16 %v1526, %v1510
          %v2487 = vpack.c.b16 %v1527, %v1511
          %v2488 = vpack.c.b16 %v1528, %v1512
          %v2489 = vpack.c.b16 %v1529, %v1513
          %v2490 = vpack.c.b16 %v1530, %v1514
          %v2491 = vpack.c.b16 %v1531, %v1515
          %v2492 = vpack.c.b16 %v1532, %v1516
          %v2493 = vpack.c.b16 %v1533, %v1517
          %v2494 = vpack.c.b16 %v1534, %v1518
          %v2495 = vpack.c.b16 %v1535, %v1519
          %v2496 = vpack.c.b16 %v1536, %v1520
          %v2497 = vpack.c.b16 %v1537, %v1521
          %v2498 = vpack.c.b16 %v1538, %v1522
          %v2499 = vpack.c.b16 %v1539, %v1523
          %v2500 = vpack.c.b16 %v1540, %v1524
          %v2501 = vpack.c.b16 %v1557, %v1541
          %v2502 = vpack.c.b16 %v1558, %v1542
          %v2503 = vpack.c.b16 %v1559, %v1543
          %v2504 = vpack.c.b16 %v1560, %v1544
          %v2505 = vpack.c.b16 %v1561, %v1545
          %v2506 = vpack.c.b16 %v1562, %v1546
          %v2507 = vpack.c.b16 %v1563, %v1547
          %v2508 = vpack.c.b16 %v1564, %v1548
          %v2509 = vpack.c.b16 %v1565, %v1549
          %v2510 = vpack.c.b16 %v1566, %v1550
          %v2511 = vpack.c.b16 %v1567, %v1551
          %v2512 = vpack.c.b16 %v1568, %v1552
          %v2513 = vpack.c.b16 %v1569, %v1553
          %v2514 = vpack.c.b16 %v1570, %v1554
          %v2515 = vpack.c.b16 %v1571, %v1555
          %v2516 = vpack.c.b16 %v1572, %v1556
          %v2517 = vpack.c.b16 %v1589, %v1573
          %v2518 = vpack.c.b16 %v1590, %v1574
          %v2519 = vpack.c.b16 %v1591, %v1575
          %v2520 = vpack.c.b16 %v1592, %v1576
          %v2521 = vpack.c.b16 %v1593, %v1577
          %v2522 = vpack.c.b16 %v1594, %v1578
          %v2523 = vpack.c.b16 %v1595, %v1579
          %v2524 = vpack.c.b16 %v1596, %v1580
          %v2525 = vpack.c.b16 %v1597, %v1581
          %v2526 = vpack.c.b16 %v1598, %v1582
          %v2527 = vpack.c.b16 %v1599, %v1583
          %v2528 = vpack.c.b16 %v1600, %v1584
          %v2529 = vpack.c.b16 %v1601, %v1585
          %v2530 = vpack.c.b16 %v1602, %v1586
          %v2531 = vpack.c.b16 %v1603, %v1587
          %v2532 = vpack.c.b16 %v1604, %v1588
          %v2533 = vpack.c.b16 %v1621, %v1605
          %v2534 = vpack.c.b16 %v1622, %v1606
          %v2535 = vpack.c.b16 %v1623, %v1607
          %v2536 = vpack.c.b16 %v1624, %v1608
          %v2537 = vpack.c.b16 %v1625, %v1609
          %v2538 = vpack.c.b16 %v1626, %v1610
          %v2539 = vpack.c.b16 %v1627, %v1611
          %v2540 = vpack.c.b16 %v1628, %v1612
          %v2541 = vpack.c.b16 %v1629, %v1613
          %v2542 = vpack.c.b16 %v1630, %v1614
          %v2543 = vpack.c.b16 %v1631, %v1615
          %v2544 = vpack.c.b16 %v1632, %v1616
          %v2545 = vpack.c.b16 %v1633, %v1617
          %v2546 = vpack.c.b16 %v1634, %v1618
          %v2547 = vpack.c.b16 %v1635, %v1619
          %v2548 = vpack.c.b16 %v1636, %v1620
          %v2549 = vpack.c.b16 %v1653, %v1637
          %v2550 = vpack.c.b16 %v1654, %v1638
          %v2551 = vpack.c.b16 %v1655, %v1639
          %v2552 = vpack.c.b16 %v1656, %v1640
          %v2553 = vpack.c.b16 %v1657, %v1641
          %v2554 = vpack.c.b16 %v1658, %v1642
          %v2555 = vpack.c.b16 %v1659, %v1643
          %v2556 = vpack.c.b16 %v1660, %v1644
          %v2557 = vpack.c.b16 %v1661, %v1645
          %v2558 = vpack.c.b16 %v1662, %v1646
          %v2559 = vpack.c.b16 %v1663, %v1647
          %v2560 = vpack.c.b16 %v1664, %v1648
          %v2561 = vpack.c.b16 %v1665, %v1649
          %v2562 = vpack.c.b16 %v1666, %v1650
          %v2563 = vpack.c.b16 %v1667, %v1651
          %v2564 = vpack.c.b16 %v1668, %v1652
          %v2565 = vpack.c.b16 %v1685, %v1669
          %v2566 = vpack.c.b16 %v1686, %v1670
          %v2567 = vpack.c.b16 %v1687, %v1671
          %v2568 = vpack.c.b16 %v1688, %v1672
          %v2569 = vpack.c.b16 %v1689, %v1673
          %v2570 = vpack.c.b16 %v1690, %v1674
          %v2571 = vpack.c.b16 %v1691, %v1675
          %v2572 = vpack.c.b16 %v1692, %v1676
          %v2573 = vpack.c.b16 %v1693, %v1677
          %v2574 = vpack.c.b16 %v1694, %v1678
          %v2575 = vpack.c.b16 %v1695, %v1679
          %v2576 = vpack.c.b16 %v1696, %v1680
          %v2577 = vpack.c.b16 %v1697, %v1681
          %v2578 = vpack.c.b16 %v1698, %v1682
          %v2579 = vpack.c.b16 %v1699, %v1683
          %v2580 = vpack.c.b16 %v1700, %v1684
          %v2581 = vpack.c.b16 %v1717, %v1701
          %v2582 = vpack.c.b16 %v1718, %v1702
          %v2583 = vpack.c.b16 %v1719, %v1703
          %v2584 = vpack.c.b16 %v1720, %v1704
          %v2585 = vpack.c.b16 %v1721, %v1705
          %v2586 = vpack.c.b16 %v1722, %v1706
          %v2587 = vpack.c.b16 %v1723, %v1707
          %v2588 = vpack.c.b16 %v1724, %v1708
          %v2589 = vpack.c.b16 %v1725, %v1709
          %v2590 = vpack.c.b16 %v1726, %v1710
          %v2591 = vpack.c.b16 %v1727, %v1711
          %v2592 = vpack.c.b16 %v1728, %v1712
          %v2593 = vpack.c.b16 %v1729, %v1713
          %v2594 = vpack.c.b16 %v1730, %v1714
          %v2595 = vpack.c.b16 %v1731, %v1715
          %v2596 = vpack.c.b16 %v1732, %v1716
          %v2597 = vpack.c.b16 %v1749, %v1733
          %v2598 = vpack.c.b16 %v1750, %v1734
          %v2599 = vpack.c.b16 %v1751, %v1735
          %v2600 = vpack.c.b16 %v1752, %v1736
          %v2601 = vpack.c.b16 %v1753, %v1737
          %v2602 = vpack.c.b16 %v1754, %v1738
          %v2603 = vpack.c.b16 %v1755, %v1739
          %v2604 = vpack.c.b16 %v1756, %v1740
          %v2605 = vpack.c.b16 %v1757, %v1741
          %v2606 = vpack.c.b16 %v1758, %v1742
          %v2607 = vpack.c.b16 %v1759, %v1743
          %v2608 = vpack.c.b16 %v1760, %v1744
          %v2609 = vpack.c.b16 %v1761, %v1745
          %v2610 = vpack.c.b16 %v1762, %v1746
          %v2611 = vpack.c.b16 %v1763, %v1747
          %v2612 = vpack.c.b16 %v1764, %v1748
          %v2613 = vpack.c.b16 %v1781, %v1765
          %v2614 = vpack.c.b16 %v1782, %v1766
          %v2615 = vpack.c.b16 %v1783, %v1767
          %v2616 = vpack.c.b16 %v1784, %v1768
          %v2617 = vpack.c.b16 %v1785, %v1769
          %v2618 = vpack.c.b16 %v1786, %v1770
          %v2619 = vpack.c.b16 %v1787, %v1771
          %v2620 = vpack.c.b16 %v1788, %v1772
          %v2621 = vpack.c.b16 %v1789, %v1773
          %v2622 = vpack.c.b16 %v1790, %v1774
          %v2623 = vpack.c.b16 %v1791, %v1775
          %v2624 = vpack.c.b16 %v1792, %v1776
          %v2625 = vpack.c.b16 %v1793, %v1777
          %v2626 = vpack.c.b16 %v1794, %v1778
          %v2627 = vpack.c.b16 %v1795, %v1779
          %v2628 = vpack.c.b16 %v1796, %v1780
          %v2629 = vpack.c.b16 %v1813, %v1797
          %v2630 = vpack.c.b16 %v1814, %v1798
          %v2631 = vpack.c.b16 %v1815, %v1799
          %v2632 = vpack.c.b16 %v1816, %v1800
          %v2633 = vpack.c.b16 %v1817, %v1801
          %v2634 = vpack.c.b16 %v1818, %v1802
          %v2635 = vpack.c.b16 %v1819, %v1803
          %v2636 = vpack.c.b16 %v1820, %v1804
          %v2637 = vpack.c.b16 %v1821, %v1805
          %v2638 = vpack.c.b16 %v1822, %v1806
          %v2639 = vpack.c.b16 %v1823, %v1807
          %v2640 = vpack.c.b16 %v1824, %v1808
          %v2641 = vpack.c.b16 %v1825, %v1809
          %v2642 = vpack.c.b16 %v1826, %v1810
          %v2643 = vpack.c.b16 %v1827, %v1811
          %v2644 = vpack.c.b16 %v1828, %v1812
          %v2645 = vpack.c.b16 %v1845, %v1829
          %v2646 = vpack.c.b16 %v1846, %v1830
          %v2647 = vpack.c.b16 %v1847, %v1831
          %v2648 = vpack.c.b16 %v1848, %v1832
          %v2649 = vpack.c.b16 %v1849, %v1833
          %v2650 = vpack.c.b16 %v1850, %v1834
          %v2651 = vpack.c.b16 %v1851, %v1835
          %v2652 = vpack.c.b16 %v1852, %v1836
          %v2653 = vpack.c.b16 %v1853, %v1837
          %v2654 = vpack.c.b16 %v1854, %v1838
          %v2655 = vpack.c.b16 %v1855, %v1839
          %v2656 = vpack.c.b16 %v1856, %v1840
          %v2657 = vpack.c.b16 %v1857, %v1841
          %v2658 = vpack.c.b16 %v1858, %v1842
          %v2659 = vpack.c.b16 %v1859, %v1843
          %v2660 = vpack.c.b16 %v1860, %v1844
          %v2661 = vpack.c.b16 %v1877, %v1861
          %v2662 = vpack.c.b16 %v1878, %v1862
          %v2663 = vpack.c.b16 %v1879, %v1863
          %v2664 = vpack.c.b16 %v1880, %v1864
          %v2665 = vpack.c.b16 %v1881, %v1865
          %v2666 = vpack.c.b16 %v1882, %v1866
          %v2667 = vpack.c.b16 %v1883, %v1867
          %v2668 = vpack.c.b16 %v1884, %v1868
          %v2669 = vpack.c.b16 %v1885, %v1869
          %v2670 = vpack.c.b16 %v1886, %v1870
          %v2671 = vpack.c.b16 %v1887, %v1871
          %v2672 = vpack.c.b16 %v1888, %v1872
          %v2673 = vpack.c.b16 %v1889, %v1873
          %v2674 = vpack.c.b16 %v1890, %v1874
          %v2675 = vpack.c.b16 %v1891, %v1875
          %v2676 = vpack.c.b16 %v1892, %v1876
          %v2677 = vpack.c.b16 %v1909, %v1893
          %v2678 = vpack.c.b16 %v1910, %v1894
          %v2679 = vpack.c.b16 %v1911, %v1895
          %v2680 = vpack.c.b16 %v1912, %v1896
          %v2681 = vpack.c.b16 %v1913, %v1897
          %v2682 = vpack.c.b16 %v1914, %v1898
          %v2683 = vpack.c.b16 %v1915, %v1899
          %v2684 = vpack.c.b16 %v1916, %v1900
          %v2685 = vpack.c.b16 %v1917, %v1901
          %v2686 = vpack.c.b16 %v1918, %v1902
          %v2687 = vpack.c.b16 %v1919, %v1903
          %v2688 = vpack.c.b16 %v1920, %v1904
          %v2689 = vpack.c.b16 %v1921, %v1905
          %v2690 = vpack.c.b16 %v1922, %v1906
          %v2691 = vpack.c.b16 %v1923, %v1907
          %v2692 = vpack.c.b16 %v1924, %v1908
          %v2693 = vpack.c.b16 %v1941, %v1925
          %v2694 = vpack.c.b16 %v1942, %v1926
          %v2695 = vpack.c.b16 %v1943, %v1927
          %v2696 = vpack.c.b16 %v1944, %v1928
          %v2697 = vpack.c.b16 %v1945, %v1929
          %v2698 = vpack.c.b16 %v1946, %v1930
          %v2699 = vpack.c.b16 %v1947, %v1931
          %v2700 = vpack.c.b16 %v1948, %v1932
          %v2701 = vpack.c.b16 %v1949, %v1933
          %v2702 = vpack.c.b16 %v1950, %v1934
          %v2703 = vpack.c.b16 %v1951, %v1935
          %v2704 = vpack.c.b16 %v1952, %v1936
          %v2705 = vpack.c.b16 %v1953, %v1937
          %v2706 = vpack.c.b16 %v1954, %v1938
          %v2707 = vpack.c.b16 %v1955, %v1939
          %v2708 = vpack.c.b16 %v1956, %v1940
          %v2709 = vpack.c.b16 %v1973, %v1957
          %v2710 = vpack.c.b16 %v1974, %v1958
          %v2711 = vpack.c.b16 %v1975, %v1959
          %v2712 = vpack.c.b16 %v1976, %v1960
          %v2713 = vpack.c.b16 %v1977, %v1961
          %v2714 = vpack.c.b16 %v1978, %v1962
          %v2715 = vpack.c.b16 %v1979, %v1963
          %v2716 = vpack.c.b16 %v1980, %v1964
          %v2717 = vpack.c.b16 %v1981, %v1965
          %v2718 = vpack.c.b16 %v1982, %v1966
          %v2719 = vpack.c.b16 %v1983, %v1967
          %v2720 = vpack.c.b16 %v1984, %v1968
          %v2721 = vpack.c.b16 %v1985, %v1969
          %v2722 = vpack.c.b16 %v1986, %v1970
          %v2723 = vpack.c.b16 %v1987, %v1971
          %v2724 = vpack.c.b16 %v1988, %v1972
          %v2725 = vpack.c.b16 %v2005, %v1989
          %v2726 = vpack.c.b16 %v2006, %v1990
          %v2727 = vpack.c.b16 %v2007, %v1991
          %v2728 = vpack.c.b16 %v2008, %v1992
          %v2729 = vpack.c.b16 %v2009, %v1993
          %v2730 = vpack.c.b16 %v2010, %v1994
          %v2731 = vpack.c.b16 %v2011, %v1995
          %v2732 = vpack.c.b16 %v2012, %v1996
          %v2733 = vpack.c.b16 %v2013, %v1997
          %v2734 = vpack.c.b16 %v2014, %v1998
          %v2735 = vpack.c.b16 %v2015, %v1999
          %v2736 = vpack.c.b16 %v2016, %v2000
          %v2737 = vpack.c.b16 %v2017, %v2001
          %v2738 = vpack.c.b16 %v2018, %v2002
          %v2739 = vpack.c.b16 %v2019, %v2003
          %v2740 = vpack.c.b16 %v2020, %v2004
          %v2741 = vpack.c.b16 %v2037, %v2021
          %v2742 = vpack.c.b16 %v2038, %v2022
          %v2743 = vpack.c.b16 %v2039, %v2023
          %v2744 = vpack.c.b16 %v2040, %v2024
          %v2745 = vpack.c.b16 %v2041, %v2025
          %v2746 = vpack.c.b16 %v2042, %v2026
          %v2747 = vpack.c.b16 %v2043, %v2027
          %v2748 = vpack.c.b16 %v2044, %v2028
          %v2749 = vpack.c.b16 %v2045, %v2029
          %v2750 = vpack.c.b16 %v2046, %v2030
          %v2751 = vpack.c.b16 %v2047, %v2031
          %v2752 = vpack.c.b16 %v2048, %v2032
          %v2753 = vpack.c.b16 %v2049, %v2033
          %v2754 = vpack.c.b16 %v2050, %v2034
          %v2755 = vpack.c.b16 %v2051, %v2035
          %v2756 = vpack.c.b16 %v2052, %v2036
          %v2757 = vpack.c.b16 %v2069, %v2053
          %v2758 = vpack.c.b16 %v2070, %v2054
          %v2759 = vpack.c.b16 %v2071, %v2055
          %v2760 = vpack.c.b16 %v2072, %v2056
          %v2761 = vpack.c.b16 %v2073, %v2057
          %v2762 = vpack.c.b16 %v2074, %v2058
          %v2763 = vpack.c.b16 %v2075, %v2059
          %v2764 = vpack.c.b16 %v2076, %v2060
          %v2765 = vpack.c.b16 %v2077, %v2061
          %v2766 = vpack.c.b16 %v2078, %v2062
          %v2767 = vpack.c.b16 %v2079, %v2063
          %v2768 = vpack.c.b16 %v2080, %v2064
          %v2769 = vpack.c.b16 %v2081, %v2065
          %v2770 = vpack.c.b16 %v2082, %v2066
          %v2771 = vpack.c.b16 %v2083, %v2067
          %v2772 = vpack.c.b16 %v2084, %v2068
          %v2773 = vpack.c.b16 %v2101, %v2085
          %v2774 = vpack.c.b16 %v2102, %v2086
          %v2775 = vpack.c.b16 %v2103, %v2087
          %v2776 = vpack.c.b16 %v2104, %v2088
          %v2777 = vpack.c.b16 %v2105, %v2089
          %v2778 = vpack.c.b16 %v2106, %v2090
          %v2779 = vpack.c.b16 %v2107, %v2091
          %v2780 = vpack.c.b16 %v2108, %v2092
          %v2781 = vpack.c.b16 %v2109, %v2093
          %v2782 = vpack.c.b16 %v2110, %v2094
          %v2783 = vpack.c.b16 %v2111, %v2095
          %v2784 = vpack.c.b16 %v2112, %v2096
          %v2785 = vpack.c.b16 %v2113, %v2097
          %v2786 = vpack.c.b16 %v2114, %v2098
          %v2787 = vpack.c.b16 %v2115, %v2099
          %v2788 = vpack.c.b16 %v2116, %v2100
          %v2789 = vpack.c.b16 %v2133, %v2117
          %v2790 = vpack.c.b16 %v2134, %v2118
          %v2791 = vpack.c.b16 %v2135, %v2119
          %v2792 = vpack.c.b16 %v2136, %v2120
          %v2793 = vpack.c.b16 %v2137, %v2121
          %v2794 = vpack.c.b16 %v2138, %v2122
          %v2795 = vpack.c.b16 %v2139, %v2123
          %v2796 = vpack.c.b16 %v2140, %v2124
          %v2797 = vpack.c.b16 %v2141, %v2125
          %v2798 = vpack.c.b16 %v2142, %v2126
          %v2799 = vpack.c.b16 %v2143, %v2127
          %v2800 = vpack.c.b16 %v2144, %v2128
          %v2801 = vpack.c.b16 %v2145, %v2129
          %v2802 = vpack.c.b16 %v2146, %v2130
          %v2803 = vpack.c.b16 %v2147, %v2131
          %v2804 = vpack.c.b16 %v2148, %v2132
          %v2805 = vpack.c.b16 %v2165, %v2149
          %v2806 = vpack.c.b16 %v2166, %v2150
          %v2807 = vpack.c.b16 %v2167, %v2151
          %v2808 = vpack.c.b16 %v2168, %v2152
          %v2809 = vpack.c.b16 %v2169, %v2153
          %v2810 = vpack.c.b16 %v2170, %v2154
          %v2811 = vpack.c.b16 %v2171, %v2155
          %v2812 = vpack.c.b16 %v2172, %v2156
          %v2813 = vpack.c.b16 %v2173, %v2157
          %v2814 = vpack.c.b16 %v2174, %v2158
          %v2815 = vpack.c.b16 %v2175, %v2159
          %v2816 = vpack.c.b16 %v2176, %v2160
          %v2817 = vpack.c.b16 %v2177, %v2161
          %v2818 = vpack.c.b16 %v2178, %v2162
          %v2819 = vpack.c.b16 %v2179, %v2163
          %v2820 = vpack.c.b16 %v2180, %v2164
          %v2821 = vpack.c.b16 %v2197, %v2181
          %v2822 = vpack.c.b16 %v2198, %v2182
          %v2823 = vpack.c.b16 %v2199, %v2183
          %v2824 = vpack.c.b16 %v2200, %v2184
          %v2825 = vpack.c.b16 %v2201, %v2185
          %v2826 = vpack.c.b16 %v2202, %v2186
          %v2827 = vpack.c.b16 %v2203, %v2187
          %v2828 = vpack.c.b16 %v2204, %v2188
          %v2829 = vpack.c.b16 %v2205, %v2189
          %v2830 = vpack.c.b16 %v2206, %v2190
          %v2831 = vpack.c.b16 %v2207, %v2191
          %v2832 = vpack.c.b16 %v2208, %v2192
          %v2833 = vpack.c.b16 %v2209, %v2193
          %v2834 = vpack.c.b16 %v2210, %v2194
          %v2835 = vpack.c.b16 %v2211, %v2195
          %v2836 = vpack.c.b16 %v2212, %v2196
          %v2837 = vpack.c.b16 %v2229, %v2213
          %v2838 = vpack.c.b16 %v2230, %v2214
          %v2839 = vpack.c.b16 %v2231, %v2215
          %v2840 = vpack.c.b16 %v2232, %v2216
          %v2841 = vpack.c.b16 %v2233, %v2217
          %v2842 = vpack.c.b16 %v2234, %v2218
          %v2843 = vpack.c.b16 %v2235, %v2219
          %v2844 = vpack.c.b16 %v2236, %v2220
          %v2845 = vpack.c.b16 %v2237, %v2221
          %v2846 = vpack.c.b16 %v2238, %v2222
          %v2847 = vpack.c.b16 %v2239, %v2223
          %v2848 = vpack.c.b16 %v2240, %v2224
          %v2849 = vpack.c.b16 %v2241, %v2225
          %v2850 = vpack.c.b16 %v2242, %v2226
          %v2851 = vpack.c.b16 %v2243, %v2227
          %v2852 = vpack.c.b16 %v2244, %v2228
          %v2853 = vpack.c.b16 %v2261, %v2245
          %v2854 = vpack.c.b16 %v2262, %v2246
          %v2855 = vpack.c.b16 %v2263, %v2247
          %v2856 = vpack.c.b16 %v2264, %v2248
          %v2857 = vpack.c.b16 %v2265, %v2249
          %v2858 = vpack.c.b16 %v2266, %v2250
          %v2859 = vpack.c.b16 %v2267, %v2251
          %v2860 = vpack.c.b16 %v2268, %v2252
          %v2861 = vpack.c.b16 %v2269, %v2253
          %v2862 = vpack.c.b16 %v2270, %v2254
          %v2863 = vpack.c.b16 %v2271, %v2255
          %v2864 = vpack.c.b16 %v2272, %v2256
          %v2865 = vpack.c.b16 %v2273, %v2257
          %v2866 = vpack.c.b16 %v2274, %v2258
          %v2867 = vpack.c.b16 %v2275, %v2259
          %v2868 = vpack.c.b16 %v2276, %v2260
          %v2869 = vpack.c.b16 %v2293, %v2277
          %v2870 = vpack.c.b16 %v2294, %v2278
          %v2871 = vpack.c.b16 %v2295, %v2279
          %v2872 = vpack.c.b16 %v2296, %v2280
          %v2873 = vpack.c.b16 %v2297, %v2281
          %v2874 = vpack.c.b16 %v2298, %v2282
          %v2875 = vpack.c.b16 %v2299, %v2283
          %v2876 = vpack.c.b16 %v2300, %v2284
          %v2877 = vpack.c.b16 %v2301, %v2285
          %v2878 = vpack.c.b16 %v2302, %v2286
          %v2879 = vpack.c.b16 %v2303, %v2287
          %v2880 = vpack.c.b16 %v2304, %v2288
          %v2881 = vpack.c.b16 %v2305, %v2289
          %v2882 = vpack.c.b16 %v2306, %v2290
          %v2883 = vpack.c.b16 %v2307, %v2291
          %v2884 = vpack.c.b16 %v2308, %v2292
          %v2885 = vpack.c.b16 %v2325, %v2309
          %v2886 = vpack.c.b16 %v2326, %v2310
          %v2887 = vpack.c.b16 %v2327, %v2311
          %v2888 = vpack.c.b16 %v2328, %v2312
          %v2889 = vpack.c.b16 %v2329, %v2313
          %v2890 = vpack.c.b16 %v2330, %v2314
          %v2891 = vpack.c.b16 %v2331, %v2315
          %v2892 = vpack.c.b16 %v2332, %v2316
          %v2893 = vpack.c.b16 %v2333, %v2317
          %v2894 = vpack.c.b16 %v2334, %v2318
          %v2895 = vpack.c.b16 %v2335, %v2319
          %v2896 = vpack.c.b16 %v2336, %v2320
          %v2897 = vpack.c.b16 %v2337, %v2321
          %v2898 = vpack.c.b16 %v2338, %v2322
          %v2899 = vpack.c.b16 %v2339, %v2323
          %v2900 = vpack.c.b16 %v2340, %v2324
          %v2901 = vpack.c.b16 %v2357, %v2341
          %v2902 = vpack.c.b16 %v2358, %v2342
          %v2903 = vpack.c.b16 %v2359, %v2343
          %v2904 = vpack.c.b16 %v2360, %v2344
          %v2905 = vpack.c.b16 %v2361, %v2345
          %v2906 = vpack.c.b16 %v2362, %v2346
          %v2907 = vpack.c.b16 %v2363, %v2347
          %v2908 = vpack.c.b16 %v2364, %v2348
          %v2909 = vpack.c.b16 %v2365, %v2349
          %v2910 = vpack.c.b16 %v2366, %v2350
          %v2911 = vpack.c.b16 %v2367, %v2351
          %v2912 = vpack.c.b16 %v2368, %v2352
          %v2913 = vpack.c.b16 %v2369, %v2353
          %v2914 = vpack.c.b16 %v2370, %v2354
          %v2915 = vpack.c.b16 %v2371, %v2355
          %v2916 = vpack.c.b16 %v2372, %v2356
          %v2917 = vpack.c.b16 %v2389, %v2373
          %v2918 = vpack.c.b16 %v2390, %v2374
          %v2919 = vpack.c.b16 %v2391, %v2375
          %v2920 = vpack.c.b16 %v2392, %v2376
          %v2921 = vpack.c.b16 %v2393, %v2377
          %v2922 = vpack.c.b16 %v2394, %v2378
          %v2923 = vpack.c.b16 %v2395, %v2379
          %v2924 = vpack.c.b16 %v2396, %v2380
          %v2925 = vpack.c.b16 %v2397, %v2381
          %v2926 = vpack.c.b16 %v2398, %v2382
          %v2927 = vpack.c.b16 %v2399, %v2383
          %v2928 = vpack.c.b16 %v2400, %v2384
          %v2929 = vpack.c.b16 %v2401, %v2385
          %v2930 = vpack.c.b16 %v2402, %v2386
          %v2931 = vpack.c.b16 %v2403, %v2387
          %v2932 = vpack.c.b16 %v2404, %v2388
          %v2933 = vpack.c.b16 %v2421, %v2405
          %v2934 = vpack.c.b16 %v2422, %v2406
          %v2935 = vpack.c.b16 %v2423, %v2407
          %v2936 = vpack.c.b16 %v2424, %v2408
          %v2937 = vpack.c.b16 %v2425, %v2409
          %v2938 = vpack.c.b16 %v2426, %v2410
          %v2939 = vpack.c.b16 %v2427, %v2411
          %v2940 = vpack.c.b16 %v2428, %v2412
          %v2941 = vpack.c.b16 %v2429, %v2413
          %v2942 = vpack.c.b16 %v2430, %v2414
          %v2943 = vpack.c.b16 %v2431, %v2415
          %v2944 = vpack.c.b16 %v2432, %v2416
          %v2945 = vpack.c.b16 %v2433, %v2417
          %v2946 = vpack.c.b16 %v2434, %v2418
          %v2947 = vpack.c.b16 %v2435, %v2419
          %v2948 = vpack.c.b16 %v2436, %v2420
          %3461 = vmatprep.subr.bf16.mxu0 %v2438
          %3462 = vmatpush1.bf16.msra.mxu0 %v2437
          %3463 = vmatprep.subr.bf16.mxu0 %v2454
          %3464 = vmatpush1.bf16.msra.mxu0 %v2453
          %3465 = vmatprep.subr.bf16.mxu0 %v2470
          %3466 = vmatpush1.bf16.msra.mxu0 %v2469
          %3467 = vmatprep.subr.bf16.mxu0 %v2486
          %3468 = vmatpush1.bf16.msra.mxu0 %v2485
          %3469 = vmatprep.subr.bf16.mxu0 %v2502
          %3470 = vmatpush1.bf16.msra.mxu0 %v2501
          %3471 = vmatprep.subr.bf16.mxu0 %v2518
          %3472 = vmatpush1.bf16.msra.mxu0 %v2517
          %3473 = vmatprep.subr.bf16.mxu0 %v2534
          %3474 = vmatpush1.bf16.msra.mxu0 %v2533
          %3475 = vmatprep.subr.bf16.mxu0 %v2550
          %3476 = vmatpush1.bf16.msra.mxu0 %v2549
          %3477 = vmatprep.subr.bf16.mxu0 %v2566
          %3478 = vmatpush1.bf16.msra.mxu0 %v2565
          %3479 = vmatprep.subr.bf16.mxu0 %v2582
          %3480 = vmatpush1.bf16.msra.mxu0 %v2581
          %3481 = vmatprep.subr.bf16.mxu0 %v2598
          %3482 = vmatpush1.bf16.msra.mxu0 %v2597
          %3483 = vmatprep.subr.bf16.mxu0 %v2614
          %3484 = vmatpush1.bf16.msra.mxu0 %v2613
          %3485 = vmatprep.subr.bf16.mxu0 %v2630
          %3486 = vmatpush1.bf16.msra.mxu0 %v2629
          %3487 = vmatprep.subr.bf16.mxu0 %v2646
          %3488 = vmatpush1.bf16.msra.mxu0 %v2645
          %3489 = vmatprep.subr.bf16.mxu0 %v2662
          %3490 = vmatpush1.bf16.msra.mxu0 %v2661
          %3491 = vmatprep.subr.bf16.mxu0 %v2678
          %3492 = vmatpush1.bf16.msra.mxu0 %v2677
          %3493 = vmatprep.mubr.bf16.mxu0 %v894
          %3494 = vmatmul.mubr.bf16.gmra.mrb[0].mxu0 %v893
          %v3495 = vpop.f32.mrb[0].mxu0
          %v3496 = vadd.f32 0.0, %v3495
          %v3497 = vpop.f32.mrb[0].mxu0
          %v3498 = vadd.f32 0.0, %v3497
          %v3499 = vpop.f32.mrb[0].mxu0
          %v3500 = vpop.f32.mrb[0].mxu0
          %3501 = vdwg.mxu0
          %3502 = vmatprep.subr.bf16.mxu0 %v2694
          %3503 = vmatpush1.bf16.msra.mxu0 %v2693
          %3504 = vmatprep.subr.bf16.mxu0 %v2710
          %3505 = vmatpush1.bf16.msra.mxu0 %v2709
          %3506 = vmatprep.subr.bf16.mxu0 %v2726
          %3507 = vmatpush1.bf16.msra.mxu0 %v2725
          %3508 = vmatprep.subr.bf16.mxu0 %v2742
          %3509 = vmatpush1.bf16.msra.mxu0 %v2741
          %3510 = vmatprep.subr.bf16.mxu0 %v2758
          %3511 = vmatpush1.bf16.msra.mxu0 %v2757
          %3512 = vmatprep.subr.bf16.mxu0 %v2774
          %3513 = vmatpush1.bf16.msra.mxu0 %v2773
          %3514 = vmatprep.subr.bf16.mxu0 %v2790
          %3515 = vmatpush1.bf16.msra.mxu0 %v2789
          %3516 = vmatprep.subr.bf16.mxu0 %v2806
          %3517 = vmatpush1.bf16.msra.mxu0 %v2805
          %3518 = vmatprep.subr.bf16.mxu0 %v2822
          %3519 = vmatpush1.bf16.msra.mxu0 %v2821
          %3520 = vmatprep.subr.bf16.mxu0 %v2838
          %3521 = vmatpush1.bf16.msra.mxu0 %v2837
          %3522 = vmatprep.subr.bf16.mxu0 %v2854
          %3523 = vmatpush1.bf16.msra.mxu0 %v2853
          %3524 = vmatprep.subr.bf16.mxu0 %v2870
          %3525 = vmatpush1.bf16.msra.mxu0 %v2869
          %3526 = vmatprep.subr.bf16.mxu0 %v2886
          %3527 = vmatpush1.bf16.msra.mxu0 %v2885
          %3528 = vmatprep.subr.bf16.mxu0 %v2902
          %3529 = vmatpush1.bf16.msra.mxu0 %v2901
          %3530 = vmatprep.subr.bf16.mxu0 %v2918
          %3531 = vmatpush1.bf16.msra.mxu0 %v2917
          %3532 = vmatprep.subr.bf16.mxu0 %v2934
          %3533 = vmatpush1.bf16.msra.mxu0 %v2933
          %3534 = vmatprep.mubr.bf16.mxu0 %v896
          %3535 = vmatmul.mubr.bf16.gmra.mrb[0].mxu0 %v895
          %v3536 = vpop.f32.mrb[0].mxu0
          %v3537 = vadd.f32 %v3496, %v3536
          %v3538 = vpop.f32.mrb[0].mxu0
          %v3539 = vadd.f32 %v3498, %v3538
          %v3540 = vpop.f32.mrb[0].mxu0
          %v3541 = vpop.f32.mrb[0].mxu0
          %3542 = vdwg.mxu0
          %3543 = vmatprep.subr.bf16.mxu0 %v2440
          %3544 = vmatpush1.bf16.msra.mxu0 %v2439
          %3545 = vmatprep.subr.bf16.mxu0 %v2456
          %3546 = vmatpush1.bf16.msra.mxu0 %v2455
          %3547 = vmatprep.subr.bf16.mxu0 %v2472
          %3548 = vmatpush1.bf16.msra.mxu0 %v2471
          %3549 = vmatprep.subr.bf16.mxu0 %v2488
          %3550 = vmatpush1.bf16.msra.mxu0 %v2487
          %3551 = vmatprep.subr.bf16.mxu0 %v2504
          %3552 = vmatpush1.bf16.msra.mxu0 %v2503
          %3553 = vmatprep.subr.bf16.mxu0 %v2520
          %3554 = vmatpush1.bf16.msra.mxu0 %v2519
          %3555 = vmatprep.subr.bf16.mxu0 %v2536
          %3556 = vmatpush1.bf16.msra.mxu0 %v2535
          %3557 = vmatprep.subr.bf16.mxu0 %v2552
          %3558 = vmatpush1.bf16.msra.mxu0 %v2551
          %3559 = vmatprep.subr.bf16.mxu0 %v2568
          %3560 = vmatpush1.bf16.msra.mxu0 %v2567
          %3561 = vmatprep.subr.bf16.mxu0 %v2584
          %3562 = vmatpush1.bf16.msra.mxu0 %v2583
          %3563 = vmatprep.subr.bf16.mxu0 %v2600
          %3564 = vmatpush1.bf16.msra.mxu0 %v2599
          %3565 = vmatprep.subr.bf16.mxu0 %v2616
          %3566 = vmatpush1.bf16.msra.mxu0 %v2615
          %3567 = vmatprep.subr.bf16.mxu0 %v2632
          %3568 = vmatpush1.bf16.msra.mxu0 %v2631
          %3569 = vmatprep.subr.bf16.mxu0 %v2648
          %3570 = vmatpush1.bf16.msra.mxu0 %v2647
          %3571 = vmatprep.subr.bf16.mxu0 %v2664
          %3572 = vmatpush1.bf16.msra.mxu0 %v2663
          %3573 = vmatprep.subr.bf16.mxu0 %v2680
          %3574 = vmatpush1.bf16.msra.mxu0 %v2679
          %3575 = vmatprep.mubr.bf16.mxu0 %v894
          %3576 = vmatmul.mubr.bf16.gmra.mrb[0].mxu0 %v893
          %v3577 = vpop.f32.mrb[0].mxu0
          %v3578 = vadd.f32 0.0, %v3577
          %v3579 = vpop.f32.mrb[0].mxu0
          %v3580 = vadd.f32 0.0, %v3579
          %v3581 = vpop.f32.mrb[0].mxu0
          %v3582 = vpop.f32.mrb[0].mxu0
          %3583 = vdwg.mxu0
          %3584 = vmatprep.subr.bf16.mxu0 %v2696
          %3585 = vmatpush1.bf16.msra.mxu0 %v2695
          %3586 = vmatprep.subr.bf16.mxu0 %v2712
          %3587 = vmatpush1.bf16.msra.mxu0 %v2711
          %3588 = vmatprep.subr.bf16.mxu0 %v2728
          %3589 = vmatpush1.bf16.msra.mxu0 %v2727
          %3590 = vmatprep.subr.bf16.mxu0 %v2744
          %3591 = vmatpush1.bf16.msra.mxu0 %v2743
          %3592 = vmatprep.subr.bf16.mxu0 %v2760
          %3593 = vmatpush1.bf16.msra.mxu0 %v2759
          %3594 = vmatprep.subr.bf16.mxu0 %v2776
          %3595 = vmatpush1.bf16.msra.mxu0 %v2775
          %3596 = vmatprep.subr.bf16.mxu0 %v2792
          %3597 = vmatpush1.bf16.msra.mxu0 %v2791
          %3598 = vmatprep.subr.bf16.mxu0 %v2808
          %3599 = vmatpush1.bf16.msra.mxu0 %v2807
          %3600 = vmatprep.subr.bf16.mxu0 %v2824
          %3601 = vmatpush1.bf16.msra.mxu0 %v2823
          %3602 = vmatprep.subr.bf16.mxu0 %v2840
          %3603 = vmatpush1.bf16.msra.mxu0 %v2839
          %3604 = vmatprep.subr.bf16.mxu0 %v2856
          %3605 = vmatpush1.bf16.msra.mxu0 %v2855
          %3606 = vmatprep.subr.bf16.mxu0 %v2872
          %3607 = vmatpush1.bf16.msra.mxu0 %v2871
          %3608 = vmatprep.subr.bf16.mxu0 %v2888
          %3609 = vmatpush1.bf16.msra.mxu0 %v2887
          %3610 = vmatprep.subr.bf16.mxu0 %v2904
          %3611 = vmatpush1.bf16.msra.mxu0 %v2903
          %3612 = vmatprep.subr.bf16.mxu0 %v2920
          %3613 = vmatpush1.bf16.msra.mxu0 %v2919
          %3614 = vmatprep.subr.bf16.mxu0 %v2936
          %3615 = vmatpush1.bf16.msra.mxu0 %v2935
          %3616 = vmatprep.mubr.bf16.mxu0 %v896
          %3617 = vmatmul.mubr.bf16.gmra.mrb[0].mxu0 %v895
          %v3618 = vpop.f32.mrb[0].mxu0
          %v3619 = vadd.f32 %v3578, %v3618
          %v3620 = vpop.f32.mrb[0].mxu0
          %v3621 = vadd.f32 %v3580, %v3620
          %v3622 = vpop.f32.mrb[0].mxu0
          %v3623 = vpop.f32.mrb[0].mxu0
          %3624 = vdwg.mxu0
          %3625 = vmatprep.subr.bf16.mxu0 %v2442
          %3626 = vmatpush1.bf16.msra.mxu0 %v2441
          %3627 = vmatprep.subr.bf16.mxu0 %v2458
          %3628 = vmatpush1.bf16.msra.mxu0 %v2457
          %3629 = vmatprep.subr.bf16.mxu0 %v2474
          %3630 = vmatpush1.bf16.msra.mxu0 %v2473
          %3631 = vmatprep.subr.bf16.mxu0 %v2490
          %3632 = vmatpush1.bf16.msra.mxu0 %v2489
          %3633 = vmatprep.subr.bf16.mxu0 %v2506
          %3634 = vmatpush1.bf16.msra.mxu0 %v2505
          %3635 = vmatprep.subr.bf16.mxu0 %v2522
          %3636 = vmatpush1.bf16.msra.mxu0 %v2521
          %3637 = vmatprep.subr.bf16.mxu0 %v2538
          %3638 = vmatpush1.bf16.msra.mxu0 %v2537
          %3639 = vmatprep.subr.bf16.mxu0 %v2554
          %3640 = vmatpush1.bf16.msra.mxu0 %v2553
          %3641 = vmatprep.subr.bf16.mxu0 %v2570
          %3642 = vmatpush1.bf16.msra.mxu0 %v2569
          %3643 = vmatprep.subr.bf16.mxu0 %v2586
          %3644 = vmatpush1.bf16.msra.mxu0 %v2585
          %3645 = vmatprep.subr.bf16.mxu0 %v2602
          %3646 = vmatpush1.bf16.msra.mxu0 %v2601
          %3647 = vmatprep.subr.bf16.mxu0 %v2618
          %3648 = vmatpush1.bf16.msra.mxu0 %v2617
          %3649 = vmatprep.subr.bf16.mxu0 %v2634
          %3650 = vmatpush1.bf16.msra.mxu0 %v2633
          %3651 = vmatprep.subr.bf16.mxu0 %v2650
          %3652 = vmatpush1.bf16.msra.mxu0 %v2649
          %3653 = vmatprep.subr.bf16.mxu0 %v2666
          %3654 = vmatpush1.bf16.msra.mxu0 %v2665
          %3655 = vmatprep.subr.bf16.mxu0 %v2682
          %3656 = vmatpush1.bf16.msra.mxu0 %v2681
          %3657 = vmatprep.mubr.bf16.mxu0 %v894
          %3658 = vmatmul.mubr.bf16.gmra.mrb[0].mxu0 %v893
          %v3659 = vpop.f32.mrb[0].mxu0
          %v3660 = vadd.f32 0.0, %v3659
          %v3661 = vpop.f32.mrb[0].mxu0
          %v3662 = vadd.f32 0.0, %v3661
          %v3663 = vpop.f32.mrb[0].mxu0
          %v3664 = vpop.f32.mrb[0].mxu0
          %3665 = vdwg.mxu0
          %3666 = vmatprep.subr.bf16.mxu0 %v2698
          %3667 = vmatpush1.bf16.msra.mxu0 %v2697
          %3668 = vmatprep.subr.bf16.mxu0 %v2714
          %3669 = vmatpush1.bf16.msra.mxu0 %v2713
          %3670 = vmatprep.subr.bf16.mxu0 %v2730
          %3671 = vmatpush1.bf16.msra.mxu0 %v2729
          %3672 = vmatprep.subr.bf16.mxu0 %v2746
          %3673 = vmatpush1.bf16.msra.mxu0 %v2745
          %3674 = vmatprep.subr.bf16.mxu0 %v2762
          %3675 = vmatpush1.bf16.msra.mxu0 %v2761
          %3676 = vmatprep.subr.bf16.mxu0 %v2778
          %3677 = vmatpush1.bf16.msra.mxu0 %v2777
          %3678 = vmatprep.subr.bf16.mxu0 %v2794
          %3679 = vmatpush1.bf16.msra.mxu0 %v2793
          %3680 = vmatprep.subr.bf16.mxu0 %v2810
          %3681 = vmatpush1.bf16.msra.mxu0 %v2809
          %3682 = vmatprep.subr.bf16.mxu0 %v2826
          %3683 = vmatpush1.bf16.msra.mxu0 %v2825
          %3684 = vmatprep.subr.bf16.mxu0 %v2842
          %3685 = vmatpush1.bf16.msra.mxu0 %v2841
          %3686 = vmatprep.subr.bf16.mxu0 %v2858
          %3687 = vmatpush1.bf16.msra.mxu0 %v2857
          %3688 = vmatprep.subr.bf16.mxu0 %v2874
          %3689 = vmatpush1.bf16.msra.mxu0 %v2873
          %3690 = vmatprep.subr.bf16.mxu0 %v2890
          %3691 = vmatpush1.bf16.msra.mxu0 %v2889
          %3692 = vmatprep.subr.bf16.mxu0 %v2906
          %3693 = vmatpush1.bf16.msra.mxu0 %v2905
          %3694 = vmatprep.subr.bf16.mxu0 %v2922
          %3695 = vmatpush1.bf16.msra.mxu0 %v2921
          %3696 = vmatprep.subr.bf16.mxu0 %v2938
          %3697 = vmatpush1.bf16.msra.mxu0 %v2937
          %3698 = vmatprep.mubr.bf16.mxu0 %v896
          %3699 = vmatmul.mubr.bf16.gmra.mrb[0].mxu0 %v895
          %v3700 = vpop.f32.mrb[0].mxu0
          %v3701 = vadd.f32 %v3660, %v3700
          %v3702 = vpop.f32.mrb[0].mxu0
          %v3703 = vadd.f32 %v3662, %v3702
          %v3704 = vpop.f32.mrb[0].mxu0
          %v3705 = vpop.f32.mrb[0].mxu0
          %3706 = vdwg.mxu0
          %3707 = vmatprep.subr.bf16.mxu0 %v2444
          %3708 = vmatpush1.bf16.msra.mxu0 %v2443
          %3709 = vmatprep.subr.bf16.mxu0 %v2460
          %3710 = vmatpush1.bf16.msra.mxu0 %v2459
          %3711 = vmatprep.subr.bf16.mxu0 %v2476
          %3712 = vmatpush1.bf16.msra.mxu0 %v2475
          %3713 = vmatprep.subr.bf16.mxu0 %v2492
          %3714 = vmatpush1.bf16.msra.mxu0 %v2491
          %3715 = vmatprep.subr.bf16.mxu0 %v2508
          %3716 = vmatpush1.bf16.msra.mxu0 %v2507
          %3717 = vmatprep.subr.bf16.mxu0 %v2524
          %3718 = vmatpush1.bf16.msra.mxu0 %v2523
          %3719 = vmatprep.subr.bf16.mxu0 %v2540
          %3720 = vmatpush1.bf16.msra.mxu0 %v2539
          %3721 = vmatprep.subr.bf16.mxu0 %v2556
          %3722 = vmatpush1.bf16.msra.mxu0 %v2555
          %3723 = vmatprep.subr.bf16.mxu0 %v2572
          %3724 = vmatpush1.bf16.msra.mxu0 %v2571
          %3725 = vmatprep.subr.bf16.mxu0 %v2588
          %3726 = vmatpush1.bf16.msra.mxu0 %v2587
          %3727 = vmatprep.subr.bf16.mxu0 %v2604
          %3728 = vmatpush1.bf16.msra.mxu0 %v2603
          %3729 = vmatprep.subr.bf16.mxu0 %v2620
          %3730 = vmatpush1.bf16.msra.mxu0 %v2619
          %3731 = vmatprep.subr.bf16.mxu0 %v2636
          %3732 = vmatpush1.bf16.msra.mxu0 %v2635
          %3733 = vmatprep.subr.bf16.mxu0 %v2652
          %3734 = vmatpush1.bf16.msra.mxu0 %v2651
          %3735 = vmatprep.subr.bf16.mxu0 %v2668
          %3736 = vmatpush1.bf16.msra.mxu0 %v2667
          %3737 = vmatprep.subr.bf16.mxu0 %v2684
          %3738 = vmatpush1.bf16.msra.mxu0 %v2683
          %3739 = vmatprep.mubr.bf16.mxu0 %v894
          %3740 = vmatmul.mubr.bf16.gmra.mrb[0].mxu0 %v893
          %v3741 = vpop.f32.mrb[0].mxu0
          %v3742 = vadd.f32 0.0, %v3741
          %v3743 = vpop.f32.mrb[0].mxu0
          %v3744 = vadd.f32 0.0, %v3743
          %v3745 = vpop.f32.mrb[0].mxu0
          %v3746 = vpop.f32.mrb[0].mxu0
          %3747 = vdwg.mxu0
          %3748 = vmatprep.subr.bf16.mxu0 %v2700
          %3749 = vmatpush1.bf16.msra.mxu0 %v2699
          %3750 = vmatprep.subr.bf16.mxu0 %v2716
          %3751 = vmatpush1.bf16.msra.mxu0 %v2715
          %3752 = vmatprep.subr.bf16.mxu0 %v2732
          %3753 = vmatpush1.bf16.msra.mxu0 %v2731
          %3754 = vmatprep.subr.bf16.mxu0 %v2748
          %3755 = vmatpush1.bf16.msra.mxu0 %v2747
          %3756 = vmatprep.subr.bf16.mxu0 %v2764
          %3757 = vmatpush1.bf16.msra.mxu0 %v2763
          %3758 = vmatprep.subr.bf16.mxu0 %v2780
          %3759 = vmatpush1.bf16.msra.mxu0 %v2779
          %3760 = vmatprep.subr.bf16.mxu0 %v2796
          %3761 = vmatpush1.bf16.msra.mxu0 %v2795
          %3762 = vmatprep.subr.bf16.mxu0 %v2812
          %3763 = vmatpush1.bf16.msra.mxu0 %v2811
          %3764 = vmatprep.subr.bf16.mxu0 %v2828
          %3765 = vmatpush1.bf16.msra.mxu0 %v2827
          %3766 = vmatprep.subr.bf16.mxu0 %v2844
          %3767 = vmatpush1.bf16.msra.mxu0 %v2843
          %3768 = vmatprep.subr.bf16.mxu0 %v2860
          %3769 = vmatpush1.bf16.msra.mxu0 %v2859
          %3770 = vmatprep.subr.bf16.mxu0 %v2876
          %3771 = vmatpush1.bf16.msra.mxu0 %v2875
          %3772 = vmatprep.subr.bf16.mxu0 %v2892
          %3773 = vmatpush1.bf16.msra.mxu0 %v2891
          %3774 = vmatprep.subr.bf16.mxu0 %v2908
          %3775 = vmatpush1.bf16.msra.mxu0 %v2907
          %3776 = vmatprep.subr.bf16.mxu0 %v2924
          %3777 = vmatpush1.bf16.msra.mxu0 %v2923
          %3778 = vmatprep.subr.bf16.mxu0 %v2940
          %3779 = vmatpush1.bf16.msra.mxu0 %v2939
          %3780 = vmatprep.mubr.bf16.mxu0 %v896
          %3781 = vmatmul.mubr.bf16.gmra.mrb[0].mxu0 %v895
          %v3782 = vpop.f32.mrb[0].mxu0
          %v3783 = vadd.f32 %v3742, %v3782
          %v3784 = vpop.f32.mrb[0].mxu0
          %v3785 = vadd.f32 %v3744, %v3784
          %v3786 = vpop.f32.mrb[0].mxu0
          %v3787 = vpop.f32.mrb[0].mxu0
          %3788 = vdwg.mxu0
          %3789 = vmatprep.subr.bf16.mxu0 %v2446
          %3790 = vmatpush1.bf16.msra.mxu0 %v2445
          %3791 = vmatprep.subr.bf16.mxu0 %v2462
          %3792 = vmatpush1.bf16.msra.mxu0 %v2461
          %3793 = vmatprep.subr.bf16.mxu0 %v2478
          %3794 = vmatpush1.bf16.msra.mxu0 %v2477
          %3795 = vmatprep.subr.bf16.mxu0 %v2494
          %3796 = vmatpush1.bf16.msra.mxu0 %v2493
          %3797 = vmatprep.subr.bf16.mxu0 %v2510
          %3798 = vmatpush1.bf16.msra.mxu0 %v2509
          %3799 = vmatprep.subr.bf16.mxu0 %v2526
          %3800 = vmatpush1.bf16.msra.mxu0 %v2525
          %3801 = vmatprep.subr.bf16.mxu0 %v2542
          %3802 = vmatpush1.bf16.msra.mxu0 %v2541
          %3803 = vmatprep.subr.bf16.mxu0 %v2558
          %3804 = vmatpush1.bf16.msra.mxu0 %v2557
          %3805 = vmatprep.subr.bf16.mxu0 %v2574
          %3806 = vmatpush1.bf16.msra.mxu0 %v2573
          %3807 = vmatprep.subr.bf16.mxu0 %v2590
          %3808 = vmatpush1.bf16.msra.mxu0 %v2589
          %3809 = vmatprep.subr.bf16.mxu0 %v2606
          %3810 = vmatpush1.bf16.msra.mxu0 %v2605
          %3811 = vmatprep.subr.bf16.mxu0 %v2622
          %3812 = vmatpush1.bf16.msra.mxu0 %v2621
          %3813 = vmatprep.subr.bf16.mxu0 %v2638
          %3814 = vmatpush1.bf16.msra.mxu0 %v2637
          %3815 = vmatprep.subr.bf16.mxu0 %v2654
          %3816 = vmatpush1.bf16.msra.mxu0 %v2653
          %3817 = vmatprep.subr.bf16.mxu0 %v2670
          %3818 = vmatpush1.bf16.msra.mxu0 %v2669
          %3819 = vmatprep.subr.bf16.mxu0 %v2686
          %3820 = vmatpush1.bf16.msra.mxu0 %v2685
          %3821 = vmatprep.mubr.bf16.mxu0 %v894
          %3822 = vmatmul.mubr.bf16.gmra.mrb[0].mxu0 %v893
          %v3823 = vpop.f32.mrb[0].mxu0
          %v3824 = vadd.f32 0.0, %v3823
          %v3825 = vpop.f32.mrb[0].mxu0
          %v3826 = vadd.f32 0.0, %v3825
          %v3827 = vpop.f32.mrb[0].mxu0
          %v3828 = vpop.f32.mrb[0].mxu0
          %3829 = vdwg.mxu0
          %3830 = vmatprep.subr.bf16.mxu0 %v2702
          %3831 = vmatpush1.bf16.msra.mxu0 %v2701
          %3832 = vmatprep.subr.bf16.mxu0 %v2718
          %3833 = vmatpush1.bf16.msra.mxu0 %v2717
          %3834 = vmatprep.subr.bf16.mxu0 %v2734
          %3835 = vmatpush1.bf16.msra.mxu0 %v2733
          %3836 = vmatprep.subr.bf16.mxu0 %v2750
          %3837 = vmatpush1.bf16.msra.mxu0 %v2749
          %3838 = vmatprep.subr.bf16.mxu0 %v2766
          %3839 = vmatpush1.bf16.msra.mxu0 %v2765
          %3840 = vmatprep.subr.bf16.mxu0 %v2782
          %3841 = vmatpush1.bf16.msra.mxu0 %v2781
          %3842 = vmatprep.subr.bf16.mxu0 %v2798
          %3843 = vmatpush1.bf16.msra.mxu0 %v2797
          %3844 = vmatprep.subr.bf16.mxu0 %v2814
          %3845 = vmatpush1.bf16.msra.mxu0 %v2813
          %3846 = vmatprep.subr.bf16.mxu0 %v2830
          %3847 = vmatpush1.bf16.msra.mxu0 %v2829
          %3848 = vmatprep.subr.bf16.mxu0 %v2846
          %3849 = vmatpush1.bf16.msra.mxu0 %v2845
          %3850 = vmatprep.subr.bf16.mxu0 %v2862
          %3851 = vmatpush1.bf16.msra.mxu0 %v2861
          %3852 = vmatprep.subr.bf16.mxu0 %v2878
          %3853 = vmatpush1.bf16.msra.mxu0 %v2877
          %3854 = vmatprep.subr.bf16.mxu0 %v2894
          %3855 = vmatpush1.bf16.msra.mxu0 %v2893
          %3856 = vmatprep.subr.bf16.mxu0 %v2910
          %3857 = vmatpush1.bf16.msra.mxu0 %v2909
          %3858 = vmatprep.subr.bf16.mxu0 %v2926
          %3859 = vmatpush1.bf16.msra.mxu0 %v2925
          %3860 = vmatprep.subr.bf16.mxu0 %v2942
          %3861 = vmatpush1.bf16.msra.mxu0 %v2941
          %3862 = vmatprep.mubr.bf16.mxu0 %v896
          %3863 = vmatmul.mubr.bf16.gmra.mrb[0].mxu0 %v895
          %v3864 = vpop.f32.mrb[0].mxu0
          %v3865 = vadd.f32 %v3824, %v3864
          %v3866 = vpop.f32.mrb[0].mxu0
          %v3867 = vadd.f32 %v3826, %v3866
          %v3868 = vpop.f32.mrb[0].mxu0
          %v3869 = vpop.f32.mrb[0].mxu0
          %3870 = vdwg.mxu0
          %3871 = vmatprep.subr.bf16.mxu0 %v2448
          %3872 = vmatpush1.bf16.msra.mxu0 %v2447
          %3873 = vmatprep.subr.bf16.mxu0 %v2464
          %3874 = vmatpush1.bf16.msra.mxu0 %v2463
          %3875 = vmatprep.subr.bf16.mxu0 %v2480
          %3876 = vmatpush1.bf16.msra.mxu0 %v2479
          %3877 = vmatprep.subr.bf16.mxu0 %v2496
          %3878 = vmatpush1.bf16.msra.mxu0 %v2495
          %3879 = vmatprep.subr.bf16.mxu0 %v2512
          %3880 = vmatpush1.bf16.msra.mxu0 %v2511
          %3881 = vmatprep.subr.bf16.mxu0 %v2528
          %3882 = vmatpush1.bf16.msra.mxu0 %v2527
          %3883 = vmatprep.subr.bf16.mxu0 %v2544
          %3884 = vmatpush1.bf16.msra.mxu0 %v2543
          %3885 = vmatprep.subr.bf16.mxu0 %v2560
          %3886 = vmatpush1.bf16.msra.mxu0 %v2559
          %3887 = vmatprep.subr.bf16.mxu0 %v2576
          %3888 = vmatpush1.bf16.msra.mxu0 %v2575
          %3889 = vmatprep.subr.bf16.mxu0 %v2592
          %3890 = vmatpush1.bf16.msra.mxu0 %v2591
          %3891 = vmatprep.subr.bf16.mxu0 %v2608
          %3892 = vmatpush1.bf16.msra.mxu0 %v2607
          %3893 = vmatprep.subr.bf16.mxu0 %v2624
          %3894 = vmatpush1.bf16.msra.mxu0 %v2623
          %3895 = vmatprep.subr.bf16.mxu0 %v2640
          %3896 = vmatpush1.bf16.msra.mxu0 %v2639
          %3897 = vmatprep.subr.bf16.mxu0 %v2656
          %3898 = vmatpush1.bf16.msra.mxu0 %v2655
          %3899 = vmatprep.subr.bf16.mxu0 %v2672
          %3900 = vmatpush1.bf16.msra.mxu0 %v2671
          %3901 = vmatprep.subr.bf16.mxu0 %v2688
          %3902 = vmatpush1.bf16.msra.mxu0 %v2687
          %3903 = vmatprep.mubr.bf16.mxu0 %v894
          %3904 = vmatmul.mubr.bf16.gmra.mrb[0].mxu0 %v893
          %v3905 = vpop.f32.mrb[0].mxu0
          %v3906 = vadd.f32 0.0, %v3905
          %v3907 = vpop.f32.mrb[0].mxu0
          %v3908 = vadd.f32 0.0, %v3907
          %v3909 = vpop.f32.mrb[0].mxu0
          %v3910 = vpop.f32.mrb[0].mxu0
          %3911 = vdwg.mxu0
          %3912 = vmatprep.subr.bf16.mxu0 %v2704
          %3913 = vmatpush1.bf16.msra.mxu0 %v2703
          %3914 = vmatprep.subr.bf16.mxu0 %v2720
          %3915 = vmatpush1.bf16.msra.mxu0 %v2719
          %3916 = vmatprep.subr.bf16.mxu0 %v2736
          %3917 = vmatpush1.bf16.msra.mxu0 %v2735
          %3918 = vmatprep.subr.bf16.mxu0 %v2752
          %3919 = vmatpush1.bf16.msra.mxu0 %v2751
          %3920 = vmatprep.subr.bf16.mxu0 %v2768
          %3921 = vmatpush1.bf16.msra.mxu0 %v2767
          %3922 = vmatprep.subr.bf16.mxu0 %v2784
          %3923 = vmatpush1.bf16.msra.mxu0 %v2783
          %3924 = vmatprep.subr.bf16.mxu0 %v2800
          %3925 = vmatpush1.bf16.msra.mxu0 %v2799
          %3926 = vmatprep.subr.bf16.mxu0 %v2816
          %3927 = vmatpush1.bf16.msra.mxu0 %v2815
          %3928 = vmatprep.subr.bf16.mxu0 %v2832
          %3929 = vmatpush1.bf16.msra.mxu0 %v2831
          %3930 = vmatprep.subr.bf16.mxu0 %v2848
          %3931 = vmatpush1.bf16.msra.mxu0 %v2847
          %3932 = vmatprep.subr.bf16.mxu0 %v2864
          %3933 = vmatpush1.bf16.msra.mxu0 %v2863
          %3934 = vmatprep.subr.bf16.mxu0 %v2880
          %3935 = vmatpush1.bf16.msra.mxu0 %v2879
          %3936 = vmatprep.subr.bf16.mxu0 %v2896
          %3937 = vmatpush1.bf16.msra.mxu0 %v2895
          %3938 = vmatprep.subr.bf16.mxu0 %v2912
          %3939 = vmatpush1.bf16.msra.mxu0 %v2911
          %3940 = vmatprep.subr.bf16.mxu0 %v2928
          %3941 = vmatpush1.bf16.msra.mxu0 %v2927
          %3942 = vmatprep.subr.bf16.mxu0 %v2944
          %3943 = vmatpush1.bf16.msra.mxu0 %v2943
          %3944 = vmatprep.mubr.bf16.mxu0 %v896
          %3945 = vmatmul.mubr.bf16.gmra.mrb[0].mxu0 %v895
          %v3946 = vpop.f32.mrb[0].mxu0
          %v3947 = vadd.f32 %v3906, %v3946
          %v3948 = vpop.f32.mrb[0].mxu0
          %v3949 = vadd.f32 %v3908, %v3948
          %v3950 = vpop.f32.mrb[0].mxu0
          %v3951 = vpop.f32.mrb[0].mxu0
          %3952 = vdwg.mxu0
          %3953 = vmatprep.subr.bf16.mxu0 %v2450
          %3954 = vmatpush1.bf16.msra.mxu0 %v2449
          %3955 = vmatprep.subr.bf16.mxu0 %v2466
          %3956 = vmatpush1.bf16.msra.mxu0 %v2465
          %3957 = vmatprep.subr.bf16.mxu0 %v2482
          %3958 = vmatpush1.bf16.msra.mxu0 %v2481
          %3959 = vmatprep.subr.bf16.mxu0 %v2498
          %3960 = vmatpush1.bf16.msra.mxu0 %v2497
          %3961 = vmatprep.subr.bf16.mxu0 %v2514
          %3962 = vmatpush1.bf16.msra.mxu0 %v2513
          %3963 = vmatprep.subr.bf16.mxu0 %v2530
          %3964 = vmatpush1.bf16.msra.mxu0 %v2529
          %3965 = vmatprep.subr.bf16.mxu0 %v2546
          %3966 = vmatpush1.bf16.msra.mxu0 %v2545
          %3967 = vmatprep.subr.bf16.mxu0 %v2562
          %3968 = vmatpush1.bf16.msra.mxu0 %v2561
          %3969 = vmatprep.subr.bf16.mxu0 %v2578
          %3970 = vmatpush1.bf16.msra.mxu0 %v2577
          %3971 = vmatprep.subr.bf16.mxu0 %v2594
          %3972 = vmatpush1.bf16.msra.mxu0 %v2593
          %3973 = vmatprep.subr.bf16.mxu0 %v2610
          %3974 = vmatpush1.bf16.msra.mxu0 %v2609
          %3975 = vmatprep.subr.bf16.mxu0 %v2626
          %3976 = vmatpush1.bf16.msra.mxu0 %v2625
          %3977 = vmatprep.subr.bf16.mxu0 %v2642
          %3978 = vmatpush1.bf16.msra.mxu0 %v2641
          %3979 = vmatprep.subr.bf16.mxu0 %v2658
          %3980 = vmatpush1.bf16.msra.mxu0 %v2657
          %3981 = vmatprep.subr.bf16.mxu0 %v2674
          %3982 = vmatpush1.bf16.msra.mxu0 %v2673
          %3983 = vmatprep.subr.bf16.mxu0 %v2690
          %3984 = vmatpush1.bf16.msra.mxu0 %v2689
          %3985 = vmatprep.mubr.bf16.mxu0 %v894
          %3986 = vmatmul.mubr.bf16.gmra.mrb[0].mxu0 %v893
          %v3987 = vpop.f32.mrb[0].mxu0
          %v3988 = vadd.f32 0.0, %v3987
          %v3989 = vpop.f32.mrb[0].mxu0
          %v3990 = vadd.f32 0.0, %v3989
          %v3991 = vpop.f32.mrb[0].mxu0
          %v3992 = vpop.f32.mrb[0].mxu0
          %3993 = vdwg.mxu0
          %3994 = vmatprep.subr.bf16.mxu0 %v2706
          %3995 = vmatpush1.bf16.msra.mxu0 %v2705
          %3996 = vmatprep.subr.bf16.mxu0 %v2722
          %3997 = vmatpush1.bf16.msra.mxu0 %v2721
          %3998 = vmatprep.subr.bf16.mxu0 %v2738
          %3999 = vmatpush1.bf16.msra.mxu0 %v2737
          %4000 = vmatprep.subr.bf16.mxu0 %v2754
          %4001 = vmatpush1.bf16.msra.mxu0 %v2753
          %4002 = vmatprep.subr.bf16.mxu0 %v2770
          %4003 = vmatpush1.bf16.msra.mxu0 %v2769
          %4004 = vmatprep.subr.bf16.mxu0 %v2786
          %4005 = vmatpush1.bf16.msra.mxu0 %v2785
          %4006 = vmatprep.subr.bf16.mxu0 %v2802
          %4007 = vmatpush1.bf16.msra.mxu0 %v2801
          %4008 = vmatprep.subr.bf16.mxu0 %v2818
          %4009 = vmatpush1.bf16.msra.mxu0 %v2817
          %4010 = vmatprep.subr.bf16.mxu0 %v2834
          %4011 = vmatpush1.bf16.msra.mxu0 %v2833
          %4012 = vmatprep.subr.bf16.mxu0 %v2850
          %4013 = vmatpush1.bf16.msra.mxu0 %v2849
          %4014 = vmatprep.subr.bf16.mxu0 %v2866
          %4015 = vmatpush1.bf16.msra.mxu0 %v2865
          %4016 = vmatprep.subr.bf16.mxu0 %v2882
          %4017 = vmatpush1.bf16.msra.mxu0 %v2881
          %4018 = vmatprep.subr.bf16.mxu0 %v2898
          %4019 = vmatpush1.bf16.msra.mxu0 %v2897
          %4020 = vmatprep.subr.bf16.mxu0 %v2914
          %4021 = vmatpush1.bf16.msra.mxu0 %v2913
          %4022 = vmatprep.subr.bf16.mxu0 %v2930
          %4023 = vmatpush1.bf16.msra.mxu0 %v2929
          %4024 = vmatprep.subr.bf16.mxu0 %v2946
          %4025 = vmatpush1.bf16.msra.mxu0 %v2945
          %4026 = vmatprep.mubr.bf16.mxu0 %v896
          %4027 = vmatmul.mubr.bf16.gmra.mrb[0].mxu0 %v895
          %v4028 = vpop.f32.mrb[0].mxu0
          %v4029 = vadd.f32 %v3988, %v4028
          %v4030 = vpop.f32.mrb[0].mxu0
          %v4031 = vadd.f32 %v3990, %v4030
          %v4032 = vpop.f32.mrb[0].mxu0
          %v4033 = vpop.f32.mrb[0].mxu0
          %4034 = vdwg.mxu0
          %4035 = vmatprep.subr.bf16.mxu0 %v2452
          %4036 = vmatpush1.bf16.msra.mxu0 %v2451
          %4037 = vmatprep.subr.bf16.mxu0 %v2468
          %4038 = vmatpush1.bf16.msra.mxu0 %v2467
          %4039 = vmatprep.subr.bf16.mxu0 %v2484
          %4040 = vmatpush1.bf16.msra.mxu0 %v2483
          %4041 = vmatprep.subr.bf16.mxu0 %v2500
          %4042 = vmatpush1.bf16.msra.mxu0 %v2499
          %4043 = vmatprep.subr.bf16.mxu0 %v2516
          %4044 = vmatpush1.bf16.msra.mxu0 %v2515
          %4045 = vmatprep.subr.bf16.mxu0 %v2532
          %4046 = vmatpush1.bf16.msra.mxu0 %v2531
          %4047 = vmatprep.subr.bf16.mxu0 %v2548
          %4048 = vmatpush1.bf16.msra.mxu0 %v2547
          %4049 = vmatprep.subr.bf16.mxu0 %v2564
          %4050 = vmatpush1.bf16.msra.mxu0 %v2563
          %4051 = vmatprep.subr.bf16.mxu0 %v2580
          %4052 = vmatpush1.bf16.msra.mxu0 %v2579
          %4053 = vmatprep.subr.bf16.mxu0 %v2596
          %4054 = vmatpush1.bf16.msra.mxu0 %v2595
          %4055 = vmatprep.subr.bf16.mxu0 %v2612
          %4056 = vmatpush1.bf16.msra.mxu0 %v2611
          %4057 = vmatprep.subr.bf16.mxu0 %v2628
          %4058 = vmatpush1.bf16.msra.mxu0 %v2627
          %4059 = vmatprep.subr.bf16.mxu0 %v2644
          %4060 = vmatpush1.bf16.msra.mxu0 %v2643
          %4061 = vmatprep.subr.bf16.mxu0 %v2660
          %4062 = vmatpush1.bf16.msra.mxu0 %v2659
          %4063 = vmatprep.subr.bf16.mxu0 %v2676
          %4064 = vmatpush1.bf16.msra.mxu0 %v2675
          %4065 = vmatprep.subr.bf16.mxu0 %v2692
          %4066 = vmatpush1.bf16.msra.mxu0 %v2691
          %4067 = vmatprep.mubr.bf16.mxu0 %v894
          %4068 = vmatmul.mubr.bf16.gmra.mrb[0].mxu0 %v893
          %v4069 = vpop.f32.mrb[0].mxu0
          %v4070 = vadd.f32 0.0, %v4069
          %v4071 = vpop.f32.mrb[0].mxu0
          %v4072 = vadd.f32 0.0, %v4071
          %v4073 = vpop.f32.mrb[0].mxu0
          %v4074 = vpop.f32.mrb[0].mxu0
          %4075 = vdwg.mxu0
          %4076 = vmatprep.subr.bf16.mxu0 %v2708
          %4077 = vmatpush1.bf16.msra.mxu0 %v2707
          %4078 = vmatprep.subr.bf16.mxu0 %v2724
          %4079 = vmatpush1.bf16.msra.mxu0 %v2723
          %4080 = vmatprep.subr.bf16.mxu0 %v2740
          %4081 = vmatpush1.bf16.msra.mxu0 %v2739
          %4082 = vmatprep.subr.bf16.mxu0 %v2756
          %4083 = vmatpush1.bf16.msra.mxu0 %v2755
          %4084 = vmatprep.subr.bf16.mxu0 %v2772
          %4085 = vmatpush1.bf16.msra.mxu0 %v2771
          %4086 = vmatprep.subr.bf16.mxu0 %v2788
          %4087 = vmatpush1.bf16.msra.mxu0 %v2787
          %4088 = vmatprep.subr.bf16.mxu0 %v2804
          %4089 = vmatpush1.bf16.msra.mxu0 %v2803
          %4090 = vmatprep.subr.bf16.mxu0 %v2820
          %4091 = vmatpush1.bf16.msra.mxu0 %v2819
          %4092 = vmatprep.subr.bf16.mxu0 %v2836
          %4093 = vmatpush1.bf16.msra.mxu0 %v2835
          %4094 = vmatprep.subr.bf16.mxu0 %v2852
          %4095 = vmatpush1.bf16.msra.mxu0 %v2851
          %4096 = vmatprep.subr.bf16.mxu0 %v2868
          %4097 = vmatpush1.bf16.msra.mxu0 %v2867
          %4098 = vmatprep.subr.bf16.mxu0 %v2884
          %4099 = vmatpush1.bf16.msra.mxu0 %v2883
          %4100 = vmatprep.subr.bf16.mxu0 %v2900
          %4101 = vmatpush1.bf16.msra.mxu0 %v2899
          %4102 = vmatprep.subr.bf16.mxu0 %v2916
          %4103 = vmatpush1.bf16.msra.mxu0 %v2915
          %4104 = vmatprep.subr.bf16.mxu0 %v2932
          %4105 = vmatpush1.bf16.msra.mxu0 %v2931
          %4106 = vmatprep.subr.bf16.mxu0 %v2948
          %4107 = vmatpush1.bf16.msra.mxu0 %v2947
          %4108 = vmatprep.mubr.bf16.mxu0 %v896
          %4109 = vmatmul.mubr.bf16.gmra.mrb[0].mxu0 %v895
          %v4110 = vpop.f32.mrb[0].mxu0
          %v4111 = vadd.f32 %v4070, %v4110
          %v4112 = vpop.f32.mrb[0].mxu0
          %v4113 = vadd.f32 %v4072, %v4112
          %v4114 = vpop.f32.mrb[0].mxu0
          %v4115 = vpop.f32.mrb[0].mxu0
          %4116 = vdwg.mxu0
          %v4117 = vadd.f32 %v357, %v3537
          %v4118 = vadd.f32 %v358, %v3539
          %v4119 = vadd.f32 %v359, %v3619
          %v4120 = vadd.f32 %v360, %v3621
          %v4121 = vadd.f32 %v361, %v3701
          %v4122 = vadd.f32 %v362, %v3703
          %v4123 = vadd.f32 %v363, %v3783
          %v4124 = vadd.f32 %v364, %v3785
          %v4125 = vadd.f32 %v365, %v3865
          %v4126 = vadd.f32 %v366, %v3867
          %v4127 = vadd.f32 %v367, %v3947
          %v4128 = vadd.f32 %v368, %v3949
          %v4129 = vadd.f32 %v369, %v4029
          %v4130 = vadd.f32 %v370, %v4031
          %v4131 = vadd.f32 %v371, %v4111
          %v4132 = vadd.f32 %v372, %v4113
          %4133 = vst [vmem:[#allocation2] sm:$0xff] %v4117
          %4134 = vst [vmem:[#allocation2 + $0x8] sm:$0xff] %v4118
          %4135 = vst [vmem:[#allocation2 + $0x10] sm:$0xff] %v4119
          %4136 = vst [vmem:[#allocation2 + $0x18] sm:$0xff] %v4120
          %4137 = vst [vmem:[#allocation2 + $0x20] sm:$0xff] %v4121
          %4138 = vst [vmem:[#allocation2 + $0x28] sm:$0xff] %v4122
          %4139 = vst [vmem:[#allocation2 + $0x30] sm:$0xff] %v4123
          %4140 = vst [vmem:[#allocation2 + $0x38] sm:$0xff] %v4124
          %4141 = vst [vmem:[#allocation2 + $0x40] sm:$0xff] %v4125
          %4142 = vst [vmem:[#allocation2 + $0x48] sm:$0xff] %v4126
          %4143 = vst [vmem:[#allocation2 + $0x50] sm:$0xff] %v4127
          %4144 = vst [vmem:[#allocation2 + $0x58] sm:$0xff] %v4128
          %4145 = vst [vmem:[#allocation2 + $0x60] sm:$0xff] %v4129
          %4146 = vst [vmem:[#allocation2 + $0x68] sm:$0xff] %v4130
          %4147 = vst [vmem:[#allocation2 + $0x70] sm:$0xff] %v4131
          %4148 = vst [vmem:[#allocation2 + $0x78] sm:$0xff] %v4132
        $region68: #{b_classifier_forward.1} parent=43 // pred_fallthru
          _
        %p4149 = scmp.eq.s32.totalorder %s22, 2
        // Predicated region
        $region69: #{b_classifier_forward.1} parent=43 // pred_check
          %p4150 = pneg %p4149
        $region70: #{b_classifier_forward.1} parent=43 // pred_check_branch
          %4152 = sbr.rel (%p4150) target = $region72
        $region71: #{b_classifier_forward.1} parent=43 // pred_region
          %v4153 = vld [vmem:[#allocation2] sm:$0xff]
          %v4154 = vld [vmem:[#allocation2 + $0x8] sm:$0xff]
          %v4155 = vld [vmem:[#allocation2 + $0x10] sm:$0xff]
          %v4156 = vld [vmem:[#allocation2 + $0x18] sm:$0xff]
          %v4157 = vld [vmem:[#allocation2 + $0x20] sm:$0xff]
          %v4158 = vld [vmem:[#allocation2 + $0x28] sm:$0xff]
          %v4159 = vld [vmem:[#allocation2 + $0x30] sm:$0xff]
          %v4160 = vld [vmem:[#allocation2 + $0x38] sm:$0xff]
          %v4161 = vld [vmem:[#allocation2 + $0x40] sm:$0xff]
          %v4162 = vld [vmem:[#allocation2 + $0x48] sm:$0xff]
          %v4163 = vld [vmem:[#allocation2 + $0x50] sm:$0xff]
          %v4164 = vld [vmem:[#allocation2 + $0x58] sm:$0xff]
          %v4165 = vld [vmem:[#allocation2 + $0x60] sm:$0xff]
          %v4166 = vld [vmem:[#allocation2 + $0x68] sm:$0xff]
          %v4167 = vld [vmem:[#allocation2 + $0x70] sm:$0xff]
          %v4168 = vld [vmem:[#allocation2 + $0x78] sm:$0xff]
          %v4169 = vld [vmem:[#allocation6] ss:$4 sm:$0xff]
          %s4170 = scalar_lea.vmem [#allocation6], 32
          %v4171 = vld [vmem:[%s4170] ss:$4 sm:$0xff]
          %v4174 = vlaneseq
          %v4175 = vshrl.u32 %v4174, 7
          %v4176 = vsub.s32 0, %v4175
          %v4177 = vrot.slane %v4169, %v4176
          %v4178 = vlaneseq
          %v4179 = vshrl.u32 %v4178, 7
          %v4180 = vsub.s32 1, %v4179
          %v4181 = vrot.slane %v4169, %v4180
          %v4182 = vlaneseq
          %v4183 = vshrl.u32 %v4182, 7
          %v4184 = vsub.s32 2, %v4183
          %v4185 = vrot.slane %v4169, %v4184
          %v4186 = vlaneseq
          %v4187 = vshrl.u32 %v4186, 7
          %v4188 = vsub.s32 3, %v4187
          %v4189 = vrot.slane %v4169, %v4188
          %v4190 = vlaneseq
          %v4191 = vshrl.u32 %v4190, 7
          %v4192 = vsub.s32 4, %v4191
          %v4193 = vrot.slane %v4169, %v4192
          %v4194 = vlaneseq
          %v4195 = vshrl.u32 %v4194, 7
          %v4196 = vsub.s32 5, %v4195
          %v4197 = vrot.slane %v4169, %v4196
          %v4198 = vlaneseq
          %v4199 = vshrl.u32 %v4198, 7
          %v4200 = vsub.s32 6, %v4199
          %v4201 = vrot.slane %v4169, %v4200
          %v4202 = vlaneseq
          %v4203 = vshrl.u32 %v4202, 7
          %v4204 = vsub.s32 7, %v4203
          %v4205 = vrot.slane %v4169, %v4204
          %v4206 = vlaneseq
          %v4207 = vshrl.u32 %v4206, 7
          %v4208 = vsub.s32 0, %v4207
          %v4209 = vrot.slane %v4171, %v4208
          %v4210 = vlaneseq
          %v4211 = vshrl.u32 %v4210, 7
          %v4212 = vsub.s32 1, %v4211
          %v4213 = vrot.slane %v4171, %v4212
          %v4214 = vlaneseq
          %v4215 = vshrl.u32 %v4214, 7
          %v4216 = vsub.s32 2, %v4215
          %v4217 = vrot.slane %v4171, %v4216
          %v4218 = vlaneseq
          %v4219 = vshrl.u32 %v4218, 7
          %v4220 = vsub.s32 3, %v4219
          %v4221 = vrot.slane %v4171, %v4220
          %v4222 = vlaneseq
          %v4223 = vshrl.u32 %v4222, 7
          %v4224 = vsub.s32 4, %v4223
          %v4225 = vrot.slane %v4171, %v4224
          %v4226 = vlaneseq
          %v4227 = vshrl.u32 %v4226, 7
          %v4228 = vsub.s32 5, %v4227
          %v4229 = vrot.slane %v4171, %v4228
          %v4230 = vlaneseq
          %v4231 = vshrl.u32 %v4230, 7
          %v4232 = vsub.s32 6, %v4231
          %v4233 = vrot.slane %v4171, %v4232
          %v4234 = vlaneseq
          %v4235 = vshrl.u32 %v4234, 7
          %v4236 = vsub.s32 7, %v4235
          %v4237 = vrot.slane %v4171, %v4236
          %v4254 = vadd.f32 %v4153, %v4177
          %v4255 = vadd.f32 %v4154, %v4181
          %v4256 = vadd.f32 %v4155, %v4185
          %v4257 = vadd.f32 %v4156, %v4189
          %v4258 = vadd.f32 %v4157, %v4193
          %v4259 = vadd.f32 %v4158, %v4197
          %v4260 = vadd.f32 %v4159, %v4201
          %v4261 = vadd.f32 %v4160, %v4205
          %v4262 = vadd.f32 %v4161, %v4209
          %v4263 = vadd.f32 %v4162, %v4213
          %v4264 = vadd.f32 %v4163, %v4217
          %v4265 = vadd.f32 %v4164, %v4221
          %v4266 = vadd.f32 %v4165, %v4225
          %v4267 = vadd.f32 %v4166, %v4229
          %v4268 = vadd.f32 %v4167, %v4233
          %v4269 = vadd.f32 %v4168, %v4237
          %s4270 = scalar_lea.vmem [#allocation6], 1
          %v4271 = vld [vmem:[%s4270] ss:$4 sm:$0xff]
          %s4272 = scalar_lea.vmem [#allocation6], 33
          %v4273 = vld [vmem:[%s4272] ss:$4 sm:$0xff]
          %s4274 = scalar_lea.vmem [#allocation6], 2
          %v4275 = vld [vmem:[%s4274] ss:$4 sm:$0xff]
          %s4276 = scalar_lea.vmem [#allocation6], 34
          %v4277 = vld [vmem:[%s4276] ss:$4 sm:$0xff]
          %v4278 = vadd.f32 %v4254, %v4255
          %v4279 = vadd.f32 %v4278, %v4256
          %v4280 = vadd.f32 %v4279, %v4257
          %v4281 = vadd.f32 %v4280, %v4258
          %v4282 = vadd.f32 %v4281, %v4259
          %v4283 = vadd.f32 %v4282, %v4260
          %v4284 = vadd.f32 %v4283, %v4261
          %v4285 = vadd.f32 %v4284, %v4262
          %v4286 = vadd.f32 %v4285, %v4263
          %v4287 = vadd.f32 %v4286, %v4264
          %v4288 = vadd.f32 %v4287, %v4265
          %v4289 = vadd.f32 %v4288, %v4266
          %v4290 = vadd.f32 %v4289, %v4267
          %v4291 = vadd.f32 %v4290, %v4268
          %v4292 = vadd.f32 %v4291, %v4269
          %4293 = vadd.xlane.f32.xlu0 %v4292
          %v4294 = vpop.xlane.xlu0 %4293
          %v4295 = vrcp.pop 2048.0
          %v4296 = vmul.f32 %v4294, %v4295
          %v4297 = vsub.f32 %v4254, %v4296
          %v4298 = vsub.f32 %v4255, %v4296
          %v4299 = vsub.f32 %v4256, %v4296
          %v4300 = vsub.f32 %v4257, %v4296
          %v4301 = vsub.f32 %v4258, %v4296
          %v4302 = vsub.f32 %v4259, %v4296
          %v4303 = vsub.f32 %v4260, %v4296
          %v4304 = vsub.f32 %v4261, %v4296
          %v4305 = vsub.f32 %v4262, %v4296
          %v4306 = vsub.f32 %v4263, %v4296
          %v4307 = vsub.f32 %v4264, %v4296
          %v4308 = vsub.f32 %v4265, %v4296
          %v4309 = vsub.f32 %v4266, %v4296
          %v4310 = vsub.f32 %v4267, %v4296
          %v4311 = vsub.f32 %v4268, %v4296
          %v4312 = vsub.f32 %v4269, %v4296
          %v4313 = vmul.f32 %v4297, %v4297
          %v4314 = vmul.f32 %v4298, %v4298
          %v4315 = vmul.f32 %v4299, %v4299
          %v4316 = vmul.f32 %v4300, %v4300
          %v4317 = vmul.f32 %v4301, %v4301
          %v4318 = vmul.f32 %v4302, %v4302
          %v4319 = vmul.f32 %v4303, %v4303
          %v4320 = vmul.f32 %v4304, %v4304
          %v4321 = vmul.f32 %v4305, %v4305
          %v4322 = vmul.f32 %v4306, %v4306
          %v4323 = vmul.f32 %v4307, %v4307
          %v4324 = vmul.f32 %v4308, %v4308
          %v4325 = vmul.f32 %v4309, %v4309
          %v4326 = vmul.f32 %v4310, %v4310
          %v4327 = vmul.f32 %v4311, %v4311
          %v4328 = vmul.f32 %v4312, %v4312
          %v4329 = vadd.f32 %v4313, %v4314
          %v4330 = vadd.f32 %v4329, %v4315
          %v4331 = vadd.f32 %v4330, %v4316
          %v4332 = vadd.f32 %v4331, %v4317
          %v4333 = vadd.f32 %v4332, %v4318
          %v4334 = vadd.f32 %v4333, %v4319
          %v4335 = vadd.f32 %v4334, %v4320
          %v4336 = vadd.f32 %v4335, %v4321
          %v4337 = vadd.f32 %v4336, %v4322
          %v4338 = vadd.f32 %v4337, %v4323
          %v4339 = vadd.f32 %v4338, %v4324
          %v4340 = vadd.f32 %v4339, %v4325
          %v4341 = vadd.f32 %v4340, %v4326
          %v4342 = vadd.f32 %v4341, %v4327
          %v4343 = vadd.f32 %v4342, %v4328
          %4344 = vadd.xlane.f32.xlu0 %v4343
          %v4345 = vpop.xlane.xlu0 %4344
          %v4346 = vmul.f32 %v4345, %v4295
          %v4347 = vadd.f32 %v4346, 1e-05
          %v4348 = vrsqrt.pop %v4347
          %v4349 = vmul.f32 %v4297, %v4348
          %v4350 = vmul.f32 %v4298, %v4348
          %v4351 = vmul.f32 %v4299, %v4348
          %v4352 = vmul.f32 %v4300, %v4348
          %v4353 = vmul.f32 %v4301, %v4348
          %v4354 = vmul.f32 %v4302, %v4348
          %v4355 = vmul.f32 %v4303, %v4348
          %v4356 = vmul.f32 %v4304, %v4348
          %v4357 = vmul.f32 %v4305, %v4348
          %v4358 = vmul.f32 %v4306, %v4348
          %v4359 = vmul.f32 %v4307, %v4348
          %v4360 = vmul.f32 %v4308, %v4348
          %v4361 = vmul.f32 %v4309, %v4348
          %v4362 = vmul.f32 %v4310, %v4348
          %v4363 = vmul.f32 %v4311, %v4348
          %v4364 = vmul.f32 %v4312, %v4348
          %v4367 = vlaneseq
          %v4368 = vshrl.u32 %v4367, 7
          %v4369 = vsub.s32 0, %v4368
          %v4370 = vrot.slane %v4271, %v4369
          %v4371 = vlaneseq
          %v4372 = vshrl.u32 %v4371, 7
          %v4373 = vsub.s32 1, %v4372
          %v4374 = vrot.slane %v4271, %v4373
          %v4375 = vlaneseq
          %v4376 = vshrl.u32 %v4375, 7
          %v4377 = vsub.s32 2, %v4376
          %v4378 = vrot.slane %v4271, %v4377
          %v4379 = vlaneseq
          %v4380 = vshrl.u32 %v4379, 7
          %v4381 = vsub.s32 3, %v4380
          %v4382 = vrot.slane %v4271, %v4381
          %v4383 = vlaneseq
          %v4384 = vshrl.u32 %v4383, 7
          %v4385 = vsub.s32 4, %v4384
          %v4386 = vrot.slane %v4271, %v4385
          %v4387 = vlaneseq
          %v4388 = vshrl.u32 %v4387, 7
          %v4389 = vsub.s32 5, %v4388
          %v4390 = vrot.slane %v4271, %v4389
          %v4391 = vlaneseq
          %v4392 = vshrl.u32 %v4391, 7
          %v4393 = vsub.s32 6, %v4392
          %v4394 = vrot.slane %v4271, %v4393
          %v4395 = vlaneseq
          %v4396 = vshrl.u32 %v4395, 7
          %v4397 = vsub.s32 7, %v4396
          %v4398 = vrot.slane %v4271, %v4397
          %v4399 = vlaneseq
          %v4400 = vshrl.u32 %v4399, 7
          %v4401 = vsub.s32 0, %v4400
          %v4402 = vrot.slane %v4273, %v4401
          %v4403 = vlaneseq
          %v4404 = vshrl.u32 %v4403, 7
          %v4405 = vsub.s32 1, %v4404
          %v4406 = vrot.slane %v4273, %v4405
          %v4407 = vlaneseq
          %v4408 = vshrl.u32 %v4407, 7
          %v4409 = vsub.s32 2, %v4408
          %v4410 = vrot.slane %v4273, %v4409
          %v4411 = vlaneseq
          %v4412 = vshrl.u32 %v4411, 7
          %v4413 = vsub.s32 3, %v4412
          %v4414 = vrot.slane %v4273, %v4413
          %v4415 = vlaneseq
          %v4416 = vshrl.u32 %v4415, 7
          %v4417 = vsub.s32 4, %v4416
          %v4418 = vrot.slane %v4273, %v4417
          %v4419 = vlaneseq
          %v4420 = vshrl.u32 %v4419, 7
          %v4421 = vsub.s32 5, %v4420
          %v4422 = vrot.slane %v4273, %v4421
          %v4423 = vlaneseq
          %v4424 = vshrl.u32 %v4423, 7
          %v4425 = vsub.s32 6, %v4424
          %v4426 = vrot.slane %v4273, %v4425
          %v4427 = vlaneseq
          %v4428 = vshrl.u32 %v4427, 7
          %v4429 = vsub.s32 7, %v4428
          %v4430 = vrot.slane %v4273, %v4429
          %v4447 = vmul.f32 %v4349, %v4370
          %v4448 = vmul.f32 %v4350, %v4374
          %v4449 = vmul.f32 %v4351, %v4378
          %v4450 = vmul.f32 %v4352, %v4382
          %v4451 = vmul.f32 %v4353, %v4386
          %v4452 = vmul.f32 %v4354, %v4390
          %v4453 = vmul.f32 %v4355, %v4394
          %v4454 = vmul.f32 %v4356, %v4398
          %v4455 = vmul.f32 %v4357, %v4402
          %v4456 = vmul.f32 %v4358, %v4406
          %v4457 = vmul.f32 %v4359, %v4410
          %v4458 = vmul.f32 %v4360, %v4414
          %v4459 = vmul.f32 %v4361, %v4418
          %v4460 = vmul.f32 %v4362, %v4422
          %v4461 = vmul.f32 %v4363, %v4426
          %v4462 = vmul.f32 %v4364, %v4430
          %v4465 = vlaneseq
          %v4466 = vshrl.u32 %v4465, 7
          %v4467 = vsub.s32 0, %v4466
          %v4468 = vrot.slane %v4275, %v4467
          %v4469 = vlaneseq
          %v4470 = vshrl.u32 %v4469, 7
          %v4471 = vsub.s32 1, %v4470
          %v4472 = vrot.slane %v4275, %v4471
          %v4473 = vlaneseq
          %v4474 = vshrl.u32 %v4473, 7
          %v4475 = vsub.s32 2, %v4474
          %v4476 = vrot.slane %v4275, %v4475
          %v4477 = vlaneseq
          %v4478 = vshrl.u32 %v4477, 7
          %v4479 = vsub.s32 3, %v4478
          %v4480 = vrot.slane %v4275, %v4479
          %v4481 = vlaneseq
          %v4482 = vshrl.u32 %v4481, 7
          %v4483 = vsub.s32 4, %v4482
          %v4484 = vrot.slane %v4275, %v4483
          %v4485 = vlaneseq
          %v4486 = vshrl.u32 %v4485, 7
          %v4487 = vsub.s32 5, %v4486
          %v4488 = vrot.slane %v4275, %v4487
          %v4489 = vlaneseq
          %v4490 = vshrl.u32 %v4489, 7
          %v4491 = vsub.s32 6, %v4490
          %v4492 = vrot.slane %v4275, %v4491
          %v4493 = vlaneseq
          %v4494 = vshrl.u32 %v4493, 7
          %v4495 = vsub.s32 7, %v4494
          %v4496 = vrot.slane %v4275, %v4495
          %v4497 = vlaneseq
          %v4498 = vshrl.u32 %v4497, 7
          %v4499 = vsub.s32 0, %v4498
          %v4500 = vrot.slane %v4277, %v4499
          %v4501 = vlaneseq
          %v4502 = vshrl.u32 %v4501, 7
          %v4503 = vsub.s32 1, %v4502
          %v4504 = vrot.slane %v4277, %v4503
          %v4505 = vlaneseq
          %v4506 = vshrl.u32 %v4505, 7
          %v4507 = vsub.s32 2, %v4506
          %v4508 = vrot.slane %v4277, %v4507
          %v4509 = vlaneseq
          %v4510 = vshrl.u32 %v4509, 7
          %v4511 = vsub.s32 3, %v4510
          %v4512 = vrot.slane %v4277, %v4511
          %v4513 = vlaneseq
          %v4514 = vshrl.u32 %v4513, 7
          %v4515 = vsub.s32 4, %v4514
          %v4516 = vrot.slane %v4277, %v4515
          %v4517 = vlaneseq
          %v4518 = vshrl.u32 %v4517, 7
          %v4519 = vsub.s32 5, %v4518
          %v4520 = vrot.slane %v4277, %v4519
          %v4521 = vlaneseq
          %v4522 = vshrl.u32 %v4521, 7
          %v4523 = vsub.s32 6, %v4522
          %v4524 = vrot.slane %v4277, %v4523
          %v4525 = vlaneseq
          %v4526 = vshrl.u32 %v4525, 7
          %v4527 = vsub.s32 7, %v4526
          %v4528 = vrot.slane %v4277, %v4527
          %v4545 = vadd.f32 %v4447, %v4468
          %v4546 = vadd.f32 %v4448, %v4472
          %v4547 = vadd.f32 %v4449, %v4476
          %v4548 = vadd.f32 %v4450, %v4480
          %v4549 = vadd.f32 %v4451, %v4484
          %v4550 = vadd.f32 %v4452, %v4488
          %v4551 = vadd.f32 %v4453, %v4492
          %v4552 = vadd.f32 %v4454, %v4496
          %v4553 = vadd.f32 %v4455, %v4500
          %v4554 = vadd.f32 %v4456, %v4504
          %v4555 = vadd.f32 %v4457, %v4508
          %v4556 = vadd.f32 %v4458, %v4512
          %v4557 = vadd.f32 %v4459, %v4516
          %v4558 = vadd.f32 %v4460, %v4520
          %v4559 = vadd.f32 %v4461, %v4524
          %v4560 = vadd.f32 %v4462, %v4528
          %v4561 = vpack.c.bf16 %v4545, %v4545
          %v4562 = vpack.c.bf16 %v4546, %v4546
          %v4563 = vpack.c.bf16 %v4547, %v4547
          %v4564 = vpack.c.bf16 %v4548, %v4548
          %v4565 = vpack.c.bf16 %v4549, %v4549
          %v4566 = vpack.c.bf16 %v4550, %v4550
          %v4567 = vpack.c.bf16 %v4551, %v4551
          %v4568 = vpack.c.bf16 %v4552, %v4552
          %v4569 = vpack.c.bf16 %v4553, %v4553
          %v4570 = vpack.c.bf16 %v4554, %v4554
          %v4571 = vpack.c.bf16 %v4555, %v4555
          %v4572 = vpack.c.bf16 %v4556, %v4556
          %v4573 = vpack.c.bf16 %v4557, %v4557
          %v4574 = vpack.c.bf16 %v4558, %v4558
          %v4575 = vpack.c.bf16 %v4559, %v4559
          %v4576 = vpack.c.bf16 %v4560, %v4560
          %v4581 = vunpack.c.l.b16 %v4561
          %v4582 = vunpack.c.l.b16 %v4562
          %v4583 = vunpack.c.l.b16 %v4563
          %v4584 = vunpack.c.l.b16 %v4564
          %v4585 = vpack.c.b16 %v4582, %v4581
          %v4586 = vpack.c.b16 %v4584, %v4583
          %4589 = vst [vmem:[#allocation3] sm:$0xff] %v4585
          %4590 = vst [vmem:[#allocation3 + $0x8] sm:$0xff] %v4586
          %v4595 = vunpack.c.l.b16 %v4565
          %v4596 = vunpack.c.l.b16 %v4566
          %v4597 = vunpack.c.l.b16 %v4567
          %v4598 = vunpack.c.l.b16 %v4568
          %v4599 = vpack.c.b16 %v4596, %v4595
          %v4600 = vpack.c.b16 %v4598, %v4597
          %s4603 = scalar_lea.vmem [#allocation3], 16
          %4604 = vst [vmem:[%s4603] sm:$0xff] %v4599
          %4605 = vst [vmem:[%s4603 + $0x8] sm:$0xff] %v4600
          %v4610 = vunpack.c.l.b16 %v4569
          %v4611 = vunpack.c.l.b16 %v4570
          %v4612 = vunpack.c.l.b16 %v4571
          %v4613 = vunpack.c.l.b16 %v4572
          %v4614 = vpack.c.b16 %v4611, %v4610
          %v4615 = vpack.c.b16 %v4613, %v4612
          %s4618 = scalar_lea.vmem [#allocation3], 32
          %4619 = vst [vmem:[%s4618] sm:$0xff] %v4614
          %4620 = vst [vmem:[%s4618 + $0x8] sm:$0xff] %v4615
          %v4625 = vunpack.c.l.b16 %v4573
          %v4626 = vunpack.c.l.b16 %v4574
          %v4627 = vunpack.c.l.b16 %v4575
          %v4628 = vunpack.c.l.b16 %v4576
          %v4629 = vpack.c.b16 %v4626, %v4625
          %v4630 = vpack.c.b16 %v4628, %v4627
          %s4633 = scalar_lea.vmem [#allocation3], 48
          %4634 = vst [vmem:[%s4633] sm:$0xff] %v4629
          %4635 = vst [vmem:[%s4633 + $0x8] sm:$0xff] %v4630
          %4636 = vst [vmem:[#allocation2] sm:$0xff] 0.0
          %4637 = vst [vmem:[#allocation2 + $0x8] sm:$0xff] 0.0
          %4638 = vst [vmem:[#allocation2 + $0x10] sm:$0xff] 0.0
          %4639 = vst [vmem:[#allocation2 + $0x18] sm:$0xff] 0.0
          %4640 = vst [vmem:[#allocation2 + $0x20] sm:$0xff] 0.0
          %4641 = vst [vmem:[#allocation2 + $0x28] sm:$0xff] 0.0
          %4642 = vst [vmem:[#allocation2 + $0x30] sm:$0xff] 0.0
          %4643 = vst [vmem:[#allocation2 + $0x38] sm:$0xff] 0.0
          %4644 = vst [vmem:[#allocation2 + $0x40] sm:$0xff] 0.0
          %4645 = vst [vmem:[#allocation2 + $0x48] sm:$0xff] 0.0
          %4646 = vst [vmem:[#allocation2 + $0x50] sm:$0xff] 0.0
          %4647 = vst [vmem:[#allocation2 + $0x58] sm:$0xff] 0.0
          %4648 = vst [vmem:[#allocation2 + $0x60] sm:$0xff] 0.0
          %4649 = vst [vmem:[#allocation2 + $0x68] sm:$0xff] 0.0
          %4650 = vst [vmem:[#allocation2 + $0x70] sm:$0xff] 0.0
          %4651 = vst [vmem:[#allocation2 + $0x78] sm:$0xff] 0.0
        $region72: #{b_classifier_forward.1} parent=43 // pred_fallthru
          _
        %p4652 = scmp.ge.s32.totalorder %s22, 3
        // Predicated region
        $region73: #{b_classifier_forward.1} parent=43 // pred_check
          %p4653 = pneg %p4652
        $region74: #{b_classifier_forward.1} parent=43 // pred_check_branch
          %4655 = sbr.rel (%p4653) target = $region76
        $region75: #{b_classifier_forward.1} parent=43 // pred_region
          %s4656 = ssub.s32 %s22, 3
          %v4657 = vld [vmem:[#allocation2] sm:$0xff]
          %v4658 = vld [vmem:[#allocation2 + $0x8] sm:$0xff]
          %v4659 = vld [vmem:[#allocation2 + $0x10] sm:$0xff]
          %v4660 = vld [vmem:[#allocation2 + $0x18] sm:$0xff]
          %v4661 = vld [vmem:[#allocation2 + $0x20] sm:$0xff]
          %v4662 = vld [vmem:[#allocation2 + $0x28] sm:$0xff]
          %v4663 = vld [vmem:[#allocation2 + $0x30] sm:$0xff]
          %v4664 = vld [vmem:[#allocation2 + $0x38] sm:$0xff]
          %v4665 = vld [vmem:[#allocation2 + $0x40] sm:$0xff]
          %v4666 = vld [vmem:[#allocation2 + $0x48] sm:$0xff]
          %v4667 = vld [vmem:[#allocation2 + $0x50] sm:$0xff]
          %v4668 = vld [vmem:[#allocation2 + $0x58] sm:$0xff]
          %v4669 = vld [vmem:[#allocation2 + $0x60] sm:$0xff]
          %v4670 = vld [vmem:[#allocation2 + $0x68] sm:$0xff]
          %v4671 = vld [vmem:[#allocation2 + $0x70] sm:$0xff]
          %v4672 = vld [vmem:[#allocation2 + $0x78] sm:$0xff]
          %s4673 = smul.u32 %s4656, 4
          %s4674 = smul.addr %s4673, 4
          %s4675 = scalar_lea.vmem [#allocation3], %s4674
          %v4676 = vld [vmem:[%s4675] sm:$0xff]
          %v4677 = vld [vmem:[%s4675 + $0x8] sm:$0xff]
          %v4678 = vld [vmem:[%s279] sm:$0xff]
          %v4679 = vld [vmem:[%s279 + $0x8] sm:$0xff]
          %v4680 = vld [vmem:[%s279 + $0x10] sm:$0xff]
          %v4681 = vld [vmem:[%s279 + $0x18] sm:$0xff]
          %v4682 = vld [vmem:[%s279 + $0x20] sm:$0xff]
          %v4683 = vld [vmem:[%s279 + $0x28] sm:$0xff]
          %v4684 = vld [vmem:[%s279 + $0x30] sm:$0xff]
          %v4685 = vld [vmem:[%s279 + $0x38] sm:$0xff]
          %v4686 = vld [vmem:[%s279 + $0x40] sm:$0xff]
          %v4687 = vld [vmem:[%s279 + $0x48] sm:$0xff]
          %v4688 = vld [vmem:[%s279 + $0x50] sm:$0xff]
          %v4689 = vld [vmem:[%s279 + $0x58] sm:$0xff]
          %v4690 = vld [vmem:[%s279 + $0x60] sm:$0xff]
          %v4691 = vld [vmem:[%s279 + $0x68] sm:$0xff]
          %v4692 = vld [vmem:[%s279 + $0x70] sm:$0xff]
          %v4693 = vld [vmem:[%s279 + $0x78] sm:$0xff]
          %v4694 = vld [vmem:[%s279 + $0x80] sm:$0xff]
          %v4695 = vld [vmem:[%s279 + $0x88] sm:$0xff]
          %v4696 = vld [vmem:[%s279 + $0x90] sm:$0xff]
          %v4697 = vld [vmem:[%s279 + $0x98] sm:$0xff]
          %v4698 = vld [vmem:[%s279 + $0xa0] sm:$0xff]
          %v4699 = vld [vmem:[%s279 + $0xa8] sm:$0xff]
          %v4700 = vld [vmem:[%s279 + $0xb0] sm:$0xff]
          %v4701 = vld [vmem:[%s279 + $0xb8] sm:$0xff]
          %v4702 = vld [vmem:[%s279 + $0xc0] sm:$0xff]
          %v4703 = vld [vmem:[%s279 + $0xc8] sm:$0xff]
          %v4704 = vld [vmem:[%s279 + $0xd0] sm:$0xff]
          %v4705 = vld [vmem:[%s279 + $0xd8] sm:$0xff]
          %v4706 = vld [vmem:[%s279 + $0xe0] sm:$0xff]
          %v4707 = vld [vmem:[%s279 + $0xe8] sm:$0xff]
          %v4708 = vld [vmem:[%s279 + $0xf0] sm:$0xff]
          %v4709 = vld [vmem:[%s279 + $0xf8] sm:$0xff]
          %v4710 = vld [vmem:[%s279 + $0x100] sm:$0xff]
          %v4711 = vld [vmem:[%s279 + $0x108] sm:$0xff]
          %v4712 = vld [vmem:[%s279 + $0x110] sm:$0xff]
          %v4713 = vld [vmem:[%s279 + $0x118] sm:$0xff]
          %v4714 = vld [vmem:[%s279 + $0x120] sm:$0xff]
          %v4715 = vld [vmem:[%s279 + $0x128] sm:$0xff]
          %v4716 = vld [vmem:[%s279 + $0x130] sm:$0xff]
          %v4717 = vld [vmem:[%s279 + $0x138] sm:$0xff]
          %v4718 = vld [vmem:[%s279 + $0x140] sm:$0xff]
          %v4719 = vld [vmem:[%s279 + $0x148] sm:$0xff]
          %v4720 = vld [vmem:[%s279 + $0x150] sm:$0xff]
          %v4721 = vld [vmem:[%s279 + $0x158] sm:$0xff]
          %v4722 = vld [vmem:[%s279 + $0x160] sm:$0xff]
          %v4723 = vld [vmem:[%s279 + $0x168] sm:$0xff]
          %v4724 = vld [vmem:[%s279 + $0x170] sm:$0xff]
          %v4725 = vld [vmem:[%s279 + $0x178] sm:$0xff]
          %v4726 = vld [vmem:[%s279 + $0x180] sm:$0xff]
          %v4727 = vld [vmem:[%s279 + $0x188] sm:$0xff]
          %v4728 = vld [vmem:[%s279 + $0x190] sm:$0xff]
          %v4729 = vld [vmem:[%s279 + $0x198] sm:$0xff]
          %v4730 = vld [vmem:[%s279 + $0x1a0] sm:$0xff]
          %v4731 = vld [vmem:[%s279 + $0x1a8] sm:$0xff]
          %v4732 = vld [vmem:[%s279 + $0x1b0] sm:$0xff]
          %v4733 = vld [vmem:[%s279 + $0x1b8] sm:$0xff]
          %v4734 = vld [vmem:[%s279 + $0x1c0] sm:$0xff]
          %v4735 = vld [vmem:[%s279 + $0x1c8] sm:$0xff]
          %v4736 = vld [vmem:[%s279 + $0x1d0] sm:$0xff]
          %v4737 = vld [vmem:[%s279 + $0x1d8] sm:$0xff]
          %v4738 = vld [vmem:[%s279 + $0x1e0] sm:$0xff]
          %v4739 = vld [vmem:[%s279 + $0x1e8] sm:$0xff]
          %v4740 = vld [vmem:[%s279 + $0x1f0] sm:$0xff]
          %v4741 = vld [vmem:[%s279 + $0x1f8] sm:$0xff]
          %v4742 = vld [vmem:[%s279 + $0x200] sm:$0xff]
          %v4743 = vld [vmem:[%s279 + $0x208] sm:$0xff]
          %v4744 = vld [vmem:[%s279 + $0x210] sm:$0xff]
          %v4745 = vld [vmem:[%s279 + $0x218] sm:$0xff]
          %v4746 = vld [vmem:[%s279 + $0x220] sm:$0xff]
          %v4747 = vld [vmem:[%s279 + $0x228] sm:$0xff]
          %v4748 = vld [vmem:[%s279 + $0x230] sm:$0xff]
          %v4749 = vld [vmem:[%s279 + $0x238] sm:$0xff]
          %v4750 = vld [vmem:[%s279 + $0x240] sm:$0xff]
          %v4751 = vld [vmem:[%s279 + $0x248] sm:$0xff]
          %v4752 = vld [vmem:[%s279 + $0x250] sm:$0xff]
          %v4753 = vld [vmem:[%s279 + $0x258] sm:$0xff]
          %v4754 = vld [vmem:[%s279 + $0x260] sm:$0xff]
          %v4755 = vld [vmem:[%s279 + $0x268] sm:$0xff]
          %v4756 = vld [vmem:[%s279 + $0x270] sm:$0xff]
          %v4757 = vld [vmem:[%s279 + $0x278] sm:$0xff]
          %v4758 = vld [vmem:[%s279 + $0x280] sm:$0xff]
          %v4759 = vld [vmem:[%s279 + $0x288] sm:$0xff]
          %v4760 = vld [vmem:[%s279 + $0x290] sm:$0xff]
          %v4761 = vld [vmem:[%s279 + $0x298] sm:$0xff]
          %v4762 = vld [vmem:[%s279 + $0x2a0] sm:$0xff]
          %v4763 = vld [vmem:[%s279 + $0x2a8] sm:$0xff]
          %v4764 = vld [vmem:[%s279 + $0x2b0] sm:$0xff]
          %v4765 = vld [vmem:[%s279 + $0x2b8] sm:$0xff]
          %v4766 = vld [vmem:[%s279 + $0x2c0] sm:$0xff]
          %v4767 = vld [vmem:[%s279 + $0x2c8] sm:$0xff]
          %v4768 = vld [vmem:[%s279 + $0x2d0] sm:$0xff]
          %v4769 = vld [vmem:[%s279 + $0x2d8] sm:$0xff]
          %v4770 = vld [vmem:[%s279 + $0x2e0] sm:$0xff]
          %v4771 = vld [vmem:[%s279 + $0x2e8] sm:$0xff]
          %v4772 = vld [vmem:[%s279 + $0x2f0] sm:$0xff]
          %v4773 = vld [vmem:[%s279 + $0x2f8] sm:$0xff]
          %v4774 = vld [vmem:[%s279 + $0x300] sm:$0xff]
          %v4775 = vld [vmem:[%s279 + $0x308] sm:$0xff]
          %v4776 = vld [vmem:[%s279 + $0x310] sm:$0xff]
          %v4777 = vld [vmem:[%s279 + $0x318] sm:$0xff]
          %v4778 = vld [vmem:[%s279 + $0x320] sm:$0xff]
          %v4779 = vld [vmem:[%s279 + $0x328] sm:$0xff]
          %v4780 = vld [vmem:[%s279 + $0x330] sm:$0xff]
          %v4781 = vld [vmem:[%s279 + $0x338] sm:$0xff]
          %v4782 = vld [vmem:[%s279 + $0x340] sm:$0xff]
          %v4783 = vld [vmem:[%s279 + $0x348] sm:$0xff]
          %v4784 = vld [vmem:[%s279 + $0x350] sm:$0xff]
          %v4785 = vld [vmem:[%s279 + $0x358] sm:$0xff]
          %v4786 = vld [vmem:[%s279 + $0x360] sm:$0xff]
          %v4787 = vld [vmem:[%s279 + $0x368] sm:$0xff]
          %v4788 = vld [vmem:[%s279 + $0x370] sm:$0xff]
          %v4789 = vld [vmem:[%s279 + $0x378] sm:$0xff]
          %v4790 = vld [vmem:[%s279 + $0x380] sm:$0xff]
          %v4791 = vld [vmem:[%s279 + $0x388] sm:$0xff]
          %v4792 = vld [vmem:[%s279 + $0x390] sm:$0xff]
          %v4793 = vld [vmem:[%s279 + $0x398] sm:$0xff]
          %v4794 = vld [vmem:[%s279 + $0x3a0] sm:$0xff]
          %v4795 = vld [vmem:[%s279 + $0x3a8] sm:$0xff]
          %v4796 = vld [vmem:[%s279 + $0x3b0] sm:$0xff]
          %v4797 = vld [vmem:[%s279 + $0x3b8] sm:$0xff]
          %v4798 = vld [vmem:[%s279 + $0x3c0] sm:$0xff]
          %v4799 = vld [vmem:[%s279 + $0x3c8] sm:$0xff]
          %v4800 = vld [vmem:[%s279 + $0x3d0] sm:$0xff]
          %v4801 = vld [vmem:[%s279 + $0x3d8] sm:$0xff]
          %v4802 = vld [vmem:[%s279 + $0x3e0] sm:$0xff]
          %v4803 = vld [vmem:[%s279 + $0x3e8] sm:$0xff]
          %v4804 = vld [vmem:[%s279 + $0x3f0] sm:$0xff]
          %v4805 = vld [vmem:[%s279 + $0x3f8] sm:$0xff]
          %v4806 = vld [vmem:[%s279 + $0x400] sm:$0xff]
          %v4807 = vld [vmem:[%s279 + $0x408] sm:$0xff]
          %v4808 = vld [vmem:[%s279 + $0x410] sm:$0xff]
          %v4809 = vld [vmem:[%s279 + $0x418] sm:$0xff]
          %v4810 = vld [vmem:[%s279 + $0x420] sm:$0xff]
          %v4811 = vld [vmem:[%s279 + $0x428] sm:$0xff]
          %v4812 = vld [vmem:[%s279 + $0x430] sm:$0xff]
          %v4813 = vld [vmem:[%s279 + $0x438] sm:$0xff]
          %v4814 = vld [vmem:[%s279 + $0x440] sm:$0xff]
          %v4815 = vld [vmem:[%s279 + $0x448] sm:$0xff]
          %v4816 = vld [vmem:[%s279 + $0x450] sm:$0xff]
          %v4817 = vld [vmem:[%s279 + $0x458] sm:$0xff]
          %v4818 = vld [vmem:[%s279 + $0x460] sm:$0xff]
          %v4819 = vld [vmem:[%s279 + $0x468] sm:$0xff]
          %v4820 = vld [vmem:[%s279 + $0x470] sm:$0xff]
          %v4821 = vld [vmem:[%s279 + $0x478] sm:$0xff]
          %v4822 = vld [vmem:[%s279 + $0x480] sm:$0xff]
          %v4823 = vld [vmem:[%s279 + $0x488] sm:$0xff]
          %v4824 = vld [vmem:[%s279 + $0x490] sm:$0xff]
          %v4825 = vld [vmem:[%s279 + $0x498] sm:$0xff]
          %v4826 = vld [vmem:[%s279 + $0x4a0] sm:$0xff]
          %v4827 = vld [vmem:[%s279 + $0x4a8] sm:$0xff]
          %v4828 = vld [vmem:[%s279 + $0x4b0] sm:$0xff]
          %v4829 = vld [vmem:[%s279 + $0x4b8] sm:$0xff]
          %v4830 = vld [vmem:[%s279 + $0x4c0] sm:$0xff]
          %v4831 = vld [vmem:[%s279 + $0x4c8] sm:$0xff]
          %v4832 = vld [vmem:[%s279 + $0x4d0] sm:$0xff]
          %v4833 = vld [vmem:[%s279 + $0x4d8] sm:$0xff]
          %v4834 = vld [vmem:[%s279 + $0x4e0] sm:$0xff]
          %v4835 = vld [vmem:[%s279 + $0x4e8] sm:$0xff]
          %v4836 = vld [vmem:[%s279 + $0x4f0] sm:$0xff]
          %v4837 = vld [vmem:[%s279 + $0x4f8] sm:$0xff]
          %v4838 = vld [vmem:[%s279 + $0x500] sm:$0xff]
          %v4839 = vld [vmem:[%s279 + $0x508] sm:$0xff]
          %v4840 = vld [vmem:[%s279 + $0x510] sm:$0xff]
          %v4841 = vld [vmem:[%s279 + $0x518] sm:$0xff]
          %v4842 = vld [vmem:[%s279 + $0x520] sm:$0xff]
          %v4843 = vld [vmem:[%s279 + $0x528] sm:$0xff]
          %v4844 = vld [vmem:[%s279 + $0x530] sm:$0xff]
          %v4845 = vld [vmem:[%s279 + $0x538] sm:$0xff]
          %v4846 = vld [vmem:[%s279 + $0x540] sm:$0xff]
          %v4847 = vld [vmem:[%s279 + $0x548] sm:$0xff]
          %v4848 = vld [vmem:[%s279 + $0x550] sm:$0xff]
          %v4849 = vld [vmem:[%s279 + $0x558] sm:$0xff]
          %v4850 = vld [vmem:[%s279 + $0x560] sm:$0xff]
          %v4851 = vld [vmem:[%s279 + $0x568] sm:$0xff]
          %v4852 = vld [vmem:[%s279 + $0x570] sm:$0xff]
          %v4853 = vld [vmem:[%s279 + $0x578] sm:$0xff]
          %v4854 = vld [vmem:[%s279 + $0x580] sm:$0xff]
          %v4855 = vld [vmem:[%s279 + $0x588] sm:$0xff]
          %v4856 = vld [vmem:[%s279 + $0x590] sm:$0xff]
          %v4857 = vld [vmem:[%s279 + $0x598] sm:$0xff]
          %v4858 = vld [vmem:[%s279 + $0x5a0] sm:$0xff]
          %v4859 = vld [vmem:[%s279 + $0x5a8] sm:$0xff]
          %v4860 = vld [vmem:[%s279 + $0x5b0] sm:$0xff]
          %v4861 = vld [vmem:[%s279 + $0x5b8] sm:$0xff]
          %v4862 = vld [vmem:[%s279 + $0x5c0] sm:$0xff]
          %v4863 = vld [vmem:[%s279 + $0x5c8] sm:$0xff]
          %v4864 = vld [vmem:[%s279 + $0x5d0] sm:$0xff]
          %v4865 = vld [vmem:[%s279 + $0x5d8] sm:$0xff]
          %v4866 = vld [vmem:[%s279 + $0x5e0] sm:$0xff]
          %v4867 = vld [vmem:[%s279 + $0x5e8] sm:$0xff]
          %v4868 = vld [vmem:[%s279 + $0x5f0] sm:$0xff]
          %v4869 = vld [vmem:[%s279 + $0x5f8] sm:$0xff]
          %v4870 = vld [vmem:[%s279 + $0x600] sm:$0xff]
          %v4871 = vld [vmem:[%s279 + $0x608] sm:$0xff]
          %v4872 = vld [vmem:[%s279 + $0x610] sm:$0xff]
          %v4873 = vld [vmem:[%s279 + $0x618] sm:$0xff]
          %v4874 = vld [vmem:[%s279 + $0x620] sm:$0xff]
          %v4875 = vld [vmem:[%s279 + $0x628] sm:$0xff]
          %v4876 = vld [vmem:[%s279 + $0x630] sm:$0xff]
          %v4877 = vld [vmem:[%s279 + $0x638] sm:$0xff]
          %v4878 = vld [vmem:[%s279 + $0x640] sm:$0xff]
          %v4879 = vld [vmem:[%s279 + $0x648] sm:$0xff]
          %v4880 = vld [vmem:[%s279 + $0x650] sm:$0xff]
          %v4881 = vld [vmem:[%s279 + $0x658] sm:$0xff]
          %v4882 = vld [vmem:[%s279 + $0x660] sm:$0xff]
          %v4883 = vld [vmem:[%s279 + $0x668] sm:$0xff]
          %v4884 = vld [vmem:[%s279 + $0x670] sm:$0xff]
          %v4885 = vld [vmem:[%s279 + $0x678] sm:$0xff]
          %v4886 = vld [vmem:[%s279 + $0x680] sm:$0xff]
          %v4887 = vld [vmem:[%s279 + $0x688] sm:$0xff]
          %v4888 = vld [vmem:[%s279 + $0x690] sm:$0xff]
          %v4889 = vld [vmem:[%s279 + $0x698] sm:$0xff]
          %v4890 = vld [vmem:[%s279 + $0x6a0] sm:$0xff]
          %v4891 = vld [vmem:[%s279 + $0x6a8] sm:$0xff]
          %v4892 = vld [vmem:[%s279 + $0x6b0] sm:$0xff]
          %v4893 = vld [vmem:[%s279 + $0x6b8] sm:$0xff]
          %v4894 = vld [vmem:[%s279 + $0x6c0] sm:$0xff]
          %v4895 = vld [vmem:[%s279 + $0x6c8] sm:$0xff]
          %v4896 = vld [vmem:[%s279 + $0x6d0] sm:$0xff]
          %v4897 = vld [vmem:[%s279 + $0x6d8] sm:$0xff]
          %v4898 = vld [vmem:[%s279 + $0x6e0] sm:$0xff]
          %v4899 = vld [vmem:[%s279 + $0x6e8] sm:$0xff]
          %v4900 = vld [vmem:[%s279 + $0x6f0] sm:$0xff]
          %v4901 = vld [vmem:[%s279 + $0x6f8] sm:$0xff]
          %v4902 = vld [vmem:[%s279 + $0x700] sm:$0xff]
          %v4903 = vld [vmem:[%s279 + $0x708] sm:$0xff]
          %v4904 = vld [vmem:[%s279 + $0x710] sm:$0xff]
          %v4905 = vld [vmem:[%s279 + $0x718] sm:$0xff]
          %v4906 = vld [vmem:[%s279 + $0x720] sm:$0xff]
          %v4907 = vld [vmem:[%s279 + $0x728] sm:$0xff]
          %v4908 = vld [vmem:[%s279 + $0x730] sm:$0xff]
          %v4909 = vld [vmem:[%s279 + $0x738] sm:$0xff]
          %v4910 = vld [vmem:[%s279 + $0x740] sm:$0xff]
          %v4911 = vld [vmem:[%s279 + $0x748] sm:$0xff]
          %v4912 = vld [vmem:[%s279 + $0x750] sm:$0xff]
          %v4913 = vld [vmem:[%s279 + $0x758] sm:$0xff]
          %v4914 = vld [vmem:[%s279 + $0x760] sm:$0xff]
          %v4915 = vld [vmem:[%s279 + $0x768] sm:$0xff]
          %v4916 = vld [vmem:[%s279 + $0x770] sm:$0xff]
          %v4917 = vld [vmem:[%s279 + $0x778] sm:$0xff]
          %v4918 = vld [vmem:[%s279 + $0x780] sm:$0xff]
          %v4919 = vld [vmem:[%s279 + $0x788] sm:$0xff]
          %v4920 = vld [vmem:[%s279 + $0x790] sm:$0xff]
          %v4921 = vld [vmem:[%s279 + $0x798] sm:$0xff]
          %v4922 = vld [vmem:[%s279 + $0x7a0] sm:$0xff]
          %v4923 = vld [vmem:[%s279 + $0x7a8] sm:$0xff]
          %v4924 = vld [vmem:[%s279 + $0x7b0] sm:$0xff]
          %v4925 = vld [vmem:[%s279 + $0x7b8] sm:$0xff]
          %v4926 = vld [vmem:[%s279 + $0x7c0] sm:$0xff]
          %v4927 = vld [vmem:[%s279 + $0x7c8] sm:$0xff]
          %v4928 = vld [vmem:[%s279 + $0x7d0] sm:$0xff]
          %v4929 = vld [vmem:[%s279 + $0x7d8] sm:$0xff]
          %v4930 = vld [vmem:[%s279 + $0x7e0] sm:$0xff]
          %v4931 = vld [vmem:[%s279 + $0x7e8] sm:$0xff]
          %v4932 = vld [vmem:[%s279 + $0x7f0] sm:$0xff]
          %v4933 = vld [vmem:[%s279 + $0x7f8] sm:$0xff]
          %v4934 = vld [vmem:[%s279 + $0x800] sm:$0xff]
          %v4935 = vld [vmem:[%s279 + $0x808] sm:$0xff]
          %v4936 = vld [vmem:[%s279 + $0x810] sm:$0xff]
          %v4937 = vld [vmem:[%s279 + $0x818] sm:$0xff]
          %v4938 = vld [vmem:[%s279 + $0x820] sm:$0xff]
          %v4939 = vld [vmem:[%s279 + $0x828] sm:$0xff]
          %v4940 = vld [vmem:[%s279 + $0x830] sm:$0xff]
          %v4941 = vld [vmem:[%s279 + $0x838] sm:$0xff]
          %v4942 = vld [vmem:[%s279 + $0x840] sm:$0xff]
          %v4943 = vld [vmem:[%s279 + $0x848] sm:$0xff]
          %v4944 = vld [vmem:[%s279 + $0x850] sm:$0xff]
          %v4945 = vld [vmem:[%s279 + $0x858] sm:$0xff]
          %v4946 = vld [vmem:[%s279 + $0x860] sm:$0xff]
          %v4947 = vld [vmem:[%s279 + $0x868] sm:$0xff]
          %v4948 = vld [vmem:[%s279 + $0x870] sm:$0xff]
          %v4949 = vld [vmem:[%s279 + $0x878] sm:$0xff]
          %v4950 = vld [vmem:[%s279 + $0x880] sm:$0xff]
          %v4951 = vld [vmem:[%s279 + $0x888] sm:$0xff]
          %v4952 = vld [vmem:[%s279 + $0x890] sm:$0xff]
          %v4953 = vld [vmem:[%s279 + $0x898] sm:$0xff]
          %v4954 = vld [vmem:[%s279 + $0x8a0] sm:$0xff]
          %v4955 = vld [vmem:[%s279 + $0x8a8] sm:$0xff]
          %v4956 = vld [vmem:[%s279 + $0x8b0] sm:$0xff]
          %v4957 = vld [vmem:[%s279 + $0x8b8] sm:$0xff]
          %v4958 = vld [vmem:[%s279 + $0x8c0] sm:$0xff]
          %v4959 = vld [vmem:[%s279 + $0x8c8] sm:$0xff]
          %v4960 = vld [vmem:[%s279 + $0x8d0] sm:$0xff]
          %v4961 = vld [vmem:[%s279 + $0x8d8] sm:$0xff]
          %v4962 = vld [vmem:[%s279 + $0x8e0] sm:$0xff]
          %v4963 = vld [vmem:[%s279 + $0x8e8] sm:$0xff]
          %v4964 = vld [vmem:[%s279 + $0x8f0] sm:$0xff]
          %v4965 = vld [vmem:[%s279 + $0x8f8] sm:$0xff]
          %v4966 = vld [vmem:[%s279 + $0x900] sm:$0xff]
          %v4967 = vld [vmem:[%s279 + $0x908] sm:$0xff]
          %v4968 = vld [vmem:[%s279 + $0x910] sm:$0xff]
          %v4969 = vld [vmem:[%s279 + $0x918] sm:$0xff]
          %v4970 = vld [vmem:[%s279 + $0x920] sm:$0xff]
          %v4971 = vld [vmem:[%s279 + $0x928] sm:$0xff]
          %v4972 = vld [vmem:[%s279 + $0x930] sm:$0xff]
          %v4973 = vld [vmem:[%s279 + $0x938] sm:$0xff]
          %v4974 = vld [vmem:[%s279 + $0x940] sm:$0xff]
          %v4975 = vld [vmem:[%s279 + $0x948] sm:$0xff]
          %v4976 = vld [vmem:[%s279 + $0x950] sm:$0xff]
          %v4977 = vld [vmem:[%s279 + $0x958] sm:$0xff]
          %v4978 = vld [vmem:[%s279 + $0x960] sm:$0xff]
          %v4979 = vld [vmem:[%s279 + $0x968] sm:$0xff]
          %v4980 = vld [vmem:[%s279 + $0x970] sm:$0xff]
          %v4981 = vld [vmem:[%s279 + $0x978] sm:$0xff]
          %v4982 = vld [vmem:[%s279 + $0x980] sm:$0xff]
          %v4983 = vld [vmem:[%s279 + $0x988] sm:$0xff]
          %v4984 = vld [vmem:[%s279 + $0x990] sm:$0xff]
          %v4985 = vld [vmem:[%s279 + $0x998] sm:$0xff]
          %v4986 = vld [vmem:[%s279 + $0x9a0] sm:$0xff]
          %v4987 = vld [vmem:[%s279 + $0x9a8] sm:$0xff]
          %v4988 = vld [vmem:[%s279 + $0x9b0] sm:$0xff]
          %v4989 = vld [vmem:[%s279 + $0x9b8] sm:$0xff]
          %v4990 = vld [vmem:[%s279 + $0x9c0] sm:$0xff]
          %v4991 = vld [vmem:[%s279 + $0x9c8] sm:$0xff]
          %v4992 = vld [vmem:[%s279 + $0x9d0] sm:$0xff]
          %v4993 = vld [vmem:[%s279 + $0x9d8] sm:$0xff]
          %v4994 = vld [vmem:[%s279 + $0x9e0] sm:$0xff]
          %v4995 = vld [vmem:[%s279 + $0x9e8] sm:$0xff]
          %v4996 = vld [vmem:[%s279 + $0x9f0] sm:$0xff]
          %v4997 = vld [vmem:[%s279 + $0x9f8] sm:$0xff]
          %v4998 = vld [vmem:[%s279 + $0xa00] sm:$0xff]
          %v4999 = vld [vmem:[%s279 + $0xa08] sm:$0xff]
          %v5000 = vld [vmem:[%s279 + $0xa10] sm:$0xff]
          %v5001 = vld [vmem:[%s279 + $0xa18] sm:$0xff]
          %v5002 = vld [vmem:[%s279 + $0xa20] sm:$0xff]
          %v5003 = vld [vmem:[%s279 + $0xa28] sm:$0xff]
          %v5004 = vld [vmem:[%s279 + $0xa30] sm:$0xff]
          %v5005 = vld [vmem:[%s279 + $0xa38] sm:$0xff]
          %v5006 = vld [vmem:[%s279 + $0xa40] sm:$0xff]
          %v5007 = vld [vmem:[%s279 + $0xa48] sm:$0xff]
          %v5008 = vld [vmem:[%s279 + $0xa50] sm:$0xff]
          %v5009 = vld [vmem:[%s279 + $0xa58] sm:$0xff]
          %v5010 = vld [vmem:[%s279 + $0xa60] sm:$0xff]
          %v5011 = vld [vmem:[%s279 + $0xa68] sm:$0xff]
          %v5012 = vld [vmem:[%s279 + $0xa70] sm:$0xff]
          %v5013 = vld [vmem:[%s279 + $0xa78] sm:$0xff]
          %v5014 = vld [vmem:[%s279 + $0xa80] sm:$0xff]
          %v5015 = vld [vmem:[%s279 + $0xa88] sm:$0xff]
          %v5016 = vld [vmem:[%s279 + $0xa90] sm:$0xff]
          %v5017 = vld [vmem:[%s279 + $0xa98] sm:$0xff]
          %v5018 = vld [vmem:[%s279 + $0xaa0] sm:$0xff]
          %v5019 = vld [vmem:[%s279 + $0xaa8] sm:$0xff]
          %v5020 = vld [vmem:[%s279 + $0xab0] sm:$0xff]
          %v5021 = vld [vmem:[%s279 + $0xab8] sm:$0xff]
          %v5022 = vld [vmem:[%s279 + $0xac0] sm:$0xff]
          %v5023 = vld [vmem:[%s279 + $0xac8] sm:$0xff]
          %v5024 = vld [vmem:[%s279 + $0xad0] sm:$0xff]
          %v5025 = vld [vmem:[%s279 + $0xad8] sm:$0xff]
          %v5026 = vld [vmem:[%s279 + $0xae0] sm:$0xff]
          %v5027 = vld [vmem:[%s279 + $0xae8] sm:$0xff]
          %v5028 = vld [vmem:[%s279 + $0xaf0] sm:$0xff]
          %v5029 = vld [vmem:[%s279 + $0xaf8] sm:$0xff]
          %v5030 = vld [vmem:[%s279 + $0xb00] sm:$0xff]
          %v5031 = vld [vmem:[%s279 + $0xb08] sm:$0xff]
          %v5032 = vld [vmem:[%s279 + $0xb10] sm:$0xff]
          %v5033 = vld [vmem:[%s279 + $0xb18] sm:$0xff]
          %v5034 = vld [vmem:[%s279 + $0xb20] sm:$0xff]
          %v5035 = vld [vmem:[%s279 + $0xb28] sm:$0xff]
          %v5036 = vld [vmem:[%s279 + $0xb30] sm:$0xff]
          %v5037 = vld [vmem:[%s279 + $0xb38] sm:$0xff]
          %v5038 = vld [vmem:[%s279 + $0xb40] sm:$0xff]
          %v5039 = vld [vmem:[%s279 + $0xb48] sm:$0xff]
          %v5040 = vld [vmem:[%s279 + $0xb50] sm:$0xff]
          %v5041 = vld [vmem:[%s279 + $0xb58] sm:$0xff]
          %v5042 = vld [vmem:[%s279 + $0xb60] sm:$0xff]
          %v5043 = vld [vmem:[%s279 + $0xb68] sm:$0xff]
          %v5044 = vld [vmem:[%s279 + $0xb70] sm:$0xff]
          %v5045 = vld [vmem:[%s279 + $0xb78] sm:$0xff]
          %v5046 = vld [vmem:[%s279 + $0xb80] sm:$0xff]
          %v5047 = vld [vmem:[%s279 + $0xb88] sm:$0xff]
          %v5048 = vld [vmem:[%s279 + $0xb90] sm:$0xff]
          %v5049 = vld [vmem:[%s279 + $0xb98] sm:$0xff]
          %v5050 = vld [vmem:[%s279 + $0xba0] sm:$0xff]
          %v5051 = vld [vmem:[%s279 + $0xba8] sm:$0xff]
          %v5052 = vld [vmem:[%s279 + $0xbb0] sm:$0xff]
          %v5053 = vld [vmem:[%s279 + $0xbb8] sm:$0xff]
          %v5054 = vld [vmem:[%s279 + $0xbc0] sm:$0xff]
          %v5055 = vld [vmem:[%s279 + $0xbc8] sm:$0xff]
          %v5056 = vld [vmem:[%s279 + $0xbd0] sm:$0xff]
          %v5057 = vld [vmem:[%s279 + $0xbd8] sm:$0xff]
          %v5058 = vld [vmem:[%s279 + $0xbe0] sm:$0xff]
          %v5059 = vld [vmem:[%s279 + $0xbe8] sm:$0xff]
          %v5060 = vld [vmem:[%s279 + $0xbf0] sm:$0xff]
          %v5061 = vld [vmem:[%s279 + $0xbf8] sm:$0xff]
          %v5062 = vld [vmem:[%s279 + $0xc00] sm:$0xff]
          %v5063 = vld [vmem:[%s279 + $0xc08] sm:$0xff]
          %v5064 = vld [vmem:[%s279 + $0xc10] sm:$0xff]
          %v5065 = vld [vmem:[%s279 + $0xc18] sm:$0xff]
          %v5066 = vld [vmem:[%s279 + $0xc20] sm:$0xff]
          %v5067 = vld [vmem:[%s279 + $0xc28] sm:$0xff]
          %v5068 = vld [vmem:[%s279 + $0xc30] sm:$0xff]
          %v5069 = vld [vmem:[%s279 + $0xc38] sm:$0xff]
          %v5070 = vld [vmem:[%s279 + $0xc40] sm:$0xff]
          %v5071 = vld [vmem:[%s279 + $0xc48] sm:$0xff]
          %v5072 = vld [vmem:[%s279 + $0xc50] sm:$0xff]
          %v5073 = vld [vmem:[%s279 + $0xc58] sm:$0xff]
          %v5074 = vld [vmem:[%s279 + $0xc60] sm:$0xff]
          %v5075 = vld [vmem:[%s279 + $0xc68] sm:$0xff]
          %v5076 = vld [vmem:[%s279 + $0xc70] sm:$0xff]
          %v5077 = vld [vmem:[%s279 + $0xc78] sm:$0xff]
          %v5078 = vld [vmem:[%s279 + $0xc80] sm:$0xff]
          %v5079 = vld [vmem:[%s279 + $0xc88] sm:$0xff]
          %v5080 = vld [vmem:[%s279 + $0xc90] sm:$0xff]
          %v5081 = vld [vmem:[%s279 + $0xc98] sm:$0xff]
          %v5082 = vld [vmem:[%s279 + $0xca0] sm:$0xff]
          %v5083 = vld [vmem:[%s279 + $0xca8] sm:$0xff]
          %v5084 = vld [vmem:[%s279 + $0xcb0] sm:$0xff]
          %v5085 = vld [vmem:[%s279 + $0xcb8] sm:$0xff]
          %v5086 = vld [vmem:[%s279 + $0xcc0] sm:$0xff]
          %v5087 = vld [vmem:[%s279 + $0xcc8] sm:$0xff]
          %v5088 = vld [vmem:[%s279 + $0xcd0] sm:$0xff]
          %v5089 = vld [vmem:[%s279 + $0xcd8] sm:$0xff]
          %v5090 = vld [vmem:[%s279 + $0xce0] sm:$0xff]
          %v5091 = vld [vmem:[%s279 + $0xce8] sm:$0xff]
          %v5092 = vld [vmem:[%s279 + $0xcf0] sm:$0xff]
          %v5093 = vld [vmem:[%s279 + $0xcf8] sm:$0xff]
          %v5094 = vld [vmem:[%s279 + $0xd00] sm:$0xff]
          %v5095 = vld [vmem:[%s279 + $0xd08] sm:$0xff]
          %v5096 = vld [vmem:[%s279 + $0xd10] sm:$0xff]
          %v5097 = vld [vmem:[%s279 + $0xd18] sm:$0xff]
          %v5098 = vld [vmem:[%s279 + $0xd20] sm:$0xff]
          %v5099 = vld [vmem:[%s279 + $0xd28] sm:$0xff]
          %v5100 = vld [vmem:[%s279 + $0xd30] sm:$0xff]
          %v5101 = vld [vmem:[%s279 + $0xd38] sm:$0xff]
          %v5102 = vld [vmem:[%s279 + $0xd40] sm:$0xff]
          %v5103 = vld [vmem:[%s279 + $0xd48] sm:$0xff]
          %v5104 = vld [vmem:[%s279 + $0xd50] sm:$0xff]
          %v5105 = vld [vmem:[%s279 + $0xd58] sm:$0xff]
          %v5106 = vld [vmem:[%s279 + $0xd60] sm:$0xff]
          %v5107 = vld [vmem:[%s279 + $0xd68] sm:$0xff]
          %v5108 = vld [vmem:[%s279 + $0xd70] sm:$0xff]
          %v5109 = vld [vmem:[%s279 + $0xd78] sm:$0xff]
          %v5110 = vld [vmem:[%s279 + $0xd80] sm:$0xff]
          %v5111 = vld [vmem:[%s279 + $0xd88] sm:$0xff]
          %v5112 = vld [vmem:[%s279 + $0xd90] sm:$0xff]
          %v5113 = vld [vmem:[%s279 + $0xd98] sm:$0xff]
          %v5114 = vld [vmem:[%s279 + $0xda0] sm:$0xff]
          %v5115 = vld [vmem:[%s279 + $0xda8] sm:$0xff]
          %v5116 = vld [vmem:[%s279 + $0xdb0] sm:$0xff]
          %v5117 = vld [vmem:[%s279 + $0xdb8] sm:$0xff]
          %v5118 = vld [vmem:[%s279 + $0xdc0] sm:$0xff]
          %v5119 = vld [vmem:[%s279 + $0xdc8] sm:$0xff]
          %v5120 = vld [vmem:[%s279 + $0xdd0] sm:$0xff]
          %v5121 = vld [vmem:[%s279 + $0xdd8] sm:$0xff]
          %v5122 = vld [vmem:[%s279 + $0xde0] sm:$0xff]
          %v5123 = vld [vmem:[%s279 + $0xde8] sm:$0xff]
          %v5124 = vld [vmem:[%s279 + $0xdf0] sm:$0xff]
          %v5125 = vld [vmem:[%s279 + $0xdf8] sm:$0xff]
          %v5126 = vld [vmem:[%s279 + $0xe00] sm:$0xff]
          %v5127 = vld [vmem:[%s279 + $0xe08] sm:$0xff]
          %v5128 = vld [vmem:[%s279 + $0xe10] sm:$0xff]
          %v5129 = vld [vmem:[%s279 + $0xe18] sm:$0xff]
          %v5130 = vld [vmem:[%s279 + $0xe20] sm:$0xff]
          %v5131 = vld [vmem:[%s279 + $0xe28] sm:$0xff]
          %v5132 = vld [vmem:[%s279 + $0xe30] sm:$0xff]
          %v5133 = vld [vmem:[%s279 + $0xe38] sm:$0xff]
          %v5134 = vld [vmem:[%s279 + $0xe40] sm:$0xff]
          %v5135 = vld [vmem:[%s279 + $0xe48] sm:$0xff]
          %v5136 = vld [vmem:[%s279 + $0xe50] sm:$0xff]
          %v5137 = vld [vmem:[%s279 + $0xe58] sm:$0xff]
          %v5138 = vld [vmem:[%s279 + $0xe60] sm:$0xff]
          %v5139 = vld [vmem:[%s279 + $0xe68] sm:$0xff]
          %v5140 = vld [vmem:[%s279 + $0xe70] sm:$0xff]
          %v5141 = vld [vmem:[%s279 + $0xe78] sm:$0xff]
          %v5142 = vld [vmem:[%s279 + $0xe80] sm:$0xff]
          %v5143 = vld [vmem:[%s279 + $0xe88] sm:$0xff]
          %v5144 = vld [vmem:[%s279 + $0xe90] sm:$0xff]
          %v5145 = vld [vmem:[%s279 + $0xe98] sm:$0xff]
          %v5146 = vld [vmem:[%s279 + $0xea0] sm:$0xff]
          %v5147 = vld [vmem:[%s279 + $0xea8] sm:$0xff]
          %v5148 = vld [vmem:[%s279 + $0xeb0] sm:$0xff]
          %v5149 = vld [vmem:[%s279 + $0xeb8] sm:$0xff]
          %v5150 = vld [vmem:[%s279 + $0xec0] sm:$0xff]
          %v5151 = vld [vmem:[%s279 + $0xec8] sm:$0xff]
          %v5152 = vld [vmem:[%s279 + $0xed0] sm:$0xff]
          %v5153 = vld [vmem:[%s279 + $0xed8] sm:$0xff]
          %v5154 = vld [vmem:[%s279 + $0xee0] sm:$0xff]
          %v5155 = vld [vmem:[%s279 + $0xee8] sm:$0xff]
          %v5156 = vld [vmem:[%s279 + $0xef0] sm:$0xff]
          %v5157 = vld [vmem:[%s279 + $0xef8] sm:$0xff]
          %v5158 = vld [vmem:[%s279 + $0xf00] sm:$0xff]
          %v5159 = vld [vmem:[%s279 + $0xf08] sm:$0xff]
          %v5160 = vld [vmem:[%s279 + $0xf10] sm:$0xff]
          %v5161 = vld [vmem:[%s279 + $0xf18] sm:$0xff]
          %v5162 = vld [vmem:[%s279 + $0xf20] sm:$0xff]
          %v5163 = vld [vmem:[%s279 + $0xf28] sm:$0xff]
          %v5164 = vld [vmem:[%s279 + $0xf30] sm:$0xff]
          %v5165 = vld [vmem:[%s279 + $0xf38] sm:$0xff]
          %v5166 = vld [vmem:[%s279 + $0xf40] sm:$0xff]
          %v5167 = vld [vmem:[%s279 + $0xf48] sm:$0xff]
          %v5168 = vld [vmem:[%s279 + $0xf50] sm:$0xff]
          %v5169 = vld [vmem:[%s279 + $0xf58] sm:$0xff]
          %v5170 = vld [vmem:[%s279 + $0xf60] sm:$0xff]
          %v5171 = vld [vmem:[%s279 + $0xf68] sm:$0xff]
          %v5172 = vld [vmem:[%s279 + $0xf70] sm:$0xff]
          %v5173 = vld [vmem:[%s279 + $0xf78] sm:$0xff]
          %v5174 = vld [vmem:[%s279 + $0xf80] sm:$0xff]
          %v5175 = vld [vmem:[%s279 + $0xf88] sm:$0xff]
          %v5176 = vld [vmem:[%s279 + $0xf90] sm:$0xff]
          %v5177 = vld [vmem:[%s279 + $0xf98] sm:$0xff]
          %v5178 = vld [vmem:[%s279 + $0xfa0] sm:$0xff]
          %v5179 = vld [vmem:[%s279 + $0xfa8] sm:$0xff]
          %v5180 = vld [vmem:[%s279 + $0xfb0] sm:$0xff]
          %v5181 = vld [vmem:[%s279 + $0xfb8] sm:$0xff]
          %v5182 = vld [vmem:[%s279 + $0xfc0] sm:$0xff]
          %v5183 = vld [vmem:[%s279 + $0xfc8] sm:$0xff]
          %v5184 = vld [vmem:[%s279 + $0xfd0] sm:$0xff]
          %v5185 = vld [vmem:[%s279 + $0xfd8] sm:$0xff]
          %v5186 = vld [vmem:[%s279 + $0xfe0] sm:$0xff]
          %v5187 = vld [vmem:[%s279 + $0xfe8] sm:$0xff]
          %v5188 = vld [vmem:[%s279 + $0xff0] sm:$0xff]
          %v5189 = vld [vmem:[%s279 + $0xff8] sm:$0xff]
          %v5192 = vunpack.c.l.b16 %v4676
          %v5193 = vunpack.c.h.b16 %v4676
          %v5194 = vunpack.c.l.b16 %v4677
          %v5195 = vunpack.c.h.b16 %v4677
          %v5196 = vpack.c.b16 %v5192, %v5192
          %v5197 = vpack.c.b16 %v5193, %v5193
          %v5198 = vpack.c.b16 %v5194, %v5194
          %v5199 = vpack.c.b16 %v5195, %v5195
          %v5716 = vunpack.c.l.b16 %v4678
          %v5717 = vunpack.c.h.b16 %v4678
          %v5718 = vunpack.c.l.b16 %v4679
          %v5719 = vunpack.c.h.b16 %v4679
          %v5720 = vunpack.c.l.b16 %v4680
          %v5721 = vunpack.c.h.b16 %v4680
          %v5722 = vunpack.c.l.b16 %v4681
          %v5723 = vunpack.c.h.b16 %v4681
          %v5724 = vunpack.c.l.b16 %v4682
          %v5725 = vunpack.c.h.b16 %v4682
          %v5726 = vunpack.c.l.b16 %v4683
          %v5727 = vunpack.c.h.b16 %v4683
          %v5728 = vunpack.c.l.b16 %v4684
          %v5729 = vunpack.c.h.b16 %v4684
          %v5730 = vunpack.c.l.b16 %v4685
          %v5731 = vunpack.c.h.b16 %v4685
          %v5732 = vunpack.c.l.b16 %v4686
          %v5733 = vunpack.c.h.b16 %v4686
          %v5734 = vunpack.c.l.b16 %v4687
          %v5735 = vunpack.c.h.b16 %v4687
          %v5736 = vunpack.c.l.b16 %v4688
          %v5737 = vunpack.c.h.b16 %v4688
          %v5738 = vunpack.c.l.b16 %v4689
          %v5739 = vunpack.c.h.b16 %v4689
          %v5740 = vunpack.c.l.b16 %v4690
          %v5741 = vunpack.c.h.b16 %v4690
          %v5742 = vunpack.c.l.b16 %v4691
          %v5743 = vunpack.c.h.b16 %v4691
          %v5744 = vunpack.c.l.b16 %v4692
          %v5745 = vunpack.c.h.b16 %v4692
          %v5746 = vunpack.c.l.b16 %v4693
          %v5747 = vunpack.c.h.b16 %v4693
          %v5748 = vunpack.c.l.b16 %v4694
          %v5749 = vunpack.c.h.b16 %v4694
          %v5750 = vunpack.c.l.b16 %v4695
          %v5751 = vunpack.c.h.b16 %v4695
          %v5752 = vunpack.c.l.b16 %v4696
          %v5753 = vunpack.c.h.b16 %v4696
          %v5754 = vunpack.c.l.b16 %v4697
          %v5755 = vunpack.c.h.b16 %v4697
          %v5756 = vunpack.c.l.b16 %v4698
          %v5757 = vunpack.c.h.b16 %v4698
          %v5758 = vunpack.c.l.b16 %v4699
          %v5759 = vunpack.c.h.b16 %v4699
          %v5760 = vunpack.c.l.b16 %v4700
          %v5761 = vunpack.c.h.b16 %v4700
          %v5762 = vunpack.c.l.b16 %v4701
          %v5763 = vunpack.c.h.b16 %v4701
          %v5764 = vunpack.c.l.b16 %v4702
          %v5765 = vunpack.c.h.b16 %v4702
          %v5766 = vunpack.c.l.b16 %v4703
          %v5767 = vunpack.c.h.b16 %v4703
          %v5768 = vunpack.c.l.b16 %v4704
          %v5769 = vunpack.c.h.b16 %v4704
          %v5770 = vunpack.c.l.b16 %v4705
          %v5771 = vunpack.c.h.b16 %v4705
          %v5772 = vunpack.c.l.b16 %v4706
          %v5773 = vunpack.c.h.b16 %v4706
          %v5774 = vunpack.c.l.b16 %v4707
          %v5775 = vunpack.c.h.b16 %v4707
          %v5776 = vunpack.c.l.b16 %v4708
          %v5777 = vunpack.c.h.b16 %v4708
          %v5778 = vunpack.c.l.b16 %v4709
          %v5779 = vunpack.c.h.b16 %v4709
          %v5780 = vunpack.c.l.b16 %v4710
          %v5781 = vunpack.c.h.b16 %v4710
          %v5782 = vunpack.c.l.b16 %v4711
          %v5783 = vunpack.c.h.b16 %v4711
          %v5784 = vunpack.c.l.b16 %v4712
          %v5785 = vunpack.c.h.b16 %v4712
          %v5786 = vunpack.c.l.b16 %v4713
          %v5787 = vunpack.c.h.b16 %v4713
          %v5788 = vunpack.c.l.b16 %v4714
          %v5789 = vunpack.c.h.b16 %v4714
          %v5790 = vunpack.c.l.b16 %v4715
          %v5791 = vunpack.c.h.b16 %v4715
          %v5792 = vunpack.c.l.b16 %v4716
          %v5793 = vunpack.c.h.b16 %v4716
          %v5794 = vunpack.c.l.b16 %v4717
          %v5795 = vunpack.c.h.b16 %v4717
          %v5796 = vunpack.c.l.b16 %v4718
          %v5797 = vunpack.c.h.b16 %v4718
          %v5798 = vunpack.c.l.b16 %v4719
          %v5799 = vunpack.c.h.b16 %v4719
          %v5800 = vunpack.c.l.b16 %v4720
          %v5801 = vunpack.c.h.b16 %v4720
          %v5802 = vunpack.c.l.b16 %v4721
          %v5803 = vunpack.c.h.b16 %v4721
          %v5804 = vunpack.c.l.b16 %v4722
          %v5805 = vunpack.c.h.b16 %v4722
          %v5806 = vunpack.c.l.b16 %v4723
          %v5807 = vunpack.c.h.b16 %v4723
          %v5808 = vunpack.c.l.b16 %v4724
          %v5809 = vunpack.c.h.b16 %v4724
          %v5810 = vunpack.c.l.b16 %v4725
          %v5811 = vunpack.c.h.b16 %v4725
          %v5812 = vunpack.c.l.b16 %v4726
          %v5813 = vunpack.c.h.b16 %v4726
          %v5814 = vunpack.c.l.b16 %v4727
          %v5815 = vunpack.c.h.b16 %v4727
          %v5816 = vunpack.c.l.b16 %v4728
          %v5817 = vunpack.c.h.b16 %v4728
          %v5818 = vunpack.c.l.b16 %v4729
          %v5819 = vunpack.c.h.b16 %v4729
          %v5820 = vunpack.c.l.b16 %v4730
          %v5821 = vunpack.c.h.b16 %v4730
          %v5822 = vunpack.c.l.b16 %v4731
          %v5823 = vunpack.c.h.b16 %v4731
          %v5824 = vunpack.c.l.b16 %v4732
          %v5825 = vunpack.c.h.b16 %v4732
          %v5826 = vunpack.c.l.b16 %v4733
          %v5827 = vunpack.c.h.b16 %v4733
          %v5828 = vunpack.c.l.b16 %v4734
          %v5829 = vunpack.c.h.b16 %v4734
          %v5830 = vunpack.c.l.b16 %v4735
          %v5831 = vunpack.c.h.b16 %v4735
          %v5832 = vunpack.c.l.b16 %v4736
          %v5833 = vunpack.c.h.b16 %v4736
          %v5834 = vunpack.c.l.b16 %v4737
          %v5835 = vunpack.c.h.b16 %v4737
          %v5836 = vunpack.c.l.b16 %v4738
          %v5837 = vunpack.c.h.b16 %v4738
          %v5838 = vunpack.c.l.b16 %v4739
          %v5839 = vunpack.c.h.b16 %v4739
          %v5840 = vunpack.c.l.b16 %v4740
          %v5841 = vunpack.c.h.b16 %v4740
          %v5842 = vunpack.c.l.b16 %v4741
          %v5843 = vunpack.c.h.b16 %v4741
          %v5844 = vunpack.c.l.b16 %v4742
          %v5845 = vunpack.c.h.b16 %v4742
          %v5846 = vunpack.c.l.b16 %v4743
          %v5847 = vunpack.c.h.b16 %v4743
          %v5848 = vunpack.c.l.b16 %v4744
          %v5849 = vunpack.c.h.b16 %v4744
          %v5850 = vunpack.c.l.b16 %v4745
          %v5851 = vunpack.c.h.b16 %v4745
          %v5852 = vunpack.c.l.b16 %v4746
          %v5853 = vunpack.c.h.b16 %v4746
          %v5854 = vunpack.c.l.b16 %v4747
          %v5855 = vunpack.c.h.b16 %v4747
          %v5856 = vunpack.c.l.b16 %v4748
          %v5857 = vunpack.c.h.b16 %v4748
          %v5858 = vunpack.c.l.b16 %v4749
          %v5859 = vunpack.c.h.b16 %v4749
          %v5860 = vunpack.c.l.b16 %v4750
          %v5861 = vunpack.c.h.b16 %v4750
          %v5862 = vunpack.c.l.b16 %v4751
          %v5863 = vunpack.c.h.b16 %v4751
          %v5864 = vunpack.c.l.b16 %v4752
          %v5865 = vunpack.c.h.b16 %v4752
          %v5866 = vunpack.c.l.b16 %v4753
          %v5867 = vunpack.c.h.b16 %v4753
          %v5868 = vunpack.c.l.b16 %v4754
          %v5869 = vunpack.c.h.b16 %v4754
          %v5870 = vunpack.c.l.b16 %v4755
          %v5871 = vunpack.c.h.b16 %v4755
          %v5872 = vunpack.c.l.b16 %v4756
          %v5873 = vunpack.c.h.b16 %v4756
          %v5874 = vunpack.c.l.b16 %v4757
          %v5875 = vunpack.c.h.b16 %v4757
          %v5876 = vunpack.c.l.b16 %v4758
          %v5877 = vunpack.c.h.b16 %v4758
          %v5878 = vunpack.c.l.b16 %v4759
          %v5879 = vunpack.c.h.b16 %v4759
          %v5880 = vunpack.c.l.b16 %v4760
          %v5881 = vunpack.c.h.b16 %v4760
          %v5882 = vunpack.c.l.b16 %v4761
          %v5883 = vunpack.c.h.b16 %v4761
          %v5884 = vunpack.c.l.b16 %v4762
          %v5885 = vunpack.c.h.b16 %v4762
          %v5886 = vunpack.c.l.b16 %v4763
          %v5887 = vunpack.c.h.b16 %v4763
          %v5888 = vunpack.c.l.b16 %v4764
          %v5889 = vunpack.c.h.b16 %v4764
          %v5890 = vunpack.c.l.b16 %v4765
          %v5891 = vunpack.c.h.b16 %v4765
          %v5892 = vunpack.c.l.b16 %v4766
          %v5893 = vunpack.c.h.b16 %v4766
          %v5894 = vunpack.c.l.b16 %v4767
          %v5895 = vunpack.c.h.b16 %v4767
          %v5896 = vunpack.c.l.b16 %v4768
          %v5897 = vunpack.c.h.b16 %v4768
          %v5898 = vunpack.c.l.b16 %v4769
          %v5899 = vunpack.c.h.b16 %v4769
          %v5900 = vunpack.c.l.b16 %v4770
          %v5901 = vunpack.c.h.b16 %v4770
          %v5902 = vunpack.c.l.b16 %v4771
          %v5903 = vunpack.c.h.b16 %v4771
          %v5904 = vunpack.c.l.b16 %v4772
          %v5905 = vunpack.c.h.b16 %v4772
          %v5906 = vunpack.c.l.b16 %v4773
          %v5907 = vunpack.c.h.b16 %v4773
          %v5908 = vunpack.c.l.b16 %v4774
          %v5909 = vunpack.c.h.b16 %v4774
          %v5910 = vunpack.c.l.b16 %v4775
          %v5911 = vunpack.c.h.b16 %v4775
          %v5912 = vunpack.c.l.b16 %v4776
          %v5913 = vunpack.c.h.b16 %v4776
          %v5914 = vunpack.c.l.b16 %v4777
          %v5915 = vunpack.c.h.b16 %v4777
          %v5916 = vunpack.c.l.b16 %v4778
          %v5917 = vunpack.c.h.b16 %v4778
          %v5918 = vunpack.c.l.b16 %v4779
          %v5919 = vunpack.c.h.b16 %v4779
          %v5920 = vunpack.c.l.b16 %v4780
          %v5921 = vunpack.c.h.b16 %v4780
          %v5922 = vunpack.c.l.b16 %v4781
          %v5923 = vunpack.c.h.b16 %v4781
          %v5924 = vunpack.c.l.b16 %v4782
          %v5925 = vunpack.c.h.b16 %v4782
          %v5926 = vunpack.c.l.b16 %v4783
          %v5927 = vunpack.c.h.b16 %v4783
          %v5928 = vunpack.c.l.b16 %v4784
          %v5929 = vunpack.c.h.b16 %v4784
          %v5930 = vunpack.c.l.b16 %v4785
          %v5931 = vunpack.c.h.b16 %v4785
          %v5932 = vunpack.c.l.b16 %v4786
          %v5933 = vunpack.c.h.b16 %v4786
          %v5934 = vunpack.c.l.b16 %v4787
          %v5935 = vunpack.c.h.b16 %v4787
          %v5936 = vunpack.c.l.b16 %v4788
          %v5937 = vunpack.c.h.b16 %v4788
          %v5938 = vunpack.c.l.b16 %v4789
          %v5939 = vunpack.c.h.b16 %v4789
          %v5940 = vunpack.c.l.b16 %v4790
          %v5941 = vunpack.c.h.b16 %v4790
          %v5942 = vunpack.c.l.b16 %v4791
          %v5943 = vunpack.c.h.b16 %v4791
          %v5944 = vunpack.c.l.b16 %v4792
          %v5945 = vunpack.c.h.b16 %v4792
          %v5946 = vunpack.c.l.b16 %v4793
          %v5947 = vunpack.c.h.b16 %v4793
          %v5948 = vunpack.c.l.b16 %v4794
          %v5949 = vunpack.c.h.b16 %v4794
          %v5950 = vunpack.c.l.b16 %v4795
          %v5951 = vunpack.c.h.b16 %v4795
          %v5952 = vunpack.c.l.b16 %v4796
          %v5953 = vunpack.c.h.b16 %v4796
          %v5954 = vunpack.c.l.b16 %v4797
          %v5955 = vunpack.c.h.b16 %v4797
          %v5956 = vunpack.c.l.b16 %v4798
          %v5957 = vunpack.c.h.b16 %v4798
          %v5958 = vunpack.c.l.b16 %v4799
          %v5959 = vunpack.c.h.b16 %v4799
          %v5960 = vunpack.c.l.b16 %v4800
          %v5961 = vunpack.c.h.b16 %v4800
          %v5962 = vunpack.c.l.b16 %v4801
          %v5963 = vunpack.c.h.b16 %v4801
          %v5964 = vunpack.c.l.b16 %v4802
          %v5965 = vunpack.c.h.b16 %v4802
          %v5966 = vunpack.c.l.b16 %v4803
          %v5967 = vunpack.c.h.b16 %v4803
          %v5968 = vunpack.c.l.b16 %v4804
          %v5969 = vunpack.c.h.b16 %v4804
          %v5970 = vunpack.c.l.b16 %v4805
          %v5971 = vunpack.c.h.b16 %v4805
          %v5972 = vunpack.c.l.b16 %v4806
          %v5973 = vunpack.c.h.b16 %v4806
          %v5974 = vunpack.c.l.b16 %v4807
          %v5975 = vunpack.c.h.b16 %v4807
          %v5976 = vunpack.c.l.b16 %v4808
          %v5977 = vunpack.c.h.b16 %v4808
          %v5978 = vunpack.c.l.b16 %v4809
          %v5979 = vunpack.c.h.b16 %v4809
          %v5980 = vunpack.c.l.b16 %v4810
          %v5981 = vunpack.c.h.b16 %v4810
          %v5982 = vunpack.c.l.b16 %v4811
          %v5983 = vunpack.c.h.b16 %v4811
          %v5984 = vunpack.c.l.b16 %v4812
          %v5985 = vunpack.c.h.b16 %v4812
          %v5986 = vunpack.c.l.b16 %v4813
          %v5987 = vunpack.c.h.b16 %v4813
          %v5988 = vunpack.c.l.b16 %v4814
          %v5989 = vunpack.c.h.b16 %v4814
          %v5990 = vunpack.c.l.b16 %v4815
          %v5991 = vunpack.c.h.b16 %v4815
          %v5992 = vunpack.c.l.b16 %v4816
          %v5993 = vunpack.c.h.b16 %v4816
          %v5994 = vunpack.c.l.b16 %v4817
          %v5995 = vunpack.c.h.b16 %v4817
          %v5996 = vunpack.c.l.b16 %v4818
          %v5997 = vunpack.c.h.b16 %v4818
          %v5998 = vunpack.c.l.b16 %v4819
          %v5999 = vunpack.c.h.b16 %v4819
          %v6000 = vunpack.c.l.b16 %v4820
          %v6001 = vunpack.c.h.b16 %v4820
          %v6002 = vunpack.c.l.b16 %v4821
          %v6003 = vunpack.c.h.b16 %v4821
          %v6004 = vunpack.c.l.b16 %v4822
          %v6005 = vunpack.c.h.b16 %v4822
          %v6006 = vunpack.c.l.b16 %v4823
          %v6007 = vunpack.c.h.b16 %v4823
          %v6008 = vunpack.c.l.b16 %v4824
          %v6009 = vunpack.c.h.b16 %v4824
          %v6010 = vunpack.c.l.b16 %v4825
          %v6011 = vunpack.c.h.b16 %v4825
          %v6012 = vunpack.c.l.b16 %v4826
          %v6013 = vunpack.c.h.b16 %v4826
          %v6014 = vunpack.c.l.b16 %v4827
          %v6015 = vunpack.c.h.b16 %v4827
          %v6016 = vunpack.c.l.b16 %v4828
          %v6017 = vunpack.c.h.b16 %v4828
          %v6018 = vunpack.c.l.b16 %v4829
          %v6019 = vunpack.c.h.b16 %v4829
          %v6020 = vunpack.c.l.b16 %v4830
          %v6021 = vunpack.c.h.b16 %v4830
          %v6022 = vunpack.c.l.b16 %v4831
          %v6023 = vunpack.c.h.b16 %v4831
          %v6024 = vunpack.c.l.b16 %v4832
          %v6025 = vunpack.c.h.b16 %v4832
          %v6026 = vunpack.c.l.b16 %v4833
          %v6027 = vunpack.c.h.b16 %v4833
          %v6028 = vunpack.c.l.b16 %v4834
          %v6029 = vunpack.c.h.b16 %v4834
          %v6030 = vunpack.c.l.b16 %v4835
          %v6031 = vunpack.c.h.b16 %v4835
          %v6032 = vunpack.c.l.b16 %v4836
          %v6033 = vunpack.c.h.b16 %v4836
          %v6034 = vunpack.c.l.b16 %v4837
          %v6035 = vunpack.c.h.b16 %v4837
          %v6036 = vunpack.c.l.b16 %v4838
          %v6037 = vunpack.c.h.b16 %v4838
          %v6038 = vunpack.c.l.b16 %v4839
          %v6039 = vunpack.c.h.b16 %v4839
          %v6040 = vunpack.c.l.b16 %v4840
          %v6041 = vunpack.c.h.b16 %v4840
          %v6042 = vunpack.c.l.b16 %v4841
          %v6043 = vunpack.c.h.b16 %v4841
          %v6044 = vunpack.c.l.b16 %v4842
          %v6045 = vunpack.c.h.b16 %v4842
          %v6046 = vunpack.c.l.b16 %v4843
          %v6047 = vunpack.c.h.b16 %v4843
          %v6048 = vunpack.c.l.b16 %v4844
          %v6049 = vunpack.c.h.b16 %v4844
          %v6050 = vunpack.c.l.b16 %v4845
          %v6051 = vunpack.c.h.b16 %v4845
          %v6052 = vunpack.c.l.b16 %v4846
          %v6053 = vunpack.c.h.b16 %v4846
          %v6054 = vunpack.c.l.b16 %v4847
          %v6055 = vunpack.c.h.b16 %v4847
          %v6056 = vunpack.c.l.b16 %v4848
          %v6057 = vunpack.c.h.b16 %v4848
          %v6058 = vunpack.c.l.b16 %v4849
          %v6059 = vunpack.c.h.b16 %v4849
          %v6060 = vunpack.c.l.b16 %v4850
          %v6061 = vunpack.c.h.b16 %v4850
          %v6062 = vunpack.c.l.b16 %v4851
          %v6063 = vunpack.c.h.b16 %v4851
          %v6064 = vunpack.c.l.b16 %v4852
          %v6065 = vunpack.c.h.b16 %v4852
          %v6066 = vunpack.c.l.b16 %v4853
          %v6067 = vunpack.c.h.b16 %v4853
          %v6068 = vunpack.c.l.b16 %v4854
          %v6069 = vunpack.c.h.b16 %v4854
          %v6070 = vunpack.c.l.b16 %v4855
          %v6071 = vunpack.c.h.b16 %v4855
          %v6072 = vunpack.c.l.b16 %v4856
          %v6073 = vunpack.c.h.b16 %v4856
          %v6074 = vunpack.c.l.b16 %v4857
          %v6075 = vunpack.c.h.b16 %v4857
          %v6076 = vunpack.c.l.b16 %v4858
          %v6077 = vunpack.c.h.b16 %v4858
          %v6078 = vunpack.c.l.b16 %v4859
          %v6079 = vunpack.c.h.b16 %v4859
          %v6080 = vunpack.c.l.b16 %v4860
          %v6081 = vunpack.c.h.b16 %v4860
          %v6082 = vunpack.c.l.b16 %v4861
          %v6083 = vunpack.c.h.b16 %v4861
          %v6084 = vunpack.c.l.b16 %v4862
          %v6085 = vunpack.c.h.b16 %v4862
          %v6086 = vunpack.c.l.b16 %v4863
          %v6087 = vunpack.c.h.b16 %v4863
          %v6088 = vunpack.c.l.b16 %v4864
          %v6089 = vunpack.c.h.b16 %v4864
          %v6090 = vunpack.c.l.b16 %v4865
          %v6091 = vunpack.c.h.b16 %v4865
          %v6092 = vunpack.c.l.b16 %v4866
          %v6093 = vunpack.c.h.b16 %v4866
          %v6094 = vunpack.c.l.b16 %v4867
          %v6095 = vunpack.c.h.b16 %v4867
          %v6096 = vunpack.c.l.b16 %v4868
          %v6097 = vunpack.c.h.b16 %v4868
          %v6098 = vunpack.c.l.b16 %v4869
          %v6099 = vunpack.c.h.b16 %v4869
          %v6100 = vunpack.c.l.b16 %v4870
          %v6101 = vunpack.c.h.b16 %v4870
          %v6102 = vunpack.c.l.b16 %v4871
          %v6103 = vunpack.c.h.b16 %v4871
          %v6104 = vunpack.c.l.b16 %v4872
          %v6105 = vunpack.c.h.b16 %v4872
          %v6106 = vunpack.c.l.b16 %v4873
          %v6107 = vunpack.c.h.b16 %v4873
          %v6108 = vunpack.c.l.b16 %v4874
          %v6109 = vunpack.c.h.b16 %v4874
          %v6110 = vunpack.c.l.b16 %v4875
          %v6111 = vunpack.c.h.b16 %v4875
          %v6112 = vunpack.c.l.b16 %v4876
          %v6113 = vunpack.c.h.b16 %v4876
          %v6114 = vunpack.c.l.b16 %v4877
          %v6115 = vunpack.c.h.b16 %v4877
          %v6116 = vunpack.c.l.b16 %v4878
          %v6117 = vunpack.c.h.b16 %v4878
          %v6118 = vunpack.c.l.b16 %v4879
          %v6119 = vunpack.c.h.b16 %v4879
          %v6120 = vunpack.c.l.b16 %v4880
          %v6121 = vunpack.c.h.b16 %v4880
          %v6122 = vunpack.c.l.b16 %v4881
          %v6123 = vunpack.c.h.b16 %v4881
          %v6124 = vunpack.c.l.b16 %v4882
          %v6125 = vunpack.c.h.b16 %v4882
          %v6126 = vunpack.c.l.b16 %v4883
          %v6127 = vunpack.c.h.b16 %v4883
          %v6128 = vunpack.c.l.b16 %v4884
          %v6129 = vunpack.c.h.b16 %v4884
          %v6130 = vunpack.c.l.b16 %v4885
          %v6131 = vunpack.c.h.b16 %v4885
          %v6132 = vunpack.c.l.b16 %v4886
          %v6133 = vunpack.c.h.b16 %v4886
          %v6134 = vunpack.c.l.b16 %v4887
          %v6135 = vunpack.c.h.b16 %v4887
          %v6136 = vunpack.c.l.b16 %v4888
          %v6137 = vunpack.c.h.b16 %v4888
          %v6138 = vunpack.c.l.b16 %v4889
          %v6139 = vunpack.c.h.b16 %v4889
          %v6140 = vunpack.c.l.b16 %v4890
          %v6141 = vunpack.c.h.b16 %v4890
          %v6142 = vunpack.c.l.b16 %v4891
          %v6143 = vunpack.c.h.b16 %v4891
          %v6144 = vunpack.c.l.b16 %v4892
          %v6145 = vunpack.c.h.b16 %v4892
          %v6146 = vunpack.c.l.b16 %v4893
          %v6147 = vunpack.c.h.b16 %v4893
          %v6148 = vunpack.c.l.b16 %v4894
          %v6149 = vunpack.c.h.b16 %v4894
          %v6150 = vunpack.c.l.b16 %v4895
          %v6151 = vunpack.c.h.b16 %v4895
          %v6152 = vunpack.c.l.b16 %v4896
          %v6153 = vunpack.c.h.b16 %v4896
          %v6154 = vunpack.c.l.b16 %v4897
          %v6155 = vunpack.c.h.b16 %v4897
          %v6156 = vunpack.c.l.b16 %v4898
          %v6157 = vunpack.c.h.b16 %v4898
          %v6158 = vunpack.c.l.b16 %v4899
          %v6159 = vunpack.c.h.b16 %v4899
          %v6160 = vunpack.c.l.b16 %v4900
          %v6161 = vunpack.c.h.b16 %v4900
          %v6162 = vunpack.c.l.b16 %v4901
          %v6163 = vunpack.c.h.b16 %v4901
          %v6164 = vunpack.c.l.b16 %v4902
          %v6165 = vunpack.c.h.b16 %v4902
          %v6166 = vunpack.c.l.b16 %v4903
          %v6167 = vunpack.c.h.b16 %v4903
          %v6168 = vunpack.c.l.b16 %v4904
          %v6169 = vunpack.c.h.b16 %v4904
          %v6170 = vunpack.c.l.b16 %v4905
          %v6171 = vunpack.c.h.b16 %v4905
          %v6172 = vunpack.c.l.b16 %v4906
          %v6173 = vunpack.c.h.b16 %v4906
          %v6174 = vunpack.c.l.b16 %v4907
          %v6175 = vunpack.c.h.b16 %v4907
          %v6176 = vunpack.c.l.b16 %v4908
          %v6177 = vunpack.c.h.b16 %v4908
          %v6178 = vunpack.c.l.b16 %v4909
          %v6179 = vunpack.c.h.b16 %v4909
          %v6180 = vunpack.c.l.b16 %v4910
          %v6181 = vunpack.c.h.b16 %v4910
          %v6182 = vunpack.c.l.b16 %v4911
          %v6183 = vunpack.c.h.b16 %v4911
          %v6184 = vunpack.c.l.b16 %v4912
          %v6185 = vunpack.c.h.b16 %v4912
          %v6186 = vunpack.c.l.b16 %v4913
          %v6187 = vunpack.c.h.b16 %v4913
          %v6188 = vunpack.c.l.b16 %v4914
          %v6189 = vunpack.c.h.b16 %v4914
          %v6190 = vunpack.c.l.b16 %v4915
          %v6191 = vunpack.c.h.b16 %v4915
          %v6192 = vunpack.c.l.b16 %v4916
          %v6193 = vunpack.c.h.b16 %v4916
          %v6194 = vunpack.c.l.b16 %v4917
          %v6195 = vunpack.c.h.b16 %v4917
          %v6196 = vunpack.c.l.b16 %v4918
          %v6197 = vunpack.c.h.b16 %v4918
          %v6198 = vunpack.c.l.b16 %v4919
          %v6199 = vunpack.c.h.b16 %v4919
          %v6200 = vunpack.c.l.b16 %v4920
          %v6201 = vunpack.c.h.b16 %v4920
          %v6202 = vunpack.c.l.b16 %v4921
          %v6203 = vunpack.c.h.b16 %v4921
          %v6204 = vunpack.c.l.b16 %v4922
          %v6205 = vunpack.c.h.b16 %v4922
          %v6206 = vunpack.c.l.b16 %v4923
          %v6207 = vunpack.c.h.b16 %v4923
          %v6208 = vunpack.c.l.b16 %v4924
          %v6209 = vunpack.c.h.b16 %v4924
          %v6210 = vunpack.c.l.b16 %v4925
          %v6211 = vunpack.c.h.b16 %v4925
          %v6212 = vunpack.c.l.b16 %v4926
          %v6213 = vunpack.c.h.b16 %v4926
          %v6214 = vunpack.c.l.b16 %v4927
          %v6215 = vunpack.c.h.b16 %v4927
          %v6216 = vunpack.c.l.b16 %v4928
          %v6217 = vunpack.c.h.b16 %v4928
          %v6218 = vunpack.c.l.b16 %v4929
          %v6219 = vunpack.c.h.b16 %v4929
          %v6220 = vunpack.c.l.b16 %v4930
          %v6221 = vunpack.c.h.b16 %v4930
          %v6222 = vunpack.c.l.b16 %v4931
          %v6223 = vunpack.c.h.b16 %v4931
          %v6224 = vunpack.c.l.b16 %v4932
          %v6225 = vunpack.c.h.b16 %v4932
          %v6226 = vunpack.c.l.b16 %v4933
          %v6227 = vunpack.c.h.b16 %v4933
          %v6228 = vunpack.c.l.b16 %v4934
          %v6229 = vunpack.c.h.b16 %v4934
          %v6230 = vunpack.c.l.b16 %v4935
          %v6231 = vunpack.c.h.b16 %v4935
          %v6232 = vunpack.c.l.b16 %v4936
          %v6233 = vunpack.c.h.b16 %v4936
          %v6234 = vunpack.c.l.b16 %v4937
          %v6235 = vunpack.c.h.b16 %v4937
          %v6236 = vunpack.c.l.b16 %v4938
          %v6237 = vunpack.c.h.b16 %v4938
          %v6238 = vunpack.c.l.b16 %v4939
          %v6239 = vunpack.c.h.b16 %v4939
          %v6240 = vunpack.c.l.b16 %v4940
          %v6241 = vunpack.c.h.b16 %v4940
          %v6242 = vunpack.c.l.b16 %v4941
          %v6243 = vunpack.c.h.b16 %v4941
          %v6244 = vunpack.c.l.b16 %v4942
          %v6245 = vunpack.c.h.b16 %v4942
          %v6246 = vunpack.c.l.b16 %v4943
          %v6247 = vunpack.c.h.b16 %v4943
          %v6248 = vunpack.c.l.b16 %v4944
          %v6249 = vunpack.c.h.b16 %v4944
          %v6250 = vunpack.c.l.b16 %v4945
          %v6251 = vunpack.c.h.b16 %v4945
          %v6252 = vunpack.c.l.b16 %v4946
          %v6253 = vunpack.c.h.b16 %v4946
          %v6254 = vunpack.c.l.b16 %v4947
          %v6255 = vunpack.c.h.b16 %v4947
          %v6256 = vunpack.c.l.b16 %v4948
          %v6257 = vunpack.c.h.b16 %v4948
          %v6258 = vunpack.c.l.b16 %v4949
          %v6259 = vunpack.c.h.b16 %v4949
          %v6260 = vunpack.c.l.b16 %v4950
          %v6261 = vunpack.c.h.b16 %v4950
          %v6262 = vunpack.c.l.b16 %v4951
          %v6263 = vunpack.c.h.b16 %v4951
          %v6264 = vunpack.c.l.b16 %v4952
          %v6265 = vunpack.c.h.b16 %v4952
          %v6266 = vunpack.c.l.b16 %v4953
          %v6267 = vunpack.c.h.b16 %v4953
          %v6268 = vunpack.c.l.b16 %v4954
          %v6269 = vunpack.c.h.b16 %v4954
          %v6270 = vunpack.c.l.b16 %v4955
          %v6271 = vunpack.c.h.b16 %v4955
          %v6272 = vunpack.c.l.b16 %v4956
          %v6273 = vunpack.c.h.b16 %v4956
          %v6274 = vunpack.c.l.b16 %v4957
          %v6275 = vunpack.c.h.b16 %v4957
          %v6276 = vunpack.c.l.b16 %v4958
          %v6277 = vunpack.c.h.b16 %v4958
          %v6278 = vunpack.c.l.b16 %v4959
          %v6279 = vunpack.c.h.b16 %v4959
          %v6280 = vunpack.c.l.b16 %v4960
          %v6281 = vunpack.c.h.b16 %v4960
          %v6282 = vunpack.c.l.b16 %v4961
          %v6283 = vunpack.c.h.b16 %v4961
          %v6284 = vunpack.c.l.b16 %v4962
          %v6285 = vunpack.c.h.b16 %v4962
          %v6286 = vunpack.c.l.b16 %v4963
          %v6287 = vunpack.c.h.b16 %v4963
          %v6288 = vunpack.c.l.b16 %v4964
          %v6289 = vunpack.c.h.b16 %v4964
          %v6290 = vunpack.c.l.b16 %v4965
          %v6291 = vunpack.c.h.b16 %v4965
          %v6292 = vunpack.c.l.b16 %v4966
          %v6293 = vunpack.c.h.b16 %v4966
          %v6294 = vunpack.c.l.b16 %v4967
          %v6295 = vunpack.c.h.b16 %v4967
          %v6296 = vunpack.c.l.b16 %v4968
          %v6297 = vunpack.c.h.b16 %v4968
          %v6298 = vunpack.c.l.b16 %v4969
          %v6299 = vunpack.c.h.b16 %v4969
          %v6300 = vunpack.c.l.b16 %v4970
          %v6301 = vunpack.c.h.b16 %v4970
          %v6302 = vunpack.c.l.b16 %v4971
          %v6303 = vunpack.c.h.b16 %v4971
          %v6304 = vunpack.c.l.b16 %v4972
          %v6305 = vunpack.c.h.b16 %v4972
          %v6306 = vunpack.c.l.b16 %v4973
          %v6307 = vunpack.c.h.b16 %v4973
          %v6308 = vunpack.c.l.b16 %v4974
          %v6309 = vunpack.c.h.b16 %v4974
          %v6310 = vunpack.c.l.b16 %v4975
          %v6311 = vunpack.c.h.b16 %v4975
          %v6312 = vunpack.c.l.b16 %v4976
          %v6313 = vunpack.c.h.b16 %v4976
          %v6314 = vunpack.c.l.b16 %v4977
          %v6315 = vunpack.c.h.b16 %v4977
          %v6316 = vunpack.c.l.b16 %v4978
          %v6317 = vunpack.c.h.b16 %v4978
          %v6318 = vunpack.c.l.b16 %v4979
          %v6319 = vunpack.c.h.b16 %v4979
          %v6320 = vunpack.c.l.b16 %v4980
          %v6321 = vunpack.c.h.b16 %v4980
          %v6322 = vunpack.c.l.b16 %v4981
          %v6323 = vunpack.c.h.b16 %v4981
          %v6324 = vunpack.c.l.b16 %v4982
          %v6325 = vunpack.c.h.b16 %v4982
          %v6326 = vunpack.c.l.b16 %v4983
          %v6327 = vunpack.c.h.b16 %v4983
          %v6328 = vunpack.c.l.b16 %v4984
          %v6329 = vunpack.c.h.b16 %v4984
          %v6330 = vunpack.c.l.b16 %v4985
          %v6331 = vunpack.c.h.b16 %v4985
          %v6332 = vunpack.c.l.b16 %v4986
          %v6333 = vunpack.c.h.b16 %v4986
          %v6334 = vunpack.c.l.b16 %v4987
          %v6335 = vunpack.c.h.b16 %v4987
          %v6336 = vunpack.c.l.b16 %v4988
          %v6337 = vunpack.c.h.b16 %v4988
          %v6338 = vunpack.c.l.b16 %v4989
          %v6339 = vunpack.c.h.b16 %v4989
          %v6340 = vunpack.c.l.b16 %v4990
          %v6341 = vunpack.c.h.b16 %v4990
          %v6342 = vunpack.c.l.b16 %v4991
          %v6343 = vunpack.c.h.b16 %v4991
          %v6344 = vunpack.c.l.b16 %v4992
          %v6345 = vunpack.c.h.b16 %v4992
          %v6346 = vunpack.c.l.b16 %v4993
          %v6347 = vunpack.c.h.b16 %v4993
          %v6348 = vunpack.c.l.b16 %v4994
          %v6349 = vunpack.c.h.b16 %v4994
          %v6350 = vunpack.c.l.b16 %v4995
          %v6351 = vunpack.c.h.b16 %v4995
          %v6352 = vunpack.c.l.b16 %v4996
          %v6353 = vunpack.c.h.b16 %v4996
          %v6354 = vunpack.c.l.b16 %v4997
          %v6355 = vunpack.c.h.b16 %v4997
          %v6356 = vunpack.c.l.b16 %v4998
          %v6357 = vunpack.c.h.b16 %v4998
          %v6358 = vunpack.c.l.b16 %v4999
          %v6359 = vunpack.c.h.b16 %v4999
          %v6360 = vunpack.c.l.b16 %v5000
          %v6361 = vunpack.c.h.b16 %v5000
          %v6362 = vunpack.c.l.b16 %v5001
          %v6363 = vunpack.c.h.b16 %v5001
          %v6364 = vunpack.c.l.b16 %v5002
          %v6365 = vunpack.c.h.b16 %v5002
          %v6366 = vunpack.c.l.b16 %v5003
          %v6367 = vunpack.c.h.b16 %v5003
          %v6368 = vunpack.c.l.b16 %v5004
          %v6369 = vunpack.c.h.b16 %v5004
          %v6370 = vunpack.c.l.b16 %v5005
          %v6371 = vunpack.c.h.b16 %v5005
          %v6372 = vunpack.c.l.b16 %v5006
          %v6373 = vunpack.c.h.b16 %v5006
          %v6374 = vunpack.c.l.b16 %v5007
          %v6375 = vunpack.c.h.b16 %v5007
          %v6376 = vunpack.c.l.b16 %v5008
          %v6377 = vunpack.c.h.b16 %v5008
          %v6378 = vunpack.c.l.b16 %v5009
          %v6379 = vunpack.c.h.b16 %v5009
          %v6380 = vunpack.c.l.b16 %v5010
          %v6381 = vunpack.c.h.b16 %v5010
          %v6382 = vunpack.c.l.b16 %v5011
          %v6383 = vunpack.c.h.b16 %v5011
          %v6384 = vunpack.c.l.b16 %v5012
          %v6385 = vunpack.c.h.b16 %v5012
          %v6386 = vunpack.c.l.b16 %v5013
          %v6387 = vunpack.c.h.b16 %v5013
          %v6388 = vunpack.c.l.b16 %v5014
          %v6389 = vunpack.c.h.b16 %v5014
          %v6390 = vunpack.c.l.b16 %v5015
          %v6391 = vunpack.c.h.b16 %v5015
          %v6392 = vunpack.c.l.b16 %v5016
          %v6393 = vunpack.c.h.b16 %v5016
          %v6394 = vunpack.c.l.b16 %v5017
          %v6395 = vunpack.c.h.b16 %v5017
          %v6396 = vunpack.c.l.b16 %v5018
          %v6397 = vunpack.c.h.b16 %v5018
          %v6398 = vunpack.c.l.b16 %v5019
          %v6399 = vunpack.c.h.b16 %v5019
          %v6400 = vunpack.c.l.b16 %v5020
          %v6401 = vunpack.c.h.b16 %v5020
          %v6402 = vunpack.c.l.b16 %v5021
          %v6403 = vunpack.c.h.b16 %v5021
          %v6404 = vunpack.c.l.b16 %v5022
          %v6405 = vunpack.c.h.b16 %v5022
          %v6406 = vunpack.c.l.b16 %v5023
          %v6407 = vunpack.c.h.b16 %v5023
          %v6408 = vunpack.c.l.b16 %v5024
          %v6409 = vunpack.c.h.b16 %v5024
          %v6410 = vunpack.c.l.b16 %v5025
          %v6411 = vunpack.c.h.b16 %v5025
          %v6412 = vunpack.c.l.b16 %v5026
          %v6413 = vunpack.c.h.b16 %v5026
          %v6414 = vunpack.c.l.b16 %v5027
          %v6415 = vunpack.c.h.b16 %v5027
          %v6416 = vunpack.c.l.b16 %v5028
          %v6417 = vunpack.c.h.b16 %v5028
          %v6418 = vunpack.c.l.b16 %v5029
          %v6419 = vunpack.c.h.b16 %v5029
          %v6420 = vunpack.c.l.b16 %v5030
          %v6421 = vunpack.c.h.b16 %v5030
          %v6422 = vunpack.c.l.b16 %v5031
          %v6423 = vunpack.c.h.b16 %v5031
          %v6424 = vunpack.c.l.b16 %v5032
          %v6425 = vunpack.c.h.b16 %v5032
          %v6426 = vunpack.c.l.b16 %v5033
          %v6427 = vunpack.c.h.b16 %v5033
          %v6428 = vunpack.c.l.b16 %v5034
          %v6429 = vunpack.c.h.b16 %v5034
          %v6430 = vunpack.c.l.b16 %v5035
          %v6431 = vunpack.c.h.b16 %v5035
          %v6432 = vunpack.c.l.b16 %v5036
          %v6433 = vunpack.c.h.b16 %v5036
          %v6434 = vunpack.c.l.b16 %v5037
          %v6435 = vunpack.c.h.b16 %v5037
          %v6436 = vunpack.c.l.b16 %v5038
          %v6437 = vunpack.c.h.b16 %v5038
          %v6438 = vunpack.c.l.b16 %v5039
          %v6439 = vunpack.c.h.b16 %v5039
          %v6440 = vunpack.c.l.b16 %v5040
          %v6441 = vunpack.c.h.b16 %v5040
          %v6442 = vunpack.c.l.b16 %v5041
          %v6443 = vunpack.c.h.b16 %v5041
          %v6444 = vunpack.c.l.b16 %v5042
          %v6445 = vunpack.c.h.b16 %v5042
          %v6446 = vunpack.c.l.b16 %v5043
          %v6447 = vunpack.c.h.b16 %v5043
          %v6448 = vunpack.c.l.b16 %v5044
          %v6449 = vunpack.c.h.b16 %v5044
          %v6450 = vunpack.c.l.b16 %v5045
          %v6451 = vunpack.c.h.b16 %v5045
          %v6452 = vunpack.c.l.b16 %v5046
          %v6453 = vunpack.c.h.b16 %v5046
          %v6454 = vunpack.c.l.b16 %v5047
          %v6455 = vunpack.c.h.b16 %v5047
          %v6456 = vunpack.c.l.b16 %v5048
          %v6457 = vunpack.c.h.b16 %v5048
          %v6458 = vunpack.c.l.b16 %v5049
          %v6459 = vunpack.c.h.b16 %v5049
          %v6460 = vunpack.c.l.b16 %v5050
          %v6461 = vunpack.c.h.b16 %v5050
          %v6462 = vunpack.c.l.b16 %v5051
          %v6463 = vunpack.c.h.b16 %v5051
          %v6464 = vunpack.c.l.b16 %v5052
          %v6465 = vunpack.c.h.b16 %v5052
          %v6466 = vunpack.c.l.b16 %v5053
          %v6467 = vunpack.c.h.b16 %v5053
          %v6468 = vunpack.c.l.b16 %v5054
          %v6469 = vunpack.c.h.b16 %v5054
          %v6470 = vunpack.c.l.b16 %v5055
          %v6471 = vunpack.c.h.b16 %v5055
          %v6472 = vunpack.c.l.b16 %v5056
          %v6473 = vunpack.c.h.b16 %v5056
          %v6474 = vunpack.c.l.b16 %v5057
          %v6475 = vunpack.c.h.b16 %v5057
          %v6476 = vunpack.c.l.b16 %v5058
          %v6477 = vunpack.c.h.b16 %v5058
          %v6478 = vunpack.c.l.b16 %v5059
          %v6479 = vunpack.c.h.b16 %v5059
          %v6480 = vunpack.c.l.b16 %v5060
          %v6481 = vunpack.c.h.b16 %v5060
          %v6482 = vunpack.c.l.b16 %v5061
          %v6483 = vunpack.c.h.b16 %v5061
          %v6484 = vunpack.c.l.b16 %v5062
          %v6485 = vunpack.c.h.b16 %v5062
          %v6486 = vunpack.c.l.b16 %v5063
          %v6487 = vunpack.c.h.b16 %v5063
          %v6488 = vunpack.c.l.b16 %v5064
          %v6489 = vunpack.c.h.b16 %v5064
          %v6490 = vunpack.c.l.b16 %v5065
          %v6491 = vunpack.c.h.b16 %v5065
          %v6492 = vunpack.c.l.b16 %v5066
          %v6493 = vunpack.c.h.b16 %v5066
          %v6494 = vunpack.c.l.b16 %v5067
          %v6495 = vunpack.c.h.b16 %v5067
          %v6496 = vunpack.c.l.b16 %v5068
          %v6497 = vunpack.c.h.b16 %v5068
          %v6498 = vunpack.c.l.b16 %v5069
          %v6499 = vunpack.c.h.b16 %v5069
          %v6500 = vunpack.c.l.b16 %v5070
          %v6501 = vunpack.c.h.b16 %v5070
          %v6502 = vunpack.c.l.b16 %v5071
          %v6503 = vunpack.c.h.b16 %v5071
          %v6504 = vunpack.c.l.b16 %v5072
          %v6505 = vunpack.c.h.b16 %v5072
          %v6506 = vunpack.c.l.b16 %v5073
          %v6507 = vunpack.c.h.b16 %v5073
          %v6508 = vunpack.c.l.b16 %v5074
          %v6509 = vunpack.c.h.b16 %v5074
          %v6510 = vunpack.c.l.b16 %v5075
          %v6511 = vunpack.c.h.b16 %v5075
          %v6512 = vunpack.c.l.b16 %v5076
          %v6513 = vunpack.c.h.b16 %v5076
          %v6514 = vunpack.c.l.b16 %v5077
          %v6515 = vunpack.c.h.b16 %v5077
          %v6516 = vunpack.c.l.b16 %v5078
          %v6517 = vunpack.c.h.b16 %v5078
          %v6518 = vunpack.c.l.b16 %v5079
          %v6519 = vunpack.c.h.b16 %v5079
          %v6520 = vunpack.c.l.b16 %v5080
          %v6521 = vunpack.c.h.b16 %v5080
          %v6522 = vunpack.c.l.b16 %v5081
          %v6523 = vunpack.c.h.b16 %v5081
          %v6524 = vunpack.c.l.b16 %v5082
          %v6525 = vunpack.c.h.b16 %v5082
          %v6526 = vunpack.c.l.b16 %v5083
          %v6527 = vunpack.c.h.b16 %v5083
          %v6528 = vunpack.c.l.b16 %v5084
          %v6529 = vunpack.c.h.b16 %v5084
          %v6530 = vunpack.c.l.b16 %v5085
          %v6531 = vunpack.c.h.b16 %v5085
          %v6532 = vunpack.c.l.b16 %v5086
          %v6533 = vunpack.c.h.b16 %v5086
          %v6534 = vunpack.c.l.b16 %v5087
          %v6535 = vunpack.c.h.b16 %v5087
          %v6536 = vunpack.c.l.b16 %v5088
          %v6537 = vunpack.c.h.b16 %v5088
          %v6538 = vunpack.c.l.b16 %v5089
          %v6539 = vunpack.c.h.b16 %v5089
          %v6540 = vunpack.c.l.b16 %v5090
          %v6541 = vunpack.c.h.b16 %v5090
          %v6542 = vunpack.c.l.b16 %v5091
          %v6543 = vunpack.c.h.b16 %v5091
          %v6544 = vunpack.c.l.b16 %v5092
          %v6545 = vunpack.c.h.b16 %v5092
          %v6546 = vunpack.c.l.b16 %v5093
          %v6547 = vunpack.c.h.b16 %v5093
          %v6548 = vunpack.c.l.b16 %v5094
          %v6549 = vunpack.c.h.b16 %v5094
          %v6550 = vunpack.c.l.b16 %v5095
          %v6551 = vunpack.c.h.b16 %v5095
          %v6552 = vunpack.c.l.b16 %v5096
          %v6553 = vunpack.c.h.b16 %v5096
          %v6554 = vunpack.c.l.b16 %v5097
          %v6555 = vunpack.c.h.b16 %v5097
          %v6556 = vunpack.c.l.b16 %v5098
          %v6557 = vunpack.c.h.b16 %v5098
          %v6558 = vunpack.c.l.b16 %v5099
          %v6559 = vunpack.c.h.b16 %v5099
          %v6560 = vunpack.c.l.b16 %v5100
          %v6561 = vunpack.c.h.b16 %v5100
          %v6562 = vunpack.c.l.b16 %v5101
          %v6563 = vunpack.c.h.b16 %v5101
          %v6564 = vunpack.c.l.b16 %v5102
          %v6565 = vunpack.c.h.b16 %v5102
          %v6566 = vunpack.c.l.b16 %v5103
          %v6567 = vunpack.c.h.b16 %v5103
          %v6568 = vunpack.c.l.b16 %v5104
          %v6569 = vunpack.c.h.b16 %v5104
          %v6570 = vunpack.c.l.b16 %v5105
          %v6571 = vunpack.c.h.b16 %v5105
          %v6572 = vunpack.c.l.b16 %v5106
          %v6573 = vunpack.c.h.b16 %v5106
          %v6574 = vunpack.c.l.b16 %v5107
          %v6575 = vunpack.c.h.b16 %v5107
          %v6576 = vunpack.c.l.b16 %v5108
          %v6577 = vunpack.c.h.b16 %v5108
          %v6578 = vunpack.c.l.b16 %v5109
          %v6579 = vunpack.c.h.b16 %v5109
          %v6580 = vunpack.c.l.b16 %v5110
          %v6581 = vunpack.c.h.b16 %v5110
          %v6582 = vunpack.c.l.b16 %v5111
          %v6583 = vunpack.c.h.b16 %v5111
          %v6584 = vunpack.c.l.b16 %v5112
          %v6585 = vunpack.c.h.b16 %v5112
          %v6586 = vunpack.c.l.b16 %v5113
          %v6587 = vunpack.c.h.b16 %v5113
          %v6588 = vunpack.c.l.b16 %v5114
          %v6589 = vunpack.c.h.b16 %v5114
          %v6590 = vunpack.c.l.b16 %v5115
          %v6591 = vunpack.c.h.b16 %v5115
          %v6592 = vunpack.c.l.b16 %v5116
          %v6593 = vunpack.c.h.b16 %v5116
          %v6594 = vunpack.c.l.b16 %v5117
          %v6595 = vunpack.c.h.b16 %v5117
          %v6596 = vunpack.c.l.b16 %v5118
          %v6597 = vunpack.c.h.b16 %v5118
          %v6598 = vunpack.c.l.b16 %v5119
          %v6599 = vunpack.c.h.b16 %v5119
          %v6600 = vunpack.c.l.b16 %v5120
          %v6601 = vunpack.c.h.b16 %v5120
          %v6602 = vunpack.c.l.b16 %v5121
          %v6603 = vunpack.c.h.b16 %v5121
          %v6604 = vunpack.c.l.b16 %v5122
          %v6605 = vunpack.c.h.b16 %v5122
          %v6606 = vunpack.c.l.b16 %v5123
          %v6607 = vunpack.c.h.b16 %v5123
          %v6608 = vunpack.c.l.b16 %v5124
          %v6609 = vunpack.c.h.b16 %v5124
          %v6610 = vunpack.c.l.b16 %v5125
          %v6611 = vunpack.c.h.b16 %v5125
          %v6612 = vunpack.c.l.b16 %v5126
          %v6613 = vunpack.c.h.b16 %v5126
          %v6614 = vunpack.c.l.b16 %v5127
          %v6615 = vunpack.c.h.b16 %v5127
          %v6616 = vunpack.c.l.b16 %v5128
          %v6617 = vunpack.c.h.b16 %v5128
          %v6618 = vunpack.c.l.b16 %v5129
          %v6619 = vunpack.c.h.b16 %v5129
          %v6620 = vunpack.c.l.b16 %v5130
          %v6621 = vunpack.c.h.b16 %v5130
          %v6622 = vunpack.c.l.b16 %v5131
          %v6623 = vunpack.c.h.b16 %v5131
          %v6624 = vunpack.c.l.b16 %v5132
          %v6625 = vunpack.c.h.b16 %v5132
          %v6626 = vunpack.c.l.b16 %v5133
          %v6627 = vunpack.c.h.b16 %v5133
          %v6628 = vunpack.c.l.b16 %v5134
          %v6629 = vunpack.c.h.b16 %v5134
          %v6630 = vunpack.c.l.b16 %v5135
          %v6631 = vunpack.c.h.b16 %v5135
          %v6632 = vunpack.c.l.b16 %v5136
          %v6633 = vunpack.c.h.b16 %v5136
          %v6634 = vunpack.c.l.b16 %v5137
          %v6635 = vunpack.c.h.b16 %v5137
          %v6636 = vunpack.c.l.b16 %v5138
          %v6637 = vunpack.c.h.b16 %v5138
          %v6638 = vunpack.c.l.b16 %v5139
          %v6639 = vunpack.c.h.b16 %v5139
          %v6640 = vunpack.c.l.b16 %v5140
          %v6641 = vunpack.c.h.b16 %v5140
          %v6642 = vunpack.c.l.b16 %v5141
          %v6643 = vunpack.c.h.b16 %v5141
          %v6644 = vunpack.c.l.b16 %v5142
          %v6645 = vunpack.c.h.b16 %v5142
          %v6646 = vunpack.c.l.b16 %v5143
          %v6647 = vunpack.c.h.b16 %v5143
          %v6648 = vunpack.c.l.b16 %v5144
          %v6649 = vunpack.c.h.b16 %v5144
          %v6650 = vunpack.c.l.b16 %v5145
          %v6651 = vunpack.c.h.b16 %v5145
          %v6652 = vunpack.c.l.b16 %v5146
          %v6653 = vunpack.c.h.b16 %v5146
          %v6654 = vunpack.c.l.b16 %v5147
          %v6655 = vunpack.c.h.b16 %v5147
          %v6656 = vunpack.c.l.b16 %v5148
          %v6657 = vunpack.c.h.b16 %v5148
          %v6658 = vunpack.c.l.b16 %v5149
          %v6659 = vunpack.c.h.b16 %v5149
          %v6660 = vunpack.c.l.b16 %v5150
          %v6661 = vunpack.c.h.b16 %v5150
          %v6662 = vunpack.c.l.b16 %v5151
          %v6663 = vunpack.c.h.b16 %v5151
          %v6664 = vunpack.c.l.b16 %v5152
          %v6665 = vunpack.c.h.b16 %v5152
          %v6666 = vunpack.c.l.b16 %v5153
          %v6667 = vunpack.c.h.b16 %v5153
          %v6668 = vunpack.c.l.b16 %v5154
          %v6669 = vunpack.c.h.b16 %v5154
          %v6670 = vunpack.c.l.b16 %v5155
          %v6671 = vunpack.c.h.b16 %v5155
          %v6672 = vunpack.c.l.b16 %v5156
          %v6673 = vunpack.c.h.b16 %v5156
          %v6674 = vunpack.c.l.b16 %v5157
          %v6675 = vunpack.c.h.b16 %v5157
          %v6676 = vunpack.c.l.b16 %v5158
          %v6677 = vunpack.c.h.b16 %v5158
          %v6678 = vunpack.c.l.b16 %v5159
          %v6679 = vunpack.c.h.b16 %v5159
          %v6680 = vunpack.c.l.b16 %v5160
          %v6681 = vunpack.c.h.b16 %v5160
          %v6682 = vunpack.c.l.b16 %v5161
          %v6683 = vunpack.c.h.b16 %v5161
          %v6684 = vunpack.c.l.b16 %v5162
          %v6685 = vunpack.c.h.b16 %v5162
          %v6686 = vunpack.c.l.b16 %v5163
          %v6687 = vunpack.c.h.b16 %v5163
          %v6688 = vunpack.c.l.b16 %v5164
          %v6689 = vunpack.c.h.b16 %v5164
          %v6690 = vunpack.c.l.b16 %v5165
          %v6691 = vunpack.c.h.b16 %v5165
          %v6692 = vunpack.c.l.b16 %v5166
          %v6693 = vunpack.c.h.b16 %v5166
          %v6694 = vunpack.c.l.b16 %v5167
          %v6695 = vunpack.c.h.b16 %v5167
          %v6696 = vunpack.c.l.b16 %v5168
          %v6697 = vunpack.c.h.b16 %v5168
          %v6698 = vunpack.c.l.b16 %v5169
          %v6699 = vunpack.c.h.b16 %v5169
          %v6700 = vunpack.c.l.b16 %v5170
          %v6701 = vunpack.c.h.b16 %v5170
          %v6702 = vunpack.c.l.b16 %v5171
          %v6703 = vunpack.c.h.b16 %v5171
          %v6704 = vunpack.c.l.b16 %v5172
          %v6705 = vunpack.c.h.b16 %v5172
          %v6706 = vunpack.c.l.b16 %v5173
          %v6707 = vunpack.c.h.b16 %v5173
          %v6708 = vunpack.c.l.b16 %v5174
          %v6709 = vunpack.c.h.b16 %v5174
          %v6710 = vunpack.c.l.b16 %v5175
          %v6711 = vunpack.c.h.b16 %v5175
          %v6712 = vunpack.c.l.b16 %v5176
          %v6713 = vunpack.c.h.b16 %v5176
          %v6714 = vunpack.c.l.b16 %v5177
          %v6715 = vunpack.c.h.b16 %v5177
          %v6716 = vunpack.c.l.b16 %v5178
          %v6717 = vunpack.c.h.b16 %v5178
          %v6718 = vunpack.c.l.b16 %v5179
          %v6719 = vunpack.c.h.b16 %v5179
          %v6720 = vunpack.c.l.b16 %v5180
          %v6721 = vunpack.c.h.b16 %v5180
          %v6722 = vunpack.c.l.b16 %v5181
          %v6723 = vunpack.c.h.b16 %v5181
          %v6724 = vunpack.c.l.b16 %v5182
          %v6725 = vunpack.c.h.b16 %v5182
          %v6726 = vunpack.c.l.b16 %v5183
          %v6727 = vunpack.c.h.b16 %v5183
          %v6728 = vunpack.c.l.b16 %v5184
          %v6729 = vunpack.c.h.b16 %v5184
          %v6730 = vunpack.c.l.b16 %v5185
          %v6731 = vunpack.c.h.b16 %v5185
          %v6732 = vunpack.c.l.b16 %v5186
          %v6733 = vunpack.c.h.b16 %v5186
          %v6734 = vunpack.c.l.b16 %v5187
          %v6735 = vunpack.c.h.b16 %v5187
          %v6736 = vunpack.c.l.b16 %v5188
          %v6737 = vunpack.c.h.b16 %v5188
          %v6738 = vunpack.c.l.b16 %v5189
          %v6739 = vunpack.c.h.b16 %v5189
          %v6740 = vpack.c.b16 %v5732, %v5716
          %v6741 = vpack.c.b16 %v5733, %v5717
          %v6742 = vpack.c.b16 %v5734, %v5718
          %v6743 = vpack.c.b16 %v5735, %v5719
          %v6744 = vpack.c.b16 %v5736, %v5720
          %v6745 = vpack.c.b16 %v5737, %v5721
          %v6746 = vpack.c.b16 %v5738, %v5722
          %v6747 = vpack.c.b16 %v5739, %v5723
          %v6748 = vpack.c.b16 %v5740, %v5724
          %v6749 = vpack.c.b16 %v5741, %v5725
          %v6750 = vpack.c.b16 %v5742, %v5726
          %v6751 = vpack.c.b16 %v5743, %v5727
          %v6752 = vpack.c.b16 %v5744, %v5728
          %v6753 = vpack.c.b16 %v5745, %v5729
          %v6754 = vpack.c.b16 %v5746, %v5730
          %v6755 = vpack.c.b16 %v5747, %v5731
          %v6756 = vpack.c.b16 %v5764, %v5748
          %v6757 = vpack.c.b16 %v5765, %v5749
          %v6758 = vpack.c.b16 %v5766, %v5750
          %v6759 = vpack.c.b16 %v5767, %v5751
          %v6760 = vpack.c.b16 %v5768, %v5752
          %v6761 = vpack.c.b16 %v5769, %v5753
          %v6762 = vpack.c.b16 %v5770, %v5754
          %v6763 = vpack.c.b16 %v5771, %v5755
          %v6764 = vpack.c.b16 %v5772, %v5756
          %v6765 = vpack.c.b16 %v5773, %v5757
          %v6766 = vpack.c.b16 %v5774, %v5758
          %v6767 = vpack.c.b16 %v5775, %v5759
          %v6768 = vpack.c.b16 %v5776, %v5760
          %v6769 = vpack.c.b16 %v5777, %v5761
          %v6770 = vpack.c.b16 %v5778, %v5762
          %v6771 = vpack.c.b16 %v5779, %v5763
          %v6772 = vpack.c.b16 %v5796, %v5780
          %v6773 = vpack.c.b16 %v5797, %v5781
          %v6774 = vpack.c.b16 %v5798, %v5782
          %v6775 = vpack.c.b16 %v5799, %v5783
          %v6776 = vpack.c.b16 %v5800, %v5784
          %v6777 = vpack.c.b16 %v5801, %v5785
          %v6778 = vpack.c.b16 %v5802, %v5786
          %v6779 = vpack.c.b16 %v5803, %v5787
          %v6780 = vpack.c.b16 %v5804, %v5788
          %v6781 = vpack.c.b16 %v5805, %v5789
          %v6782 = vpack.c.b16 %v5806, %v5790
          %v6783 = vpack.c.b16 %v5807, %v5791
          %v6784 = vpack.c.b16 %v5808, %v5792
          %v6785 = vpack.c.b16 %v5809, %v5793
          %v6786 = vpack.c.b16 %v5810, %v5794
          %v6787 = vpack.c.b16 %v5811, %v5795
          %v6788 = vpack.c.b16 %v5828, %v5812
          %v6789 = vpack.c.b16 %v5829, %v5813
          %v6790 = vpack.c.b16 %v5830, %v5814
          %v6791 = vpack.c.b16 %v5831, %v5815
          %v6792 = vpack.c.b16 %v5832, %v5816
          %v6793 = vpack.c.b16 %v5833, %v5817
          %v6794 = vpack.c.b16 %v5834, %v5818
          %v6795 = vpack.c.b16 %v5835, %v5819
          %v6796 = vpack.c.b16 %v5836, %v5820
          %v6797 = vpack.c.b16 %v5837, %v5821
          %v6798 = vpack.c.b16 %v5838, %v5822
          %v6799 = vpack.c.b16 %v5839, %v5823
          %v6800 = vpack.c.b16 %v5840, %v5824
          %v6801 = vpack.c.b16 %v5841, %v5825
          %v6802 = vpack.c.b16 %v5842, %v5826
          %v6803 = vpack.c.b16 %v5843, %v5827
          %v6804 = vpack.c.b16 %v5860, %v5844
          %v6805 = vpack.c.b16 %v5861, %v5845
          %v6806 = vpack.c.b16 %v5862, %v5846
          %v6807 = vpack.c.b16 %v5863, %v5847
          %v6808 = vpack.c.b16 %v5864, %v5848
          %v6809 = vpack.c.b16 %v5865, %v5849
          %v6810 = vpack.c.b16 %v5866, %v5850
          %v6811 = vpack.c.b16 %v5867, %v5851
          %v6812 = vpack.c.b16 %v5868, %v5852
          %v6813 = vpack.c.b16 %v5869, %v5853
          %v6814 = vpack.c.b16 %v5870, %v5854
          %v6815 = vpack.c.b16 %v5871, %v5855
          %v6816 = vpack.c.b16 %v5872, %v5856
          %v6817 = vpack.c.b16 %v5873, %v5857
          %v6818 = vpack.c.b16 %v5874, %v5858
          %v6819 = vpack.c.b16 %v5875, %v5859
          %v6820 = vpack.c.b16 %v5892, %v5876
          %v6821 = vpack.c.b16 %v5893, %v5877
          %v6822 = vpack.c.b16 %v5894, %v5878
          %v6823 = vpack.c.b16 %v5895, %v5879
          %v6824 = vpack.c.b16 %v5896, %v5880
          %v6825 = vpack.c.b16 %v5897, %v5881
          %v6826 = vpack.c.b16 %v5898, %v5882
          %v6827 = vpack.c.b16 %v5899, %v5883
          %v6828 = vpack.c.b16 %v5900, %v5884
          %v6829 = vpack.c.b16 %v5901, %v5885
          %v6830 = vpack.c.b16 %v5902, %v5886
          %v6831 = vpack.c.b16 %v5903, %v5887
          %v6832 = vpack.c.b16 %v5904, %v5888
          %v6833 = vpack.c.b16 %v5905, %v5889
          %v6834 = vpack.c.b16 %v5906, %v5890
          %v6835 = vpack.c.b16 %v5907, %v5891
          %v6836 = vpack.c.b16 %v5924, %v5908
          %v6837 = vpack.c.b16 %v5925, %v5909
          %v6838 = vpack.c.b16 %v5926, %v5910
          %v6839 = vpack.c.b16 %v5927, %v5911
          %v6840 = vpack.c.b16 %v5928, %v5912
          %v6841 = vpack.c.b16 %v5929, %v5913
          %v6842 = vpack.c.b16 %v5930, %v5914
          %v6843 = vpack.c.b16 %v5931, %v5915
          %v6844 = vpack.c.b16 %v5932, %v5916
          %v6845 = vpack.c.b16 %v5933, %v5917
          %v6846 = vpack.c.b16 %v5934, %v5918
          %v6847 = vpack.c.b16 %v5935, %v5919
          %v6848 = vpack.c.b16 %v5936, %v5920
          %v6849 = vpack.c.b16 %v5937, %v5921
          %v6850 = vpack.c.b16 %v5938, %v5922
          %v6851 = vpack.c.b16 %v5939, %v5923
          %v6852 = vpack.c.b16 %v5956, %v5940
          %v6853 = vpack.c.b16 %v5957, %v5941
          %v6854 = vpack.c.b16 %v5958, %v5942
          %v6855 = vpack.c.b16 %v5959, %v5943
          %v6856 = vpack.c.b16 %v5960, %v5944
          %v6857 = vpack.c.b16 %v5961, %v5945
          %v6858 = vpack.c.b16 %v5962, %v5946
          %v6859 = vpack.c.b16 %v5963, %v5947
          %v6860 = vpack.c.b16 %v5964, %v5948
          %v6861 = vpack.c.b16 %v5965, %v5949
          %v6862 = vpack.c.b16 %v5966, %v5950
          %v6863 = vpack.c.b16 %v5967, %v5951
          %v6864 = vpack.c.b16 %v5968, %v5952
          %v6865 = vpack.c.b16 %v5969, %v5953
          %v6866 = vpack.c.b16 %v5970, %v5954
          %v6867 = vpack.c.b16 %v5971, %v5955
          %v6868 = vpack.c.b16 %v5988, %v5972
          %v6869 = vpack.c.b16 %v5989, %v5973
          %v6870 = vpack.c.b16 %v5990, %v5974
          %v6871 = vpack.c.b16 %v5991, %v5975
          %v6872 = vpack.c.b16 %v5992, %v5976
          %v6873 = vpack.c.b16 %v5993, %v5977
          %v6874 = vpack.c.b16 %v5994, %v5978
          %v6875 = vpack.c.b16 %v5995, %v5979
          %v6876 = vpack.c.b16 %v5996, %v5980
          %v6877 = vpack.c.b16 %v5997, %v5981
          %v6878 = vpack.c.b16 %v5998, %v5982
          %v6879 = vpack.c.b16 %v5999, %v5983
          %v6880 = vpack.c.b16 %v6000, %v5984
          %v6881 = vpack.c.b16 %v6001, %v5985
          %v6882 = vpack.c.b16 %v6002, %v5986
          %v6883 = vpack.c.b16 %v6003, %v5987
          %v6884 = vpack.c.b16 %v6020, %v6004
          %v6885 = vpack.c.b16 %v6021, %v6005
          %v6886 = vpack.c.b16 %v6022, %v6006
          %v6887 = vpack.c.b16 %v6023, %v6007
          %v6888 = vpack.c.b16 %v6024, %v6008
          %v6889 = vpack.c.b16 %v6025, %v6009
          %v6890 = vpack.c.b16 %v6026, %v6010
          %v6891 = vpack.c.b16 %v6027, %v6011
          %v6892 = vpack.c.b16 %v6028, %v6012
          %v6893 = vpack.c.b16 %v6029, %v6013
          %v6894 = vpack.c.b16 %v6030, %v6014
          %v6895 = vpack.c.b16 %v6031, %v6015
          %v6896 = vpack.c.b16 %v6032, %v6016
          %v6897 = vpack.c.b16 %v6033, %v6017
          %v6898 = vpack.c.b16 %v6034, %v6018
          %v6899 = vpack.c.b16 %v6035, %v6019
          %v6900 = vpack.c.b16 %v6052, %v6036
          %v6901 = vpack.c.b16 %v6053, %v6037
          %v6902 = vpack.c.b16 %v6054, %v6038
          %v6903 = vpack.c.b16 %v6055, %v6039
          %v6904 = vpack.c.b16 %v6056, %v6040
          %v6905 = vpack.c.b16 %v6057, %v6041
          %v6906 = vpack.c.b16 %v6058, %v6042
          %v6907 = vpack.c.b16 %v6059, %v6043
          %v6908 = vpack.c.b16 %v6060, %v6044
          %v6909 = vpack.c.b16 %v6061, %v6045
          %v6910 = vpack.c.b16 %v6062, %v6046
          %v6911 = vpack.c.b16 %v6063, %v6047
          %v6912 = vpack.c.b16 %v6064, %v6048
          %v6913 = vpack.c.b16 %v6065, %v6049
          %v6914 = vpack.c.b16 %v6066, %v6050
          %v6915 = vpack.c.b16 %v6067, %v6051
          %v6916 = vpack.c.b16 %v6084, %v6068
          %v6917 = vpack.c.b16 %v6085, %v6069
          %v6918 = vpack.c.b16 %v6086, %v6070
          %v6919 = vpack.c.b16 %v6087, %v6071
          %v6920 = vpack.c.b16 %v6088, %v6072
          %v6921 = vpack.c.b16 %v6089, %v6073
          %v6922 = vpack.c.b16 %v6090, %v6074
          %v6923 = vpack.c.b16 %v6091, %v6075
          %v6924 = vpack.c.b16 %v6092, %v6076
          %v6925 = vpack.c.b16 %v6093, %v6077
          %v6926 = vpack.c.b16 %v6094, %v6078
          %v6927 = vpack.c.b16 %v6095, %v6079
          %v6928 = vpack.c.b16 %v6096, %v6080
          %v6929 = vpack.c.b16 %v6097, %v6081
          %v6930 = vpack.c.b16 %v6098, %v6082
          %v6931 = vpack.c.b16 %v6099, %v6083
          %v6932 = vpack.c.b16 %v6116, %v6100
          %v6933 = vpack.c.b16 %v6117, %v6101
          %v6934 = vpack.c.b16 %v6118, %v6102
          %v6935 = vpack.c.b16 %v6119, %v6103
          %v6936 = vpack.c.b16 %v6120, %v6104
          %v6937 = vpack.c.b16 %v6121, %v6105
          %v6938 = vpack.c.b16 %v6122, %v6106
          %v6939 = vpack.c.b16 %v6123, %v6107
          %v6940 = vpack.c.b16 %v6124, %v6108
          %v6941 = vpack.c.b16 %v6125, %v6109
          %v6942 = vpack.c.b16 %v6126, %v6110
          %v6943 = vpack.c.b16 %v6127, %v6111
          %v6944 = vpack.c.b16 %v6128, %v6112
          %v6945 = vpack.c.b16 %v6129, %v6113
          %v6946 = vpack.c.b16 %v6130, %v6114
          %v6947 = vpack.c.b16 %v6131, %v6115
          %v6948 = vpack.c.b16 %v6148, %v6132
          %v6949 = vpack.c.b16 %v6149, %v6133
          %v6950 = vpack.c.b16 %v6150, %v6134
          %v6951 = vpack.c.b16 %v6151, %v6135
          %v6952 = vpack.c.b16 %v6152, %v6136
          %v6953 = vpack.c.b16 %v6153, %v6137
          %v6954 = vpack.c.b16 %v6154, %v6138
          %v6955 = vpack.c.b16 %v6155, %v6139
          %v6956 = vpack.c.b16 %v6156, %v6140
          %v6957 = vpack.c.b16 %v6157, %v6141
          %v6958 = vpack.c.b16 %v6158, %v6142
          %v6959 = vpack.c.b16 %v6159, %v6143
          %v6960 = vpack.c.b16 %v6160, %v6144
          %v6961 = vpack.c.b16 %v6161, %v6145
          %v6962 = vpack.c.b16 %v6162, %v6146
          %v6963 = vpack.c.b16 %v6163, %v6147
          %v6964 = vpack.c.b16 %v6180, %v6164
          %v6965 = vpack.c.b16 %v6181, %v6165
          %v6966 = vpack.c.b16 %v6182, %v6166
          %v6967 = vpack.c.b16 %v6183, %v6167
          %v6968 = vpack.c.b16 %v6184, %v6168
          %v6969 = vpack.c.b16 %v6185, %v6169
          %v6970 = vpack.c.b16 %v6186, %v6170
          %v6971 = vpack.c.b16 %v6187, %v6171
          %v6972 = vpack.c.b16 %v6188, %v6172
          %v6973 = vpack.c.b16 %v6189, %v6173
          %v6974 = vpack.c.b16 %v6190, %v6174
          %v6975 = vpack.c.b16 %v6191, %v6175
          %v6976 = vpack.c.b16 %v6192, %v6176
          %v6977 = vpack.c.b16 %v6193, %v6177
          %v6978 = vpack.c.b16 %v6194, %v6178
          %v6979 = vpack.c.b16 %v6195, %v6179
          %v6980 = vpack.c.b16 %v6212, %v6196
          %v6981 = vpack.c.b16 %v6213, %v6197
          %v6982 = vpack.c.b16 %v6214, %v6198
          %v6983 = vpack.c.b16 %v6215, %v6199
          %v6984 = vpack.c.b16 %v6216, %v6200
          %v6985 = vpack.c.b16 %v6217, %v6201
          %v6986 = vpack.c.b16 %v6218, %v6202
          %v6987 = vpack.c.b16 %v6219, %v6203
          %v6988 = vpack.c.b16 %v6220, %v6204
          %v6989 = vpack.c.b16 %v6221, %v6205
          %v6990 = vpack.c.b16 %v6222, %v6206
          %v6991 = vpack.c.b16 %v6223, %v6207
          %v6992 = vpack.c.b16 %v6224, %v6208
          %v6993 = vpack.c.b16 %v6225, %v6209
          %v6994 = vpack.c.b16 %v6226, %v6210
          %v6995 = vpack.c.b16 %v6227, %v6211
          %v6996 = vpack.c.b16 %v6244, %v6228
          %v6997 = vpack.c.b16 %v6245, %v6229
          %v6998 = vpack.c.b16 %v6246, %v6230
          %v6999 = vpack.c.b16 %v6247, %v6231
          %v7000 = vpack.c.b16 %v6248, %v6232
          %v7001 = vpack.c.b16 %v6249, %v6233
          %v7002 = vpack.c.b16 %v6250, %v6234
          %v7003 = vpack.c.b16 %v6251, %v6235
          %v7004 = vpack.c.b16 %v6252, %v6236
          %v7005 = vpack.c.b16 %v6253, %v6237
          %v7006 = vpack.c.b16 %v6254, %v6238
          %v7007 = vpack.c.b16 %v6255, %v6239
          %v7008 = vpack.c.b16 %v6256, %v6240
          %v7009 = vpack.c.b16 %v6257, %v6241
          %v7010 = vpack.c.b16 %v6258, %v6242
          %v7011 = vpack.c.b16 %v6259, %v6243
          %v7012 = vpack.c.b16 %v6276, %v6260
          %v7013 = vpack.c.b16 %v6277, %v6261
          %v7014 = vpack.c.b16 %v6278, %v6262
          %v7015 = vpack.c.b16 %v6279, %v6263
          %v7016 = vpack.c.b16 %v6280, %v6264
          %v7017 = vpack.c.b16 %v6281, %v6265
          %v7018 = vpack.c.b16 %v6282, %v6266
          %v7019 = vpack.c.b16 %v6283, %v6267
          %v7020 = vpack.c.b16 %v6284, %v6268
          %v7021 = vpack.c.b16 %v6285, %v6269
          %v7022 = vpack.c.b16 %v6286, %v6270
          %v7023 = vpack.c.b16 %v6287, %v6271
          %v7024 = vpack.c.b16 %v6288, %v6272
          %v7025 = vpack.c.b16 %v6289, %v6273
          %v7026 = vpack.c.b16 %v6290, %v6274
          %v7027 = vpack.c.b16 %v6291, %v6275
          %v7028 = vpack.c.b16 %v6308, %v6292
          %v7029 = vpack.c.b16 %v6309, %v6293
          %v7030 = vpack.c.b16 %v6310, %v6294
          %v7031 = vpack.c.b16 %v6311, %v6295
          %v7032 = vpack.c.b16 %v6312, %v6296
          %v7033 = vpack.c.b16 %v6313, %v6297
          %v7034 = vpack.c.b16 %v6314, %v6298
          %v7035 = vpack.c.b16 %v6315, %v6299
          %v7036 = vpack.c.b16 %v6316, %v6300
          %v7037 = vpack.c.b16 %v6317, %v6301
          %v7038 = vpack.c.b16 %v6318, %v6302
          %v7039 = vpack.c.b16 %v6319, %v6303
          %v7040 = vpack.c.b16 %v6320, %v6304
          %v7041 = vpack.c.b16 %v6321, %v6305
          %v7042 = vpack.c.b16 %v6322, %v6306
          %v7043 = vpack.c.b16 %v6323, %v6307
          %v7044 = vpack.c.b16 %v6340, %v6324
          %v7045 = vpack.c.b16 %v6341, %v6325
          %v7046 = vpack.c.b16 %v6342, %v6326
          %v7047 = vpack.c.b16 %v6343, %v6327
          %v7048 = vpack.c.b16 %v6344, %v6328
          %v7049 = vpack.c.b16 %v6345, %v6329
          %v7050 = vpack.c.b16 %v6346, %v6330
          %v7051 = vpack.c.b16 %v6347, %v6331
          %v7052 = vpack.c.b16 %v6348, %v6332
          %v7053 = vpack.c.b16 %v6349, %v6333
          %v7054 = vpack.c.b16 %v6350, %v6334
          %v7055 = vpack.c.b16 %v6351, %v6335
          %v7056 = vpack.c.b16 %v6352, %v6336
          %v7057 = vpack.c.b16 %v6353, %v6337
          %v7058 = vpack.c.b16 %v6354, %v6338
          %v7059 = vpack.c.b16 %v6355, %v6339
          %v7060 = vpack.c.b16 %v6372, %v6356
          %v7061 = vpack.c.b16 %v6373, %v6357
          %v7062 = vpack.c.b16 %v6374, %v6358
          %v7063 = vpack.c.b16 %v6375, %v6359
          %v7064 = vpack.c.b16 %v6376, %v6360
          %v7065 = vpack.c.b16 %v6377, %v6361
          %v7066 = vpack.c.b16 %v6378, %v6362
          %v7067 = vpack.c.b16 %v6379, %v6363
          %v7068 = vpack.c.b16 %v6380, %v6364
          %v7069 = vpack.c.b16 %v6381, %v6365
          %v7070 = vpack.c.b16 %v6382, %v6366
          %v7071 = vpack.c.b16 %v6383, %v6367
          %v7072 = vpack.c.b16 %v6384, %v6368
          %v7073 = vpack.c.b16 %v6385, %v6369
          %v7074 = vpack.c.b16 %v6386, %v6370
          %v7075 = vpack.c.b16 %v6387, %v6371
          %v7076 = vpack.c.b16 %v6404, %v6388
          %v7077 = vpack.c.b16 %v6405, %v6389
          %v7078 = vpack.c.b16 %v6406, %v6390
          %v7079 = vpack.c.b16 %v6407, %v6391
          %v7080 = vpack.c.b16 %v6408, %v6392
          %v7081 = vpack.c.b16 %v6409, %v6393
          %v7082 = vpack.c.b16 %v6410, %v6394
          %v7083 = vpack.c.b16 %v6411, %v6395
          %v7084 = vpack.c.b16 %v6412, %v6396
          %v7085 = vpack.c.b16 %v6413, %v6397
          %v7086 = vpack.c.b16 %v6414, %v6398
          %v7087 = vpack.c.b16 %v6415, %v6399
          %v7088 = vpack.c.b16 %v6416, %v6400
          %v7089 = vpack.c.b16 %v6417, %v6401
          %v7090 = vpack.c.b16 %v6418, %v6402
          %v7091 = vpack.c.b16 %v6419, %v6403
          %v7092 = vpack.c.b16 %v6436, %v6420
          %v7093 = vpack.c.b16 %v6437, %v6421
          %v7094 = vpack.c.b16 %v6438, %v6422
          %v7095 = vpack.c.b16 %v6439, %v6423
          %v7096 = vpack.c.b16 %v6440, %v6424
          %v7097 = vpack.c.b16 %v6441, %v6425
          %v7098 = vpack.c.b16 %v6442, %v6426
          %v7099 = vpack.c.b16 %v6443, %v6427
          %v7100 = vpack.c.b16 %v6444, %v6428
          %v7101 = vpack.c.b16 %v6445, %v6429
          %v7102 = vpack.c.b16 %v6446, %v6430
          %v7103 = vpack.c.b16 %v6447, %v6431
          %v7104 = vpack.c.b16 %v6448, %v6432
          %v7105 = vpack.c.b16 %v6449, %v6433
          %v7106 = vpack.c.b16 %v6450, %v6434
          %v7107 = vpack.c.b16 %v6451, %v6435
          %v7108 = vpack.c.b16 %v6468, %v6452
          %v7109 = vpack.c.b16 %v6469, %v6453
          %v7110 = vpack.c.b16 %v6470, %v6454
          %v7111 = vpack.c.b16 %v6471, %v6455
          %v7112 = vpack.c.b16 %v6472, %v6456
          %v7113 = vpack.c.b16 %v6473, %v6457
          %v7114 = vpack.c.b16 %v6474, %v6458
          %v7115 = vpack.c.b16 %v6475, %v6459
          %v7116 = vpack.c.b16 %v6476, %v6460
          %v7117 = vpack.c.b16 %v6477, %v6461
          %v7118 = vpack.c.b16 %v6478, %v6462
          %v7119 = vpack.c.b16 %v6479, %v6463
          %v7120 = vpack.c.b16 %v6480, %v6464
          %v7121 = vpack.c.b16 %v6481, %v6465
          %v7122 = vpack.c.b16 %v6482, %v6466
          %v7123 = vpack.c.b16 %v6483, %v6467
          %v7124 = vpack.c.b16 %v6500, %v6484
          %v7125 = vpack.c.b16 %v6501, %v6485
          %v7126 = vpack.c.b16 %v6502, %v6486
          %v7127 = vpack.c.b16 %v6503, %v6487
          %v7128 = vpack.c.b16 %v6504, %v6488
          %v7129 = vpack.c.b16 %v6505, %v6489
          %v7130 = vpack.c.b16 %v6506, %v6490
          %v7131 = vpack.c.b16 %v6507, %v6491
          %v7132 = vpack.c.b16 %v6508, %v6492
          %v7133 = vpack.c.b16 %v6509, %v6493
          %v7134 = vpack.c.b16 %v6510, %v6494
          %v7135 = vpack.c.b16 %v6511, %v6495
          %v7136 = vpack.c.b16 %v6512, %v6496
          %v7137 = vpack.c.b16 %v6513, %v6497
          %v7138 = vpack.c.b16 %v6514, %v6498
          %v7139 = vpack.c.b16 %v6515, %v6499
          %v7140 = vpack.c.b16 %v6532, %v6516
          %v7141 = vpack.c.b16 %v6533, %v6517
          %v7142 = vpack.c.b16 %v6534, %v6518
          %v7143 = vpack.c.b16 %v6535, %v6519
          %v7144 = vpack.c.b16 %v6536, %v6520
          %v7145 = vpack.c.b16 %v6537, %v6521
          %v7146 = vpack.c.b16 %v6538, %v6522
          %v7147 = vpack.c.b16 %v6539, %v6523
          %v7148 = vpack.c.b16 %v6540, %v6524
          %v7149 = vpack.c.b16 %v6541, %v6525
          %v7150 = vpack.c.b16 %v6542, %v6526
          %v7151 = vpack.c.b16 %v6543, %v6527
          %v7152 = vpack.c.b16 %v6544, %v6528
          %v7153 = vpack.c.b16 %v6545, %v6529
          %v7154 = vpack.c.b16 %v6546, %v6530
          %v7155 = vpack.c.b16 %v6547, %v6531
          %v7156 = vpack.c.b16 %v6564, %v6548
          %v7157 = vpack.c.b16 %v6565, %v6549
          %v7158 = vpack.c.b16 %v6566, %v6550
          %v7159 = vpack.c.b16 %v6567, %v6551
          %v7160 = vpack.c.b16 %v6568, %v6552
          %v7161 = vpack.c.b16 %v6569, %v6553
          %v7162 = vpack.c.b16 %v6570, %v6554
          %v7163 = vpack.c.b16 %v6571, %v6555
          %v7164 = vpack.c.b16 %v6572, %v6556
          %v7165 = vpack.c.b16 %v6573, %v6557
          %v7166 = vpack.c.b16 %v6574, %v6558
          %v7167 = vpack.c.b16 %v6575, %v6559
          %v7168 = vpack.c.b16 %v6576, %v6560
          %v7169 = vpack.c.b16 %v6577, %v6561
          %v7170 = vpack.c.b16 %v6578, %v6562
          %v7171 = vpack.c.b16 %v6579, %v6563
          %v7172 = vpack.c.b16 %v6596, %v6580
          %v7173 = vpack.c.b16 %v6597, %v6581
          %v7174 = vpack.c.b16 %v6598, %v6582
          %v7175 = vpack.c.b16 %v6599, %v6583
          %v7176 = vpack.c.b16 %v6600, %v6584
          %v7177 = vpack.c.b16 %v6601, %v6585
          %v7178 = vpack.c.b16 %v6602, %v6586
          %v7179 = vpack.c.b16 %v6603, %v6587
          %v7180 = vpack.c.b16 %v6604, %v6588
          %v7181 = vpack.c.b16 %v6605, %v6589
          %v7182 = vpack.c.b16 %v6606, %v6590
          %v7183 = vpack.c.b16 %v6607, %v6591
          %v7184 = vpack.c.b16 %v6608, %v6592
          %v7185 = vpack.c.b16 %v6609, %v6593
          %v7186 = vpack.c.b16 %v6610, %v6594
          %v7187 = vpack.c.b16 %v6611, %v6595
          %v7188 = vpack.c.b16 %v6628, %v6612
          %v7189 = vpack.c.b16 %v6629, %v6613
          %v7190 = vpack.c.b16 %v6630, %v6614
          %v7191 = vpack.c.b16 %v6631, %v6615
          %v7192 = vpack.c.b16 %v6632, %v6616
          %v7193 = vpack.c.b16 %v6633, %v6617
          %v7194 = vpack.c.b16 %v6634, %v6618
          %v7195 = vpack.c.b16 %v6635, %v6619
          %v7196 = vpack.c.b16 %v6636, %v6620
          %v7197 = vpack.c.b16 %v6637, %v6621
          %v7198 = vpack.c.b16 %v6638, %v6622
          %v7199 = vpack.c.b16 %v6639, %v6623
          %v7200 = vpack.c.b16 %v6640, %v6624
          %v7201 = vpack.c.b16 %v6641, %v6625
          %v7202 = vpack.c.b16 %v6642, %v6626
          %v7203 = vpack.c.b16 %v6643, %v6627
          %v7204 = vpack.c.b16 %v6660, %v6644
          %v7205 = vpack.c.b16 %v6661, %v6645
          %v7206 = vpack.c.b16 %v6662, %v6646
          %v7207 = vpack.c.b16 %v6663, %v6647
          %v7208 = vpack.c.b16 %v6664, %v6648
          %v7209 = vpack.c.b16 %v6665, %v6649
          %v7210 = vpack.c.b16 %v6666, %v6650
          %v7211 = vpack.c.b16 %v6667, %v6651
          %v7212 = vpack.c.b16 %v6668, %v6652
          %v7213 = vpack.c.b16 %v6669, %v6653
          %v7214 = vpack.c.b16 %v6670, %v6654
          %v7215 = vpack.c.b16 %v6671, %v6655
          %v7216 = vpack.c.b16 %v6672, %v6656
          %v7217 = vpack.c.b16 %v6673, %v6657
          %v7218 = vpack.c.b16 %v6674, %v6658
          %v7219 = vpack.c.b16 %v6675, %v6659
          %v7220 = vpack.c.b16 %v6692, %v6676
          %v7221 = vpack.c.b16 %v6693, %v6677
          %v7222 = vpack.c.b16 %v6694, %v6678
          %v7223 = vpack.c.b16 %v6695, %v6679
          %v7224 = vpack.c.b16 %v6696, %v6680
          %v7225 = vpack.c.b16 %v6697, %v6681
          %v7226 = vpack.c.b16 %v6698, %v6682
          %v7227 = vpack.c.b16 %v6699, %v6683
          %v7228 = vpack.c.b16 %v6700, %v6684
          %v7229 = vpack.c.b16 %v6701, %v6685
          %v7230 = vpack.c.b16 %v6702, %v6686
          %v7231 = vpack.c.b16 %v6703, %v6687
          %v7232 = vpack.c.b16 %v6704, %v6688
          %v7233 = vpack.c.b16 %v6705, %v6689
          %v7234 = vpack.c.b16 %v6706, %v6690
          %v7235 = vpack.c.b16 %v6707, %v6691
          %v7236 = vpack.c.b16 %v6724, %v6708
          %v7237 = vpack.c.b16 %v6725, %v6709
          %v7238 = vpack.c.b16 %v6726, %v6710
          %v7239 = vpack.c.b16 %v6727, %v6711
          %v7240 = vpack.c.b16 %v6728, %v6712
          %v7241 = vpack.c.b16 %v6729, %v6713
          %v7242 = vpack.c.b16 %v6730, %v6714
          %v7243 = vpack.c.b16 %v6731, %v6715
          %v7244 = vpack.c.b16 %v6732, %v6716
          %v7245 = vpack.c.b16 %v6733, %v6717
          %v7246 = vpack.c.b16 %v6734, %v6718
          %v7247 = vpack.c.b16 %v6735, %v6719
          %v7248 = vpack.c.b16 %v6736, %v6720
          %v7249 = vpack.c.b16 %v6737, %v6721
          %v7250 = vpack.c.b16 %v6738, %v6722
          %v7251 = vpack.c.b16 %v6739, %v6723
          %7764 = vmatprep.subr.bf16.mxu0 %v6741
          %7765 = vmatpush1.bf16.msra.mxu0 %v6740
          %7766 = vmatprep.subr.bf16.mxu0 %v6757
          %7767 = vmatpush1.bf16.msra.mxu0 %v6756
          %7768 = vmatprep.subr.bf16.mxu0 %v6773
          %7769 = vmatpush1.bf16.msra.mxu0 %v6772
          %7770 = vmatprep.subr.bf16.mxu0 %v6789
          %7771 = vmatpush1.bf16.msra.mxu0 %v6788
          %7772 = vmatprep.subr.bf16.mxu0 %v6805
          %7773 = vmatpush1.bf16.msra.mxu0 %v6804
          %7774 = vmatprep.subr.bf16.mxu0 %v6821
          %7775 = vmatpush1.bf16.msra.mxu0 %v6820
          %7776 = vmatprep.subr.bf16.mxu0 %v6837
          %7777 = vmatpush1.bf16.msra.mxu0 %v6836
          %7778 = vmatprep.subr.bf16.mxu0 %v6853
          %7779 = vmatpush1.bf16.msra.mxu0 %v6852
          %7780 = vmatprep.subr.bf16.mxu0 %v6869
          %7781 = vmatpush1.bf16.msra.mxu0 %v6868
          %7782 = vmatprep.subr.bf16.mxu0 %v6885
          %7783 = vmatpush1.bf16.msra.mxu0 %v6884
          %7784 = vmatprep.subr.bf16.mxu0 %v6901
          %7785 = vmatpush1.bf16.msra.mxu0 %v6900
          %7786 = vmatprep.subr.bf16.mxu0 %v6917
          %7787 = vmatpush1.bf16.msra.mxu0 %v6916
          %7788 = vmatprep.subr.bf16.mxu0 %v6933
          %7789 = vmatpush1.bf16.msra.mxu0 %v6932
          %7790 = vmatprep.subr.bf16.mxu0 %v6949
          %7791 = vmatpush1.bf16.msra.mxu0 %v6948
          %7792 = vmatprep.subr.bf16.mxu0 %v6965
          %7793 = vmatpush1.bf16.msra.mxu0 %v6964
          %7794 = vmatprep.subr.bf16.mxu0 %v6981
          %7795 = vmatpush1.bf16.msra.mxu0 %v6980
          %7796 = vmatprep.mubr.bf16.mxu0 %v5197
          %7797 = vmatmul.mubr.bf16.gmra.mrb[0].mxu0 %v5196
          %v7798 = vpop.f32.mrb[0].mxu0
          %v7799 = vadd.f32 0.0, %v7798
          %v7800 = vpop.f32.mrb[0].mxu0
          %v7801 = vadd.f32 0.0, %v7800
          %v7802 = vpop.f32.mrb[0].mxu0
          %v7803 = vpop.f32.mrb[0].mxu0
          %7804 = vdwg.mxu0
          %7805 = vmatprep.subr.bf16.mxu0 %v6997
          %7806 = vmatpush1.bf16.msra.mxu0 %v6996
          %7807 = vmatprep.subr.bf16.mxu0 %v7013
          %7808 = vmatpush1.bf16.msra.mxu0 %v7012
          %7809 = vmatprep.subr.bf16.mxu0 %v7029
          %7810 = vmatpush1.bf16.msra.mxu0 %v7028
          %7811 = vmatprep.subr.bf16.mxu0 %v7045
          %7812 = vmatpush1.bf16.msra.mxu0 %v7044
          %7813 = vmatprep.subr.bf16.mxu0 %v7061
          %7814 = vmatpush1.bf16.msra.mxu0 %v7060
          %7815 = vmatprep.subr.bf16.mxu0 %v7077
          %7816 = vmatpush1.bf16.msra.mxu0 %v7076
          %7817 = vmatprep.subr.bf16.mxu0 %v7093
          %7818 = vmatpush1.bf16.msra.mxu0 %v7092
          %7819 = vmatprep.subr.bf16.mxu0 %v7109
          %7820 = vmatpush1.bf16.msra.mxu0 %v7108
          %7821 = vmatprep.subr.bf16.mxu0 %v7125
          %7822 = vmatpush1.bf16.msra.mxu0 %v7124
          %7823 = vmatprep.subr.bf16.mxu0 %v7141
          %7824 = vmatpush1.bf16.msra.mxu0 %v7140
          %7825 = vmatprep.subr.bf16.mxu0 %v7157
          %7826 = vmatpush1.bf16.msra.mxu0 %v7156
          %7827 = vmatprep.subr.bf16.mxu0 %v7173
          %7828 = vmatpush1.bf16.msra.mxu0 %v7172
          %7829 = vmatprep.subr.bf16.mxu0 %v7189
          %7830 = vmatpush1.bf16.msra.mxu0 %v7188
          %7831 = vmatprep.subr.bf16.mxu0 %v7205
          %7832 = vmatpush1.bf16.msra.mxu0 %v7204
          %7833 = vmatprep.subr.bf16.mxu0 %v7221
          %7834 = vmatpush1.bf16.msra.mxu0 %v7220
          %7835 = vmatprep.subr.bf16.mxu0 %v7237
          %7836 = vmatpush1.bf16.msra.mxu0 %v7236
          %7837 = vmatprep.mubr.bf16.mxu0 %v5199
          %7838 = vmatmul.mubr.bf16.gmra.mrb[0].mxu0 %v5198
          %v7839 = vpop.f32.mrb[0].mxu0
          %v7840 = vadd.f32 %v7799, %v7839
          %v7841 = vpop.f32.mrb[0].mxu0
          %v7842 = vadd.f32 %v7801, %v7841
          %v7843 = vpop.f32.mrb[0].mxu0
          %v7844 = vpop.f32.mrb[0].mxu0
          %7845 = vdwg.mxu0
          %7846 = vmatprep.subr.bf16.mxu0 %v6743
          %7847 = vmatpush1.bf16.msra.mxu0 %v6742
          %7848 = vmatprep.subr.bf16.mxu0 %v6759
          %7849 = vmatpush1.bf16.msra.mxu0 %v6758
          %7850 = vmatprep.subr.bf16.mxu0 %v6775
          %7851 = vmatpush1.bf16.msra.mxu0 %v6774
          %7852 = vmatprep.subr.bf16.mxu0 %v6791
          %7853 = vmatpush1.bf16.msra.mxu0 %v6790
          %7854 = vmatprep.subr.bf16.mxu0 %v6807
          %7855 = vmatpush1.bf16.msra.mxu0 %v6806
          %7856 = vmatprep.subr.bf16.mxu0 %v6823
          %7857 = vmatpush1.bf16.msra.mxu0 %v6822
          %7858 = vmatprep.subr.bf16.mxu0 %v6839
          %7859 = vmatpush1.bf16.msra.mxu0 %v6838
          %7860 = vmatprep.subr.bf16.mxu0 %v6855
          %7861 = vmatpush1.bf16.msra.mxu0 %v6854
          %7862 = vmatprep.subr.bf16.mxu0 %v6871
          %7863 = vmatpush1.bf16.msra.mxu0 %v6870
          %7864 = vmatprep.subr.bf16.mxu0 %v6887
          %7865 = vmatpush1.bf16.msra.mxu0 %v6886
          %7866 = vmatprep.subr.bf16.mxu0 %v6903
          %7867 = vmatpush1.bf16.msra.mxu0 %v6902
          %7868 = vmatprep.subr.bf16.mxu0 %v6919
          %7869 = vmatpush1.bf16.msra.mxu0 %v6918
          %7870 = vmatprep.subr.bf16.mxu0 %v6935
          %7871 = vmatpush1.bf16.msra.mxu0 %v6934
          %7872 = vmatprep.subr.bf16.mxu0 %v6951
          %7873 = vmatpush1.bf16.msra.mxu0 %v6950
          %7874 = vmatprep.subr.bf16.mxu0 %v6967
          %7875 = vmatpush1.bf16.msra.mxu0 %v6966
          %7876 = vmatprep.subr.bf16.mxu0 %v6983
          %7877 = vmatpush1.bf16.msra.mxu0 %v6982
          %7878 = vmatprep.mubr.bf16.mxu0 %v5197
          %7879 = vmatmul.mubr.bf16.gmra.mrb[0].mxu0 %v5196
          %v7880 = vpop.f32.mrb[0].mxu0
          %v7881 = vadd.f32 0.0, %v7880
          %v7882 = vpop.f32.mrb[0].mxu0
          %v7883 = vadd.f32 0.0, %v7882
          %v7884 = vpop.f32.mrb[0].mxu0
          %v7885 = vpop.f32.mrb[0].mxu0
          %7886 = vdwg.mxu0
          %7887 = vmatprep.subr.bf16.mxu0 %v6999
          %7888 = vmatpush1.bf16.msra.mxu0 %v6998
          %7889 = vmatprep.subr.bf16.mxu0 %v7015
          %7890 = vmatpush1.bf16.msra.mxu0 %v7014
          %7891 = vmatprep.subr.bf16.mxu0 %v7031
          %7892 = vmatpush1.bf16.msra.mxu0 %v7030
          %7893 = vmatprep.subr.bf16.mxu0 %v7047
          %7894 = vmatpush1.bf16.msra.mxu0 %v7046
          %7895 = vmatprep.subr.bf16.mxu0 %v7063
          %7896 = vmatpush1.bf16.msra.mxu0 %v7062
          %7897 = vmatprep.subr.bf16.mxu0 %v7079
          %7898 = vmatpush1.bf16.msra.mxu0 %v7078
          %7899 = vmatprep.subr.bf16.mxu0 %v7095
          %7900 = vmatpush1.bf16.msra.mxu0 %v7094
          %7901 = vmatprep.subr.bf16.mxu0 %v7111
          %7902 = vmatpush1.bf16.msra.mxu0 %v7110
          %7903 = vmatprep.subr.bf16.mxu0 %v7127
          %7904 = vmatpush1.bf16.msra.mxu0 %v7126
          %7905 = vmatprep.subr.bf16.mxu0 %v7143
          %7906 = vmatpush1.bf16.msra.mxu0 %v7142
          %7907 = vmatprep.subr.bf16.mxu0 %v7159
          %7908 = vmatpush1.bf16.msra.mxu0 %v7158
          %7909 = vmatprep.subr.bf16.mxu0 %v7175
          %7910 = vmatpush1.bf16.msra.mxu0 %v7174
          %7911 = vmatprep.subr.bf16.mxu0 %v7191
          %7912 = vmatpush1.bf16.msra.mxu0 %v7190
          %7913 = vmatprep.subr.bf16.mxu0 %v7207
          %7914 = vmatpush1.bf16.msra.mxu0 %v7206
          %7915 = vmatprep.subr.bf16.mxu0 %v7223
          %7916 = vmatpush1.bf16.msra.mxu0 %v7222
          %7917 = vmatprep.subr.bf16.mxu0 %v7239
          %7918 = vmatpush1.bf16.msra.mxu0 %v7238
          %7919 = vmatprep.mubr.bf16.mxu0 %v5199
          %7920 = vmatmul.mubr.bf16.gmra.mrb[0].mxu0 %v5198
          %v7921 = vpop.f32.mrb[0].mxu0
          %v7922 = vadd.f32 %v7881, %v7921
          %v7923 = vpop.f32.mrb[0].mxu0
          %v7924 = vadd.f32 %v7883, %v7923
          %v7925 = vpop.f32.mrb[0].mxu0
          %v7926 = vpop.f32.mrb[0].mxu0
          %7927 = vdwg.mxu0
          %7928 = vmatprep.subr.bf16.mxu0 %v6745
          %7929 = vmatpush1.bf16.msra.mxu0 %v6744
          %7930 = vmatprep.subr.bf16.mxu0 %v6761
          %7931 = vmatpush1.bf16.msra.mxu0 %v6760
          %7932 = vmatprep.subr.bf16.mxu0 %v6777
          %7933 = vmatpush1.bf16.msra.mxu0 %v6776
          %7934 = vmatprep.subr.bf16.mxu0 %v6793
          %7935 = vmatpush1.bf16.msra.mxu0 %v6792
          %7936 = vmatprep.subr.bf16.mxu0 %v6809
          %7937 = vmatpush1.bf16.msra.mxu0 %v6808
          %7938 = vmatprep.subr.bf16.mxu0 %v6825
          %7939 = vmatpush1.bf16.msra.mxu0 %v6824
          %7940 = vmatprep.subr.bf16.mxu0 %v6841
          %7941 = vmatpush1.bf16.msra.mxu0 %v6840
          %7942 = vmatprep.subr.bf16.mxu0 %v6857
          %7943 = vmatpush1.bf16.msra.mxu0 %v6856
          %7944 = vmatprep.subr.bf16.mxu0 %v6873
          %7945 = vmatpush1.bf16.msra.mxu0 %v6872
          %7946 = vmatprep.subr.bf16.mxu0 %v6889
          %7947 = vmatpush1.bf16.msra.mxu0 %v6888
          %7948 = vmatprep.subr.bf16.mxu0 %v6905
          %7949 = vmatpush1.bf16.msra.mxu0 %v6904
          %7950 = vmatprep.subr.bf16.mxu0 %v6921
          %7951 = vmatpush1.bf16.msra.mxu0 %v6920
          %7952 = vmatprep.subr.bf16.mxu0 %v6937
          %7953 = vmatpush1.bf16.msra.mxu0 %v6936
          %7954 = vmatprep.subr.bf16.mxu0 %v6953
          %7955 = vmatpush1.bf16.msra.mxu0 %v6952
          %7956 = vmatprep.subr.bf16.mxu0 %v6969
          %7957 = vmatpush1.bf16.msra.mxu0 %v6968
          %7958 = vmatprep.subr.bf16.mxu0 %v6985
          %7959 = vmatpush1.bf16.msra.mxu0 %v6984
          %7960 = vmatprep.mubr.bf16.mxu0 %v5197
          %7961 = vmatmul.mubr.bf16.gmra.mrb[0].mxu0 %v5196
          %v7962 = vpop.f32.mrb[0].mxu0
          %v7963 = vadd.f32 0.0, %v7962
          %v7964 = vpop.f32.mrb[0].mxu0
          %v7965 = vadd.f32 0.0, %v7964
          %v7966 = vpop.f32.mrb[0].mxu0
          %v7967 = vpop.f32.mrb[0].mxu0
          %7968 = vdwg.mxu0
          %7969 = vmatprep.subr.bf16.mxu0 %v7001
          %7970 = vmatpush1.bf16.msra.mxu0 %v7000
          %7971 = vmatprep.subr.bf16.mxu0 %v7017
          %7972 = vmatpush1.bf16.msra.mxu0 %v7016
          %7973 = vmatprep.subr.bf16.mxu0 %v7033
          %7974 = vmatpush1.bf16.msra.mxu0 %v7032
          %7975 = vmatprep.subr.bf16.mxu0 %v7049
          %7976 = vmatpush1.bf16.msra.mxu0 %v7048
          %7977 = vmatprep.subr.bf16.mxu0 %v7065
          %7978 = vmatpush1.bf16.msra.mxu0 %v7064
          %7979 = vmatprep.subr.bf16.mxu0 %v7081
          %7980 = vmatpush1.bf16.msra.mxu0 %v7080
          %7981 = vmatprep.subr.bf16.mxu0 %v7097
          %7982 = vmatpush1.bf16.msra.mxu0 %v7096
          %7983 = vmatprep.subr.bf16.mxu0 %v7113
          %7984 = vmatpush1.bf16.msra.mxu0 %v7112
          %7985 = vmatprep.subr.bf16.mxu0 %v7129
          %7986 = vmatpush1.bf16.msra.mxu0 %v7128
          %7987 = vmatprep.subr.bf16.mxu0 %v7145
          %7988 = vmatpush1.bf16.msra.mxu0 %v7144
          %7989 = vmatprep.subr.bf16.mxu0 %v7161
          %7990 = vmatpush1.bf16.msra.mxu0 %v7160
          %7991 = vmatprep.subr.bf16.mxu0 %v7177
          %7992 = vmatpush1.bf16.msra.mxu0 %v7176
          %7993 = vmatprep.subr.bf16.mxu0 %v7193
          %7994 = vmatpush1.bf16.msra.mxu0 %v7192
          %7995 = vmatprep.subr.bf16.mxu0 %v7209
          %7996 = vmatpush1.bf16.msra.mxu0 %v7208
          %7997 = vmatprep.subr.bf16.mxu0 %v7225
          %7998 = vmatpush1.bf16.msra.mxu0 %v7224
          %7999 = vmatprep.subr.bf16.mxu0 %v7241
          %8000 = vmatpush1.bf16.msra.mxu0 %v7240
          %8001 = vmatprep.mubr.bf16.mxu0 %v5199
          %8002 = vmatmul.mubr.bf16.gmra.mrb[0].mxu0 %v5198
          %v8003 = vpop.f32.mrb[0].mxu0
          %v8004 = vadd.f32 %v7963, %v8003
          %v8005 = vpop.f32.mrb[0].mxu0
          %v8006 = vadd.f32 %v7965, %v8005
          %v8007 = vpop.f32.mrb[0].mxu0
          %v8008 = vpop.f32.mrb[0].mxu0
          %8009 = vdwg.mxu0
          %8010 = vmatprep.subr.bf16.mxu0 %v6747
          %8011 = vmatpush1.bf16.msra.mxu0 %v6746
          %8012 = vmatprep.subr.bf16.mxu0 %v6763
          %8013 = vmatpush1.bf16.msra.mxu0 %v6762
          %8014 = vmatprep.subr.bf16.mxu0 %v6779
          %8015 = vmatpush1.bf16.msra.mxu0 %v6778
          %8016 = vmatprep.subr.bf16.mxu0 %v6795
          %8017 = vmatpush1.bf16.msra.mxu0 %v6794
          %8018 = vmatprep.subr.bf16.mxu0 %v6811
          %8019 = vmatpush1.bf16.msra.mxu0 %v6810
          %8020 = vmatprep.subr.bf16.mxu0 %v6827
          %8021 = vmatpush1.bf16.msra.mxu0 %v6826
          %8022 = vmatprep.subr.bf16.mxu0 %v6843
          %8023 = vmatpush1.bf16.msra.mxu0 %v6842
          %8024 = vmatprep.subr.bf16.mxu0 %v6859
          %8025 = vmatpush1.bf16.msra.mxu0 %v6858
          %8026 = vmatprep.subr.bf16.mxu0 %v6875
          %8027 = vmatpush1.bf16.msra.mxu0 %v6874
          %8028 = vmatprep.subr.bf16.mxu0 %v6891
          %8029 = vmatpush1.bf16.msra.mxu0 %v6890
          %8030 = vmatprep.subr.bf16.mxu0 %v6907
          %8031 = vmatpush1.bf16.msra.mxu0 %v6906
          %8032 = vmatprep.subr.bf16.mxu0 %v6923
          %8033 = vmatpush1.bf16.msra.mxu0 %v6922
          %8034 = vmatprep.subr.bf16.mxu0 %v6939
          %8035 = vmatpush1.bf16.msra.mxu0 %v6938
          %8036 = vmatprep.subr.bf16.mxu0 %v6955
          %8037 = vmatpush1.bf16.msra.mxu0 %v6954
          %8038 = vmatprep.subr.bf16.mxu0 %v6971
          %8039 = vmatpush1.bf16.msra.mxu0 %v6970
          %8040 = vmatprep.subr.bf16.mxu0 %v6987
          %8041 = vmatpush1.bf16.msra.mxu0 %v6986
          %8042 = vmatprep.mubr.bf16.mxu0 %v5197
          %8043 = vmatmul.mubr.bf16.gmra.mrb[0].mxu0 %v5196
          %v8044 = vpop.f32.mrb[0].mxu0
          %v8045 = vadd.f32 0.0, %v8044
          %v8046 = vpop.f32.mrb[0].mxu0
          %v8047 = vadd.f32 0.0, %v8046
          %v8048 = vpop.f32.mrb[0].mxu0
          %v8049 = vpop.f32.mrb[0].mxu0
          %8050 = vdwg.mxu0
          %8051 = vmatprep.subr.bf16.mxu0 %v7003
          %8052 = vmatpush1.bf16.msra.mxu0 %v7002
          %8053 = vmatprep.subr.bf16.mxu0 %v7019
          %8054 = vmatpush1.bf16.msra.mxu0 %v7018
          %8055 = vmatprep.subr.bf16.mxu0 %v7035
          %8056 = vmatpush1.bf16.msra.mxu0 %v7034
          %8057 = vmatprep.subr.bf16.mxu0 %v7051
          %8058 = vmatpush1.bf16.msra.mxu0 %v7050
          %8059 = vmatprep.subr.bf16.mxu0 %v7067
          %8060 = vmatpush1.bf16.msra.mxu0 %v7066
          %8061 = vmatprep.subr.bf16.mxu0 %v7083
          %8062 = vmatpush1.bf16.msra.mxu0 %v7082
          %8063 = vmatprep.subr.bf16.mxu0 %v7099
          %8064 = vmatpush1.bf16.msra.mxu0 %v7098
          %8065 = vmatprep.subr.bf16.mxu0 %v7115
          %8066 = vmatpush1.bf16.msra.mxu0 %v7114
          %8067 = vmatprep.subr.bf16.mxu0 %v7131
          %8068 = vmatpush1.bf16.msra.mxu0 %v7130
          %8069 = vmatprep.subr.bf16.mxu0 %v7147
          %8070 = vmatpush1.bf16.msra.mxu0 %v7146
          %8071 = vmatprep.subr.bf16.mxu0 %v7163
          %8072 = vmatpush1.bf16.msra.mxu0 %v7162
          %8073 = vmatprep.subr.bf16.mxu0 %v7179
          %8074 = vmatpush1.bf16.msra.mxu0 %v7178
          %8075 = vmatprep.subr.bf16.mxu0 %v7195
          %8076 = vmatpush1.bf16.msra.mxu0 %v7194
          %8077 = vmatprep.subr.bf16.mxu0 %v7211
          %8078 = vmatpush1.bf16.msra.mxu0 %v7210
          %8079 = vmatprep.subr.bf16.mxu0 %v7227
          %8080 = vmatpush1.bf16.msra.mxu0 %v7226
          %8081 = vmatprep.subr.bf16.mxu0 %v7243
          %8082 = vmatpush1.bf16.msra.mxu0 %v7242
          %8083 = vmatprep.mubr.bf16.mxu0 %v5199
          %8084 = vmatmul.mubr.bf16.gmra.mrb[0].mxu0 %v5198
          %v8085 = vpop.f32.mrb[0].mxu0
          %v8086 = vadd.f32 %v8045, %v8085
          %v8087 = vpop.f32.mrb[0].mxu0
          %v8088 = vadd.f32 %v8047, %v8087
          %v8089 = vpop.f32.mrb[0].mxu0
          %v8090 = vpop.f32.mrb[0].mxu0
          %8091 = vdwg.mxu0
          %8092 = vmatprep.subr.bf16.mxu0 %v6749
          %8093 = vmatpush1.bf16.msra.mxu0 %v6748
          %8094 = vmatprep.subr.bf16.mxu0 %v6765
          %8095 = vmatpush1.bf16.msra.mxu0 %v6764
          %8096 = vmatprep.subr.bf16.mxu0 %v6781
          %8097 = vmatpush1.bf16.msra.mxu0 %v6780
          %8098 = vmatprep.subr.bf16.mxu0 %v6797
          %8099 = vmatpush1.bf16.msra.mxu0 %v6796
          %8100 = vmatprep.subr.bf16.mxu0 %v6813
          %8101 = vmatpush1.bf16.msra.mxu0 %v6812
          %8102 = vmatprep.subr.bf16.mxu0 %v6829
          %8103 = vmatpush1.bf16.msra.mxu0 %v6828
          %8104 = vmatprep.subr.bf16.mxu0 %v6845
          %8105 = vmatpush1.bf16.msra.mxu0 %v6844
          %8106 = vmatprep.subr.bf16.mxu0 %v6861
          %8107 = vmatpush1.bf16.msra.mxu0 %v6860
          %8108 = vmatprep.subr.bf16.mxu0 %v6877
          %8109 = vmatpush1.bf16.msra.mxu0 %v6876
          %8110 = vmatprep.subr.bf16.mxu0 %v6893
          %8111 = vmatpush1.bf16.msra.mxu0 %v6892
          %8112 = vmatprep.subr.bf16.mxu0 %v6909
          %8113 = vmatpush1.bf16.msra.mxu0 %v6908
          %8114 = vmatprep.subr.bf16.mxu0 %v6925
          %8115 = vmatpush1.bf16.msra.mxu0 %v6924
          %8116 = vmatprep.subr.bf16.mxu0 %v6941
          %8117 = vmatpush1.bf16.msra.mxu0 %v6940
          %8118 = vmatprep.subr.bf16.mxu0 %v6957
          %8119 = vmatpush1.bf16.msra.mxu0 %v6956
          %8120 = vmatprep.subr.bf16.mxu0 %v6973
          %8121 = vmatpush1.bf16.msra.mxu0 %v6972
          %8122 = vmatprep.subr.bf16.mxu0 %v6989
          %8123 = vmatpush1.bf16.msra.mxu0 %v6988
          %8124 = vmatprep.mubr.bf16.mxu0 %v5197
          %8125 = vmatmul.mubr.bf16.gmra.mrb[0].mxu0 %v5196
          %v8126 = vpop.f32.mrb[0].mxu0
          %v8127 = vadd.f32 0.0, %v8126
          %v8128 = vpop.f32.mrb[0].mxu0
          %v8129 = vadd.f32 0.0, %v8128
          %v8130 = vpop.f32.mrb[0].mxu0
          %v8131 = vpop.f32.mrb[0].mxu0
          %8132 = vdwg.mxu0
          %8133 = vmatprep.subr.bf16.mxu0 %v7005
          %8134 = vmatpush1.bf16.msra.mxu0 %v7004
          %8135 = vmatprep.subr.bf16.mxu0 %v7021
          %8136 = vmatpush1.bf16.msra.mxu0 %v7020
          %8137 = vmatprep.subr.bf16.mxu0 %v7037
          %8138 = vmatpush1.bf16.msra.mxu0 %v7036
          %8139 = vmatprep.subr.bf16.mxu0 %v7053
          %8140 = vmatpush1.bf16.msra.mxu0 %v7052
          %8141 = vmatprep.subr.bf16.mxu0 %v7069
          %8142 = vmatpush1.bf16.msra.mxu0 %v7068
          %8143 = vmatprep.subr.bf16.mxu0 %v7085
          %8144 = vmatpush1.bf16.msra.mxu0 %v7084
          %8145 = vmatprep.subr.bf16.mxu0 %v7101
          %8146 = vmatpush1.bf16.msra.mxu0 %v7100
          %8147 = vmatprep.subr.bf16.mxu0 %v7117
          %8148 = vmatpush1.bf16.msra.mxu0 %v7116
          %8149 = vmatprep.subr.bf16.mxu0 %v7133
          %8150 = vmatpush1.bf16.msra.mxu0 %v7132
          %8151 = vmatprep.subr.bf16.mxu0 %v7149
          %8152 = vmatpush1.bf16.msra.mxu0 %v7148
          %8153 = vmatprep.subr.bf16.mxu0 %v7165
          %8154 = vmatpush1.bf16.msra.mxu0 %v7164
          %8155 = vmatprep.subr.bf16.mxu0 %v7181
          %8156 = vmatpush1.bf16.msra.mxu0 %v7180
          %8157 = vmatprep.subr.bf16.mxu0 %v7197
          %8158 = vmatpush1.bf16.msra.mxu0 %v7196
          %8159 = vmatprep.subr.bf16.mxu0 %v7213
          %8160 = vmatpush1.bf16.msra.mxu0 %v7212
          %8161 = vmatprep.subr.bf16.mxu0 %v7229
          %8162 = vmatpush1.bf16.msra.mxu0 %v7228
          %8163 = vmatprep.subr.bf16.mxu0 %v7245
          %8164 = vmatpush1.bf16.msra.mxu0 %v7244
          %8165 = vmatprep.mubr.bf16.mxu0 %v5199
          %8166 = vmatmul.mubr.bf16.gmra.mrb[0].mxu0 %v5198
          %v8167 = vpop.f32.mrb[0].mxu0
          %v8168 = vadd.f32 %v8127, %v8167
          %v8169 = vpop.f32.mrb[0].mxu0
          %v8170 = vadd.f32 %v8129, %v8169
          %v8171 = vpop.f32.mrb[0].mxu0
          %v8172 = vpop.f32.mrb[0].mxu0
          %8173 = vdwg.mxu0
          %8174 = vmatprep.subr.bf16.mxu0 %v6751
          %8175 = vmatpush1.bf16.msra.mxu0 %v6750
          %8176 = vmatprep.subr.bf16.mxu0 %v6767
          %8177 = vmatpush1.bf16.msra.mxu0 %v6766
          %8178 = vmatprep.subr.bf16.mxu0 %v6783
          %8179 = vmatpush1.bf16.msra.mxu0 %v6782
          %8180 = vmatprep.subr.bf16.mxu0 %v6799
          %8181 = vmatpush1.bf16.msra.mxu0 %v6798
          %8182 = vmatprep.subr.bf16.mxu0 %v6815
          %8183 = vmatpush1.bf16.msra.mxu0 %v6814
          %8184 = vmatprep.subr.bf16.mxu0 %v6831
          %8185 = vmatpush1.bf16.msra.mxu0 %v6830
          %8186 = vmatprep.subr.bf16.mxu0 %v6847
          %8187 = vmatpush1.bf16.msra.mxu0 %v6846
          %8188 = vmatprep.subr.bf16.mxu0 %v6863
          %8189 = vmatpush1.bf16.msra.mxu0 %v6862
          %8190 = vmatprep.subr.bf16.mxu0 %v6879
          %8191 = vmatpush1.bf16.msra.mxu0 %v6878
          %8192 = vmatprep.subr.bf16.mxu0 %v6895
          %8193 = vmatpush1.bf16.msra.mxu0 %v6894
          %8194 = vmatprep.subr.bf16.mxu0 %v6911
          %8195 = vmatpush1.bf16.msra.mxu0 %v6910
          %8196 = vmatprep.subr.bf16.mxu0 %v6927
          %8197 = vmatpush1.bf16.msra.mxu0 %v6926
          %8198 = vmatprep.subr.bf16.mxu0 %v6943
          %8199 = vmatpush1.bf16.msra.mxu0 %v6942
          %8200 = vmatprep.subr.bf16.mxu0 %v6959
          %8201 = vmatpush1.bf16.msra.mxu0 %v6958
          %8202 = vmatprep.subr.bf16.mxu0 %v6975
          %8203 = vmatpush1.bf16.msra.mxu0 %v6974
          %8204 = vmatprep.subr.bf16.mxu0 %v6991
          %8205 = vmatpush1.bf16.msra.mxu0 %v6990
          %8206 = vmatprep.mubr.bf16.mxu0 %v5197
          %8207 = vmatmul.mubr.bf16.gmra.mrb[0].mxu0 %v5196
          %v8208 = vpop.f32.mrb[0].mxu0
          %v8209 = vadd.f32 0.0, %v8208
          %v8210 = vpop.f32.mrb[0].mxu0
          %v8211 = vadd.f32 0.0, %v8210
          %v8212 = vpop.f32.mrb[0].mxu0
          %v8213 = vpop.f32.mrb[0].mxu0
          %8214 = vdwg.mxu0
          %8215 = vmatprep.subr.bf16.mxu0 %v7007
          %8216 = vmatpush1.bf16.msra.mxu0 %v7006
          %8217 = vmatprep.subr.bf16.mxu0 %v7023
          %8218 = vmatpush1.bf16.msra.mxu0 %v7022
          %8219 = vmatprep.subr.bf16.mxu0 %v7039
          %8220 = vmatpush1.bf16.msra.mxu0 %v7038
          %8221 = vmatprep.subr.bf16.mxu0 %v7055
          %8222 = vmatpush1.bf16.msra.mxu0 %v7054
          %8223 = vmatprep.subr.bf16.mxu0 %v7071
          %8224 = vmatpush1.bf16.msra.mxu0 %v7070
          %8225 = vmatprep.subr.bf16.mxu0 %v7087
          %8226 = vmatpush1.bf16.msra.mxu0 %v7086
          %8227 = vmatprep.subr.bf16.mxu0 %v7103
          %8228 = vmatpush1.bf16.msra.mxu0 %v7102
          %8229 = vmatprep.subr.bf16.mxu0 %v7119
          %8230 = vmatpush1.bf16.msra.mxu0 %v7118
          %8231 = vmatprep.subr.bf16.mxu0 %v7135
          %8232 = vmatpush1.bf16.msra.mxu0 %v7134
          %8233 = vmatprep.subr.bf16.mxu0 %v7151
          %8234 = vmatpush1.bf16.msra.mxu0 %v7150
          %8235 = vmatprep.subr.bf16.mxu0 %v7167
          %8236 = vmatpush1.bf16.msra.mxu0 %v7166
          %8237 = vmatprep.subr.bf16.mxu0 %v7183
          %8238 = vmatpush1.bf16.msra.mxu0 %v7182
          %8239 = vmatprep.subr.bf16.mxu0 %v7199
          %8240 = vmatpush1.bf16.msra.mxu0 %v7198
          %8241 = vmatprep.subr.bf16.mxu0 %v7215
          %8242 = vmatpush1.bf16.msra.mxu0 %v7214
          %8243 = vmatprep.subr.bf16.mxu0 %v7231
          %8244 = vmatpush1.bf16.msra.mxu0 %v7230
          %8245 = vmatprep.subr.bf16.mxu0 %v7247
          %8246 = vmatpush1.bf16.msra.mxu0 %v7246
          %8247 = vmatprep.mubr.bf16.mxu0 %v5199
          %8248 = vmatmul.mubr.bf16.gmra.mrb[0].mxu0 %v5198
          %v8249 = vpop.f32.mrb[0].mxu0
          %v8250 = vadd.f32 %v8209, %v8249
          %v8251 = vpop.f32.mrb[0].mxu0
          %v8252 = vadd.f32 %v8211, %v8251
          %v8253 = vpop.f32.mrb[0].mxu0
          %v8254 = vpop.f32.mrb[0].mxu0
          %8255 = vdwg.mxu0
          %8256 = vmatprep.subr.bf16.mxu0 %v6753
          %8257 = vmatpush1.bf16.msra.mxu0 %v6752
          %8258 = vmatprep.subr.bf16.mxu0 %v6769
          %8259 = vmatpush1.bf16.msra.mxu0 %v6768
          %8260 = vmatprep.subr.bf16.mxu0 %v6785
          %8261 = vmatpush1.bf16.msra.mxu0 %v6784
          %8262 = vmatprep.subr.bf16.mxu0 %v6801
          %8263 = vmatpush1.bf16.msra.mxu0 %v6800
          %8264 = vmatprep.subr.bf16.mxu0 %v6817
          %8265 = vmatpush1.bf16.msra.mxu0 %v6816
          %8266 = vmatprep.subr.bf16.mxu0 %v6833
          %8267 = vmatpush1.bf16.msra.mxu0 %v6832
          %8268 = vmatprep.subr.bf16.mxu0 %v6849
          %8269 = vmatpush1.bf16.msra.mxu0 %v6848
          %8270 = vmatprep.subr.bf16.mxu0 %v6865
          %8271 = vmatpush1.bf16.msra.mxu0 %v6864
          %8272 = vmatprep.subr.bf16.mxu0 %v6881
          %8273 = vmatpush1.bf16.msra.mxu0 %v6880
          %8274 = vmatprep.subr.bf16.mxu0 %v6897
          %8275 = vmatpush1.bf16.msra.mxu0 %v6896
          %8276 = vmatprep.subr.bf16.mxu0 %v6913
          %8277 = vmatpush1.bf16.msra.mxu0 %v6912
          %8278 = vmatprep.subr.bf16.mxu0 %v6929
          %8279 = vmatpush1.bf16.msra.mxu0 %v6928
          %8280 = vmatprep.subr.bf16.mxu0 %v6945
          %8281 = vmatpush1.bf16.msra.mxu0 %v6944
          %8282 = vmatprep.subr.bf16.mxu0 %v6961
          %8283 = vmatpush1.bf16.msra.mxu0 %v6960
          %8284 = vmatprep.subr.bf16.mxu0 %v6977
          %8285 = vmatpush1.bf16.msra.mxu0 %v6976
          %8286 = vmatprep.subr.bf16.mxu0 %v6993
          %8287 = vmatpush1.bf16.msra.mxu0 %v6992
          %8288 = vmatprep.mubr.bf16.mxu0 %v5197
          %8289 = vmatmul.mubr.bf16.gmra.mrb[0].mxu0 %v5196
          %v8290 = vpop.f32.mrb[0].mxu0
          %v8291 = vadd.f32 0.0, %v8290
          %v8292 = vpop.f32.mrb[0].mxu0
          %v8293 = vadd.f32 0.0, %v8292
          %v8294 = vpop.f32.mrb[0].mxu0
          %v8295 = vpop.f32.mrb[0].mxu0
          %8296 = vdwg.mxu0
          %8297 = vmatprep.subr.bf16.mxu0 %v7009
          %8298 = vmatpush1.bf16.msra.mxu0 %v7008
          %8299 = vmatprep.subr.bf16.mxu0 %v7025
          %8300 = vmatpush1.bf16.msra.mxu0 %v7024
          %8301 = vmatprep.subr.bf16.mxu0 %v7041
          %8302 = vmatpush1.bf16.msra.mxu0 %v7040
          %8303 = vmatprep.subr.bf16.mxu0 %v7057
          %8304 = vmatpush1.bf16.msra.mxu0 %v7056
          %8305 = vmatprep.subr.bf16.mxu0 %v7073
          %8306 = vmatpush1.bf16.msra.mxu0 %v7072
          %8307 = vmatprep.subr.bf16.mxu0 %v7089
          %8308 = vmatpush1.bf16.msra.mxu0 %v7088
          %8309 = vmatprep.subr.bf16.mxu0 %v7105
          %8310 = vmatpush1.bf16.msra.mxu0 %v7104
          %8311 = vmatprep.subr.bf16.mxu0 %v7121
          %8312 = vmatpush1.bf16.msra.mxu0 %v7120
          %8313 = vmatprep.subr.bf16.mxu0 %v7137
          %8314 = vmatpush1.bf16.msra.mxu0 %v7136
          %8315 = vmatprep.subr.bf16.mxu0 %v7153
          %8316 = vmatpush1.bf16.msra.mxu0 %v7152
          %8317 = vmatprep.subr.bf16.mxu0 %v7169
          %8318 = vmatpush1.bf16.msra.mxu0 %v7168
          %8319 = vmatprep.subr.bf16.mxu0 %v7185
          %8320 = vmatpush1.bf16.msra.mxu0 %v7184
          %8321 = vmatprep.subr.bf16.mxu0 %v7201
          %8322 = vmatpush1.bf16.msra.mxu0 %v7200
          %8323 = vmatprep.subr.bf16.mxu0 %v7217
          %8324 = vmatpush1.bf16.msra.mxu0 %v7216
          %8325 = vmatprep.subr.bf16.mxu0 %v7233
          %8326 = vmatpush1.bf16.msra.mxu0 %v7232
          %8327 = vmatprep.subr.bf16.mxu0 %v7249
          %8328 = vmatpush1.bf16.msra.mxu0 %v7248
          %8329 = vmatprep.mubr.bf16.mxu0 %v5199
          %8330 = vmatmul.mubr.bf16.gmra.mrb[0].mxu0 %v5198
          %v8331 = vpop.f32.mrb[0].mxu0
          %v8332 = vadd.f32 %v8291, %v8331
          %v8333 = vpop.f32.mrb[0].mxu0
          %v8334 = vadd.f32 %v8293, %v8333
          %v8335 = vpop.f32.mrb[0].mxu0
          %v8336 = vpop.f32.mrb[0].mxu0
          %8337 = vdwg.mxu0
          %8338 = vmatprep.subr.bf16.mxu0 %v6755
          %8339 = vmatpush1.bf16.msra.mxu0 %v6754
          %8340 = vmatprep.subr.bf16.mxu0 %v6771
          %8341 = vmatpush1.bf16.msra.mxu0 %v6770
          %8342 = vmatprep.subr.bf16.mxu0 %v6787
          %8343 = vmatpush1.bf16.msra.mxu0 %v6786
          %8344 = vmatprep.subr.bf16.mxu0 %v6803
          %8345 = vmatpush1.bf16.msra.mxu0 %v6802
          %8346 = vmatprep.subr.bf16.mxu0 %v6819
          %8347 = vmatpush1.bf16.msra.mxu0 %v6818
          %8348 = vmatprep.subr.bf16.mxu0 %v6835
          %8349 = vmatpush1.bf16.msra.mxu0 %v6834
          %8350 = vmatprep.subr.bf16.mxu0 %v6851
          %8351 = vmatpush1.bf16.msra.mxu0 %v6850
          %8352 = vmatprep.subr.bf16.mxu0 %v6867
          %8353 = vmatpush1.bf16.msra.mxu0 %v6866
          %8354 = vmatprep.subr.bf16.mxu0 %v6883
          %8355 = vmatpush1.bf16.msra.mxu0 %v6882
          %8356 = vmatprep.subr.bf16.mxu0 %v6899
          %8357 = vmatpush1.bf16.msra.mxu0 %v6898
          %8358 = vmatprep.subr.bf16.mxu0 %v6915
          %8359 = vmatpush1.bf16.msra.mxu0 %v6914
          %8360 = vmatprep.subr.bf16.mxu0 %v6931
          %8361 = vmatpush1.bf16.msra.mxu0 %v6930
          %8362 = vmatprep.subr.bf16.mxu0 %v6947
          %8363 = vmatpush1.bf16.msra.mxu0 %v6946
          %8364 = vmatprep.subr.bf16.mxu0 %v6963
          %8365 = vmatpush1.bf16.msra.mxu0 %v6962
          %8366 = vmatprep.subr.bf16.mxu0 %v6979
          %8367 = vmatpush1.bf16.msra.mxu0 %v6978
          %8368 = vmatprep.subr.bf16.mxu0 %v6995
          %8369 = vmatpush1.bf16.msra.mxu0 %v6994
          %8370 = vmatprep.mubr.bf16.mxu0 %v5197
          %8371 = vmatmul.mubr.bf16.gmra.mrb[0].mxu0 %v5196
          %v8372 = vpop.f32.mrb[0].mxu0
          %v8373 = vadd.f32 0.0, %v8372
          %v8374 = vpop.f32.mrb[0].mxu0
          %v8375 = vadd.f32 0.0, %v8374
          %v8376 = vpop.f32.mrb[0].mxu0
          %v8377 = vpop.f32.mrb[0].mxu0
          %8378 = vdwg.mxu0
          %8379 = vmatprep.subr.bf16.mxu0 %v7011
          %8380 = vmatpush1.bf16.msra.mxu0 %v7010
          %8381 = vmatprep.subr.bf16.mxu0 %v7027
          %8382 = vmatpush1.bf16.msra.mxu0 %v7026
          %8383 = vmatprep.subr.bf16.mxu0 %v7043
          %8384 = vmatpush1.bf16.msra.mxu0 %v7042
          %8385 = vmatprep.subr.bf16.mxu0 %v7059
          %8386 = vmatpush1.bf16.msra.mxu0 %v7058
          %8387 = vmatprep.subr.bf16.mxu0 %v7075
          %8388 = vmatpush1.bf16.msra.mxu0 %v7074
          %8389 = vmatprep.subr.bf16.mxu0 %v7091
          %8390 = vmatpush1.bf16.msra.mxu0 %v7090
          %8391 = vmatprep.subr.bf16.mxu0 %v7107
          %8392 = vmatpush1.bf16.msra.mxu0 %v7106
          %8393 = vmatprep.subr.bf16.mxu0 %v7123
          %8394 = vmatpush1.bf16.msra.mxu0 %v7122
          %8395 = vmatprep.subr.bf16.mxu0 %v7139
          %8396 = vmatpush1.bf16.msra.mxu0 %v7138
          %8397 = vmatprep.subr.bf16.mxu0 %v7155
          %8398 = vmatpush1.bf16.msra.mxu0 %v7154
          %8399 = vmatprep.subr.bf16.mxu0 %v7171
          %8400 = vmatpush1.bf16.msra.mxu0 %v7170
          %8401 = vmatprep.subr.bf16.mxu0 %v7187
          %8402 = vmatpush1.bf16.msra.mxu0 %v7186
          %8403 = vmatprep.subr.bf16.mxu0 %v7203
          %8404 = vmatpush1.bf16.msra.mxu0 %v7202
          %8405 = vmatprep.subr.bf16.mxu0 %v7219
          %8406 = vmatpush1.bf16.msra.mxu0 %v7218
          %8407 = vmatprep.subr.bf16.mxu0 %v7235
          %8408 = vmatpush1.bf16.msra.mxu0 %v7234
          %8409 = vmatprep.subr.bf16.mxu0 %v7251
          %8410 = vmatpush1.bf16.msra.mxu0 %v7250
          %8411 = vmatprep.mubr.bf16.mxu0 %v5199
          %8412 = vmatmul.mubr.bf16.gmra.mrb[0].mxu0 %v5198
          %v8413 = vpop.f32.mrb[0].mxu0
          %v8414 = vadd.f32 %v8373, %v8413
          %v8415 = vpop.f32.mrb[0].mxu0
          %v8416 = vadd.f32 %v8375, %v8415
          %v8417 = vpop.f32.mrb[0].mxu0
          %v8418 = vpop.f32.mrb[0].mxu0
          %8419 = vdwg.mxu0
          %v8420 = vadd.f32 %v4657, %v7840
          %v8421 = vadd.f32 %v4658, %v7842
          %v8422 = vadd.f32 %v4659, %v7922
          %v8423 = vadd.f32 %v4660, %v7924
          %v8424 = vadd.f32 %v4661, %v8004
          %v8425 = vadd.f32 %v4662, %v8006
          %v8426 = vadd.f32 %v4663, %v8086
          %v8427 = vadd.f32 %v4664, %v8088
          %v8428 = vadd.f32 %v4665, %v8168
          %v8429 = vadd.f32 %v4666, %v8170
          %v8430 = vadd.f32 %v4667, %v8250
          %v8431 = vadd.f32 %v4668, %v8252
          %v8432 = vadd.f32 %v4669, %v8332
          %v8433 = vadd.f32 %v4670, %v8334
          %v8434 = vadd.f32 %v4671, %v8414
          %v8435 = vadd.f32 %v4672, %v8416
          %8436 = vst [vmem:[#allocation2] sm:$0xff] %v8420
          %8437 = vst [vmem:[#allocation2 + $0x8] sm:$0xff] %v8421
          %8438 = vst [vmem:[#allocation2 + $0x10] sm:$0xff] %v8422
          %8439 = vst [vmem:[#allocation2 + $0x18] sm:$0xff] %v8423
          %8440 = vst [vmem:[#allocation2 + $0x20] sm:$0xff] %v8424
          %8441 = vst [vmem:[#allocation2 + $0x28] sm:$0xff] %v8425
          %8442 = vst [vmem:[#allocation2 + $0x30] sm:$0xff] %v8426
          %8443 = vst [vmem:[#allocation2 + $0x38] sm:$0xff] %v8427
          %8444 = vst [vmem:[#allocation2 + $0x40] sm:$0xff] %v8428
          %8445 = vst [vmem:[#allocation2 + $0x48] sm:$0xff] %v8429
          %8446 = vst [vmem:[#allocation2 + $0x50] sm:$0xff] %v8430
          %8447 = vst [vmem:[#allocation2 + $0x58] sm:$0xff] %v8431
          %8448 = vst [vmem:[#allocation2 + $0x60] sm:$0xff] %v8432
          %8449 = vst [vmem:[#allocation2 + $0x68] sm:$0xff] %v8433
          %8450 = vst [vmem:[#allocation2 + $0x70] sm:$0xff] %v8434
          %8451 = vst [vmem:[#allocation2 + $0x78] sm:$0xff] %v8435
        $region76: #{b_classifier_forward.1} parent=43 // pred_fallthru
          _
        %p8452 = scmp.eq.s32.totalorder %s22, 6
        // Predicated region
        $region77: #{b_classifier_forward.1} parent=43 // pred_check
          %p8453 = pneg %p8452
        $region78: #{b_classifier_forward.1} parent=43 // pred_check_branch
          %8455 = sbr.rel (%p8453) target = $region80
        $region79: #{b_classifier_forward.1} parent=43 // pred_region
          %v8456 = vld [vmem:[#allocation2] sm:$0xff]
          %v8457 = vld [vmem:[#allocation2 + $0x8] sm:$0xff]
          %v8458 = vld [vmem:[#allocation2 + $0x10] sm:$0xff]
          %v8459 = vld [vmem:[#allocation2 + $0x18] sm:$0xff]
          %v8460 = vld [vmem:[#allocation2 + $0x20] sm:$0xff]
          %v8461 = vld [vmem:[#allocation2 + $0x28] sm:$0xff]
          %v8462 = vld [vmem:[#allocation2 + $0x30] sm:$0xff]
          %v8463 = vld [vmem:[#allocation2 + $0x38] sm:$0xff]
          %v8464 = vld [vmem:[#allocation2 + $0x40] sm:$0xff]
          %v8465 = vld [vmem:[#allocation2 + $0x48] sm:$0xff]
          %v8466 = vld [vmem:[#allocation2 + $0x50] sm:$0xff]
          %v8467 = vld [vmem:[#allocation2 + $0x58] sm:$0xff]
          %v8468 = vld [vmem:[#allocation2 + $0x60] sm:$0xff]
          %v8469 = vld [vmem:[#allocation2 + $0x68] sm:$0xff]
          %v8470 = vld [vmem:[#allocation2 + $0x70] sm:$0xff]
          %v8471 = vld [vmem:[#allocation2 + $0x78] sm:$0xff]
          %v8472 = vld [vmem:[#allocation8] ss:$4 sm:$0xff]
          %s8473 = scalar_lea.vmem [#allocation8], 32
          %v8474 = vld [vmem:[%s8473] ss:$4 sm:$0xff]
          %v8477 = vlaneseq
          %v8478 = vshrl.u32 %v8477, 7
          %v8479 = vsub.s32 0, %v8478
          %v8480 = vrot.slane %v8472, %v8479
          %v8481 = vlaneseq
          %v8482 = vshrl.u32 %v8481, 7
          %v8483 = vsub.s32 1, %v8482
          %v8484 = vrot.slane %v8472, %v8483
          %v8485 = vlaneseq
          %v8486 = vshrl.u32 %v8485, 7
          %v8487 = vsub.s32 2, %v8486
          %v8488 = vrot.slane %v8472, %v8487
          %v8489 = vlaneseq
          %v8490 = vshrl.u32 %v8489, 7
          %v8491 = vsub.s32 3, %v8490
          %v8492 = vrot.slane %v8472, %v8491
          %v8493 = vlaneseq
          %v8494 = vshrl.u32 %v8493, 7
          %v8495 = vsub.s32 4, %v8494
          %v8496 = vrot.slane %v8472, %v8495
          %v8497 = vlaneseq
          %v8498 = vshrl.u32 %v8497, 7
          %v8499 = vsub.s32 5, %v8498
          %v8500 = vrot.slane %v8472, %v8499
          %v8501 = vlaneseq
          %v8502 = vshrl.u32 %v8501, 7
          %v8503 = vsub.s32 6, %v8502
          %v8504 = vrot.slane %v8472, %v8503
          %v8505 = vlaneseq
          %v8506 = vshrl.u32 %v8505, 7
          %v8507 = vsub.s32 7, %v8506
          %v8508 = vrot.slane %v8472, %v8507
          %v8509 = vlaneseq
          %v8510 = vshrl.u32 %v8509, 7
          %v8511 = vsub.s32 0, %v8510
          %v8512 = vrot.slane %v8474, %v8511
          %v8513 = vlaneseq
          %v8514 = vshrl.u32 %v8513, 7
          %v8515 = vsub.s32 1, %v8514
          %v8516 = vrot.slane %v8474, %v8515
          %v8517 = vlaneseq
          %v8518 = vshrl.u32 %v8517, 7
          %v8519 = vsub.s32 2, %v8518
          %v8520 = vrot.slane %v8474, %v8519
          %v8521 = vlaneseq
          %v8522 = vshrl.u32 %v8521, 7
          %v8523 = vsub.s32 3, %v8522
          %v8524 = vrot.slane %v8474, %v8523
          %v8525 = vlaneseq
          %v8526 = vshrl.u32 %v8525, 7
          %v8527 = vsub.s32 4, %v8526
          %v8528 = vrot.slane %v8474, %v8527
          %v8529 = vlaneseq
          %v8530 = vshrl.u32 %v8529, 7
          %v8531 = vsub.s32 5, %v8530
          %v8532 = vrot.slane %v8474, %v8531
          %v8533 = vlaneseq
          %v8534 = vshrl.u32 %v8533, 7
          %v8535 = vsub.s32 6, %v8534
          %v8536 = vrot.slane %v8474, %v8535
          %v8537 = vlaneseq
          %v8538 = vshrl.u32 %v8537, 7
          %v8539 = vsub.s32 7, %v8538
          %v8540 = vrot.slane %v8474, %v8539
          %v8557 = vadd.f32 %v8456, %v8480
          %v8558 = vadd.f32 %v8457, %v8484
          %v8559 = vadd.f32 %v8458, %v8488
          %v8560 = vadd.f32 %v8459, %v8492
          %v8561 = vadd.f32 %v8460, %v8496
          %v8562 = vadd.f32 %v8461, %v8500
          %v8563 = vadd.f32 %v8462, %v8504
          %v8564 = vadd.f32 %v8463, %v8508
          %v8565 = vadd.f32 %v8464, %v8512
          %v8566 = vadd.f32 %v8465, %v8516
          %v8567 = vadd.f32 %v8466, %v8520
          %v8568 = vadd.f32 %v8467, %v8524
          %v8569 = vadd.f32 %v8468, %v8528
          %v8570 = vadd.f32 %v8469, %v8532
          %v8571 = vadd.f32 %v8470, %v8536
          %v8572 = vadd.f32 %v8471, %v8540
          %s8573 = scalar_lea.vmem [#allocation8], 1
          %v8574 = vld [vmem:[%s8573] ss:$4 sm:$0xff]
          %s8575 = scalar_lea.vmem [#allocation8], 33
          %v8576 = vld [vmem:[%s8575] ss:$4 sm:$0xff]
          %s8577 = scalar_lea.vmem [#allocation8], 2
          %v8578 = vld [vmem:[%s8577] ss:$4 sm:$0xff]
          %s8579 = scalar_lea.vmem [#allocation8], 34
          %v8580 = vld [vmem:[%s8579] ss:$4 sm:$0xff]
          %v8581 = vadd.f32 %v8557, %v8558
          %v8582 = vadd.f32 %v8581, %v8559
          %v8583 = vadd.f32 %v8582, %v8560
          %v8584 = vadd.f32 %v8583, %v8561
          %v8585 = vadd.f32 %v8584, %v8562
          %v8586 = vadd.f32 %v8585, %v8563
          %v8587 = vadd.f32 %v8586, %v8564
          %v8588 = vadd.f32 %v8587, %v8565
          %v8589 = vadd.f32 %v8588, %v8566
          %v8590 = vadd.f32 %v8589, %v8567
          %v8591 = vadd.f32 %v8590, %v8568
          %v8592 = vadd.f32 %v8591, %v8569
          %v8593 = vadd.f32 %v8592, %v8570
          %v8594 = vadd.f32 %v8593, %v8571
          %v8595 = vadd.f32 %v8594, %v8572
          %8596 = vadd.xlane.f32.xlu0 %v8595
          %v8597 = vpop.xlane.xlu0 %8596
          %v8598 = vrcp.pop 2048.0
          %v8599 = vmul.f32 %v8597, %v8598
          %v8600 = vsub.f32 %v8557, %v8599
          %v8601 = vsub.f32 %v8558, %v8599
          %v8602 = vsub.f32 %v8559, %v8599
          %v8603 = vsub.f32 %v8560, %v8599
          %v8604 = vsub.f32 %v8561, %v8599
          %v8605 = vsub.f32 %v8562, %v8599
          %v8606 = vsub.f32 %v8563, %v8599
          %v8607 = vsub.f32 %v8564, %v8599
          %v8608 = vsub.f32 %v8565, %v8599
          %v8609 = vsub.f32 %v8566, %v8599
          %v8610 = vsub.f32 %v8567, %v8599
          %v8611 = vsub.f32 %v8568, %v8599
          %v8612 = vsub.f32 %v8569, %v8599
          %v8613 = vsub.f32 %v8570, %v8599
          %v8614 = vsub.f32 %v8571, %v8599
          %v8615 = vsub.f32 %v8572, %v8599
          %v8616 = vmul.f32 %v8600, %v8600
          %v8617 = vmul.f32 %v8601, %v8601
          %v8618 = vmul.f32 %v8602, %v8602
          %v8619 = vmul.f32 %v8603, %v8603
          %v8620 = vmul.f32 %v8604, %v8604
          %v8621 = vmul.f32 %v8605, %v8605
          %v8622 = vmul.f32 %v8606, %v8606
          %v8623 = vmul.f32 %v8607, %v8607
          %v8624 = vmul.f32 %v8608, %v8608
          %v8625 = vmul.f32 %v8609, %v8609
          %v8626 = vmul.f32 %v8610, %v8610
          %v8627 = vmul.f32 %v8611, %v8611
          %v8628 = vmul.f32 %v8612, %v8612
          %v8629 = vmul.f32 %v8613, %v8613
          %v8630 = vmul.f32 %v8614, %v8614
          %v8631 = vmul.f32 %v8615, %v8615
          %v8632 = vadd.f32 %v8616, %v8617
          %v8633 = vadd.f32 %v8632, %v8618
          %v8634 = vadd.f32 %v8633, %v8619
          %v8635 = vadd.f32 %v8634, %v8620
          %v8636 = vadd.f32 %v8635, %v8621
          %v8637 = vadd.f32 %v8636, %v8622
          %v8638 = vadd.f32 %v8637, %v8623
          %v8639 = vadd.f32 %v8638, %v8624
          %v8640 = vadd.f32 %v8639, %v8625
          %v8641 = vadd.f32 %v8640, %v8626
          %v8642 = vadd.f32 %v8641, %v8627
          %v8643 = vadd.f32 %v8642, %v8628
          %v8644 = vadd.f32 %v8643, %v8629
          %v8645 = vadd.f32 %v8644, %v8630
          %v8646 = vadd.f32 %v8645, %v8631
          %8647 = vadd.xlane.f32.xlu0 %v8646
          %v8648 = vpop.xlane.xlu0 %8647
          %v8649 = vmul.f32 %v8648, %v8598
          %v8650 = vadd.f32 %v8649, 1e-05
          %v8651 = vrsqrt.pop %v8650
          %v8652 = vmul.f32 %v8600, %v8651
          %v8653 = vmul.f32 %v8601, %v8651
          %v8654 = vmul.f32 %v8602, %v8651
          %v8655 = vmul.f32 %v8603, %v8651
          %v8656 = vmul.f32 %v8604, %v8651
          %v8657 = vmul.f32 %v8605, %v8651
          %v8658 = vmul.f32 %v8606, %v8651
          %v8659 = vmul.f32 %v8607, %v8651
          %v8660 = vmul.f32 %v8608, %v8651
          %v8661 = vmul.f32 %v8609, %v8651
          %v8662 = vmul.f32 %v8610, %v8651
          %v8663 = vmul.f32 %v8611, %v8651
          %v8664 = vmul.f32 %v8612, %v8651
          %v8665 = vmul.f32 %v8613, %v8651
          %v8666 = vmul.f32 %v8614, %v8651
          %v8667 = vmul.f32 %v8615, %v8651
          %v8670 = vlaneseq
          %v8671 = vshrl.u32 %v8670, 7
          %v8672 = vsub.s32 0, %v8671
          %v8673 = vrot.slane %v8574, %v8672
          %v8674 = vlaneseq
          %v8675 = vshrl.u32 %v8674, 7
          %v8676 = vsub.s32 1, %v8675
          %v8677 = vrot.slane %v8574, %v8676
          %v8678 = vlaneseq
          %v8679 = vshrl.u32 %v8678, 7
          %v8680 = vsub.s32 2, %v8679
          %v8681 = vrot.slane %v8574, %v8680
          %v8682 = vlaneseq
          %v8683 = vshrl.u32 %v8682, 7
          %v8684 = vsub.s32 3, %v8683
          %v8685 = vrot.slane %v8574, %v8684
          %v8686 = vlaneseq
          %v8687 = vshrl.u32 %v8686, 7
          %v8688 = vsub.s32 4, %v8687
          %v8689 = vrot.slane %v8574, %v8688
          %v8690 = vlaneseq
          %v8691 = vshrl.u32 %v8690, 7
          %v8692 = vsub.s32 5, %v8691
          %v8693 = vrot.slane %v8574, %v8692
          %v8694 = vlaneseq
          %v8695 = vshrl.u32 %v8694, 7
          %v8696 = vsub.s32 6, %v8695
          %v8697 = vrot.slane %v8574, %v8696
          %v8698 = vlaneseq
          %v8699 = vshrl.u32 %v8698, 7
          %v8700 = vsub.s32 7, %v8699
          %v8701 = vrot.slane %v8574, %v8700
          %v8702 = vlaneseq
          %v8703 = vshrl.u32 %v8702, 7
          %v8704 = vsub.s32 0, %v8703
          %v8705 = vrot.slane %v8576, %v8704
          %v8706 = vlaneseq
          %v8707 = vshrl.u32 %v8706, 7
          %v8708 = vsub.s32 1, %v8707
          %v8709 = vrot.slane %v8576, %v8708
          %v8710 = vlaneseq
          %v8711 = vshrl.u32 %v8710, 7
          %v8712 = vsub.s32 2, %v8711
          %v8713 = vrot.slane %v8576, %v8712
          %v8714 = vlaneseq
          %v8715 = vshrl.u32 %v8714, 7
          %v8716 = vsub.s32 3, %v8715
          %v8717 = vrot.slane %v8576, %v8716
          %v8718 = vlaneseq
          %v8719 = vshrl.u32 %v8718, 7
          %v8720 = vsub.s32 4, %v8719
          %v8721 = vrot.slane %v8576, %v8720
          %v8722 = vlaneseq
          %v8723 = vshrl.u32 %v8722, 7
          %v8724 = vsub.s32 5, %v8723
          %v8725 = vrot.slane %v8576, %v8724
          %v8726 = vlaneseq
          %v8727 = vshrl.u32 %v8726, 7
          %v8728 = vsub.s32 6, %v8727
          %v8729 = vrot.slane %v8576, %v8728
          %v8730 = vlaneseq
          %v8731 = vshrl.u32 %v8730, 7
          %v8732 = vsub.s32 7, %v8731
          %v8733 = vrot.slane %v8576, %v8732
          %v8750 = vmul.f32 %v8652, %v8673
          %v8751 = vmul.f32 %v8653, %v8677
          %v8752 = vmul.f32 %v8654, %v8681
          %v8753 = vmul.f32 %v8655, %v8685
          %v8754 = vmul.f32 %v8656, %v8689
          %v8755 = vmul.f32 %v8657, %v8693
          %v8756 = vmul.f32 %v8658, %v8697
          %v8757 = vmul.f32 %v8659, %v8701
          %v8758 = vmul.f32 %v8660, %v8705
          %v8759 = vmul.f32 %v8661, %v8709
          %v8760 = vmul.f32 %v8662, %v8713
          %v8761 = vmul.f32 %v8663, %v8717
          %v8762 = vmul.f32 %v8664, %v8721
          %v8763 = vmul.f32 %v8665, %v8725
          %v8764 = vmul.f32 %v8666, %v8729
          %v8765 = vmul.f32 %v8667, %v8733
          %v8768 = vlaneseq
          %v8769 = vshrl.u32 %v8768, 7
          %v8770 = vsub.s32 0, %v8769
          %v8771 = vrot.slane %v8578, %v8770
          %v8772 = vlaneseq
          %v8773 = vshrl.u32 %v8772, 7
          %v8774 = vsub.s32 1, %v8773
          %v8775 = vrot.slane %v8578, %v8774
          %v8776 = vlaneseq
          %v8777 = vshrl.u32 %v8776, 7
          %v8778 = vsub.s32 2, %v8777
          %v8779 = vrot.slane %v8578, %v8778
          %v8780 = vlaneseq
          %v8781 = vshrl.u32 %v8780, 7
          %v8782 = vsub.s32 3, %v8781
          %v8783 = vrot.slane %v8578, %v8782
          %v8784 = vlaneseq
          %v8785 = vshrl.u32 %v8784, 7
          %v8786 = vsub.s32 4, %v8785
          %v8787 = vrot.slane %v8578, %v8786
          %v8788 = vlaneseq
          %v8789 = vshrl.u32 %v8788, 7
          %v8790 = vsub.s32 5, %v8789
          %v8791 = vrot.slane %v8578, %v8790
          %v8792 = vlaneseq
          %v8793 = vshrl.u32 %v8792, 7
          %v8794 = vsub.s32 6, %v8793
          %v8795 = vrot.slane %v8578, %v8794
          %v8796 = vlaneseq
          %v8797 = vshrl.u32 %v8796, 7
          %v8798 = vsub.s32 7, %v8797
          %v8799 = vrot.slane %v8578, %v8798
          %v8800 = vlaneseq
          %v8801 = vshrl.u32 %v8800, 7
          %v8802 = vsub.s32 0, %v8801
          %v8803 = vrot.slane %v8580, %v8802
          %v8804 = vlaneseq
          %v8805 = vshrl.u32 %v8804, 7
          %v8806 = vsub.s32 1, %v8805
          %v8807 = vrot.slane %v8580, %v8806
          %v8808 = vlaneseq
          %v8809 = vshrl.u32 %v8808, 7
          %v8810 = vsub.s32 2, %v8809
          %v8811 = vrot.slane %v8580, %v8810
          %v8812 = vlaneseq
          %v8813 = vshrl.u32 %v8812, 7
          %v8814 = vsub.s32 3, %v8813
          %v8815 = vrot.slane %v8580, %v8814
          %v8816 = vlaneseq
          %v8817 = vshrl.u32 %v8816, 7
          %v8818 = vsub.s32 4, %v8817
          %v8819 = vrot.slane %v8580, %v8818
          %v8820 = vlaneseq
          %v8821 = vshrl.u32 %v8820, 7
          %v8822 = vsub.s32 5, %v8821
          %v8823 = vrot.slane %v8580, %v8822
          %v8824 = vlaneseq
          %v8825 = vshrl.u32 %v8824, 7
          %v8826 = vsub.s32 6, %v8825
          %v8827 = vrot.slane %v8580, %v8826
          %v8828 = vlaneseq
          %v8829 = vshrl.u32 %v8828, 7
          %v8830 = vsub.s32 7, %v8829
          %v8831 = vrot.slane %v8580, %v8830
          %v8848 = vadd.f32 %v8750, %v8771
          %v8849 = vadd.f32 %v8751, %v8775
          %v8850 = vadd.f32 %v8752, %v8779
          %v8851 = vadd.f32 %v8753, %v8783
          %v8852 = vadd.f32 %v8754, %v8787
          %v8853 = vadd.f32 %v8755, %v8791
          %v8854 = vadd.f32 %v8756, %v8795
          %v8855 = vadd.f32 %v8757, %v8799
          %v8856 = vadd.f32 %v8758, %v8803
          %v8857 = vadd.f32 %v8759, %v8807
          %v8858 = vadd.f32 %v8760, %v8811
          %v8859 = vadd.f32 %v8761, %v8815
          %v8860 = vadd.f32 %v8762, %v8819
          %v8861 = vadd.f32 %v8763, %v8823
          %v8862 = vadd.f32 %v8764, %v8827
          %v8863 = vadd.f32 %v8765, %v8831
          %v8864 = vld [vmem:[%s4] sm:$0xff]
          %v8865 = vld [vmem:[%s4 + $0x8] sm:$0xff]
          %v8866 = vld [vmem:[%s4 + $0x10] sm:$0xff]
          %v8867 = vld [vmem:[%s4 + $0x18] sm:$0xff]
          %v8868 = vld [vmem:[%s4 + $0x20] sm:$0xff]
          %v8869 = vld [vmem:[%s4 + $0x28] sm:$0xff]
          %v8870 = vld [vmem:[%s4 + $0x30] sm:$0xff]
          %v8871 = vld [vmem:[%s4 + $0x38] sm:$0xff]
          %v8872 = vld [vmem:[%s4 + $0x40] sm:$0xff]
          %v8873 = vld [vmem:[%s4 + $0x48] sm:$0xff]
          %v8874 = vld [vmem:[%s4 + $0x50] sm:$0xff]
          %v8875 = vld [vmem:[%s4 + $0x58] sm:$0xff]
          %v8876 = vld [vmem:[%s4 + $0x60] sm:$0xff]
          %v8877 = vld [vmem:[%s4 + $0x68] sm:$0xff]
          %v8878 = vld [vmem:[%s4 + $0x70] sm:$0xff]
          %v8879 = vld [vmem:[%s4 + $0x78] sm:$0xff]
          %v8880 = vld [vmem:[%s4 + $0x80] sm:$0xff]
          %v8881 = vld [vmem:[%s4 + $0x88] sm:$0xff]
          %v8882 = vld [vmem:[%s4 + $0x90] sm:$0xff]
          %v8883 = vld [vmem:[%s4 + $0x98] sm:$0xff]
          %v8884 = vld [vmem:[%s4 + $0xa0] sm:$0xff]
          %v8885 = vld [vmem:[%s4 + $0xa8] sm:$0xff]
          %v8886 = vld [vmem:[%s4 + $0xb0] sm:$0xff]
          %v8887 = vld [vmem:[%s4 + $0xb8] sm:$0xff]
          %v8888 = vld [vmem:[%s4 + $0xc0] sm:$0xff]
          %v8889 = vld [vmem:[%s4 + $0xc8] sm:$0xff]
          %v8890 = vld [vmem:[%s4 + $0xd0] sm:$0xff]
          %v8891 = vld [vmem:[%s4 + $0xd8] sm:$0xff]
          %v8892 = vld [vmem:[%s4 + $0xe0] sm:$0xff]
          %v8893 = vld [vmem:[%s4 + $0xe8] sm:$0xff]
          %v8894 = vld [vmem:[%s4 + $0xf0] sm:$0xff]
          %v8895 = vld [vmem:[%s4 + $0xf8] sm:$0xff]
          %v8896 = vld [vmem:[%s4 + $0x100] sm:$0xff]
          %v8897 = vld [vmem:[%s4 + $0x108] sm:$0xff]
          %v8898 = vld [vmem:[%s4 + $0x110] sm:$0xff]
          %v8899 = vld [vmem:[%s4 + $0x118] sm:$0xff]
          %v8900 = vld [vmem:[%s4 + $0x120] sm:$0xff]
          %v8901 = vld [vmem:[%s4 + $0x128] sm:$0xff]
          %v8902 = vld [vmem:[%s4 + $0x130] sm:$0xff]
          %v8903 = vld [vmem:[%s4 + $0x138] sm:$0xff]
          %v8904 = vld [vmem:[%s4 + $0x140] sm:$0xff]
          %v8905 = vld [vmem:[%s4 + $0x148] sm:$0xff]
          %v8906 = vld [vmem:[%s4 + $0x150] sm:$0xff]
          %v8907 = vld [vmem:[%s4 + $0x158] sm:$0xff]
          %v8908 = vld [vmem:[%s4 + $0x160] sm:$0xff]
          %v8909 = vld [vmem:[%s4 + $0x168] sm:$0xff]
          %v8910 = vld [vmem:[%s4 + $0x170] sm:$0xff]
          %v8911 = vld [vmem:[%s4 + $0x178] sm:$0xff]
          %v8912 = vld [vmem:[%s4 + $0x180] sm:$0xff]
          %v8913 = vld [vmem:[%s4 + $0x188] sm:$0xff]
          %v8914 = vld [vmem:[%s4 + $0x190] sm:$0xff]
          %v8915 = vld [vmem:[%s4 + $0x198] sm:$0xff]
          %v8916 = vld [vmem:[%s4 + $0x1a0] sm:$0xff]
          %v8917 = vld [vmem:[%s4 + $0x1a8] sm:$0xff]
          %v8918 = vld [vmem:[%s4 + $0x1b0] sm:$0xff]
          %v8919 = vld [vmem:[%s4 + $0x1b8] sm:$0xff]
          %v8920 = vld [vmem:[%s4 + $0x1c0] sm:$0xff]
          %v8921 = vld [vmem:[%s4 + $0x1c8] sm:$0xff]
          %v8922 = vld [vmem:[%s4 + $0x1d0] sm:$0xff]
          %v8923 = vld [vmem:[%s4 + $0x1d8] sm:$0xff]
          %v8924 = vld [vmem:[%s4 + $0x1e0] sm:$0xff]
          %v8925 = vld [vmem:[%s4 + $0x1e8] sm:$0xff]
          %v8926 = vld [vmem:[%s4 + $0x1f0] sm:$0xff]
          %v8927 = vld [vmem:[%s4 + $0x1f8] sm:$0xff]
          %v8928 = vld [vmem:[%s4 + $0x200] sm:$0xff]
          %v8929 = vld [vmem:[%s4 + $0x208] sm:$0xff]
          %v8930 = vld [vmem:[%s4 + $0x210] sm:$0xff]
          %v8931 = vld [vmem:[%s4 + $0x218] sm:$0xff]
          %v8932 = vld [vmem:[%s4 + $0x220] sm:$0xff]
          %v8933 = vld [vmem:[%s4 + $0x228] sm:$0xff]
          %v8934 = vld [vmem:[%s4 + $0x230] sm:$0xff]
          %v8935 = vld [vmem:[%s4 + $0x238] sm:$0xff]
          %v8936 = vld [vmem:[%s4 + $0x240] sm:$0xff]
          %v8937 = vld [vmem:[%s4 + $0x248] sm:$0xff]
          %v8938 = vld [vmem:[%s4 + $0x250] sm:$0xff]
          %v8939 = vld [vmem:[%s4 + $0x258] sm:$0xff]
          %v8940 = vld [vmem:[%s4 + $0x260] sm:$0xff]
          %v8941 = vld [vmem:[%s4 + $0x268] sm:$0xff]
          %v8942 = vld [vmem:[%s4 + $0x270] sm:$0xff]
          %v8943 = vld [vmem:[%s4 + $0x278] sm:$0xff]
          %v8944 = vld [vmem:[%s4 + $0x280] sm:$0xff]
          %v8945 = vld [vmem:[%s4 + $0x288] sm:$0xff]
          %v8946 = vld [vmem:[%s4 + $0x290] sm:$0xff]
          %v8947 = vld [vmem:[%s4 + $0x298] sm:$0xff]
          %v8948 = vld [vmem:[%s4 + $0x2a0] sm:$0xff]
          %v8949 = vld [vmem:[%s4 + $0x2a8] sm:$0xff]
          %v8950 = vld [vmem:[%s4 + $0x2b0] sm:$0xff]
          %v8951 = vld [vmem:[%s4 + $0x2b8] sm:$0xff]
          %v8952 = vld [vmem:[%s4 + $0x2c0] sm:$0xff]
          %v8953 = vld [vmem:[%s4 + $0x2c8] sm:$0xff]
          %v8954 = vld [vmem:[%s4 + $0x2d0] sm:$0xff]
          %v8955 = vld [vmem:[%s4 + $0x2d8] sm:$0xff]
          %v8956 = vld [vmem:[%s4 + $0x2e0] sm:$0xff]
          %v8957 = vld [vmem:[%s4 + $0x2e8] sm:$0xff]
          %v8958 = vld [vmem:[%s4 + $0x2f0] sm:$0xff]
          %v8959 = vld [vmem:[%s4 + $0x2f8] sm:$0xff]
          %v8960 = vld [vmem:[%s4 + $0x300] sm:$0xff]
          %v8961 = vld [vmem:[%s4 + $0x308] sm:$0xff]
          %v8962 = vld [vmem:[%s4 + $0x310] sm:$0xff]
          %v8963 = vld [vmem:[%s4 + $0x318] sm:$0xff]
          %v8964 = vld [vmem:[%s4 + $0x320] sm:$0xff]
          %v8965 = vld [vmem:[%s4 + $0x328] sm:$0xff]
          %v8966 = vld [vmem:[%s4 + $0x330] sm:$0xff]
          %v8967 = vld [vmem:[%s4 + $0x338] sm:$0xff]
          %v8968 = vld [vmem:[%s4 + $0x340] sm:$0xff]
          %v8969 = vld [vmem:[%s4 + $0x348] sm:$0xff]
          %v8970 = vld [vmem:[%s4 + $0x350] sm:$0xff]
          %v8971 = vld [vmem:[%s4 + $0x358] sm:$0xff]
          %v8972 = vld [vmem:[%s4 + $0x360] sm:$0xff]
          %v8973 = vld [vmem:[%s4 + $0x368] sm:$0xff]
          %v8974 = vld [vmem:[%s4 + $0x370] sm:$0xff]
          %v8975 = vld [vmem:[%s4 + $0x378] sm:$0xff]
          %v8976 = vld [vmem:[%s4 + $0x380] sm:$0xff]
          %v8977 = vld [vmem:[%s4 + $0x388] sm:$0xff]
          %v8978 = vld [vmem:[%s4 + $0x390] sm:$0xff]
          %v8979 = vld [vmem:[%s4 + $0x398] sm:$0xff]
          %v8980 = vld [vmem:[%s4 + $0x3a0] sm:$0xff]
          %v8981 = vld [vmem:[%s4 + $0x3a8] sm:$0xff]
          %v8982 = vld [vmem:[%s4 + $0x3b0] sm:$0xff]
          %v8983 = vld [vmem:[%s4 + $0x3b8] sm:$0xff]
          %v8984 = vld [vmem:[%s4 + $0x3c0] sm:$0xff]
          %v8985 = vld [vmem:[%s4 + $0x3c8] sm:$0xff]
          %v8986 = vld [vmem:[%s4 + $0x3d0] sm:$0xff]
          %v8987 = vld [vmem:[%s4 + $0x3d8] sm:$0xff]
          %v8988 = vld [vmem:[%s4 + $0x3e0] sm:$0xff]
          %v8989 = vld [vmem:[%s4 + $0x3e8] sm:$0xff]
          %v8990 = vld [vmem:[%s4 + $0x3f0] sm:$0xff]
          %v8991 = vld [vmem:[%s4 + $0x3f8] sm:$0xff]
          %v8992 = vld [vmem:[%s4 + $0x400] sm:$0xff]
          %v8993 = vld [vmem:[%s4 + $0x408] sm:$0xff]
          %v8994 = vld [vmem:[%s4 + $0x410] sm:$0xff]
          %v8995 = vld [vmem:[%s4 + $0x418] sm:$0xff]
          %v8996 = vld [vmem:[%s4 + $0x420] sm:$0xff]
          %v8997 = vld [vmem:[%s4 + $0x428] sm:$0xff]
          %v8998 = vld [vmem:[%s4 + $0x430] sm:$0xff]
          %v8999 = vld [vmem:[%s4 + $0x438] sm:$0xff]
          %v9000 = vld [vmem:[%s4 + $0x440] sm:$0xff]
          %v9001 = vld [vmem:[%s4 + $0x448] sm:$0xff]
          %v9002 = vld [vmem:[%s4 + $0x450] sm:$0xff]
          %v9003 = vld [vmem:[%s4 + $0x458] sm:$0xff]
          %v9004 = vld [vmem:[%s4 + $0x460] sm:$0xff]
          %v9005 = vld [vmem:[%s4 + $0x468] sm:$0xff]
          %v9006 = vld [vmem:[%s4 + $0x470] sm:$0xff]
          %v9007 = vld [vmem:[%s4 + $0x478] sm:$0xff]
          %v9008 = vld [vmem:[%s4 + $0x480] sm:$0xff]
          %v9009 = vld [vmem:[%s4 + $0x488] sm:$0xff]
          %v9010 = vld [vmem:[%s4 + $0x490] sm:$0xff]
          %v9011 = vld [vmem:[%s4 + $0x498] sm:$0xff]
          %v9012 = vld [vmem:[%s4 + $0x4a0] sm:$0xff]
          %v9013 = vld [vmem:[%s4 + $0x4a8] sm:$0xff]
          %v9014 = vld [vmem:[%s4 + $0x4b0] sm:$0xff]
          %v9015 = vld [vmem:[%s4 + $0x4b8] sm:$0xff]
          %v9016 = vld [vmem:[%s4 + $0x4c0] sm:$0xff]
          %v9017 = vld [vmem:[%s4 + $0x4c8] sm:$0xff]
          %v9018 = vld [vmem:[%s4 + $0x4d0] sm:$0xff]
          %v9019 = vld [vmem:[%s4 + $0x4d8] sm:$0xff]
          %v9020 = vld [vmem:[%s4 + $0x4e0] sm:$0xff]
          %v9021 = vld [vmem:[%s4 + $0x4e8] sm:$0xff]
          %v9022 = vld [vmem:[%s4 + $0x4f0] sm:$0xff]
          %v9023 = vld [vmem:[%s4 + $0x4f8] sm:$0xff]
          %v9024 = vld [vmem:[%s4 + $0x500] sm:$0xff]
          %v9025 = vld [vmem:[%s4 + $0x508] sm:$0xff]
          %v9026 = vld [vmem:[%s4 + $0x510] sm:$0xff]
          %v9027 = vld [vmem:[%s4 + $0x518] sm:$0xff]
          %v9028 = vld [vmem:[%s4 + $0x520] sm:$0xff]
          %v9029 = vld [vmem:[%s4 + $0x528] sm:$0xff]
          %v9030 = vld [vmem:[%s4 + $0x530] sm:$0xff]
          %v9031 = vld [vmem:[%s4 + $0x538] sm:$0xff]
          %v9032 = vld [vmem:[%s4 + $0x540] sm:$0xff]
          %v9033 = vld [vmem:[%s4 + $0x548] sm:$0xff]
          %v9034 = vld [vmem:[%s4 + $0x550] sm:$0xff]
          %v9035 = vld [vmem:[%s4 + $0x558] sm:$0xff]
          %v9036 = vld [vmem:[%s4 + $0x560] sm:$0xff]
          %v9037 = vld [vmem:[%s4 + $0x568] sm:$0xff]
          %v9038 = vld [vmem:[%s4 + $0x570] sm:$0xff]
          %v9039 = vld [vmem:[%s4 + $0x578] sm:$0xff]
          %v9040 = vld [vmem:[%s4 + $0x580] sm:$0xff]
          %v9041 = vld [vmem:[%s4 + $0x588] sm:$0xff]
          %v9042 = vld [vmem:[%s4 + $0x590] sm:$0xff]
          %v9043 = vld [vmem:[%s4 + $0x598] sm:$0xff]
          %v9044 = vld [vmem:[%s4 + $0x5a0] sm:$0xff]
          %v9045 = vld [vmem:[%s4 + $0x5a8] sm:$0xff]
          %v9046 = vld [vmem:[%s4 + $0x5b0] sm:$0xff]
          %v9047 = vld [vmem:[%s4 + $0x5b8] sm:$0xff]
          %v9048 = vld [vmem:[%s4 + $0x5c0] sm:$0xff]
          %v9049 = vld [vmem:[%s4 + $0x5c8] sm:$0xff]
          %v9050 = vld [vmem:[%s4 + $0x5d0] sm:$0xff]
          %v9051 = vld [vmem:[%s4 + $0x5d8] sm:$0xff]
          %v9052 = vld [vmem:[%s4 + $0x5e0] sm:$0xff]
          %v9053 = vld [vmem:[%s4 + $0x5e8] sm:$0xff]
          %v9054 = vld [vmem:[%s4 + $0x5f0] sm:$0xff]
          %v9055 = vld [vmem:[%s4 + $0x5f8] sm:$0xff]
          %v9056 = vld [vmem:[%s4 + $0x600] sm:$0xff]
          %v9057 = vld [vmem:[%s4 + $0x608] sm:$0xff]
          %v9058 = vld [vmem:[%s4 + $0x610] sm:$0xff]
          %v9059 = vld [vmem:[%s4 + $0x618] sm:$0xff]
          %v9060 = vld [vmem:[%s4 + $0x620] sm:$0xff]
          %v9061 = vld [vmem:[%s4 + $0x628] sm:$0xff]
          %v9062 = vld [vmem:[%s4 + $0x630] sm:$0xff]
          %v9063 = vld [vmem:[%s4 + $0x638] sm:$0xff]
          %v9064 = vld [vmem:[%s4 + $0x640] sm:$0xff]
          %v9065 = vld [vmem:[%s4 + $0x648] sm:$0xff]
          %v9066 = vld [vmem:[%s4 + $0x650] sm:$0xff]
          %v9067 = vld [vmem:[%s4 + $0x658] sm:$0xff]
          %v9068 = vld [vmem:[%s4 + $0x660] sm:$0xff]
          %v9069 = vld [vmem:[%s4 + $0x668] sm:$0xff]
          %v9070 = vld [vmem:[%s4 + $0x670] sm:$0xff]
          %v9071 = vld [vmem:[%s4 + $0x678] sm:$0xff]
          %v9072 = vld [vmem:[%s4 + $0x680] sm:$0xff]
          %v9073 = vld [vmem:[%s4 + $0x688] sm:$0xff]
          %v9074 = vld [vmem:[%s4 + $0x690] sm:$0xff]
          %v9075 = vld [vmem:[%s4 + $0x698] sm:$0xff]
          %v9076 = vld [vmem:[%s4 + $0x6a0] sm:$0xff]
          %v9077 = vld [vmem:[%s4 + $0x6a8] sm:$0xff]
          %v9078 = vld [vmem:[%s4 + $0x6b0] sm:$0xff]
          %v9079 = vld [vmem:[%s4 + $0x6b8] sm:$0xff]
          %v9080 = vld [vmem:[%s4 + $0x6c0] sm:$0xff]
          %v9081 = vld [vmem:[%s4 + $0x6c8] sm:$0xff]
          %v9082 = vld [vmem:[%s4 + $0x6d0] sm:$0xff]
          %v9083 = vld [vmem:[%s4 + $0x6d8] sm:$0xff]
          %v9084 = vld [vmem:[%s4 + $0x6e0] sm:$0xff]
          %v9085 = vld [vmem:[%s4 + $0x6e8] sm:$0xff]
          %v9086 = vld [vmem:[%s4 + $0x6f0] sm:$0xff]
          %v9087 = vld [vmem:[%s4 + $0x6f8] sm:$0xff]
          %v9088 = vld [vmem:[%s4 + $0x700] sm:$0xff]
          %v9089 = vld [vmem:[%s4 + $0x708] sm:$0xff]
          %v9090 = vld [vmem:[%s4 + $0x710] sm:$0xff]
          %v9091 = vld [vmem:[%s4 + $0x718] sm:$0xff]
          %v9092 = vld [vmem:[%s4 + $0x720] sm:$0xff]
          %v9093 = vld [vmem:[%s4 + $0x728] sm:$0xff]
          %v9094 = vld [vmem:[%s4 + $0x730] sm:$0xff]
          %v9095 = vld [vmem:[%s4 + $0x738] sm:$0xff]
          %v9096 = vld [vmem:[%s4 + $0x740] sm:$0xff]
          %v9097 = vld [vmem:[%s4 + $0x748] sm:$0xff]
          %v9098 = vld [vmem:[%s4 + $0x750] sm:$0xff]
          %v9099 = vld [vmem:[%s4 + $0x758] sm:$0xff]
          %v9100 = vld [vmem:[%s4 + $0x760] sm:$0xff]
          %v9101 = vld [vmem:[%s4 + $0x768] sm:$0xff]
          %v9102 = vld [vmem:[%s4 + $0x770] sm:$0xff]
          %v9103 = vld [vmem:[%s4 + $0x778] sm:$0xff]
          %v9104 = vld [vmem:[%s4 + $0x780] sm:$0xff]
          %v9105 = vld [vmem:[%s4 + $0x788] sm:$0xff]
          %v9106 = vld [vmem:[%s4 + $0x790] sm:$0xff]
          %v9107 = vld [vmem:[%s4 + $0x798] sm:$0xff]
          %v9108 = vld [vmem:[%s4 + $0x7a0] sm:$0xff]
          %v9109 = vld [vmem:[%s4 + $0x7a8] sm:$0xff]
          %v9110 = vld [vmem:[%s4 + $0x7b0] sm:$0xff]
          %v9111 = vld [vmem:[%s4 + $0x7b8] sm:$0xff]
          %v9112 = vld [vmem:[%s4 + $0x7c0] sm:$0xff]
          %v9113 = vld [vmem:[%s4 + $0x7c8] sm:$0xff]
          %v9114 = vld [vmem:[%s4 + $0x7d0] sm:$0xff]
          %v9115 = vld [vmem:[%s4 + $0x7d8] sm:$0xff]
          %v9116 = vld [vmem:[%s4 + $0x7e0] sm:$0xff]
          %v9117 = vld [vmem:[%s4 + $0x7e8] sm:$0xff]
          %v9118 = vld [vmem:[%s4 + $0x7f0] sm:$0xff]
          %v9119 = vld [vmem:[%s4 + $0x7f8] sm:$0xff]
          %v9120 = vld [vmem:[#allocation9] sm:$0x1]
          %v9122 = vlaneseq
          %v9123 = vshrl.u32 %v9122, 7
          %v9124 = vsub.s32 0, %v9123
          %v9125 = vrot.slane %v9120, %v9124
          %9127 = vmatprep.subr.mxu0 0.0
          %9128 = vmatpush1.msra.mxu0 %v8864
          %9129 = vmatprep.subr.mxu0 0.0
          %9130 = vmatpush1.msra.mxu0 %v8865
          %9131 = vmatprep.subr.mxu0 0.0
          %9132 = vmatpush1.msra.mxu0 %v8866
          %9133 = vmatprep.subr.mxu0 0.0
          %9134 = vmatpush1.msra.mxu0 %v8867
          %9135 = vmatprep.subr.mxu0 0.0
          %9136 = vmatpush1.msra.mxu0 %v8868
          %9137 = vmatprep.subr.mxu0 0.0
          %9138 = vmatpush1.msra.mxu0 %v8869
          %9139 = vmatprep.subr.mxu0 0.0
          %9140 = vmatpush1.msra.mxu0 %v8870
          %9141 = vmatprep.subr.mxu0 0.0
          %9142 = vmatpush1.msra.mxu0 %v8871
          %9143 = vmatprep.subr.mxu0 0.0
          %9144 = vmatpush1.msra.mxu0 %v8872
          %9145 = vmatprep.subr.mxu0 0.0
          %9146 = vmatpush1.msra.mxu0 %v8873
          %9147 = vmatprep.subr.mxu0 0.0
          %9148 = vmatpush1.msra.mxu0 %v8874
          %9149 = vmatprep.subr.mxu0 0.0
          %9150 = vmatpush1.msra.mxu0 %v8875
          %9151 = vmatprep.subr.mxu0 0.0
          %9152 = vmatpush1.msra.mxu0 %v8876
          %9153 = vmatprep.subr.mxu0 0.0
          %9154 = vmatpush1.msra.mxu0 %v8877
          %9155 = vmatprep.subr.mxu0 0.0
          %9156 = vmatpush1.msra.mxu0 %v8878
          %9157 = vmatprep.subr.mxu0 0.0
          %9158 = vmatpush1.msra.mxu0 %v8879
          %9159 = vmatprep.subr.mxu0 0.0
          %9160 = vmatpush1.msra.mxu0 %v8880
          %9161 = vmatprep.subr.mxu0 0.0
          %9162 = vmatpush1.msra.mxu0 %v8881
          %9163 = vmatprep.subr.mxu0 0.0
          %9164 = vmatpush1.msra.mxu0 %v8882
          %9165 = vmatprep.subr.mxu0 0.0
          %9166 = vmatpush1.msra.mxu0 %v8883
          %9167 = vmatprep.subr.mxu0 0.0
          %9168 = vmatpush1.msra.mxu0 %v8884
          %9169 = vmatprep.subr.mxu0 0.0
          %9170 = vmatpush1.msra.mxu0 %v8885
          %9171 = vmatprep.subr.mxu0 0.0
          %9172 = vmatpush1.msra.mxu0 %v8886
          %9173 = vmatprep.subr.mxu0 0.0
          %9174 = vmatpush1.msra.mxu0 %v8887
          %9175 = vmatprep.subr.mxu0 0.0
          %9176 = vmatpush1.msra.mxu0 %v8888
          %9177 = vmatprep.subr.mxu0 0.0
          %9178 = vmatpush1.msra.mxu0 %v8889
          %9179 = vmatprep.subr.mxu0 0.0
          %9180 = vmatpush1.msra.mxu0 %v8890
          %9181 = vmatprep.subr.mxu0 0.0
          %9182 = vmatpush1.msra.mxu0 %v8891
          %9183 = vmatprep.subr.mxu0 0.0
          %9184 = vmatpush1.msra.mxu0 %v8892
          %9185 = vmatprep.subr.mxu0 0.0
          %9186 = vmatpush1.msra.mxu0 %v8893
          %9187 = vmatprep.subr.mxu0 0.0
          %9188 = vmatpush1.msra.mxu0 %v8894
          %9189 = vmatprep.subr.mxu0 0.0
          %9190 = vmatpush1.msra.mxu0 %v8895
          %9191 = vmatprep.mubr.f32.mxu0 %v8849
          %9192 = vmatmul.mubr.f32.gmra.mrb[0].mxu0 %v8848
          %v9193 = vpop.f32.mrb[0].mxu0
          %v9194 = vadd.f32 %v9125, %v9193
          %v9195 = vpop.f32.mrb[0].mxu0
          %9196 = vdwg.mxu0
          %9197 = vmatprep.subr.mxu0 0.0
          %9198 = vmatpush1.msra.mxu0 %v8896
          %9199 = vmatprep.subr.mxu0 0.0
          %9200 = vmatpush1.msra.mxu0 %v8897
          %9201 = vmatprep.subr.mxu0 0.0
          %9202 = vmatpush1.msra.mxu0 %v8898
          %9203 = vmatprep.subr.mxu0 0.0
          %9204 = vmatpush1.msra.mxu0 %v8899
          %9205 = vmatprep.subr.mxu0 0.0
          %9206 = vmatpush1.msra.mxu0 %v8900
          %9207 = vmatprep.subr.mxu0 0.0
          %9208 = vmatpush1.msra.mxu0 %v8901
          %9209 = vmatprep.subr.mxu0 0.0
          %9210 = vmatpush1.msra.mxu0 %v8902
          %9211 = vmatprep.subr.mxu0 0.0
          %9212 = vmatpush1.msra.mxu0 %v8903
          %9213 = vmatprep.subr.mxu0 0.0
          %9214 = vmatpush1.msra.mxu0 %v8904
          %9215 = vmatprep.subr.mxu0 0.0
          %9216 = vmatpush1.msra.mxu0 %v8905
          %9217 = vmatprep.subr.mxu0 0.0
          %9218 = vmatpush1.msra.mxu0 %v8906
          %9219 = vmatprep.subr.mxu0 0.0
          %9220 = vmatpush1.msra.mxu0 %v8907
          %9221 = vmatprep.subr.mxu0 0.0
          %9222 = vmatpush1.msra.mxu0 %v8908
          %9223 = vmatprep.subr.mxu0 0.0
          %9224 = vmatpush1.msra.mxu0 %v8909
          %9225 = vmatprep.subr.mxu0 0.0
          %9226 = vmatpush1.msra.mxu0 %v8910
          %9227 = vmatprep.subr.mxu0 0.0
          %9228 = vmatpush1.msra.mxu0 %v8911
          %9229 = vmatprep.subr.mxu0 0.0
          %9230 = vmatpush1.msra.mxu0 %v8912
          %9231 = vmatprep.subr.mxu0 0.0
          %9232 = vmatpush1.msra.mxu0 %v8913
          %9233 = vmatprep.subr.mxu0 0.0
          %9234 = vmatpush1.msra.mxu0 %v8914
          %9235 = vmatprep.subr.mxu0 0.0
          %9236 = vmatpush1.msra.mxu0 %v8915
          %9237 = vmatprep.subr.mxu0 0.0
          %9238 = vmatpush1.msra.mxu0 %v8916
          %9239 = vmatprep.subr.mxu0 0.0
          %9240 = vmatpush1.msra.mxu0 %v8917
          %9241 = vmatprep.subr.mxu0 0.0
          %9242 = vmatpush1.msra.mxu0 %v8918
          %9243 = vmatprep.subr.mxu0 0.0
          %9244 = vmatpush1.msra.mxu0 %v8919
          %9245 = vmatprep.subr.mxu0 0.0
          %9246 = vmatpush1.msra.mxu0 %v8920
          %9247 = vmatprep.subr.mxu0 0.0
          %9248 = vmatpush1.msra.mxu0 %v8921
          %9249 = vmatprep.subr.mxu0 0.0
          %9250 = vmatpush1.msra.mxu0 %v8922
          %9251 = vmatprep.subr.mxu0 0.0
          %9252 = vmatpush1.msra.mxu0 %v8923
          %9253 = vmatprep.subr.mxu0 0.0
          %9254 = vmatpush1.msra.mxu0 %v8924
          %9255 = vmatprep.subr.mxu0 0.0
          %9256 = vmatpush1.msra.mxu0 %v8925
          %9257 = vmatprep.subr.mxu0 0.0
          %9258 = vmatpush1.msra.mxu0 %v8926
          %9259 = vmatprep.subr.mxu0 0.0
          %9260 = vmatpush1.msra.mxu0 %v8927
          %9261 = vmatprep.mubr.f32.mxu0 %v8851
          %9262 = vmatmul.mubr.f32.gmra.mrb[0].mxu0 %v8850
          %v9263 = vpop.f32.mrb[0].mxu0
          %v9264 = vadd.f32 %v9194, %v9263
          %v9265 = vpop.f32.mrb[0].mxu0
          %9266 = vdwg.mxu0
          %9267 = vmatprep.subr.mxu0 0.0
          %9268 = vmatpush1.msra.mxu0 %v8928
          %9269 = vmatprep.subr.mxu0 0.0
          %9270 = vmatpush1.msra.mxu0 %v8929
          %9271 = vmatprep.subr.mxu0 0.0
          %9272 = vmatpush1.msra.mxu0 %v8930
          %9273 = vmatprep.subr.mxu0 0.0
          %9274 = vmatpush1.msra.mxu0 %v8931
          %9275 = vmatprep.subr.mxu0 0.0
          %9276 = vmatpush1.msra.mxu0 %v8932
          %9277 = vmatprep.subr.mxu0 0.0
          %9278 = vmatpush1.msra.mxu0 %v8933
          %9279 = vmatprep.subr.mxu0 0.0
          %9280 = vmatpush1.msra.mxu0 %v8934
          %9281 = vmatprep.subr.mxu0 0.0
          %9282 = vmatpush1.msra.mxu0 %v8935
          %9283 = vmatprep.subr.mxu0 0.0
          %9284 = vmatpush1.msra.mxu0 %v8936
          %9285 = vmatprep.subr.mxu0 0.0
          %9286 = vmatpush1.msra.mxu0 %v8937
          %9287 = vmatprep.subr.mxu0 0.0
          %9288 = vmatpush1.msra.mxu0 %v8938
          %9289 = vmatprep.subr.mxu0 0.0
          %9290 = vmatpush1.msra.mxu0 %v8939
          %9291 = vmatprep.subr.mxu0 0.0
          %9292 = vmatpush1.msra.mxu0 %v8940
          %9293 = vmatprep.subr.mxu0 0.0
          %9294 = vmatpush1.msra.mxu0 %v8941
          %9295 = vmatprep.subr.mxu0 0.0
          %9296 = vmatpush1.msra.mxu0 %v8942
          %9297 = vmatprep.subr.mxu0 0.0
          %9298 = vmatpush1.msra.mxu0 %v8943
          %9299 = vmatprep.subr.mxu0 0.0
          %9300 = vmatpush1.msra.mxu0 %v8944
          %9301 = vmatprep.subr.mxu0 0.0
          %9302 = vmatpush1.msra.mxu0 %v8945
          %9303 = vmatprep.subr.mxu0 0.0
          %9304 = vmatpush1.msra.mxu0 %v8946
          %9305 = vmatprep.subr.mxu0 0.0
          %9306 = vmatpush1.msra.mxu0 %v8947
          %9307 = vmatprep.subr.mxu0 0.0
          %9308 = vmatpush1.msra.mxu0 %v8948
          %9309 = vmatprep.subr.mxu0 0.0
          %9310 = vmatpush1.msra.mxu0 %v8949
          %9311 = vmatprep.subr.mxu0 0.0
          %9312 = vmatpush1.msra.mxu0 %v8950
          %9313 = vmatprep.subr.mxu0 0.0
          %9314 = vmatpush1.msra.mxu0 %v8951
          %9315 = vmatprep.subr.mxu0 0.0
          %9316 = vmatpush1.msra.mxu0 %v8952
          %9317 = vmatprep.subr.mxu0 0.0
          %9318 = vmatpush1.msra.mxu0 %v8953
          %9319 = vmatprep.subr.mxu0 0.0
          %9320 = vmatpush1.msra.mxu0 %v8954
          %9321 = vmatprep.subr.mxu0 0.0
          %9322 = vmatpush1.msra.mxu0 %v8955
          %9323 = vmatprep.subr.mxu0 0.0
          %9324 = vmatpush1.msra.mxu0 %v8956
          %9325 = vmatprep.subr.mxu0 0.0
          %9326 = vmatpush1.msra.mxu0 %v8957
          %9327 = vmatprep.subr.mxu0 0.0
          %9328 = vmatpush1.msra.mxu0 %v8958
          %9329 = vmatprep.subr.mxu0 0.0
          %9330 = vmatpush1.msra.mxu0 %v8959
          %9331 = vmatprep.mubr.f32.mxu0 %v8853
          %9332 = vmatmul.mubr.f32.gmra.mrb[0].mxu0 %v8852
          %v9333 = vpop.f32.mrb[0].mxu0
          %v9334 = vadd.f32 %v9264, %v9333
          %v9335 = vpop.f32.mrb[0].mxu0
          %9336 = vdwg.mxu0
          %9337 = vmatprep.subr.mxu0 0.0
          %9338 = vmatpush1.msra.mxu0 %v8960
          %9339 = vmatprep.subr.mxu0 0.0
          %9340 = vmatpush1.msra.mxu0 %v8961
          %9341 = vmatprep.subr.mxu0 0.0
          %9342 = vmatpush1.msra.mxu0 %v8962
          %9343 = vmatprep.subr.mxu0 0.0
          %9344 = vmatpush1.msra.mxu0 %v8963
          %9345 = vmatprep.subr.mxu0 0.0
          %9346 = vmatpush1.msra.mxu0 %v8964
          %9347 = vmatprep.subr.mxu0 0.0
          %9348 = vmatpush1.msra.mxu0 %v8965
          %9349 = vmatprep.subr.mxu0 0.0
          %9350 = vmatpush1.msra.mxu0 %v8966
          %9351 = vmatprep.subr.mxu0 0.0
          %9352 = vmatpush1.msra.mxu0 %v8967
          %9353 = vmatprep.subr.mxu0 0.0
          %9354 = vmatpush1.msra.mxu0 %v8968
          %9355 = vmatprep.subr.mxu0 0.0
          %9356 = vmatpush1.msra.mxu0 %v8969
          %9357 = vmatprep.subr.mxu0 0.0
          %9358 = vmatpush1.msra.mxu0 %v8970
          %9359 = vmatprep.subr.mxu0 0.0
          %9360 = vmatpush1.msra.mxu0 %v8971
          %9361 = vmatprep.subr.mxu0 0.0
          %9362 = vmatpush1.msra.mxu0 %v8972
          %9363 = vmatprep.subr.mxu0 0.0
          %9364 = vmatpush1.msra.mxu0 %v8973
          %9365 = vmatprep.subr.mxu0 0.0
          %9366 = vmatpush1.msra.mxu0 %v8974
          %9367 = vmatprep.subr.mxu0 0.0
          %9368 = vmatpush1.msra.mxu0 %v8975
          %9369 = vmatprep.subr.mxu0 0.0
          %9370 = vmatpush1.msra.mxu0 %v8976
          %9371 = vmatprep.subr.mxu0 0.0
          %9372 = vmatpush1.msra.mxu0 %v8977
          %9373 = vmatprep.subr.mxu0 0.0
          %9374 = vmatpush1.msra.mxu0 %v8978
          %9375 = vmatprep.subr.mxu0 0.0
          %9376 = vmatpush1.msra.mxu0 %v8979
          %9377 = vmatprep.subr.mxu0 0.0
          %9378 = vmatpush1.msra.mxu0 %v8980
          %9379 = vmatprep.subr.mxu0 0.0
          %9380 = vmatpush1.msra.mxu0 %v8981
          %9381 = vmatprep.subr.mxu0 0.0
          %9382 = vmatpush1.msra.mxu0 %v8982
          %9383 = vmatprep.subr.mxu0 0.0
          %9384 = vmatpush1.msra.mxu0 %v8983
          %9385 = vmatprep.subr.mxu0 0.0
          %9386 = vmatpush1.msra.mxu0 %v8984
          %9387 = vmatprep.subr.mxu0 0.0
          %9388 = vmatpush1.msra.mxu0 %v8985
          %9389 = vmatprep.subr.mxu0 0.0
          %9390 = vmatpush1.msra.mxu0 %v8986
          %9391 = vmatprep.subr.mxu0 0.0
          %9392 = vmatpush1.msra.mxu0 %v8987
          %9393 = vmatprep.subr.mxu0 0.0
          %9394 = vmatpush1.msra.mxu0 %v8988
          %9395 = vmatprep.subr.mxu0 0.0
          %9396 = vmatpush1.msra.mxu0 %v8989
          %9397 = vmatprep.subr.mxu0 0.0
          %9398 = vmatpush1.msra.mxu0 %v8990
          %9399 = vmatprep.subr.mxu0 0.0
          %9400 = vmatpush1.msra.mxu0 %v8991
          %9401 = vmatprep.mubr.f32.mxu0 %v8855
          %9402 = vmatmul.mubr.f32.gmra.mrb[0].mxu0 %v8854
          %v9403 = vpop.f32.mrb[0].mxu0
          %v9404 = vadd.f32 %v9334, %v9403
          %v9405 = vpop.f32.mrb[0].mxu0
          %9406 = vdwg.mxu0
          %9407 = vmatprep.subr.mxu0 0.0
          %9408 = vmatpush1.msra.mxu0 %v8992
          %9409 = vmatprep.subr.mxu0 0.0
          %9410 = vmatpush1.msra.mxu0 %v8993
          %9411 = vmatprep.subr.mxu0 0.0
          %9412 = vmatpush1.msra.mxu0 %v8994
          %9413 = vmatprep.subr.mxu0 0.0
          %9414 = vmatpush1.msra.mxu0 %v8995
          %9415 = vmatprep.subr.mxu0 0.0
          %9416 = vmatpush1.msra.mxu0 %v8996
          %9417 = vmatprep.subr.mxu0 0.0
          %9418 = vmatpush1.msra.mxu0 %v8997
          %9419 = vmatprep.subr.mxu0 0.0
          %9420 = vmatpush1.msra.mxu0 %v8998
          %9421 = vmatprep.subr.mxu0 0.0
          %9422 = vmatpush1.msra.mxu0 %v8999
          %9423 = vmatprep.subr.mxu0 0.0
          %9424 = vmatpush1.msra.mxu0 %v9000
          %9425 = vmatprep.subr.mxu0 0.0
          %9426 = vmatpush1.msra.mxu0 %v9001
          %9427 = vmatprep.subr.mxu0 0.0
          %9428 = vmatpush1.msra.mxu0 %v9002
          %9429 = vmatprep.subr.mxu0 0.0
          %9430 = vmatpush1.msra.mxu0 %v9003
          %9431 = vmatprep.subr.mxu0 0.0
          %9432 = vmatpush1.msra.mxu0 %v9004
          %9433 = vmatprep.subr.mxu0 0.0
          %9434 = vmatpush1.msra.mxu0 %v9005
          %9435 = vmatprep.subr.mxu0 0.0
          %9436 = vmatpush1.msra.mxu0 %v9006
          %9437 = vmatprep.subr.mxu0 0.0
          %9438 = vmatpush1.msra.mxu0 %v9007
          %9439 = vmatprep.subr.mxu0 0.0
          %9440 = vmatpush1.msra.mxu0 %v9008
          %9441 = vmatprep.subr.mxu0 0.0
          %9442 = vmatpush1.msra.mxu0 %v9009
          %9443 = vmatprep.subr.mxu0 0.0
          %9444 = vmatpush1.msra.mxu0 %v9010
          %9445 = vmatprep.subr.mxu0 0.0
          %9446 = vmatpush1.msra.mxu0 %v9011
          %9447 = vmatprep.subr.mxu0 0.0
          %9448 = vmatpush1.msra.mxu0 %v9012
          %9449 = vmatprep.subr.mxu0 0.0
          %9450 = vmatpush1.msra.mxu0 %v9013
          %9451 = vmatprep.subr.mxu0 0.0
          %9452 = vmatpush1.msra.mxu0 %v9014
          %9453 = vmatprep.subr.mxu0 0.0
          %9454 = vmatpush1.msra.mxu0 %v9015
          %9455 = vmatprep.subr.mxu0 0.0
          %9456 = vmatpush1.msra.mxu0 %v9016
          %9457 = vmatprep.subr.mxu0 0.0
          %9458 = vmatpush1.msra.mxu0 %v9017
          %9459 = vmatprep.subr.mxu0 0.0
          %9460 = vmatpush1.msra.mxu0 %v9018
          %9461 = vmatprep.subr.mxu0 0.0
          %9462 = vmatpush1.msra.mxu0 %v9019
          %9463 = vmatprep.subr.mxu0 0.0
          %9464 = vmatpush1.msra.mxu0 %v9020
          %9465 = vmatprep.subr.mxu0 0.0
          %9466 = vmatpush1.msra.mxu0 %v9021
          %9467 = vmatprep.subr.mxu0 0.0
          %9468 = vmatpush1.msra.mxu0 %v9022
          %9469 = vmatprep.subr.mxu0 0.0
          %9470 = vmatpush1.msra.mxu0 %v9023
          %9471 = vmatprep.mubr.f32.mxu0 %v8857
          %9472 = vmatmul.mubr.f32.gmra.mrb[0].mxu0 %v8856
          %v9473 = vpop.f32.mrb[0].mxu0
          %v9474 = vadd.f32 %v9404, %v9473
          %v9475 = vpop.f32.mrb[0].mxu0
          %9476 = vdwg.mxu0
          %9477 = vmatprep.subr.mxu0 0.0
          %9478 = vmatpush1.msra.mxu0 %v9024
          %9479 = vmatprep.subr.mxu0 0.0
          %9480 = vmatpush1.msra.mxu0 %v9025
          %9481 = vmatprep.subr.mxu0 0.0
          %9482 = vmatpush1.msra.mxu0 %v9026
          %9483 = vmatprep.subr.mxu0 0.0
          %9484 = vmatpush1.msra.mxu0 %v9027
          %9485 = vmatprep.subr.mxu0 0.0
          %9486 = vmatpush1.msra.mxu0 %v9028
          %9487 = vmatprep.subr.mxu0 0.0
          %9488 = vmatpush1.msra.mxu0 %v9029
          %9489 = vmatprep.subr.mxu0 0.0
          %9490 = vmatpush1.msra.mxu0 %v9030
          %9491 = vmatprep.subr.mxu0 0.0
          %9492 = vmatpush1.msra.mxu0 %v9031
          %9493 = vmatprep.subr.mxu0 0.0
          %9494 = vmatpush1.msra.mxu0 %v9032
          %9495 = vmatprep.subr.mxu0 0.0
          %9496 = vmatpush1.msra.mxu0 %v9033
          %9497 = vmatprep.subr.mxu0 0.0
          %9498 = vmatpush1.msra.mxu0 %v9034
          %9499 = vmatprep.subr.mxu0 0.0
          %9500 = vmatpush1.msra.mxu0 %v9035
          %9501 = vmatprep.subr.mxu0 0.0
          %9502 = vmatpush1.msra.mxu0 %v9036
          %9503 = vmatprep.subr.mxu0 0.0
          %9504 = vmatpush1.msra.mxu0 %v9037
          %9505 = vmatprep.subr.mxu0 0.0
          %9506 = vmatpush1.msra.mxu0 %v9038
          %9507 = vmatprep.subr.mxu0 0.0
          %9508 = vmatpush1.msra.mxu0 %v9039
          %9509 = vmatprep.subr.mxu0 0.0
          %9510 = vmatpush1.msra.mxu0 %v9040
          %9511 = vmatprep.subr.mxu0 0.0
          %9512 = vmatpush1.msra.mxu0 %v9041
          %9513 = vmatprep.subr.mxu0 0.0
          %9514 = vmatpush1.msra.mxu0 %v9042
          %9515 = vmatprep.subr.mxu0 0.0
          %9516 = vmatpush1.msra.mxu0 %v9043
          %9517 = vmatprep.subr.mxu0 0.0
          %9518 = vmatpush1.msra.mxu0 %v9044
          %9519 = vmatprep.subr.mxu0 0.0
          %9520 = vmatpush1.msra.mxu0 %v9045
          %9521 = vmatprep.subr.mxu0 0.0
          %9522 = vmatpush1.msra.mxu0 %v9046
          %9523 = vmatprep.subr.mxu0 0.0
          %9524 = vmatpush1.msra.mxu0 %v9047
          %9525 = vmatprep.subr.mxu0 0.0
          %9526 = vmatpush1.msra.mxu0 %v9048
          %9527 = vmatprep.subr.mxu0 0.0
          %9528 = vmatpush1.msra.mxu0 %v9049
          %9529 = vmatprep.subr.mxu0 0.0
          %9530 = vmatpush1.msra.mxu0 %v9050
          %9531 = vmatprep.subr.mxu0 0.0
          %9532 = vmatpush1.msra.mxu0 %v9051
          %9533 = vmatprep.subr.mxu0 0.0
          %9534 = vmatpush1.msra.mxu0 %v9052
          %9535 = vmatprep.subr.mxu0 0.0
          %9536 = vmatpush1.msra.mxu0 %v9053
          %9537 = vmatprep.subr.mxu0 0.0
          %9538 = vmatpush1.msra.mxu0 %v9054
          %9539 = vmatprep.subr.mxu0 0.0
          %9540 = vmatpush1.msra.mxu0 %v9055
          %9541 = vmatprep.mubr.f32.mxu0 %v8859
          %9542 = vmatmul.mubr.f32.gmra.mrb[0].mxu0 %v8858
          %v9543 = vpop.f32.mrb[0].mxu0
          %v9544 = vadd.f32 %v9474, %v9543
          %v9545 = vpop.f32.mrb[0].mxu0
          %9546 = vdwg.mxu0
          %9547 = vmatprep.subr.mxu0 0.0
          %9548 = vmatpush1.msra.mxu0 %v9056
          %9549 = vmatprep.subr.mxu0 0.0
          %9550 = vmatpush1.msra.mxu0 %v9057
          %9551 = vmatprep.subr.mxu0 0.0
          %9552 = vmatpush1.msra.mxu0 %v9058
          %9553 = vmatprep.subr.mxu0 0.0
          %9554 = vmatpush1.msra.mxu0 %v9059
          %9555 = vmatprep.subr.mxu0 0.0
          %9556 = vmatpush1.msra.mxu0 %v9060
          %9557 = vmatprep.subr.mxu0 0.0
          %9558 = vmatpush1.msra.mxu0 %v9061
          %9559 = vmatprep.subr.mxu0 0.0
          %9560 = vmatpush1.msra.mxu0 %v9062
          %9561 = vmatprep.subr.mxu0 0.0
          %9562 = vmatpush1.msra.mxu0 %v9063
          %9563 = vmatprep.subr.mxu0 0.0
          %9564 = vmatpush1.msra.mxu0 %v9064
          %9565 = vmatprep.subr.mxu0 0.0
          %9566 = vmatpush1.msra.mxu0 %v9065
          %9567 = vmatprep.subr.mxu0 0.0
          %9568 = vmatpush1.msra.mxu0 %v9066
          %9569 = vmatprep.subr.mxu0 0.0
          %9570 = vmatpush1.msra.mxu0 %v9067
          %9571 = vmatprep.subr.mxu0 0.0
          %9572 = vmatpush1.msra.mxu0 %v9068
          %9573 = vmatprep.subr.mxu0 0.0
          %9574 = vmatpush1.msra.mxu0 %v9069
          %9575 = vmatprep.subr.mxu0 0.0
          %9576 = vmatpush1.msra.mxu0 %v9070
          %9577 = vmatprep.subr.mxu0 0.0
          %9578 = vmatpush1.msra.mxu0 %v9071
          %9579 = vmatprep.subr.mxu0 0.0
          %9580 = vmatpush1.msra.mxu0 %v9072
          %9581 = vmatprep.subr.mxu0 0.0
          %9582 = vmatpush1.msra.mxu0 %v9073
          %9583 = vmatprep.subr.mxu0 0.0
          %9584 = vmatpush1.msra.mxu0 %v9074
          %9585 = vmatprep.subr.mxu0 0.0
          %9586 = vmatpush1.msra.mxu0 %v9075
          %9587 = vmatprep.subr.mxu0 0.0
          %9588 = vmatpush1.msra.mxu0 %v9076
          %9589 = vmatprep.subr.mxu0 0.0
          %9590 = vmatpush1.msra.mxu0 %v9077
          %9591 = vmatprep.subr.mxu0 0.0
          %9592 = vmatpush1.msra.mxu0 %v9078
          %9593 = vmatprep.subr.mxu0 0.0
          %9594 = vmatpush1.msra.mxu0 %v9079
          %9595 = vmatprep.subr.mxu0 0.0
          %9596 = vmatpush1.msra.mxu0 %v9080
          %9597 = vmatprep.subr.mxu0 0.0
          %9598 = vmatpush1.msra.mxu0 %v9081
          %9599 = vmatprep.subr.mxu0 0.0
          %9600 = vmatpush1.msra.mxu0 %v9082
          %9601 = vmatprep.subr.mxu0 0.0
          %9602 = vmatpush1.msra.mxu0 %v9083
          %9603 = vmatprep.subr.mxu0 0.0
          %9604 = vmatpush1.msra.mxu0 %v9084
          %9605 = vmatprep.subr.mxu0 0.0
          %9606 = vmatpush1.msra.mxu0 %v9085
          %9607 = vmatprep.subr.mxu0 0.0
          %9608 = vmatpush1.msra.mxu0 %v9086
          %9609 = vmatprep.subr.mxu0 0.0
          %9610 = vmatpush1.msra.mxu0 %v9087
          %9611 = vmatprep.mubr.f32.mxu0 %v8861
          %9612 = vmatmul.mubr.f32.gmra.mrb[0].mxu0 %v8860
          %v9613 = vpop.f32.mrb[0].mxu0
          %v9614 = vadd.f32 %v9544, %v9613
          %v9615 = vpop.f32.mrb[0].mxu0
          %9616 = vdwg.mxu0
          %9617 = vmatprep.subr.mxu0 0.0
          %9618 = vmatpush1.msra.mxu0 %v9088
          %9619 = vmatprep.subr.mxu0 0.0
          %9620 = vmatpush1.msra.mxu0 %v9089
          %9621 = vmatprep.subr.mxu0 0.0
          %9622 = vmatpush1.msra.mxu0 %v9090
          %9623 = vmatprep.subr.mxu0 0.0
          %9624 = vmatpush1.msra.mxu0 %v9091
          %9625 = vmatprep.subr.mxu0 0.0
          %9626 = vmatpush1.msra.mxu0 %v9092
          %9627 = vmatprep.subr.mxu0 0.0
          %9628 = vmatpush1.msra.mxu0 %v9093
          %9629 = vmatprep.subr.mxu0 0.0
          %9630 = vmatpush1.msra.mxu0 %v9094
          %9631 = vmatprep.subr.mxu0 0.0
          %9632 = vmatpush1.msra.mxu0 %v9095
          %9633 = vmatprep.subr.mxu0 0.0
          %9634 = vmatpush1.msra.mxu0 %v9096
          %9635 = vmatprep.subr.mxu0 0.0
          %9636 = vmatpush1.msra.mxu0 %v9097
          %9637 = vmatprep.subr.mxu0 0.0
          %9638 = vmatpush1.msra.mxu0 %v9098
          %9639 = vmatprep.subr.mxu0 0.0
          %9640 = vmatpush1.msra.mxu0 %v9099
          %9641 = vmatprep.subr.mxu0 0.0
          %9642 = vmatpush1.msra.mxu0 %v9100
          %9643 = vmatprep.subr.mxu0 0.0
          %9644 = vmatpush1.msra.mxu0 %v9101
          %9645 = vmatprep.subr.mxu0 0.0
          %9646 = vmatpush1.msra.mxu0 %v9102
          %9647 = vmatprep.subr.mxu0 0.0
          %9648 = vmatpush1.msra.mxu0 %v9103
          %9649 = vmatprep.subr.mxu0 0.0
          %9650 = vmatpush1.msra.mxu0 %v9104
          %9651 = vmatprep.subr.mxu0 0.0
          %9652 = vmatpush1.msra.mxu0 %v9105
          %9653 = vmatprep.subr.mxu0 0.0
          %9654 = vmatpush1.msra.mxu0 %v9106
          %9655 = vmatprep.subr.mxu0 0.0
          %9656 = vmatpush1.msra.mxu0 %v9107
          %9657 = vmatprep.subr.mxu0 0.0
          %9658 = vmatpush1.msra.mxu0 %v9108
          %9659 = vmatprep.subr.mxu0 0.0
          %9660 = vmatpush1.msra.mxu0 %v9109
          %9661 = vmatprep.subr.mxu0 0.0
          %9662 = vmatpush1.msra.mxu0 %v9110
          %9663 = vmatprep.subr.mxu0 0.0
          %9664 = vmatpush1.msra.mxu0 %v9111
          %9665 = vmatprep.subr.mxu0 0.0
          %9666 = vmatpush1.msra.mxu0 %v9112
          %9667 = vmatprep.subr.mxu0 0.0
          %9668 = vmatpush1.msra.mxu0 %v9113
          %9669 = vmatprep.subr.mxu0 0.0
          %9670 = vmatpush1.msra.mxu0 %v9114
          %9671 = vmatprep.subr.mxu0 0.0
          %9672 = vmatpush1.msra.mxu0 %v9115
          %9673 = vmatprep.subr.mxu0 0.0
          %9674 = vmatpush1.msra.mxu0 %v9116
          %9675 = vmatprep.subr.mxu0 0.0
          %9676 = vmatpush1.msra.mxu0 %v9117
          %9677 = vmatprep.subr.mxu0 0.0
          %9678 = vmatpush1.msra.mxu0 %v9118
          %9679 = vmatprep.subr.mxu0 0.0
          %9680 = vmatpush1.msra.mxu0 %v9119
          %9681 = vmatprep.mubr.f32.mxu0 %v8863
          %9682 = vmatmul.mubr.f32.gmra.mrb[0].mxu0 %v8862
          %v9683 = vpop.f32.mrb[0].mxu0
          %v9684 = vadd.f32 %v9614, %v9683
          %v9685 = vpop.f32.mrb[0].mxu0
          %9686 = vdwg.mxu0
          %vm9687 = vcmask 15360
          %v9688 = vsel %vm9687, %v9684, -inf
          %9689 = vmax.xlane.f32.xlu0 %v9688
          %v9690 = vpop.xlane.xlu0 %9689
          %v9691 = vsub.f32 %v9684, %v9690
          %v9692 = vmul.f32 %v9691, 1.442695
          %v9693 = vpow.pop %v9692
          %v9694 = vsel %vm9687, %v9693, 0.0
          %9695 = vadd.xlane.f32.xlu0 %v9694
          %v9696 = vpop.xlane.xlu0 %9695
          %v9697 = vrcp.pop %v9696
          %v9698 = vmul.f32 %v9693, %v9697
          %9699 = vst.msk [vmem:[%s6] sm:$0xff] %vm9687, %v9698
        $region80: #{b_classifier_forward.1} parent=43 // pred_fallthru
          _
        // Predicated region
        $region81: #{b_classifier_forward.1} parent=43 // pred_check
          %p9700 = pneg %p175
        $region82: #{b_classifier_forward.1} parent=43 // pred_check_branch
          %9702 = sbr.rel (%p9700) target = $region84
        $region83: #{b_classifier_forward.1} parent=43 // pred_region
          _
        $region84: #{b_classifier_forward.1} parent=43 // pred_fallthru
          _
        // Predicated region
        $region85: #{b_classifier_forward.1} parent=43 // pred_check
          %p9703 = pneg %p175
        $region86: #{b_classifier_forward.1} parent=43 // pred_check_branch
          %9705 = sbr.rel (%p9703) target = $region88
        $region87: #{b_classifier_forward.1} parent=43 // pred_region
          _
        $region88: #{b_classifier_forward.1} parent=43 // pred_fallthru
          _
      $region44: #{b_classifier_forward.1} parent=5 // pred_fallthru
        _
      %p9706 = scmp.le.s32.totalorder 2, %s17
      // Predicated region
      $region89: #{b_classifier_forward.1} parent=5 // pred_check
        %p9707 = pneg %p9706
      $region90: #{b_classifier_forward.1} parent=5 // pred_check_branch
        %9709 = sbr.rel (%p9707) target = $region92
      $region91: #{b_classifier_forward.1} parent=5 // pred_region
        %s9710 = ssub.s32 %s17, 2
      $region92: #{b_classifier_forward.1} parent=5 // pred_fallthru
        _
    $region6: #{b_classifier_forward.1} parent=1 // loop_footer
      %s21 = sadd.s32 1, %s17
    $region7: #{b_classifier_forward.1} parent=1 // loop_footer_branch
      %16 = sbr.rel target = $region3
    $region8: #{b_classifier_forward.1} parent=1 // loop_exit
      _
    %9711 = vsyncpa [#allocation5], 1
    %s9712 = scalar_lea.sflag [#allocation5], 1
    %9713 = vsyncpa %s9712, 1
    %9714 = vsyncpa [#allocation7], 1
    %9715 = vsyncpa [#allocation10], 1

</llo_original>
